<compile_context>
chip_gen: v6e
topology: v6e:2x2x1
jax: 0.10.0
libtpu: 0.0.40
codegen_flags: <defaults>
</compile_context>

<pallas_src>
import functools

import jax
import jax.numpy as jnp
from jax import lax
from jax.experimental import pallas as pl
from jax.experimental.pallas import tpu as pltpu

EPS = 1e-5  # BatchNorm3d default eps


# ----------------------------------------------------------------------------
# Kernel 1: 3x3x3 conv (padding=1, stride=1, no bias), channels-last.
#   grid = (N*D,) output planes, all "parallel".  The three neighboring input
#   depth planes arrive as three blocks (prev / cur / next); the full weight
#   slab [27*Cin, Cout] stays VMEM-resident (constant index map).  A fused
#   per-input-channel affine (+ optional ReLU) applies the producer BatchNorm;
#   depth padding planes are masked to zero; the H/W halo lives in a small
#   VMEM scratch whose border is kept at zero.  The 27 taps are packed into an
#   im2col tile and contracted in a single MXU matmul; per-plane BN partial
#   statistics (sum, sum of squares) are emitted as a second output.
# ----------------------------------------------------------------------------
def _conv3x3x3_kernel(xm_ref, xc_ref, xp_ref, w_ref, a_ref, b_ref,
                      y_ref, st_ref, zpad_ref, col_ref, *,
                      D, H, W, Cin, fuse_relu):
    nd = pl.program_id(0)
    d = nd % D

    # Zero only the 1-wide halo border; the interior is fully overwritten for
    # every depth tap below.  (Done per step so it is also correct when the
    # "parallel" grid axis is sharded across TensorCores.)
    zpad_ref[0:1, :, :] = jnp.zeros((1, W + 2, Cin), jnp.float32)
    zpad_ref[H + 1:H + 2, :, :] = jnp.zeros((1, W + 2, Cin), jnp.float32)
    zpad_ref[:, 0:1, :] = jnp.zeros((H + 2, 1, Cin), jnp.float32)
    zpad_ref[:, W + 1:W + 2, :] = jnp.zeros((H + 2, 1, Cin), jnp.float32)

    a = a_ref[...]                                   # [1, 1, Cin]
    b = b_ref[...]
    planes = (xm_ref, xc_ref, xp_ref)                # depth taps d-1, d, d+1

    for kd in range(3):
        z = planes[kd][...].astype(jnp.float32) * a + b   # producer BN affine
        if fuse_relu:
            z = jnp.maximum(z, 0.0)
        # Depth padding: planes outside the sample contribute zero (applied
        # AFTER the fused BN+ReLU, matching conv's zero padding of its input).
        if kd == 0:
            z = jnp.where(d > 0, z, 0.0)
        elif kd == 2:
            z = jnp.where(d < D - 1, z, 0.0)
        zpad_ref[1:H + 1, 1:W + 1, :] = z

        for kh in range(3):
            for kw in range(3):
                t = (kd * 3 + kh) * 3 + kw
                win = zpad_ref[kh:kh + H, kw:kw + W, :].reshape(H * W, Cin)
                col_ref[:, t * Cin:(t + 1) * Cin] = win

    # One wide MXU matmul: taps folded into the contraction (K = 27*Cin),
    # bf16 operands, f32 accumulation.
    acc = jnp.dot(col_ref[...].astype(jnp.bfloat16), w_ref[...],
                  preferred_element_type=jnp.float32)          # [H*W, Cout]
    y_ref[...] = acc.astype(y_ref.dtype)

    # BatchNorm partial statistics in f32 (reduced across planes on the host).
    st_ref[0:1, :] = jnp.sum(acc, axis=0, keepdims=True)
    st_ref[1:2, :] = jnp.sum(acc * acc, axis=0, keepdims=True)


def conv3x3x3(x_cl, w_flat, a, b, *, D, fuse_relu):
    """x_cl: [N*D, H, W, Cin] (bf16); w_flat: [27*Cin, Cout] (bf16);
    a, b: [1, 1, Cin] f32 fused input affine (+ optional ReLU).
    Returns (y [N*D, H*W, Cout] bf16, stats [N*D, 2, Cout] f32)."""
    ND, H, W, Cin = x_cl.shape
    Cout = w_flat.shape[-1]
    kernel = functools.partial(_conv3x3x3_kernel, D=D, H=H, W=W, Cin=Cin,
                               fuse_relu=fuse_relu)
    return pl.pallas_call(
        kernel,
        out_shape=(jax.ShapeDtypeStruct((ND, H * W, Cout), jnp.bfloat16),
                   jax.ShapeDtypeStruct((ND, 2, Cout), jnp.float32)),
        grid=(ND,),
        in_specs=[
            # prev / cur / next input depth planes
            pl.BlockSpec((None, H, W, Cin),
                         lambda nd: (jnp.maximum(nd - 1, 0), 0, 0, 0)),
            pl.BlockSpec((None, H, W, Cin), lambda nd: (nd, 0, 0, 0)),
            pl.BlockSpec((None, H, W, Cin),
                         lambda nd: (jnp.minimum(nd + 1, ND - 1), 0, 0, 0)),
            # full weight slab, VMEM-resident (constant block index)
            pl.BlockSpec((27 * Cin, Cout), lambda nd: (0, 0)),
            pl.BlockSpec((1, 1, Cin), lambda nd: (0, 0, 0)),
            pl.BlockSpec((1, 1, Cin), lambda nd: (0, 0, 0)),
        ],
        out_specs=(pl.BlockSpec((None, H * W, Cout), lambda nd: (nd, 0, 0)),
                   pl.BlockSpec((None, 2, Cout), lambda nd: (nd, 0, 0))),
        scratch_shapes=[pltpu.VMEM((H + 2, W + 2, Cin), jnp.float32),
                        pltpu.VMEM((H * W, 27 * Cin), jnp.float32)],
        compiler_params=pltpu.CompilerParams(
            dimension_semantics=("parallel",)),
    )(x_cl, x_cl, x_cl, w_flat, a, b)


# ----------------------------------------------------------------------------
# Kernel 2: fused epilogue.
#   out = relu( BN2(conv2)  +  BN_id(x @ W_id) )     (need_map)
#   out = relu( BN2(conv2)  +  x )                   (no identity mapping)
# Both BatchNorms enter as per-channel scale/shift; the 1x1x1 identity conv is
# computed in-kernel (its weight stays VMEM-resident), so the identity
# activation never touches HBM.
# ----------------------------------------------------------------------------
def _finalize_map_kernel(y2_ref, x_ref, wid_ref, a2_ref, b2_ref, ai_ref,
                         bi_ref, o_ref):
    idn = jnp.dot(x_ref[...], wid_ref[...],
                  preferred_element_type=jnp.float32)
    out = (y2_ref[...].astype(jnp.float32) * a2_ref[...] + b2_ref[...]
           + idn * ai_ref[...] + bi_ref[...])
    o_ref[...] = jnp.maximum(out, 0.0)


def _finalize_id_kernel(y2_ref, x_ref, a2_ref, b2_ref, o_ref):
    out = (y2_ref[...].astype(jnp.float32) * a2_ref[...] + b2_ref[...]
           + x_ref[...].astype(jnp.float32))
    o_ref[...] = jnp.maximum(out, 0.0)


def _pick_tile(P):
    for t in (1024, 512, 256, 128, 64, 32, 16, 8):
        if P % t == 0:
            return t, P
    # No suitable divisor: pad the (independent) rows instead of loading the
    # whole array as one block.
    return 128, ((P + 127) // 128) * 128


def finalize(y2_2d, x2d, a2, b2, wid=None, ai=None, bi=None):
    P, Cout = y2_2d.shape
    Cin = x2d.shape[-1]
    tile, Ppad = _pick_tile(P)
    if Ppad != P:
        y2_2d = jnp.pad(y2_2d, ((0, Ppad - P), (0, 0)))
        x2d = jnp.pad(x2d, ((0, Ppad - P), (0, 0)))

    vec = pl.BlockSpec((1, Cout), lambda i: (0, 0))
    row_y = pl.BlockSpec((tile, Cout), lambda i: (i, 0))
    row_x = pl.BlockSpec((tile, Cin), lambda i: (i, 0))
    cp = pltpu.CompilerParams(dimension_semantics=("parallel",))

    if wid is not None:
        out = pl.pallas_call(
            _finalize_map_kernel,
            out_shape=jax.ShapeDtypeStruct((Ppad, Cout), jnp.float32),
            grid=(Ppad // tile,),
            in_specs=[row_y, row_x,
                      pl.BlockSpec((Cin, Cout), lambda i: (0, 0)),  # resident
                      vec, vec, vec, vec],
            out_specs=pl.BlockSpec((tile, Cout), lambda i: (i, 0)),
            compiler_params=cp,
        )(y2_2d, x2d, wid, a2.reshape(1, Cout), b2.reshape(1, Cout),
          ai.reshape(1, Cout), bi.reshape(1, Cout))
    else:
        out = pl.pallas_call(
            _finalize_id_kernel,
            out_shape=jax.ShapeDtypeStruct((Ppad, Cout), jnp.float32),
            grid=(Ppad // tile,),
            in_specs=[row_y, row_x, vec, vec],
            out_specs=pl.BlockSpec((tile, Cout), lambda i: (i, 0)),
            compiler_params=cp,
        )(y2_2d, x2d, a2.reshape(1, Cout), b2.reshape(1, Cout))
    return out[:P] if Ppad != P else out


# ----------------------------------------------------------------------------
# Host-side helpers.
# ----------------------------------------------------------------------------
def _bn_from_stats(stats, gamma, beta, count):
    """Fold training-mode BatchNorm into per-channel scale/shift (y*a + b)
    from in-kernel partial sums: stats[:, 0] = sum, stats[:, 1] = sum(x^2).
    f32 accumulators; var = E[x^2] - E[x]^2 clamped at 0 against cancellation."""
    s = jnp.sum(stats, axis=0)                       # [2, C]
    mean = s[0] / count
    var = jnp.maximum(s[1] / count - mean * mean, 0.0)
    a = gamma * lax.rsqrt(var + EPS)
    return a, beta - mean * a


def res_block(x_ncdhw, params):
    """ResBlock forward with defaults: stride=1, leaky=False (ReLU), norm='BATCH'."""
    N, Cin, D, H, W = x_ncdhw.shape
    Cout = params["w1"].shape[-1]
    P = N * D * H * W
    Pf = float(P)

    # Single boundary transpose into channels-last; kernels stay channels-last.
    x_cl = jnp.transpose(x_ncdhw, (0, 2, 3, 4, 1)).astype(jnp.float32)
    x_bf = x_cl.astype(jnp.bfloat16).reshape(N * D, H, W, Cin)

    w1 = params["w1"].reshape(27 * Cin, Cout).astype(jnp.bfloat16)
    w2 = params["w2"].reshape(27 * Cout, Cout).astype(jnp.bfloat16)

    one_in = jnp.ones((1, 1, Cin), jnp.float32)
    zero_in = jnp.zeros((1, 1, Cin), jnp.float32)

    # conv1 (raw output, bf16) + BN1 batch statistics from in-kernel partials.
    y1, st1 = conv3x3x3(x_bf, w1, one_in, zero_in, D=D, fuse_relu=False)
    a1, b1 = _bn_from_stats(st1, params["g1"], params["be1"], Pf)

    # conv2; BN1 affine + ReLU are fused onto its input tiles.
    y2, st2 = conv3x3x3(y1.reshape(N * D, H, W, Cout), w2,
                        a1.reshape(1, 1, Cout), b1.reshape(1, 1, Cout),
                        D=D, fuse_relu=True)
    a2, b2 = _bn_from_stats(st2, params["g2"], params["be2"], Pf)

    x2d_bf = x_bf.reshape(P, Cin)
    need_map = Cin != Cout                            # (stride fixed at 1)
    if need_map:
        # Identity path fused into the finalize kernel; its BatchNorm stats
        # come analytically from the channel moments of x:
        #   mean_id = mean_x @ Wid,  E[id^2] = diag(Wid^T (x^T x / P) Wid).
        wid = params["wid"]                           # [Cin, Cout] f32
        x2d = x_cl.reshape(P, Cin)
        mean_x = jnp.mean(x2d, axis=0)
        sxx = jnp.dot(x2d.T, x2d, precision=lax.Precision.HIGHEST) / Pf
        mean_i = mean_x @ wid
        ex2_i = jnp.sum(wid * (sxx @ wid), axis=0)
        var_i = jnp.maximum(ex2_i - mean_i * mean_i, 0.0)
        ai = params["gid"] * lax.rsqrt(var_i + EPS)
        bi = params["beid"] - mean_i * ai
        out2d = finalize(y2.reshape(P, Cout), x2d_bf, a2, b2,
                         wid=wid.astype(jnp.bfloat16), ai=ai, bi=bi)
    else:
        out2d = finalize(y2.reshape(P, Cout), x2d_bf, a2, b2)

    return jnp.transpose(out2d.reshape(N, D, H, W, Cout), (0, 4, 1, 2, 3))


# ----------------------------------------------------------------------------
# Deterministic parameter init (shapes per ResBlock/ConvNorm; BN affine random
# to exercise the full normalization formula).
# ----------------------------------------------------------------------------
def init_params(key, c_in, c_out):
    ks = jax.random.split(key, 9)

    def wi(k, shape, fan_in):
        return jax.random.normal(k, shape, jnp.float32) / jnp.sqrt(float(fan_in))

    p = dict(
        w1=wi(ks[0], (3, 3, 3, c_in, c_out), 27 * c_in),
        w2=wi(ks[1], (3, 3, 3, c_out, c_out), 27 * c_out),
        g1=1.0 + 0.1 * jax.random.normal(ks[2], (c_out,), jnp.float32),
        be1=0.1 * jax.random.normal(ks[3], (c_out,), jnp.float32),
        g2=1.0 + 0.1 * jax.random.normal(ks[4], (c_out,), jnp.float32),
        be2=0.1 * jax.random.normal(ks[5], (c_out,), jnp.float32),
    )
    if c_in != c_out:
        p.update(
            wid=wi(ks[6], (c_in, c_out), c_in),
            gid=1.0 + 0.1 * jax.random.normal(ks[7], (c_out,), jnp.float32),
            beid=0.1 * jax.random.normal(ks[8], (c_out,), jnp.float32),
        )
    return p


# ----------------------------------------------------------------------------
# Pure-JAX reference (lax.conv_general_dilated + training-mode BatchNorm).
# ----------------------------------------------------------------------------
def reference(x_ncdhw, params):
    x_cl = jnp.transpose(x_ncdhw, (0, 2, 3, 4, 1)).astype(jnp.float32)
    Cin = x_cl.shape[-1]
    Cout = params["w1"].shape[-1]

    def conv3(v, w):
        return lax.conv_general_dilated(
            v, w, window_strides=(1, 1, 1), padding=[(1, 1)] * 3,
            dimension_numbers=("NDHWC", "DHWIO", "NDHWC"))

    def bn(v, gamma, beta):
        m = jnp.mean(v, axis=(0, 1, 2, 3))
        var = jnp.mean(jnp.square(v - m), axis=(0, 1, 2, 3))
        return (v - m) * (gamma * lax.rsqrt(var + EPS)) + beta

    h1 = jnp.maximum(bn(conv3(x_cl, params["w1"]), params["g1"], params["be1"]), 0.0)
    h2 = bn(conv3(h1, params["w2"]), params["g2"], params["be2"])
    if Cin != Cout:
        idy = bn(jnp.einsum("ndhwc,co->ndhwo", x_cl, params["wid"]),
                 params["gid"], params["beid"])
    else:
        idy = x_cl
    out = jnp.maximum(h2 + idy, 0.0)
    return jnp.transpose(out, (0, 4, 1, 2, 3))


if __name__ == "__main__":
    key = jax.random.PRNGKey(0)
    kx, kp = jax.random.split(key)

    N, Cin, Cout, D, H, W = 2, 8, 16, 8, 8, 8   # need_map path (Cin != Cout)
    x = jax.random.normal(kx, (N, Cin, D, H, W), jnp.float32)
    params = init_params(kp, Cin, Cout)

    out = jax.jit(res_block)(x, params)
    out = jax.block_until_ready(out)

    ref = reference(x, params)
    assert out.shape == (N, Cout, D, H, W)
    # Tolerance accounts for bf16 MXU operands / bf16-stored intermediates on
    # the kernel side and default-precision conv/matmuls on the reference side;
    # structural errors would be O(1) since outputs are BN-standardized.
    max_err = float(jnp.max(jnp.abs(out - ref)))
    assert max_err < 5e-2, f"mismatch: {max_err}"
    print("KERNEL_OK")
</pallas_src>

<mosaic_0001>
module attributes {stable_mosaic.version = 11 : i64} {
  func.func @_conv3x3x3_kernel(%arg0: i32, %arg1: memref<1x8x8x8xbf16, #tpu.memory_space<vmem>>, %arg2: memref<1x8x8x8xbf16, #tpu.memory_space<vmem>>, %arg3: memref<1x8x8x8xbf16, #tpu.memory_space<vmem>>, %arg4: memref<216x16xbf16, #tpu.memory_space<vmem>>, %arg5: memref<1x1x8xf32, #tpu.memory_space<vmem>>, %arg6: memref<1x1x8xf32, #tpu.memory_space<vmem>>, %arg7: memref<1x64x16xbf16, #tpu.memory_space<vmem>>, %arg8: memref<1x2x16xf32, #tpu.memory_space<vmem>>, %arg9: memref<10x10x8xf32, #tpu.memory_space<vmem>>, %arg10: memref<64x216xf32, #tpu.memory_space<vmem>>) attributes {dimension_semantics = [#tpu.dimension_semantics<parallel>], iteration_bounds = array<i64: 16>, scalar_prefetch = 0 : i64, scratch_operands = 2 : i64, tpu.core_type = #tpu.core_type<tc>, window_params = [{transform_indices = @transform_0, window_bounds = array<i64: 1, 8, 8, 8>}, {transform_indices = @transform_1, window_bounds = array<i64: 1, 8, 8, 8>}, {transform_indices = @transform_2, window_bounds = array<i64: 1, 8, 8, 8>}, {pipeline_mode = #tpu.pipeline_mode<synchronous>, transform_indices = @transform_3, window_bounds = array<i64: 216, 16>}, {pipeline_mode = #tpu.pipeline_mode<synchronous>, transform_indices = @transform_4, window_bounds = array<i64: 1, 1, 8>}, {pipeline_mode = #tpu.pipeline_mode<synchronous>, transform_indices = @transform_5, window_bounds = array<i64: 1, 1, 8>}, {transform_indices = @transform_6, window_bounds = array<i64: 1, 64, 16>}, {transform_indices = @transform_7, window_bounds = array<i64: 1, 2, 16>}]} {
    %c8_i32 = arith.constant 8 : i32
    %c0_i32 = arith.constant 0 : i32
    %0 = arith.cmpi eq, %c8_i32, %c0_i32 : i32
    %c1_i32 = arith.constant 1 : i32
    %1 = arith.select %0, %c1_i32, %c8_i32 : i32
    %2 = arith.remsi %arg0, %1 : i32
    %c0_i32_0 = arith.constant 0 : i32
    %3 = arith.cmpi ne, %2, %c0_i32_0 : i32
    %c0_i32_1 = arith.constant 0 : i32
    %4 = arith.cmpi slt, %2, %c0_i32_1 : i32
    %c0_i32_2 = arith.constant 0 : i32
    %5 = arith.cmpi slt, %1, %c0_i32_2 : i32
    %6 = arith.xori %4, %5 : i1
    %7 = arith.andi %6, %3 : i1
    %8 = arith.addi %2, %1 : i32
    %9 = arith.select %7, %8, %2 : i32
    %cst = arith.constant 0.000000e+00 : f32
    %10 = vector.broadcast %cst : f32 to vector<1x10x8xf32>
    %c0 = arith.constant 0 : index
    %c0_3 = arith.constant 0 : index
    %c0_4 = arith.constant 0 : index
    %11 = vector.load %arg9[%c0, %c0_3, %c0_4] : memref<10x10x8xf32, #tpu.memory_space<vmem>>, vector<1x10x8xf32>
    tpu.vector_store %arg9[%c0, %c0_3, %c0_4], %10 {strides = array<i32>} : memref<10x10x8xf32, #tpu.memory_space<vmem>>, vector<1x10x8xf32>,
    %cst_5 = arith.constant 0.000000e+00 : f32
    %12 = vector.broadcast %cst_5 : f32 to vector<1x10x8xf32>
    %c9 = arith.constant 9 : index
    %c0_6 = arith.constant 0 : index
    %c0_7 = arith.constant 0 : index
    %13 = vector.load %arg9[%c9, %c0_6, %c0_7] : memref<10x10x8xf32, #tpu.memory_space<vmem>>, vector<1x10x8xf32>
    tpu.vector_store %arg9[%c9, %c0_6, %c0_7], %12 {strides = array<i32>} : memref<10x10x8xf32, #tpu.memory_space<vmem>>, vector<1x10x8xf32>,
    %cst_8 = arith.constant 0.000000e+00 : f32
    %14 = vector.broadcast %cst_8 : f32 to vector<10x1x8xf32>
    %c0_9 = arith.constant 0 : index
    %c0_10 = arith.constant 0 : index
    %c0_11 = arith.constant 0 : index
    %15 = vector.load %arg9[%c0_9, %c0_10, %c0_11] : memref<10x10x8xf32, #tpu.memory_space<vmem>>, vector<10x1x8xf32>
    tpu.vector_store %arg9[%c0_9, %c0_10, %c0_11], %14 {strides = array<i32>} : memref<10x10x8xf32, #tpu.memory_space<vmem>>, vector<10x1x8xf32>,
    %cst_12 = arith.constant 0.000000e+00 : f32
    %16 = vector.broadcast %cst_12 : f32 to vector<10x1x8xf32>
    %c0_13 = arith.constant 0 : index
    %c9_14 = arith.constant 9 : index
    %c0_15 = arith.constant 0 : index
    %17 = vector.load %arg9[%c0_13, %c9_14, %c0_15] : memref<10x10x8xf32, #tpu.memory_space<vmem>>, vector<10x1x8xf32>
    tpu.vector_store %arg9[%c0_13, %c9_14, %c0_15], %16 {strides = array<i32>} : memref<10x10x8xf32, #tpu.memory_space<vmem>>, vector<10x1x8xf32>,
    %c0_16 = arith.constant 0 : index
    %c0_17 = arith.constant 0 : index
    %c0_18 = arith.constant 0 : index
    %18 = vector.load %arg5[%c0_16, %c0_17, %c0_18] : memref<1x1x8xf32, #tpu.memory_space<vmem>>, vector<1x1x8xf32>
    %c0_19 = arith.constant 0 : index
    %c0_20 = arith.constant 0 : index
    %c0_21 = arith.constant 0 : index
    %19 = vector.load %arg6[%c0_19, %c0_20, %c0_21] : memref<1x1x8xf32, #tpu.memory_space<vmem>>, vector<1x1x8xf32>
    %c0_22 = arith.constant 0 : index
    %c0_23 = arith.constant 0 : index
    %c0_24 = arith.constant 0 : index
    %c0_25 = arith.constant 0 : index
    %20 = vector.load %arg1[%c0_22, %c0_23, %c0_24, %c0_25] : memref<1x8x8x8xbf16, #tpu.memory_space<vmem>>, vector<1x8x8x8xbf16>
    %21 = vector.shape_cast %20 : vector<1x8x8x8xbf16> to vector<8x8x8xbf16>
    %22 = arith.extf %21 : vector<8x8x8xbf16> to vector<8x8x8xf32>
    %23 = vector.broadcast %18 : vector<1x1x8xf32> to vector<8x8x8xf32>
    %24 = arith.mulf %22, %23 : vector<8x8x8xf32>
    %25 = vector.broadcast %19 : vector<1x1x8xf32> to vector<8x8x8xf32>
    %26 = arith.addf %24, %25 : vector<8x8x8xf32>
    %c0_i32_26 = arith.constant 0 : i32
    %27 = arith.cmpi sgt, %9, %c0_i32_26 : i32
    %cst_27 = arith.constant 0.000000e+00 : f32
    %28 = vector.broadcast %cst_27 : f32 to vector<8x8x8xf32>
    %29 = arith.select %27, %26, %28 : vector<8x8x8xf32>
    %c1 = arith.constant 1 : index
    %c1_28 = arith.constant 1 : index
    %c0_29 = arith.constant 0 : index
    %30 = vector.load %arg9[%c1, %c1_28, %c0_29] : memref<10x10x8xf32, #tpu.memory_space<vmem>>, vector<8x8x8xf32>
    tpu.vector_store %arg9[%c1, %c1_28, %c0_29], %29 {strides = array<i32>} : memref<10x10x8xf32, #tpu.memory_space<vmem>>, vector<8x8x8xf32>,
    %c0_30 = arith.constant 0 : index
    %c0_31 = arith.constant 0 : index
    %c0_32 = arith.constant 0 : index
    %31 = vector.load %arg9[%c0_30, %c0_31, %c0_32] : memref<10x10x8xf32, #tpu.memory_space<vmem>>, vector<8x8x8xf32>
    %32 = vector.shape_cast %31 : vector<8x8x8xf32> to vector<64x8xf32>
    %c0_33 = arith.constant 0 : index
    %c0_34 = arith.constant 0 : index
    %33 = vector.load %arg10[%c0_33, %c0_34] : memref<64x216xf32, #tpu.memory_space<vmem>>, vector<64x8xf32>
    tpu.vector_store %arg10[%c0_33, %c0_34], %32 {strides = array<i32>} : memref<64x216xf32, #tpu.memory_space<vmem>>, vector<64x8xf32>,
    %c0_35 = arith.constant 0 : index
    %c1_36 = arith.constant 1 : index
    %c0_37 = arith.constant 0 : index
    %34 = vector.load %arg9[%c0_35, %c1_36, %c0_37] : memref<10x10x8xf32, #tpu.memory_space<vmem>>, vector<8x8x8xf32>
    %35 = vector.shape_cast %34 : vector<8x8x8xf32> to vector<64x8xf32>
    %c0_38 = arith.constant 0 : index
    %c8 = arith.constant 8 : index
    %36 = vector.load %arg10[%c0_38, %c8] : memref<64x216xf32, #tpu.memory_space<vmem>>, vector<64x8xf32>
    tpu.vector_store %arg10[%c0_38, %c8], %35 {strides = array<i32>} : memref<64x216xf32, #tpu.memory_space<vmem>>, vector<64x8xf32>,
    %c0_39 = arith.constant 0 : index
    %c2 = arith.constant 2 : index
    %c0_40 = arith.constant 0 : index
    %37 = vector.load %arg9[%c0_39, %c2, %c0_40] : memref<10x10x8xf32, #tpu.memory_space<vmem>>, vector<8x8x8xf32>
    %38 = vector.shape_cast %37 : vector<8x8x8xf32> to vector<64x8xf32>
    %c0_41 = arith.constant 0 : index
    %c16 = arith.constant 16 : index
    %39 = vector.load %arg10[%c0_41, %c16] : memref<64x216xf32, #tpu.memory_space<vmem>>, vector<64x8xf32>
    tpu.vector_store %arg10[%c0_41, %c16], %38 {strides = array<i32>} : memref<64x216xf32, #tpu.memory_space<vmem>>, vector<64x8xf32>,
    %c1_42 = arith.constant 1 : index
    %c0_43 = arith.constant 0 : index
    %c0_44 = arith.constant 0 : index
    %40 = vector.load %arg9[%c1_42, %c0_43, %c0_44] : memref<10x10x8xf32, #tpu.memory_space<vmem>>, vector<8x8x8xf32>
    %41 = vector.shape_cast %40 : vector<8x8x8xf32> to vector<64x8xf32>
    %c0_45 = arith.constant 0 : index
    %c24 = arith.constant 24 : index
    %42 = vector.load %arg10[%c0_45, %c24] : memref<64x216xf32, #tpu.memory_space<vmem>>, vector<64x8xf32>
    tpu.vector_store %arg10[%c0_45, %c24], %41 {strides = array<i32>} : memref<64x216xf32, #tpu.memory_space<vmem>>, vector<64x8xf32>,
    %c1_46 = arith.constant 1 : index
    %c1_47 = arith.constant 1 : index
    %c0_48 = arith.constant 0 : index
    %43 = vector.load %arg9[%c1_46, %c1_47, %c0_48] : memref<10x10x8xf32, #tpu.memory_space<vmem>>, vector<8x8x8xf32>
    %44 = vector.shape_cast %43 : vector<8x8x8xf32> to vector<64x8xf32>
    %c0_49 = arith.constant 0 : index
    %c32 = arith.constant 32 : index
    %45 = vector.load %arg10[%c0_49, %c32] : memref<64x216xf32, #tpu.memory_space<vmem>>, vector<64x8xf32>
    tpu.vector_store %arg10[%c0_49, %c32], %44 {strides = array<i32>} : memref<64x216xf32, #tpu.memory_space<vmem>>, vector<64x8xf32>,
    %c1_50 = arith.constant 1 : index
    %c2_51 = arith.constant 2 : index
    %c0_52 = arith.constant 0 : index
    %46 = vector.load %arg9[%c1_50, %c2_51, %c0_52] : memref<10x10x8xf32, #tpu.memory_space<vmem>>, vector<8x8x8xf32>
    %47 = vector.shape_cast %46 : vector<8x8x8xf32> to vector<64x8xf32>
    %c0_53 = arith.constant 0 : index
    %c40 = arith.constant 40 : index
    %48 = vector.load %arg10[%c0_53, %c40] : memref<64x216xf32, #tpu.memory_space<vmem>>, vector<64x8xf32>
    tpu.vector_store %arg10[%c0_53, %c40], %47 {strides = array<i32>} : memref<64x216xf32, #tpu.memory_space<vmem>>, vector<64x8xf32>,
    %c2_54 = arith.constant 2 : index
    %c0_55 = arith.constant 0 : index
    %c0_56 = arith.constant 0 : index
    %49 = vector.load %arg9[%c2_54, %c0_55, %c0_56] : memref<10x10x8xf32, #tpu.memory_space<vmem>>, vector<8x8x8xf32>
    %50 = vector.shape_cast %49 : vector<8x8x8xf32> to vector<64x8xf32>
    %c0_57 = arith.constant 0 : index
    %c48 = arith.constant 48 : index
    %51 = vector.load %arg10[%c0_57, %c48] : memref<64x216xf32, #tpu.memory_space<vmem>>, vector<64x8xf32>
    tpu.vector_store %arg10[%c0_57, %c48], %50 {strides = array<i32>} : memref<64x216xf32, #tpu.memory_space<vmem>>, vector<64x8xf32>,
    %c2_58 = arith.constant 2 : index
    %c1_59 = arith.constant 1 : index
    %c0_60 = arith.constant 0 : index
    %52 = vector.load %arg9[%c2_58, %c1_59, %c0_60] : memref<10x10x8xf32, #tpu.memory_space<vmem>>, vector<8x8x8xf32>
    %53 = vector.shape_cast %52 : vector<8x8x8xf32> to vector<64x8xf32>
    %c0_61 = arith.constant 0 : index
    %c56 = arith.constant 56 : index
    %54 = vector.load %arg10[%c0_61, %c56] : memref<64x216xf32, #tpu.memory_space<vmem>>, vector<64x8xf32>
    tpu.vector_store %arg10[%c0_61, %c56], %53 {strides = array<i32>} : memref<64x216xf32, #tpu.memory_space<vmem>>, vector<64x8xf32>,
    %c2_62 = arith.constant 2 : index
    %c2_63 = arith.constant 2 : index
    %c0_64 = arith.constant 0 : index
    %55 = vector.load %arg9[%c2_62, %c2_63, %c0_64] : memref<10x10x8xf32, #tpu.memory_space<vmem>>, vector<8x8x8xf32>
    %56 = vector.shape_cast %55 : vector<8x8x8xf32> to vector<64x8xf32>
    %c0_65 = arith.constant 0 : index
    %c64 = arith.constant 64 : index
    %57 = vector.load %arg10[%c0_65, %c64] : memref<64x216xf32, #tpu.memory_space<vmem>>, vector<64x8xf32>
    tpu.vector_store %arg10[%c0_65, %c64], %56 {strides = array<i32>} : memref<64x216xf32, #tpu.memory_space<vmem>>, vector<64x8xf32>,
    %c0_66 = arith.constant 0 : index
    %c0_67 = arith.constant 0 : index
    %c0_68 = arith.constant 0 : index
    %c0_69 = arith.constant 0 : index
    %58 = vector.load %arg2[%c0_66, %c0_67, %c0_68, %c0_69] : memref<1x8x8x8xbf16, #tpu.memory_space<vmem>>, vector<1x8x8x8xbf16>
    %59 = vector.shape_cast %58 : vector<1x8x8x8xbf16> to vector<8x8x8xbf16>
    %60 = arith.extf %59 : vector<8x8x8xbf16> to vector<8x8x8xf32>
    %61 = vector.broadcast %18 : vector<1x1x8xf32> to vector<8x8x8xf32>
    %62 = arith.mulf %60, %61 : vector<8x8x8xf32>
    %63 = vector.broadcast %19 : vector<1x1x8xf32> to vector<8x8x8xf32>
    %64 = arith.addf %62, %63 : vector<8x8x8xf32>
    %c1_70 = arith.constant 1 : index
    %c1_71 = arith.constant 1 : index
    %c0_72 = arith.constant 0 : index
    %65 = vector.load %arg9[%c1_70, %c1_71, %c0_72] : memref<10x10x8xf32, #tpu.memory_space<vmem>>, vector<8x8x8xf32>
    tpu.vector_store %arg9[%c1_70, %c1_71, %c0_72], %64 {strides = array<i32>} : memref<10x10x8xf32, #tpu.memory_space<vmem>>, vector<8x8x8xf32>,
    %c0_73 = arith.constant 0 : index
    %c0_74 = arith.constant 0 : index
    %c0_75 = arith.constant 0 : index
    %66 = vector.load %arg9[%c0_73, %c0_74, %c0_75] : memref<10x10x8xf32, #tpu.memory_space<vmem>>, vector<8x8x8xf32>
    %67 = vector.shape_cast %66 : vector<8x8x8xf32> to vector<64x8xf32>
    %c0_76 = arith.constant 0 : index
    %c72 = arith.constant 72 : index
    %68 = vector.load %arg10[%c0_76, %c72] : memref<64x216xf32, #tpu.memory_space<vmem>>, vector<64x8xf32>
    tpu.vector_store %arg10[%c0_76, %c72], %67 {strides = array<i32>} : memref<64x216xf32, #tpu.memory_space<vmem>>, vector<64x8xf32>,
    %c0_77 = arith.constant 0 : index
    %c1_78 = arith.constant 1 : index
    %c0_79 = arith.constant 0 : index
    %69 = vector.load %arg9[%c0_77, %c1_78, %c0_79] : memref<10x10x8xf32, #tpu.memory_space<vmem>>, vector<8x8x8xf32>
    %70 = vector.shape_cast %69 : vector<8x8x8xf32> to vector<64x8xf32>
    %c0_80 = arith.constant 0 : index
    %c80 = arith.constant 80 : index
    %71 = vector.load %arg10[%c0_80, %c80] : memref<64x216xf32, #tpu.memory_space<vmem>>, vector<64x8xf32>
    tpu.vector_store %arg10[%c0_80, %c80], %70 {strides = array<i32>} : memref<64x216xf32, #tpu.memory_space<vmem>>, vector<64x8xf32>,
    %c0_81 = arith.constant 0 : index
    %c2_82 = arith.constant 2 : index
    %c0_83 = arith.constant 0 : index
    %72 = vector.load %arg9[%c0_81, %c2_82, %c0_83] : memref<10x10x8xf32, #tpu.memory_space<vmem>>, vector<8x8x8xf32>
    %73 = vector.shape_cast %72 : vector<8x8x8xf32> to vector<64x8xf32>
    %c0_84 = arith.constant 0 : index
    %c88 = arith.constant 88 : index
    %74 = vector.load %arg10[%c0_84, %c88] : memref<64x216xf32, #tpu.memory_space<vmem>>, vector<64x8xf32>
    tpu.vector_store %arg10[%c0_84, %c88], %73 {strides = array<i32>} : memref<64x216xf32, #tpu.memory_space<vmem>>, vector<64x8xf32>,
    %c1_85 = arith.constant 1 : index
    %c0_86 = arith.constant 0 : index
    %c0_87 = arith.constant 0 : index
    %75 = vector.load %arg9[%c1_85, %c0_86, %c0_87] : memref<10x10x8xf32, #tpu.memory_space<vmem>>, vector<8x8x8xf32>
    %76 = vector.shape_cast %75 : vector<8x8x8xf32> to vector<64x8xf32>
    %c0_88 = arith.constant 0 : index
    %c96 = arith.constant 96 : index
    %77 = vector.load %arg10[%c0_88, %c96] : memref<64x216xf32, #tpu.memory_space<vmem>>, vector<64x8xf32>
    tpu.vector_store %arg10[%c0_88, %c96], %76 {strides = array<i32>} : memref<64x216xf32, #tpu.memory_space<vmem>>, vector<64x8xf32>,
    %c1_89 = arith.constant 1 : index
    %c1_90 = arith.constant 1 : index
    %c0_91 = arith.constant 0 : index
    %78 = vector.load %arg9[%c1_89, %c1_90, %c0_91] : memref<10x10x8xf32, #tpu.memory_space<vmem>>, vector<8x8x8xf32>
    %79 = vector.shape_cast %78 : vector<8x8x8xf32> to vector<64x8xf32>
    %c0_92 = arith.constant 0 : index
    %c104 = arith.constant 104 : index
    %80 = vector.load %arg10[%c0_92, %c104] : memref<64x216xf32, #tpu.memory_space<vmem>>, vector<64x8xf32>
    tpu.vector_store %arg10[%c0_92, %c104], %79 {strides = array<i32>} : memref<64x216xf32, #tpu.memory_space<vmem>>, vector<64x8xf32>,
    %c1_93 = arith.constant 1 : index
    %c2_94 = arith.constant 2 : index
    %c0_95 = arith.constant 0 : index
    %81 = vector.load %arg9[%c1_93, %c2_94, %c0_95] : memref<10x10x8xf32, #tpu.memory_space<vmem>>, vector<8x8x8xf32>
    %82 = vector.shape_cast %81 : vector<8x8x8xf32> to vector<64x8xf32>
    %c0_96 = arith.constant 0 : index
    %c112 = arith.constant 112 : index
    %83 = vector.load %arg10[%c0_96, %c112] : memref<64x216xf32, #tpu.memory_space<vmem>>, vector<64x8xf32>
    tpu.vector_store %arg10[%c0_96, %c112], %82 {strides = array<i32>} : memref<64x216xf32, #tpu.memory_space<vmem>>, vector<64x8xf32>,
    %c2_97 = arith.constant 2 : index
    %c0_98 = arith.constant 0 : index
    %c0_99 = arith.constant 0 : index
    %84 = vector.load %arg9[%c2_97, %c0_98, %c0_99] : memref<10x10x8xf32, #tpu.memory_space<vmem>>, vector<8x8x8xf32>
    %85 = vector.shape_cast %84 : vector<8x8x8xf32> to vector<64x8xf32>
    %c0_100 = arith.constant 0 : index
    %c120 = arith.constant 120 : index
    %86 = vector.load %arg10[%c0_100, %c120] : memref<64x216xf32, #tpu.memory_space<vmem>>, vector<64x8xf32>
    tpu.vector_store %arg10[%c0_100, %c120], %85 {strides = array<i32>} : memref<64x216xf32, #tpu.memory_space<vmem>>, vector<64x8xf32>,
    %c2_101 = arith.constant 2 : index
    %c1_102 = arith.constant 1 : index
    %c0_103 = arith.constant 0 : index
    %87 = vector.load %arg9[%c2_101, %c1_102, %c0_103] : memref<10x10x8xf32, #tpu.memory_space<vmem>>, vector<8x8x8xf32>
    %88 = vector.shape_cast %87 : vector<8x8x8xf32> to vector<64x8xf32>
    %c0_104 = arith.constant 0 : index
    %c128 = arith.constant 128 : index
    %89 = vector.load %arg10[%c0_104, %c128] : memref<64x216xf32, #tpu.memory_space<vmem>>, vector<64x8xf32>
    tpu.vector_store %arg10[%c0_104, %c128], %88 {strides = array<i32>} : memref<64x216xf32, #tpu.memory_space<vmem>>, vector<64x8xf32>,
    %c2_105 = arith.constant 2 : index
    %c2_106 = arith.constant 2 : index
    %c0_107 = arith.constant 0 : index
    %90 = vector.load %arg9[%c2_105, %c2_106, %c0_107] : memref<10x10x8xf32, #tpu.memory_space<vmem>>, vector<8x8x8xf32>
    %91 = vector.shape_cast %90 : vector<8x8x8xf32> to vector<64x8xf32>
    %c0_108 = arith.constant 0 : index
    %c136 = arith.constant 136 : index
    %92 = vector.load %arg10[%c0_108, %c136] : memref<64x216xf32, #tpu.memory_space<vmem>>, vector<64x8xf32>
    tpu.vector_store %arg10[%c0_108, %c136], %91 {strides = array<i32>} : memref<64x216xf32, #tpu.memory_space<vmem>>, vector<64x8xf32>,
    %c0_109 = arith.constant 0 : index
    %c0_110 = arith.constant 0 : index
    %c0_111 = arith.constant 0 : index
    %c0_112 = arith.constant 0 : index
    %93 = vector.load %arg3[%c0_109, %c0_110, %c0_111, %c0_112] : memref<1x8x8x8xbf16, #tpu.memory_space<vmem>>, vector<1x8x8x8xbf16>
    %94 = vector.shape_cast %93 : vector<1x8x8x8xbf16> to vector<8x8x8xbf16>
    %95 = arith.extf %94 : vector<8x8x8xbf16> to vector<8x8x8xf32>
    %96 = vector.broadcast %18 : vector<1x1x8xf32> to vector<8x8x8xf32>
    %97 = arith.mulf %95, %96 : vector<8x8x8xf32>
    %98 = vector.broadcast %19 : vector<1x1x8xf32> to vector<8x8x8xf32>
    %99 = arith.addf %97, %98 : vector<8x8x8xf32>
    %c7_i32 = arith.constant 7 : i32
    %100 = arith.cmpi slt, %9, %c7_i32 : i32
    %cst_113 = arith.constant 0.000000e+00 : f32
    %101 = vector.broadcast %cst_113 : f32 to vector<8x8x8xf32>
    %102 = arith.select %100, %99, %101 : vector<8x8x8xf32>
    %c1_114 = arith.constant 1 : index
    %c1_115 = arith.constant 1 : index
    %c0_116 = arith.constant 0 : index
    %103 = vector.load %arg9[%c1_114, %c1_115, %c0_116] : memref<10x10x8xf32, #tpu.memory_space<vmem>>, vector<8x8x8xf32>
    tpu.vector_store %arg9[%c1_114, %c1_115, %c0_116], %102 {strides = array<i32>} : memref<10x10x8xf32, #tpu.memory_space<vmem>>, vector<8x8x8xf32>,
    %c0_117 = arith.constant 0 : index
    %c0_118 = arith.constant 0 : index
    %c0_119 = arith.constant 0 : index
    %104 = vector.load %arg9[%c0_117, %c0_118, %c0_119] : memref<10x10x8xf32, #tpu.memory_space<vmem>>, vector<8x8x8xf32>
    %105 = vector.shape_cast %104 : vector<8x8x8xf32> to vector<64x8xf32>
    %c0_120 = arith.constant 0 : index
    %c144 = arith.constant 144 : index
    %106 = vector.load %arg10[%c0_120, %c144] : memref<64x216xf32, #tpu.memory_space<vmem>>, vector<64x8xf32>
    tpu.vector_store %arg10[%c0_120, %c144], %105 {strides = array<i32>} : memref<64x216xf32, #tpu.memory_space<vmem>>, vector<64x8xf32>,
    %c0_121 = arith.constant 0 : index
    %c1_122 = arith.constant 1 : index
    %c0_123 = arith.constant 0 : index
    %107 = vector.load %arg9[%c0_121, %c1_122, %c0_123] : memref<10x10x8xf32, #tpu.memory_space<vmem>>, vector<8x8x8xf32>
    %108 = vector.shape_cast %107 : vector<8x8x8xf32> to vector<64x8xf32>
    %c0_124 = arith.constant 0 : index
    %c152 = arith.constant 152 : index
    %109 = vector.load %arg10[%c0_124, %c152] : memref<64x216xf32, #tpu.memory_space<vmem>>, vector<64x8xf32>
    tpu.vector_store %arg10[%c0_124, %c152], %108 {strides = array<i32>} : memref<64x216xf32, #tpu.memory_space<vmem>>, vector<64x8xf32>,
    %c0_125 = arith.constant 0 : index
    %c2_126 = arith.constant 2 : index
    %c0_127 = arith.constant 0 : index
    %110 = vector.load %arg9[%c0_125, %c2_126, %c0_127] : memref<10x10x8xf32, #tpu.memory_space<vmem>>, vector<8x8x8xf32>
    %111 = vector.shape_cast %110 : vector<8x8x8xf32> to vector<64x8xf32>
    %c0_128 = arith.constant 0 : index
    %c160 = arith.constant 160 : index
    %112 = vector.load %arg10[%c0_128, %c160] : memref<64x216xf32, #tpu.memory_space<vmem>>, vector<64x8xf32>
    tpu.vector_store %arg10[%c0_128, %c160], %111 {strides = array<i32>} : memref<64x216xf32, #tpu.memory_space<vmem>>, vector<64x8xf32>,
    %c1_129 = arith.constant 1 : index
    %c0_130 = arith.constant 0 : index
    %c0_131 = arith.constant 0 : index
    %113 = vector.load %arg9[%c1_129, %c0_130, %c0_131] : memref<10x10x8xf32, #tpu.memory_space<vmem>>, vector<8x8x8xf32>
    %114 = vector.shape_cast %113 : vector<8x8x8xf32> to vector<64x8xf32>
    %c0_132 = arith.constant 0 : index
    %c168 = arith.constant 168 : index
    %115 = vector.load %arg10[%c0_132, %c168] : memref<64x216xf32, #tpu.memory_space<vmem>>, vector<64x8xf32>
    tpu.vector_store %arg10[%c0_132, %c168], %114 {strides = array<i32>} : memref<64x216xf32, #tpu.memory_space<vmem>>, vector<64x8xf32>,
    %c1_133 = arith.constant 1 : index
    %c1_134 = arith.constant 1 : index
    %c0_135 = arith.constant 0 : index
    %116 = vector.load %arg9[%c1_133, %c1_134, %c0_135] : memref<10x10x8xf32, #tpu.memory_space<vmem>>, vector<8x8x8xf32>
    %117 = vector.shape_cast %116 : vector<8x8x8xf32> to vector<64x8xf32>
    %c0_136 = arith.constant 0 : index
    %c176 = arith.constant 176 : index
    %118 = vector.load %arg10[%c0_136, %c176] : memref<64x216xf32, #tpu.memory_space<vmem>>, vector<64x8xf32>
    tpu.vector_store %arg10[%c0_136, %c176], %117 {strides = array<i32>} : memref<64x216xf32, #tpu.memory_space<vmem>>, vector<64x8xf32>,
    %c1_137 = arith.constant 1 : index
    %c2_138 = arith.constant 2 : index
    %c0_139 = arith.constant 0 : index
    %119 = vector.load %arg9[%c1_137, %c2_138, %c0_139] : memref<10x10x8xf32, #tpu.memory_space<vmem>>, vector<8x8x8xf32>
    %120 = vector.shape_cast %119 : vector<8x8x8xf32> to vector<64x8xf32>
    %c0_140 = arith.constant 0 : index
    %c184 = arith.constant 184 : index
    %121 = vector.load %arg10[%c0_140, %c184] : memref<64x216xf32, #tpu.memory_space<vmem>>, vector<64x8xf32>
    tpu.vector_store %arg10[%c0_140, %c184], %120 {strides = array<i32>} : memref<64x216xf32, #tpu.memory_space<vmem>>, vector<64x8xf32>,
    %c2_141 = arith.constant 2 : index
    %c0_142 = arith.constant 0 : index
    %c0_143 = arith.constant 0 : index
    %122 = vector.load %arg9[%c2_141, %c0_142, %c0_143] : memref<10x10x8xf32, #tpu.memory_space<vmem>>, vector<8x8x8xf32>
    %123 = vector.shape_cast %122 : vector<8x8x8xf32> to vector<64x8xf32>
    %c0_144 = arith.constant 0 : index
    %c192 = arith.constant 192 : index
    %124 = vector.load %arg10[%c0_144, %c192] : memref<64x216xf32, #tpu.memory_space<vmem>>, vector<64x8xf32>
    tpu.vector_store %arg10[%c0_144, %c192], %123 {strides = array<i32>} : memref<64x216xf32, #tpu.memory_space<vmem>>, vector<64x8xf32>,
    %c2_145 = arith.constant 2 : index
    %c1_146 = arith.constant 1 : index
    %c0_147 = arith.constant 0 : index
    %125 = vector.load %arg9[%c2_145, %c1_146, %c0_147] : memref<10x10x8xf32, #tpu.memory_space<vmem>>, vector<8x8x8xf32>
    %126 = vector.shape_cast %125 : vector<8x8x8xf32> to vector<64x8xf32>
    %c0_148 = arith.constant 0 : index
    %c200 = arith.constant 200 : index
    %127 = vector.load %arg10[%c0_148, %c200] : memref<64x216xf32, #tpu.memory_space<vmem>>, vector<64x8xf32>
    tpu.vector_store %arg10[%c0_148, %c200], %126 {strides = array<i32>} : memref<64x216xf32, #tpu.memory_space<vmem>>, vector<64x8xf32>,
    %c2_149 = arith.constant 2 : index
    %c2_150 = arith.constant 2 : index
    %c0_151 = arith.constant 0 : index
    %128 = vector.load %arg9[%c2_149, %c2_150, %c0_151] : memref<10x10x8xf32, #tpu.memory_space<vmem>>, vector<8x8x8xf32>
    %129 = vector.shape_cast %128 : vector<8x8x8xf32> to vector<64x8xf32>
    %c0_152 = arith.constant 0 : index
    %c208 = arith.constant 208 : index
    %130 = vector.load %arg10[%c0_152, %c208] : memref<64x216xf32, #tpu.memory_space<vmem>>, vector<64x8xf32>
    tpu.vector_store %arg10[%c0_152, %c208], %129 {strides = array<i32>} : memref<64x216xf32, #tpu.memory_space<vmem>>, vector<64x8xf32>,
    %c0_153 = arith.constant 0 : index
    %c0_154 = arith.constant 0 : index
    %131 = vector.load %arg10[%c0_153, %c0_154] : memref<64x216xf32, #tpu.memory_space<vmem>>, vector<64x216xf32>
    %132 = arith.truncf %131 : vector<64x216xf32> to vector<64x216xbf16>
    %c0_155 = arith.constant 0 : index
    %c0_156 = arith.constant 0 : index
    %133 = vector.load %arg4[%c0_155, %c0_156] : memref<216x16xbf16, #tpu.memory_space<vmem>>, vector<216x16xbf16>
    %cst_157 = arith.constant dense<0.000000e+00> : vector<64x16xf32>
    %134 = tpu.matmul %132, %133, %cst_157 {dimension_numbers = #tpu.dot_dimension_numbers<[1], [0], [0], [1], [0, 0, 1, 1], [], []>} : vector<64x216xbf16>, vector<216x16xbf16>, vector<64x16xf32> -> vector<64x16xf32>
    %135 = arith.truncf %134 : vector<64x16xf32> to vector<64x16xbf16>
    %c0_158 = arith.constant 0 : index
    %c0_159 = arith.constant 0 : index
    %c0_160 = arith.constant 0 : index
    %136 = vector.load %arg7[%c0_158, %c0_159, %c0_160] : memref<1x64x16xbf16, #tpu.memory_space<vmem>>, vector<1x64x16xbf16>
    %137 = vector.shape_cast %136 : vector<1x64x16xbf16> to vector<64x16xbf16>
    %138 = vector.shape_cast %135 : vector<64x16xbf16> to vector<1x64x16xbf16>
    tpu.vector_store %arg7[%c0_158, %c0_159, %c0_160], %138 {strides = array<i32>} : memref<1x64x16xbf16, #tpu.memory_space<vmem>>, vector<1x64x16xbf16>,
    %cst_161 = arith.constant dense<0.000000e+00> : vector<16xf32>
    %139 = vector.multi_reduction <add>, %134, %cst_161 [0] : vector<64x16xf32> to vector<16xf32>
    %140 = vector.shape_cast %139 : vector<16xf32> to vector<1x16xf32>
    %c0_162 = arith.constant 0 : index
    %c0_163 = arith.constant 0 : index
    %c0_164 = arith.constant 0 : index
    %141 = vector.load %arg8[%c0_162, %c0_163, %c0_164] : memref<1x2x16xf32, #tpu.memory_space<vmem>>, vector<1x1x16xf32>
    %142 = vector.shape_cast %141 : vector<1x1x16xf32> to vector<1x16xf32>
    %143 = vector.shape_cast %140 : vector<1x16xf32> to vector<1x1x16xf32>
    tpu.vector_store %arg8[%c0_162, %c0_163, %c0_164], %143 {strides = array<i32>} : memref<1x2x16xf32, #tpu.memory_space<vmem>>, vector<1x1x16xf32>,
    %144 = arith.mulf %134, %134 : vector<64x16xf32>
    %cst_165 = arith.constant dense<0.000000e+00> : vector<16xf32>
    %145 = vector.multi_reduction <add>, %144, %cst_165 [0] : vector<64x16xf32> to vector<16xf32>
    %146 = vector.shape_cast %145 : vector<16xf32> to vector<1x16xf32>
    %c0_166 = arith.constant 0 : index
    %c1_167 = arith.constant 1 : index
    %c0_168 = arith.constant 0 : index
    %147 = vector.load %arg8[%c0_166, %c1_167, %c0_168] : memref<1x2x16xf32, #tpu.memory_space<vmem>>, vector<1x1x16xf32>
    %148 = vector.shape_cast %147 : vector<1x1x16xf32> to vector<1x16xf32>
    %149 = vector.shape_cast %146 : vector<1x16xf32> to vector<1x1x16xf32>
    tpu.vector_store %arg8[%c0_166, %c1_167, %c0_168], %149 {strides = array<i32>} : memref<1x2x16xf32, #tpu.memory_space<vmem>>, vector<1x1x16xf32>,
    return
  }
  func.func @transform_0(%arg0: i32) -> (i32, i32, i32, i32) {
    %c1_i32 = arith.constant 1 : i32
    %0 = arith.subi %arg0, %c1_i32 : i32
    %c0_i32 = arith.constant 0 : i32
    %1 = arith.maxsi %0, %c0_i32 : i32
    %c0_i32_0 = arith.constant 0 : i32
    %c0_i32_1 = arith.constant 0 : i32
    %c0_i32_2 = arith.constant 0 : i32
    %c0_i32_3 = arith.constant 0 : i32
    return %1, %c0_i32_0, %c0_i32_1, %c0_i32_2 : i32, i32, i32, i32
  }
  func.func @transform_1(%arg0: i32) -> (i32, i32, i32, i32) {
    %c0_i32 = arith.constant 0 : i32
    %c0_i32_0 = arith.constant 0 : i32
    %c0_i32_1 = arith.constant 0 : i32
    %c0_i32_2 = arith.constant 0 : i32
    return %arg0, %c0_i32, %c0_i32_0, %c0_i32_1 : i32, i32, i32, i32
  }
  func.func @transform_2(%arg0: i32) -> (i32, i32, i32, i32) {
    %c1_i32 = arith.constant 1 : i32
    %0 = arith.addi %arg0, %c1_i32 : i32
    %c15_i32 = arith.constant 15 : i32
    %1 = arith.minsi %0, %c15_i32 : i32
    %c0_i32 = arith.constant 0 : i32
    %c0_i32_0 = arith.constant 0 : i32
    %c0_i32_1 = arith.constant 0 : i32
    %c0_i32_2 = arith.constant 0 : i32
    return %1, %c0_i32, %c0_i32_0, %c0_i32_1 : i32, i32, i32, i32
  }
  func.func @transform_3(%arg0: i32) -> (i32, i32) {
    %c0_i32 = arith.constant 0 : i32
    %c0_i32_0 = arith.constant 0 : i32
    %c0_i32_1 = arith.constant 0 : i32
    return %c0_i32, %c0_i32_0 : i32, i32
  }
  func.func @transform_4(%arg0: i32) -> (i32, i32, i32) {
    %c0_i32 = arith.constant 0 : i32
    %c0_i32_0 = arith.constant 0 : i32
    %c0_i32_1 = arith.constant 0 : i32
    %c0_i32_2 = arith.constant 0 : i32
    return %c0_i32, %c0_i32_0, %c0_i32_1 : i32, i32, i32
  }
  func.func @transform_5(%arg0: i32) -> (i32, i32, i32) {
    %c0_i32 = arith.constant 0 : i32
    %c0_i32_0 = arith.constant 0 : i32
    %c0_i32_1 = arith.constant 0 : i32
    %c0_i32_2 = arith.constant 0 : i32
    return %c0_i32, %c0_i32_0, %c0_i32_1 : i32, i32, i32
  }
  func.func @transform_6(%arg0: i32) -> (i32, i32, i32) {
    %c0_i32 = arith.constant 0 : i32
    %c0_i32_0 = arith.constant 0 : i32
    %c0_i32_1 = arith.constant 0 : i32
    return %arg0, %c0_i32, %c0_i32_0 : i32, i32, i32
  }
  func.func @transform_7(%arg0: i32) -> (i32, i32, i32) {
    %c0_i32 = arith.constant 0 : i32
    %c0_i32_0 = arith.constant 0 : i32
    %c0_i32_1 = arith.constant 0 : i32
    return %arg0, %c0_i32, %c0_i32_0 : i32, i32, i32
  }
}

module attributes {stable_mosaic.version = 11 : i64} {
  func.func @_conv3x3x3_kernel(%arg0: i32, %arg1: memref<1x8x8x16xbf16, #tpu.memory_space<vmem>>, %arg2: memref<1x8x8x16xbf16, #tpu.memory_space<vmem>>, %arg3: memref<1x8x8x16xbf16, #tpu.memory_space<vmem>>, %arg4: memref<432x16xbf16, #tpu.memory_space<vmem>>, %arg5: memref<1x1x16xf32, #tpu.memory_space<vmem>>, %arg6: memref<1x1x16xf32, #tpu.memory_space<vmem>>, %arg7: memref<1x64x16xbf16, #tpu.memory_space<vmem>>, %arg8: memref<1x2x16xf32, #tpu.memory_space<vmem>>, %arg9: memref<10x10x16xf32, #tpu.memory_space<vmem>>, %arg10: memref<64x432xf32, #tpu.memory_space<vmem>>) attributes {dimension_semantics = [#tpu.dimension_semantics<parallel>], iteration_bounds = array<i64: 16>, scalar_prefetch = 0 : i64, scratch_operands = 2 : i64, tpu.core_type = #tpu.core_type<tc>, window_params = [{transform_indices = @transform_0, window_bounds = array<i64: 1, 8, 8, 16>}, {transform_indices = @transform_1, window_bounds = array<i64: 1, 8, 8, 16>}, {transform_indices = @transform_2, window_bounds = array<i64: 1, 8, 8, 16>}, {pipeline_mode = #tpu.pipeline_mode<synchronous>, transform_indices = @transform_3, window_bounds = array<i64: 432, 16>}, {pipeline_mode = #tpu.pipeline_mode<synchronous>, transform_indices = @transform_4, window_bounds = array<i64: 1, 1, 16>}, {pipeline_mode = #tpu.pipeline_mode<synchronous>, transform_indices = @transform_5, window_bounds = array<i64: 1, 1, 16>}, {transform_indices = @transform_6, window_bounds = array<i64: 1, 64, 16>}, {transform_indices = @transform_7, window_bounds = array<i64: 1, 2, 16>}]} {
    %c8_i32 = arith.constant 8 : i32
    %c0_i32 = arith.constant 0 : i32
    %0 = arith.cmpi eq, %c8_i32, %c0_i32 : i32
    %c1_i32 = arith.constant 1 : i32
    %1 = arith.select %0, %c1_i32, %c8_i32 : i32
    %2 = arith.remsi %arg0, %1 : i32
    %c0_i32_0 = arith.constant 0 : i32
    %3 = arith.cmpi ne, %2, %c0_i32_0 : i32
    %c0_i32_1 = arith.constant 0 : i32
    %4 = arith.cmpi slt, %2, %c0_i32_1 : i32
    %c0_i32_2 = arith.constant 0 : i32
    %5 = arith.cmpi slt, %1, %c0_i32_2 : i32
    %6 = arith.xori %4, %5 : i1
    %7 = arith.andi %6, %3 : i1
    %8 = arith.addi %2, %1 : i32
    %9 = arith.select %7, %8, %2 : i32
    %cst = arith.constant 0.000000e+00 : f32
    %10 = vector.broadcast %cst : f32 to vector<1x10x16xf32>
    %c0 = arith.constant 0 : index
    %c0_3 = arith.constant 0 : index
    %c0_4 = arith.constant 0 : index
    %11 = vector.load %arg9[%c0, %c0_3, %c0_4] : memref<10x10x16xf32, #tpu.memory_space<vmem>>, vector<1x10x16xf32>
    tpu.vector_store %arg9[%c0, %c0_3, %c0_4], %10 {strides = array<i32>} : memref<10x10x16xf32, #tpu.memory_space<vmem>>, vector<1x10x16xf32>,
    %cst_5 = arith.constant 0.000000e+00 : f32
    %12 = vector.broadcast %cst_5 : f32 to vector<1x10x16xf32>
    %c9 = arith.constant 9 : index
    %c0_6 = arith.constant 0 : index
    %c0_7 = arith.constant 0 : index
    %13 = vector.load %arg9[%c9, %c0_6, %c0_7] : memref<10x10x16xf32, #tpu.memory_space<vmem>>, vector<1x10x16xf32>
    tpu.vector_store %arg9[%c9, %c0_6, %c0_7], %12 {strides = array<i32>} : memref<10x10x16xf32, #tpu.memory_space<vmem>>, vector<1x10x16xf32>,
    %cst_8 = arith.constant 0.000000e+00 : f32
    %14 = vector.broadcast %cst_8 : f32 to vector<10x1x16xf32>
    %c0_9 = arith.constant 0 : index
    %c0_10 = arith.constant 0 : index
    %c0_11 = arith.constant 0 : index
    %15 = vector.load %arg9[%c0_9, %c0_10, %c0_11] : memref<10x10x16xf32, #tpu.memory_space<vmem>>, vector<10x1x16xf32>
    tpu.vector_store %arg9[%c0_9, %c0_10, %c0_11], %14 {strides = array<i32>} : memref<10x10x16xf32, #tpu.memory_space<vmem>>, vector<10x1x16xf32>,
    %cst_12 = arith.constant 0.000000e+00 : f32
    %16 = vector.broadcast %cst_12 : f32 to vector<10x1x16xf32>
    %c0_13 = arith.constant 0 : index
    %c9_14 = arith.constant 9 : index
    %c0_15 = arith.constant 0 : index
    %17 = vector.load %arg9[%c0_13, %c9_14, %c0_15] : memref<10x10x16xf32, #tpu.memory_space<vmem>>, vector<10x1x16xf32>
    tpu.vector_store %arg9[%c0_13, %c9_14, %c0_15], %16 {strides = array<i32>} : memref<10x10x16xf32, #tpu.memory_space<vmem>>, vector<10x1x16xf32>,
    %c0_16 = arith.constant 0 : index
    %c0_17 = arith.constant 0 : index
    %c0_18 = arith.constant 0 : index
    %18 = vector.load %arg5[%c0_16, %c0_17, %c0_18] : memref<1x1x16xf32, #tpu.memory_space<vmem>>, vector<1x1x16xf32>
    %c0_19 = arith.constant 0 : index
    %c0_20 = arith.constant 0 : index
    %c0_21 = arith.constant 0 : index
    %19 = vector.load %arg6[%c0_19, %c0_20, %c0_21] : memref<1x1x16xf32, #tpu.memory_space<vmem>>, vector<1x1x16xf32>
    %c0_22 = arith.constant 0 : index
    %c0_23 = arith.constant 0 : index
    %c0_24 = arith.constant 0 : index
    %c0_25 = arith.constant 0 : index
    %20 = vector.load %arg1[%c0_22, %c0_23, %c0_24, %c0_25] : memref<1x8x8x16xbf16, #tpu.memory_space<vmem>>, vector<1x8x8x16xbf16>
    %21 = vector.shape_cast %20 : vector<1x8x8x16xbf16> to vector<8x8x16xbf16>
    %22 = arith.extf %21 : vector<8x8x16xbf16> to vector<8x8x16xf32>
    %23 = vector.broadcast %18 : vector<1x1x16xf32> to vector<8x8x16xf32>
    %24 = arith.mulf %22, %23 : vector<8x8x16xf32>
    %25 = vector.broadcast %19 : vector<1x1x16xf32> to vector<8x8x16xf32>
    %26 = arith.addf %24, %25 : vector<8x8x16xf32>
    %cst_26 = arith.constant 0.000000e+00 : f32
    %27 = vector.broadcast %cst_26 : f32 to vector<8x8x16xf32>
    %28 = arith.maximumf %26, %27 : vector<8x8x16xf32>
    %c0_i32_27 = arith.constant 0 : i32
    %29 = arith.cmpi sgt, %9, %c0_i32_27 : i32
    %cst_28 = arith.constant 0.000000e+00 : f32
    %30 = vector.broadcast %cst_28 : f32 to vector<8x8x16xf32>
    %31 = arith.select %29, %28, %30 : vector<8x8x16xf32>
    %c1 = arith.constant 1 : index
    %c1_29 = arith.constant 1 : index
    %c0_30 = arith.constant 0 : index
    %32 = vector.load %arg9[%c1, %c1_29, %c0_30] : memref<10x10x16xf32, #tpu.memory_space<vmem>>, vector<8x8x16xf32>
    tpu.vector_store %arg9[%c1, %c1_29, %c0_30], %31 {strides = array<i32>} : memref<10x10x16xf32, #tpu.memory_space<vmem>>, vector<8x8x16xf32>,
    %c0_31 = arith.constant 0 : index
    %c0_32 = arith.constant 0 : index
    %c0_33 = arith.constant 0 : index
    %33 = vector.load %arg9[%c0_31, %c0_32, %c0_33] : memref<10x10x16xf32, #tpu.memory_space<vmem>>, vector<8x8x16xf32>
    %34 = vector.shape_cast %33 : vector<8x8x16xf32> to vector<64x16xf32>
    %c0_34 = arith.constant 0 : index
    %c0_35 = arith.constant 0 : index
    %35 = vector.load %arg10[%c0_34, %c0_35] : memref<64x432xf32, #tpu.memory_space<vmem>>, vector<64x16xf32>
    tpu.vector_store %arg10[%c0_34, %c0_35], %34 {strides = array<i32>} : memref<64x432xf32, #tpu.memory_space<vmem>>, vector<64x16xf32>,
    %c0_36 = arith.constant 0 : index
    %c1_37 = arith.constant 1 : index
    %c0_38 = arith.constant 0 : index
    %36 = vector.load %arg9[%c0_36, %c1_37, %c0_38] : memref<10x10x16xf32, #tpu.memory_space<vmem>>, vector<8x8x16xf32>
    %37 = vector.shape_cast %36 : vector<8x8x16xf32> to vector<64x16xf32>
    %c0_39 = arith.constant 0 : index
    %c16 = arith.constant 16 : index
    %38 = vector.load %arg10[%c0_39, %c16] : memref<64x432xf32, #tpu.memory_space<vmem>>, vector<64x16xf32>
    tpu.vector_store %arg10[%c0_39, %c16], %37 {strides = array<i32>} : memref<64x432xf32, #tpu.memory_space<vmem>>, vector<64x16xf32>,
    %c0_40 = arith.constant 0 : index
    %c2 = arith.constant 2 : index
    %c0_41 = arith.constant 0 : index
    %39 = vector.load %arg9[%c0_40, %c2, %c0_41] : memref<10x10x16xf32, #tpu.memory_space<vmem>>, vector<8x8x16xf32>
    %40 = vector.shape_cast %39 : vector<8x8x16xf32> to vector<64x16xf32>
    %c0_42 = arith.constant 0 : index
    %c32 = arith.constant 32 : index
    %41 = vector.load %arg10[%c0_42, %c32] : memref<64x432xf32, #tpu.memory_space<vmem>>, vector<64x16xf32>
    tpu.vector_store %arg10[%c0_42, %c32], %40 {strides = array<i32>} : memref<64x432xf32, #tpu.memory_space<vmem>>, vector<64x16xf32>,
    %c1_43 = arith.constant 1 : index
    %c0_44 = arith.constant 0 : index
    %c0_45 = arith.constant 0 : index
    %42 = vector.load %arg9[%c1_43, %c0_44, %c0_45] : memref<10x10x16xf32, #tpu.memory_space<vmem>>, vector<8x8x16xf32>
    %43 = vector.shape_cast %42 : vector<8x8x16xf32> to vector<64x16xf32>
    %c0_46 = arith.constant 0 : index
    %c48 = arith.constant 48 : index
    %44 = vector.load %arg10[%c0_46, %c48] : memref<64x432xf32, #tpu.memory_space<vmem>>, vector<64x16xf32>
    tpu.vector_store %arg10[%c0_46, %c48], %43 {strides = array<i32>} : memref<64x432xf32, #tpu.memory_space<vmem>>, vector<64x16xf32>,
    %c1_47 = arith.constant 1 : index
    %c1_48 = arith.constant 1 : index
    %c0_49 = arith.constant 0 : index
    %45 = vector.load %arg9[%c1_47, %c1_48, %c0_49] : memref<10x10x16xf32, #tpu.memory_space<vmem>>, vector<8x8x16xf32>
    %46 = vector.shape_cast %45 : vector<8x8x16xf32> to vector<64x16xf32>
    %c0_50 = arith.constant 0 : index
    %c64 = arith.constant 64 : index
    %47 = vector.load %arg10[%c0_50, %c64] : memref<64x432xf32, #tpu.memory_space<vmem>>, vector<64x16xf32>
    tpu.vector_store %arg10[%c0_50, %c64], %46 {strides = array<i32>} : memref<64x432xf32, #tpu.memory_space<vmem>>, vector<64x16xf32>,
    %c1_51 = arith.constant 1 : index
    %c2_52 = arith.constant 2 : index
    %c0_53 = arith.constant 0 : index
    %48 = vector.load %arg9[%c1_51, %c2_52, %c0_53] : memref<10x10x16xf32, #tpu.memory_space<vmem>>, vector<8x8x16xf32>
    %49 = vector.shape_cast %48 : vector<8x8x16xf32> to vector<64x16xf32>
    %c0_54 = arith.constant 0 : index
    %c80 = arith.constant 80 : index
    %50 = vector.load %arg10[%c0_54, %c80] : memref<64x432xf32, #tpu.memory_space<vmem>>, vector<64x16xf32>
    tpu.vector_store %arg10[%c0_54, %c80], %49 {strides = array<i32>} : memref<64x432xf32, #tpu.memory_space<vmem>>, vector<64x16xf32>,
    %c2_55 = arith.constant 2 : index
    %c0_56 = arith.constant 0 : index
    %c0_57 = arith.constant 0 : index
    %51 = vector.load %arg9[%c2_55, %c0_56, %c0_57] : memref<10x10x16xf32, #tpu.memory_space<vmem>>, vector<8x8x16xf32>
    %52 = vector.shape_cast %51 : vector<8x8x16xf32> to vector<64x16xf32>
    %c0_58 = arith.constant 0 : index
    %c96 = arith.constant 96 : index
    %53 = vector.load %arg10[%c0_58, %c96] : memref<64x432xf32, #tpu.memory_space<vmem>>, vector<64x16xf32>
    tpu.vector_store %arg10[%c0_58, %c96], %52 {strides = array<i32>} : memref<64x432xf32, #tpu.memory_space<vmem>>, vector<64x16xf32>,
    %c2_59 = arith.constant 2 : index
    %c1_60 = arith.constant 1 : index
    %c0_61 = arith.constant 0 : index
    %54 = vector.load %arg9[%c2_59, %c1_60, %c0_61] : memref<10x10x16xf32, #tpu.memory_space<vmem>>, vector<8x8x16xf32>
    %55 = vector.shape_cast %54 : vector<8x8x16xf32> to vector<64x16xf32>
    %c0_62 = arith.constant 0 : index
    %c112 = arith.constant 112 : index
    %56 = vector.load %arg10[%c0_62, %c112] : memref<64x432xf32, #tpu.memory_space<vmem>>, vector<64x16xf32>
    tpu.vector_store %arg10[%c0_62, %c112], %55 {strides = array<i32>} : memref<64x432xf32, #tpu.memory_space<vmem>>, vector<64x16xf32>,
    %c2_63 = arith.constant 2 : index
    %c2_64 = arith.constant 2 : index
    %c0_65 = arith.constant 0 : index
    %57 = vector.load %arg9[%c2_63, %c2_64, %c0_65] : memref<10x10x16xf32, #tpu.memory_space<vmem>>, vector<8x8x16xf32>
    %58 = vector.shape_cast %57 : vector<8x8x16xf32> to vector<64x16xf32>
    %c0_66 = arith.constant 0 : index
    %c128 = arith.constant 128 : index
    %59 = vector.load %arg10[%c0_66, %c128] : memref<64x432xf32, #tpu.memory_space<vmem>>, vector<64x16xf32>
    tpu.vector_store %arg10[%c0_66, %c128], %58 {strides = array<i32>} : memref<64x432xf32, #tpu.memory_space<vmem>>, vector<64x16xf32>,
    %c0_67 = arith.constant 0 : index
    %c0_68 = arith.constant 0 : index
    %c0_69 = arith.constant 0 : index
    %c0_70 = arith.constant 0 : index
    %60 = vector.load %arg2[%c0_67, %c0_68, %c0_69, %c0_70] : memref<1x8x8x16xbf16, #tpu.memory_space<vmem>>, vector<1x8x8x16xbf16>
    %61 = vector.shape_cast %60 : vector<1x8x8x16xbf16> to vector<8x8x16xbf16>
    %62 = arith.extf %61 : vector<8x8x16xbf16> to vector<8x8x16xf32>
    %63 = vector.broadcast %18 : vector<1x1x16xf32> to vector<8x8x16xf32>
    %64 = arith.mulf %62, %63 : vector<8x8x16xf32>
    %65 = vector.broadcast %19 : vector<1x1x16xf32> to vector<8x8x16xf32>
    %66 = arith.addf %64, %65 : vector<8x8x16xf32>
    %cst_71 = arith.constant 0.000000e+00 : f32
    %67 = vector.broadcast %cst_71 : f32 to vector<8x8x16xf32>
    %68 = arith.maximumf %66, %67 : vector<8x8x16xf32>
    %c1_72 = arith.constant 1 : index
    %c1_73 = arith.constant 1 : index
    %c0_74 = arith.constant 0 : index
    %69 = vector.load %arg9[%c1_72, %c1_73, %c0_74] : memref<10x10x16xf32, #tpu.memory_space<vmem>>, vector<8x8x16xf32>
    tpu.vector_store %arg9[%c1_72, %c1_73, %c0_74], %68 {strides = array<i32>} : memref<10x10x16xf32, #tpu.memory_space<vmem>>, vector<8x8x16xf32>,
    %c0_75 = arith.constant 0 : index
    %c0_76 = arith.constant 0 : index
    %c0_77 = arith.constant 0 : index
    %70 = vector.load %arg9[%c0_75, %c0_76, %c0_77] : memref<10x10x16xf32, #tpu.memory_space<vmem>>, vector<8x8x16xf32>
    %71 = vector.shape_cast %70 : vector<8x8x16xf32> to vector<64x16xf32>
    %c0_78 = arith.constant 0 : index
    %c144 = arith.constant 144 : index
    %72 = vector.load %arg10[%c0_78, %c144] : memref<64x432xf32, #tpu.memory_space<vmem>>, vector<64x16xf32>
    tpu.vector_store %arg10[%c0_78, %c144], %71 {strides = array<i32>} : memref<64x432xf32, #tpu.memory_space<vmem>>, vector<64x16xf32>,
    %c0_79 = arith.constant 0 : index
    %c1_80 = arith.constant 1 : index
    %c0_81 = arith.constant 0 : index
    %73 = vector.load %arg9[%c0_79, %c1_80, %c0_81] : memref<10x10x16xf32, #tpu.memory_space<vmem>>, vector<8x8x16xf32>
    %74 = vector.shape_cast %73 : vector<8x8x16xf32> to vector<64x16xf32>
    %c0_82 = arith.constant 0 : index
    %c160 = arith.constant 160 : index
    %75 = vector.load %arg10[%c0_82, %c160] : memref<64x432xf32, #tpu.memory_space<vmem>>, vector<64x16xf32>
    tpu.vector_store %arg10[%c0_82, %c160], %74 {strides = array<i32>} : memref<64x432xf32, #tpu.memory_space<vmem>>, vector<64x16xf32>,
    %c0_83 = arith.constant 0 : index
    %c2_84 = arith.constant 2 : index
    %c0_85 = arith.constant 0 : index
    %76 = vector.load %arg9[%c0_83, %c2_84, %c0_85] : memref<10x10x16xf32, #tpu.memory_space<vmem>>, vector<8x8x16xf32>
    %77 = vector.shape_cast %76 : vector<8x8x16xf32> to vector<64x16xf32>
    %c0_86 = arith.constant 0 : index
    %c176 = arith.constant 176 : index
    %78 = vector.load %arg10[%c0_86, %c176] : memref<64x432xf32, #tpu.memory_space<vmem>>, vector<64x16xf32>
    tpu.vector_store %arg10[%c0_86, %c176], %77 {strides = array<i32>} : memref<64x432xf32, #tpu.memory_space<vmem>>, vector<64x16xf32>,
    %c1_87 = arith.constant 1 : index
    %c0_88 = arith.constant 0 : index
    %c0_89 = arith.constant 0 : index
    %79 = vector.load %arg9[%c1_87, %c0_88, %c0_89] : memref<10x10x16xf32, #tpu.memory_space<vmem>>, vector<8x8x16xf32>
    %80 = vector.shape_cast %79 : vector<8x8x16xf32> to vector<64x16xf32>
    %c0_90 = arith.constant 0 : index
    %c192 = arith.constant 192 : index
    %81 = vector.load %arg10[%c0_90, %c192] : memref<64x432xf32, #tpu.memory_space<vmem>>, vector<64x16xf32>
    tpu.vector_store %arg10[%c0_90, %c192], %80 {strides = array<i32>} : memref<64x432xf32, #tpu.memory_space<vmem>>, vector<64x16xf32>,
    %c1_91 = arith.constant 1 : index
    %c1_92 = arith.constant 1 : index
    %c0_93 = arith.constant 0 : index
    %82 = vector.load %arg9[%c1_91, %c1_92, %c0_93] : memref<10x10x16xf32, #tpu.memory_space<vmem>>, vector<8x8x16xf32>
    %83 = vector.shape_cast %82 : vector<8x8x16xf32> to vector<64x16xf32>
    %c0_94 = arith.constant 0 : index
    %c208 = arith.constant 208 : index
    %84 = vector.load %arg10[%c0_94, %c208] : memref<64x432xf32, #tpu.memory_space<vmem>>, vector<64x16xf32>
    tpu.vector_store %arg10[%c0_94, %c208], %83 {strides = array<i32>} : memref<64x432xf32, #tpu.memory_space<vmem>>, vector<64x16xf32>,
    %c1_95 = arith.constant 1 : index
    %c2_96 = arith.constant 2 : index
    %c0_97 = arith.constant 0 : index
    %85 = vector.load %arg9[%c1_95, %c2_96, %c0_97] : memref<10x10x16xf32, #tpu.memory_space<vmem>>, vector<8x8x16xf32>
    %86 = vector.shape_cast %85 : vector<8x8x16xf32> to vector<64x16xf32>
    %c0_98 = arith.constant 0 : index
    %c224 = arith.constant 224 : index
    %87 = vector.load %arg10[%c0_98, %c224] : memref<64x432xf32, #tpu.memory_space<vmem>>, vector<64x16xf32>
    tpu.vector_store %arg10[%c0_98, %c224], %86 {strides = array<i32>} : memref<64x432xf32, #tpu.memory_space<vmem>>, vector<64x16xf32>,
    %c2_99 = arith.constant 2 : index
    %c0_100 = arith.constant 0 : index
    %c0_101 = arith.constant 0 : index
    %88 = vector.load %arg9[%c2_99, %c0_100, %c0_101] : memref<10x10x16xf32, #tpu.memory_space<vmem>>, vector<8x8x16xf32>
    %89 = vector.shape_cast %88 : vector<8x8x16xf32> to vector<64x16xf32>
    %c0_102 = arith.constant 0 : index
    %c240 = arith.constant 240 : index
    %90 = vector.load %arg10[%c0_102, %c240] : memref<64x432xf32, #tpu.memory_space<vmem>>, vector<64x16xf32>
    tpu.vector_store %arg10[%c0_102, %c240], %89 {strides = array<i32>} : memref<64x432xf32, #tpu.memory_space<vmem>>, vector<64x16xf32>,
    %c2_103 = arith.constant 2 : index
    %c1_104 = arith.constant 1 : index
    %c0_105 = arith.constant 0 : index
    %91 = vector.load %arg9[%c2_103, %c1_104, %c0_105] : memref<10x10x16xf32, #tpu.memory_space<vmem>>, vector<8x8x16xf32>
    %92 = vector.shape_cast %91 : vector<8x8x16xf32> to vector<64x16xf32>
    %c0_106 = arith.constant 0 : index
    %c256 = arith.constant 256 : index
    %93 = vector.load %arg10[%c0_106, %c256] : memref<64x432xf32, #tpu.memory_space<vmem>>, vector<64x16xf32>
    tpu.vector_store %arg10[%c0_106, %c256], %92 {strides = array<i32>} : memref<64x432xf32, #tpu.memory_space<vmem>>, vector<64x16xf32>,
    %c2_107 = arith.constant 2 : index
    %c2_108 = arith.constant 2 : index
    %c0_109 = arith.constant 0 : index
    %94 = vector.load %arg9[%c2_107, %c2_108, %c0_109] : memref<10x10x16xf32, #tpu.memory_space<vmem>>, vector<8x8x16xf32>
    %95 = vector.shape_cast %94 : vector<8x8x16xf32> to vector<64x16xf32>
    %c0_110 = arith.constant 0 : index
    %c272 = arith.constant 272 : index
    %96 = vector.load %arg10[%c0_110, %c272] : memref<64x432xf32, #tpu.memory_space<vmem>>, vector<64x16xf32>
    tpu.vector_store %arg10[%c0_110, %c272], %95 {strides = array<i32>} : memref<64x432xf32, #tpu.memory_space<vmem>>, vector<64x16xf32>,
    %c0_111 = arith.constant 0 : index
    %c0_112 = arith.constant 0 : index
    %c0_113 = arith.constant 0 : index
    %c0_114 = arith.constant 0 : index
    %97 = vector.load %arg3[%c0_111, %c0_112, %c0_113, %c0_114] : memref<1x8x8x16xbf16, #tpu.memory_space<vmem>>, vector<1x8x8x16xbf16>
    %98 = vector.shape_cast %97 : vector<1x8x8x16xbf16> to vector<8x8x16xbf16>
    %99 = arith.extf %98 : vector<8x8x16xbf16> to vector<8x8x16xf32>
    %100 = vector.broadcast %18 : vector<1x1x16xf32> to vector<8x8x16xf32>
    %101 = arith.mulf %99, %100 : vector<8x8x16xf32>
    %102 = vector.broadcast %19 : vector<1x1x16xf32> to vector<8x8x16xf32>
    %103 = arith.addf %101, %102 : vector<8x8x16xf32>
    %cst_115 = arith.constant 0.000000e+00 : f32
    %104 = vector.broadcast %cst_115 : f32 to vector<8x8x16xf32>
    %105 = arith.maximumf %103, %104 : vector<8x8x16xf32>
    %c7_i32 = arith.constant 7 : i32
    %106 = arith.cmpi slt, %9, %c7_i32 : i32
    %cst_116 = arith.constant 0.000000e+00 : f32
    %107 = vector.broadcast %cst_116 : f32 to vector<8x8x16xf32>
    %108 = arith.select %106, %105, %107 : vector<8x8x16xf32>
    %c1_117 = arith.constant 1 : index
    %c1_118 = arith.constant 1 : index
    %c0_119 = arith.constant 0 : index
    %109 = vector.load %arg9[%c1_117, %c1_118, %c0_119] : memref<10x10x16xf32, #tpu.memory_space<vmem>>, vector<8x8x16xf32>
    tpu.vector_store %arg9[%c1_117, %c1_118, %c0_119], %108 {strides = array<i32>} : memref<10x10x16xf32, #tpu.memory_space<vmem>>, vector<8x8x16xf32>,
    %c0_120 = arith.constant 0 : index
    %c0_121 = arith.constant 0 : index
    %c0_122 = arith.constant 0 : index
    %110 = vector.load %arg9[%c0_120, %c0_121, %c0_122] : memref<10x10x16xf32, #tpu.memory_space<vmem>>, vector<8x8x16xf32>
    %111 = vector.shape_cast %110 : vector<8x8x16xf32> to vector<64x16xf32>
    %c0_123 = arith.constant 0 : index
    %c288 = arith.constant 288 : index
    %112 = vector.load %arg10[%c0_123, %c288] : memref<64x432xf32, #tpu.memory_space<vmem>>, vector<64x16xf32>
    tpu.vector_store %arg10[%c0_123, %c288], %111 {strides = array<i32>} : memref<64x432xf32, #tpu.memory_space<vmem>>, vector<64x16xf32>,
    %c0_124 = arith.constant 0 : index
    %c1_125 = arith.constant 1 : index
    %c0_126 = arith.constant 0 : index
    %113 = vector.load %arg9[%c0_124, %c1_125, %c0_126] : memref<10x10x16xf32, #tpu.memory_space<vmem>>, vector<8x8x16xf32>
    %114 = vector.shape_cast %113 : vector<8x8x16xf32> to vector<64x16xf32>
    %c0_127 = arith.constant 0 : index
    %c304 = arith.constant 304 : index
    %115 = vector.load %arg10[%c0_127, %c304] : memref<64x432xf32, #tpu.memory_space<vmem>>, vector<64x16xf32>
    tpu.vector_store %arg10[%c0_127, %c304], %114 {strides = array<i32>} : memref<64x432xf32, #tpu.memory_space<vmem>>, vector<64x16xf32>,
    %c0_128 = arith.constant 0 : index
    %c2_129 = arith.constant 2 : index
    %c0_130 = arith.constant 0 : index
    %116 = vector.load %arg9[%c0_128, %c2_129, %c0_130] : memref<10x10x16xf32, #tpu.memory_space<vmem>>, vector<8x8x16xf32>
    %117 = vector.shape_cast %116 : vector<8x8x16xf32> to vector<64x16xf32>
    %c0_131 = arith.constant 0 : index
    %c320 = arith.constant 320 : index
    %118 = vector.load %arg10[%c0_131, %c320] : memref<64x432xf32, #tpu.memory_space<vmem>>, vector<64x16xf32>
    tpu.vector_store %arg10[%c0_131, %c320], %117 {strides = array<i32>} : memref<64x432xf32, #tpu.memory_space<vmem>>, vector<64x16xf32>,
    %c1_132 = arith.constant 1 : index
    %c0_133 = arith.constant 0 : index
    %c0_134 = arith.constant 0 : index
    %119 = vector.load %arg9[%c1_132, %c0_133, %c0_134] : memref<10x10x16xf32, #tpu.memory_space<vmem>>, vector<8x8x16xf32>
    %120 = vector.shape_cast %119 : vector<8x8x16xf32> to vector<64x16xf32>
    %c0_135 = arith.constant 0 : index
    %c336 = arith.constant 336 : index
    %121 = vector.load %arg10[%c0_135, %c336] : memref<64x432xf32, #tpu.memory_space<vmem>>, vector<64x16xf32>
    tpu.vector_store %arg10[%c0_135, %c336], %120 {strides = array<i32>} : memref<64x432xf32, #tpu.memory_space<vmem>>, vector<64x16xf32>,
    %c1_136 = arith.constant 1 : index
    %c1_137 = arith.constant 1 : index
    %c0_138 = arith.constant 0 : index
    %122 = vector.load %arg9[%c1_136, %c1_137, %c0_138] : memref<10x10x16xf32, #tpu.memory_space<vmem>>, vector<8x8x16xf32>
    %123 = vector.shape_cast %122 : vector<8x8x16xf32> to vector<64x16xf32>
    %c0_139 = arith.constant 0 : index
    %c352 = arith.constant 352 : index
    %124 = vector.load %arg10[%c0_139, %c352] : memref<64x432xf32, #tpu.memory_space<vmem>>, vector<64x16xf32>
    tpu.vector_store %arg10[%c0_139, %c352], %123 {strides = array<i32>} : memref<64x432xf32, #tpu.memory_space<vmem>>, vector<64x16xf32>,
    %c1_140 = arith.constant 1 : index
    %c2_141 = arith.constant 2 : index
    %c0_142 = arith.constant 0 : index
    %125 = vector.load %arg9[%c1_140, %c2_141, %c0_142] : memref<10x10x16xf32, #tpu.memory_space<vmem>>, vector<8x8x16xf32>
    %126 = vector.shape_cast %125 : vector<8x8x16xf32> to vector<64x16xf32>
    %c0_143 = arith.constant 0 : index
    %c368 = arith.constant 368 : index
    %127 = vector.load %arg10[%c0_143, %c368] : memref<64x432xf32, #tpu.memory_space<vmem>>, vector<64x16xf32>
    tpu.vector_store %arg10[%c0_143, %c368], %126 {strides = array<i32>} : memref<64x432xf32, #tpu.memory_space<vmem>>, vector<64x16xf32>,
    %c2_144 = arith.constant 2 : index
    %c0_145 = arith.constant 0 : index
    %c0_146 = arith.constant 0 : index
    %128 = vector.load %arg9[%c2_144, %c0_145, %c0_146] : memref<10x10x16xf32, #tpu.memory_space<vmem>>, vector<8x8x16xf32>
    %129 = vector.shape_cast %128 : vector<8x8x16xf32> to vector<64x16xf32>
    %c0_147 = arith.constant 0 : index
    %c384 = arith.constant 384 : index
    %130 = vector.load %arg10[%c0_147, %c384] : memref<64x432xf32, #tpu.memory_space<vmem>>, vector<64x16xf32>
    tpu.vector_store %arg10[%c0_147, %c384], %129 {strides = array<i32>} : memref<64x432xf32, #tpu.memory_space<vmem>>, vector<64x16xf32>,
    %c2_148 = arith.constant 2 : index
    %c1_149 = arith.constant 1 : index
    %c0_150 = arith.constant 0 : index
    %131 = vector.load %arg9[%c2_148, %c1_149, %c0_150] : memref<10x10x16xf32, #tpu.memory_space<vmem>>, vector<8x8x16xf32>
    %132 = vector.shape_cast %131 : vector<8x8x16xf32> to vector<64x16xf32>
    %c0_151 = arith.constant 0 : index
    %c400 = arith.constant 400 : index
    %133 = vector.load %arg10[%c0_151, %c400] : memref<64x432xf32, #tpu.memory_space<vmem>>, vector<64x16xf32>
    tpu.vector_store %arg10[%c0_151, %c400], %132 {strides = array<i32>} : memref<64x432xf32, #tpu.memory_space<vmem>>, vector<64x16xf32>,
    %c2_152 = arith.constant 2 : index
    %c2_153 = arith.constant 2 : index
    %c0_154 = arith.constant 0 : index
    %134 = vector.load %arg9[%c2_152, %c2_153, %c0_154] : memref<10x10x16xf32, #tpu.memory_space<vmem>>, vector<8x8x16xf32>
    %135 = vector.shape_cast %134 : vector<8x8x16xf32> to vector<64x16xf32>
    %c0_155 = arith.constant 0 : index
    %c416 = arith.constant 416 : index
    %136 = vector.load %arg10[%c0_155, %c416] : memref<64x432xf32, #tpu.memory_space<vmem>>, vector<64x16xf32>
    tpu.vector_store %arg10[%c0_155, %c416], %135 {strides = array<i32>} : memref<64x432xf32, #tpu.memory_space<vmem>>, vector<64x16xf32>,
    %c0_156 = arith.constant 0 : index
    %c0_157 = arith.constant 0 : index
    %137 = vector.load %arg10[%c0_156, %c0_157] : memref<64x432xf32, #tpu.memory_space<vmem>>, vector<64x432xf32>
    %138 = arith.truncf %137 : vector<64x432xf32> to vector<64x432xbf16>
    %c0_158 = arith.constant 0 : index
    %c0_159 = arith.constant 0 : index
    %139 = vector.load %arg4[%c0_158, %c0_159] : memref<432x16xbf16, #tpu.memory_space<vmem>>, vector<432x16xbf16>
    %cst_160 = arith.constant dense<0.000000e+00> : vector<64x16xf32>
    %140 = tpu.matmul %138, %139, %cst_160 {dimension_numbers = #tpu.dot_dimension_numbers<[1], [0], [0], [1], [0, 0, 1, 1], [], []>} : vector<64x432xbf16>, vector<432x16xbf16>, vector<64x16xf32> -> vector<64x16xf32>
    %141 = arith.truncf %140 : vector<64x16xf32> to vector<64x16xbf16>
    %c0_161 = arith.constant 0 : index
    %c0_162 = arith.constant 0 : index
    %c0_163 = arith.constant 0 : index
    %142 = vector.load %arg7[%c0_161, %c0_162, %c0_163] : memref<1x64x16xbf16, #tpu.memory_space<vmem>>, vector<1x64x16xbf16>
    %143 = vector.shape_cast %142 : vector<1x64x16xbf16> to vector<64x16xbf16>
    %144 = vector.shape_cast %141 : vector<64x16xbf16> to vector<1x64x16xbf16>
    tpu.vector_store %arg7[%c0_161, %c0_162, %c0_163], %144 {strides = array<i32>} : memref<1x64x16xbf16, #tpu.memory_space<vmem>>, vector<1x64x16xbf16>,
    %cst_164 = arith.constant dense<0.000000e+00> : vector<16xf32>
    %145 = vector.multi_reduction <add>, %140, %cst_164 [0] : vector<64x16xf32> to vector<16xf32>
    %146 = vector.shape_cast %145 : vector<16xf32> to vector<1x16xf32>
    %c0_165 = arith.constant 0 : index
    %c0_166 = arith.constant 0 : index
    %c0_167 = arith.constant 0 : index
    %147 = vector.load %arg8[%c0_165, %c0_166, %c0_167] : memref<1x2x16xf32, #tpu.memory_space<vmem>>, vector<1x1x16xf32>
    %148 = vector.shape_cast %147 : vector<1x1x16xf32> to vector<1x16xf32>
    %149 = vector.shape_cast %146 : vector<1x16xf32> to vector<1x1x16xf32>
    tpu.vector_store %arg8[%c0_165, %c0_166, %c0_167], %149 {strides = array<i32>} : memref<1x2x16xf32, #tpu.memory_space<vmem>>, vector<1x1x16xf32>,
    %150 = arith.mulf %140, %140 : vector<64x16xf32>
    %cst_168 = arith.constant dense<0.000000e+00> : vector<16xf32>
    %151 = vector.multi_reduction <add>, %150, %cst_168 [0] : vector<64x16xf32> to vector<16xf32>
    %152 = vector.shape_cast %151 : vector<16xf32> to vector<1x16xf32>
    %c0_169 = arith.constant 0 : index
    %c1_170 = arith.constant 1 : index
    %c0_171 = arith.constant 0 : index
    %153 = vector.load %arg8[%c0_169, %c1_170, %c0_171] : memref<1x2x16xf32, #tpu.memory_space<vmem>>, vector<1x1x16xf32>
    %154 = vector.shape_cast %153 : vector<1x1x16xf32> to vector<1x16xf32>
    %155 = vector.shape_cast %152 : vector<1x16xf32> to vector<1x1x16xf32>
    tpu.vector_store %arg8[%c0_169, %c1_170, %c0_171], %155 {strides = array<i32>} : memref<1x2x16xf32, #tpu.memory_space<vmem>>, vector<1x1x16xf32>,
    return
  }
  func.func @transform_0(%arg0: i32) -> (i32, i32, i32, i32) {
    %c1_i32 = arith.constant 1 : i32
    %0 = arith.subi %arg0, %c1_i32 : i32
    %c0_i32 = arith.constant 0 : i32
    %1 = arith.maxsi %0, %c0_i32 : i32
    %c0_i32_0 = arith.constant 0 : i32
    %c0_i32_1 = arith.constant 0 : i32
    %c0_i32_2 = arith.constant 0 : i32
    %c0_i32_3 = arith.constant 0 : i32
    return %1, %c0_i32_0, %c0_i32_1, %c0_i32_2 : i32, i32, i32, i32
  }
  func.func @transform_1(%arg0: i32) -> (i32, i32, i32, i32) {
    %c0_i32 = arith.constant 0 : i32
    %c0_i32_0 = arith.constant 0 : i32
    %c0_i32_1 = arith.constant 0 : i32
    %c0_i32_2 = arith.constant 0 : i32
    return %arg0, %c0_i32, %c0_i32_0, %c0_i32_1 : i32, i32, i32, i32
  }
  func.func @transform_2(%arg0: i32) -> (i32, i32, i32, i32) {
    %c1_i32 = arith.constant 1 : i32
    %0 = arith.addi %arg0, %c1_i32 : i32
    %c15_i32 = arith.constant 15 : i32
    %1 = arith.minsi %0, %c15_i32 : i32
    %c0_i32 = arith.constant 0 : i32
    %c0_i32_0 = arith.constant 0 : i32
    %c0_i32_1 = arith.constant 0 : i32
    %c0_i32_2 = arith.constant 0 : i32
    return %1, %c0_i32, %c0_i32_0, %c0_i32_1 : i32, i32, i32, i32
  }
  func.func @transform_3(%arg0: i32) -> (i32, i32) {
    %c0_i32 = arith.constant 0 : i32
    %c0_i32_0 = arith.constant 0 : i32
    %c0_i32_1 = arith.constant 0 : i32
    return %c0_i32, %c0_i32_0 : i32, i32
  }
  func.func @transform_4(%arg0: i32) -> (i32, i32, i32) {
    %c0_i32 = arith.constant 0 : i32
    %c0_i32_0 = arith.constant 0 : i32
    %c0_i32_1 = arith.constant 0 : i32
    %c0_i32_2 = arith.constant 0 : i32
    return %c0_i32, %c0_i32_0, %c0_i32_1 : i32, i32, i32
  }
  func.func @transform_5(%arg0: i32) -> (i32, i32, i32) {
    %c0_i32 = arith.constant 0 : i32
    %c0_i32_0 = arith.constant 0 : i32
    %c0_i32_1 = arith.constant 0 : i32
    %c0_i32_2 = arith.constant 0 : i32
    return %c0_i32, %c0_i32_0, %c0_i32_1 : i32, i32, i32
  }
  func.func @transform_6(%arg0: i32) -> (i32, i32, i32) {
    %c0_i32 = arith.constant 0 : i32
    %c0_i32_0 = arith.constant 0 : i32
    %c0_i32_1 = arith.constant 0 : i32
    return %arg0, %c0_i32, %c0_i32_0 : i32, i32, i32
  }
  func.func @transform_7(%arg0: i32) -> (i32, i32, i32) {
    %c0_i32 = arith.constant 0 : i32
    %c0_i32_0 = arith.constant 0 : i32
    %c0_i32_1 = arith.constant 0 : i32
    return %arg0, %c0_i32, %c0_i32_0 : i32, i32, i32
  }
}

module attributes {stable_mosaic.version = 11 : i64} {
  func.func @_finalize_map_kernel(%arg0: i32, %arg1: memref<1024x16xbf16, #tpu.memory_space<vmem>>, %arg2: memref<1024x8xbf16, #tpu.memory_space<vmem>>, %arg3: memref<8x16xbf16, #tpu.memory_space<vmem>>, %arg4: memref<1x16xf32, #tpu.memory_space<vmem>>, %arg5: memref<1x16xf32, #tpu.memory_space<vmem>>, %arg6: memref<1x16xf32, #tpu.memory_space<vmem>>, %arg7: memref<1x16xf32, #tpu.memory_space<vmem>>, %arg8: memref<1024x16xf32, #tpu.memory_space<vmem>>) attributes {dimension_semantics = [#tpu.dimension_semantics<parallel>], iteration_bounds = array<i64: 1>, scalar_prefetch = 0 : i64, scratch_operands = 0 : i64, tpu.core_type = #tpu.core_type<tc>, window_params = [{transform_indices = @transform_0, window_bounds = array<i64: 1024, 16>}, {transform_indices = @transform_1, window_bounds = array<i64: 1024, 8>}, {pipeline_mode = #tpu.pipeline_mode<synchronous>, transform_indices = @transform_2, window_bounds = array<i64: 8, 16>}, {pipeline_mode = #tpu.pipeline_mode<synchronous>, transform_indices = @transform_3, window_bounds = array<i64: 1, 16>}, {pipeline_mode = #tpu.pipeline_mode<synchronous>, transform_indices = @transform_4, window_bounds = array<i64: 1, 16>}, {pipeline_mode = #tpu.pipeline_mode<synchronous>, transform_indices = @transform_5, window_bounds = array<i64: 1, 16>}, {pipeline_mode = #tpu.pipeline_mode<synchronous>, transform_indices = @transform_6, window_bounds = array<i64: 1, 16>}, {transform_indices = @transform_7, window_bounds = array<i64: 1024, 16>}]} {
    %c0 = arith.constant 0 : index
    %c0_0 = arith.constant 0 : index
    %0 = vector.load %arg2[%c0, %c0_0] : memref<1024x8xbf16, #tpu.memory_space<vmem>>, vector<1024x8xbf16>
    %c0_1 = arith.constant 0 : index
    %c0_2 = arith.constant 0 : index
    %1 = vector.load %arg3[%c0_1, %c0_2] : memref<8x16xbf16, #tpu.memory_space<vmem>>, vector<8x16xbf16>
    %cst = arith.constant dense<0.000000e+00> : vector<1024x16xf32>
    %2 = tpu.matmul %0, %1, %cst {dimension_numbers = #tpu.dot_dimension_numbers<[1], [0], [0], [1], [0, 0, 1, 1], [], []>} : vector<1024x8xbf16>, vector<8x16xbf16>, vector<1024x16xf32> -> vector<1024x16xf32>
    %c0_3 = arith.constant 0 : index
    %c0_4 = arith.constant 0 : index
    %3 = vector.load %arg1[%c0_3, %c0_4] : memref<1024x16xbf16, #tpu.memory_space<vmem>>, vector<1024x16xbf16>
    %4 = arith.extf %3 : vector<1024x16xbf16> to vector<1024x16xf32>
    %c0_5 = arith.constant 0 : index
    %c0_6 = arith.constant 0 : index
    %5 = vector.load %arg4[%c0_5, %c0_6] : memref<1x16xf32, #tpu.memory_space<vmem>>, vector<1x16xf32>
    %6 = vector.broadcast %5 : vector<1x16xf32> to vector<1024x16xf32>
    %7 = arith.mulf %4, %6 : vector<1024x16xf32>
    %c0_7 = arith.constant 0 : index
    %c0_8 = arith.constant 0 : index
    %8 = vector.load %arg5[%c0_7, %c0_8] : memref<1x16xf32, #tpu.memory_space<vmem>>, vector<1x16xf32>
    %9 = vector.broadcast %8 : vector<1x16xf32> to vector<1024x16xf32>
    %10 = arith.addf %7, %9 : vector<1024x16xf32>
    %c0_9 = arith.constant 0 : index
    %c0_10 = arith.constant 0 : index
    %11 = vector.load %arg6[%c0_9, %c0_10] : memref<1x16xf32, #tpu.memory_space<vmem>>, vector<1x16xf32>
    %12 = vector.broadcast %11 : vector<1x16xf32> to vector<1024x16xf32>
    %13 = arith.mulf %2, %12 : vector<1024x16xf32>
    %14 = arith.addf %10, %13 : vector<1024x16xf32>
    %c0_11 = arith.constant 0 : index
    %c0_12 = arith.constant 0 : index
    %15 = vector.load %arg7[%c0_11, %c0_12] : memref<1x16xf32, #tpu.memory_space<vmem>>, vector<1x16xf32>
    %16 = vector.broadcast %15 : vector<1x16xf32> to vector<1024x16xf32>
    %17 = arith.addf %14, %16 : vector<1024x16xf32>
    %cst_13 = arith.constant 0.000000e+00 : f32
    %18 = vector.broadcast %cst_13 : f32 to vector<1024x16xf32>
    %19 = arith.maximumf %17, %18 : vector<1024x16xf32>
    %c0_14 = arith.constant 0 : index
    %c0_15 = arith.constant 0 : index
    %20 = vector.load %arg8[%c0_14, %c0_15] : memref<1024x16xf32, #tpu.memory_space<vmem>>, vector<1024x16xf32>
    tpu.vector_store %arg8[%c0_14, %c0_15], %19 {strides = array<i32>} : memref<1024x16xf32, #tpu.memory_space<vmem>>, vector<1024x16xf32>,
    return
  }
  func.func @transform_0(%arg0: i32) -> (i32, i32) {
    %c0_i32 = arith.constant 0 : i32
    %c0_i32_0 = arith.constant 0 : i32
    return %arg0, %c0_i32 : i32, i32
  }
  func.func @transform_1(%arg0: i32) -> (i32, i32) {
    %c0_i32 = arith.constant 0 : i32
    %c0_i32_0 = arith.constant 0 : i32
    return %arg0, %c0_i32 : i32, i32
  }
  func.func @transform_2(%arg0: i32) -> (i32, i32) {
    %c0_i32 = arith.constant 0 : i32
    %c0_i32_0 = arith.constant 0 : i32
    %c0_i32_1 = arith.constant 0 : i32
    return %c0_i32, %c0_i32_0 : i32, i32
  }
  func.func @transform_3(%arg0: i32) -> (i32, i32) {
    %c0_i32 = arith.constant 0 : i32
    %c0_i32_0 = arith.constant 0 : i32
    %c0_i32_1 = arith.constant 0 : i32
    return %c0_i32, %c0_i32_0 : i32, i32
  }
  func.func @transform_4(%arg0: i32) -> (i32, i32) {
    %c0_i32 = arith.constant 0 : i32
    %c0_i32_0 = arith.constant 0 : i32
    %c0_i32_1 = arith.constant 0 : i32
    return %c0_i32, %c0_i32_0 : i32, i32
  }
  func.func @transform_5(%arg0: i32) -> (i32, i32) {
    %c0_i32 = arith.constant 0 : i32
    %c0_i32_0 = arith.constant 0 : i32
    %c0_i32_1 = arith.constant 0 : i32
    return %c0_i32, %c0_i32_0 : i32, i32
  }
  func.func @transform_6(%arg0: i32) -> (i32, i32) {
    %c0_i32 = arith.constant 0 : i32
    %c0_i32_0 = arith.constant 0 : i32
    %c0_i32_1 = arith.constant 0 : i32
    return %c0_i32, %c0_i32_0 : i32, i32
  }
  func.func @transform_7(%arg0: i32) -> (i32, i32) {
    %c0_i32 = arith.constant 0 : i32
    %c0_i32_0 = arith.constant 0 : i32
    return %arg0, %c0_i32 : i32, i32
  }
}

</mosaic_0001>

<llo_original>
// kernel: res_block.3
$region0: #{res_block.3}
  #allocation0 [shape = 'u32[]', space=smem, size = 0x4, offset = 0x4, fixed_abs, tag = 'smem constant byte address 0x4 - core index']
  #allocation1 [shape = 'u32[144,128]{1,0:T(1,128)}', space=vmem, size = 0x12000, scoped, tag = 'internal scratch']
  #allocation2 [shape = 'f32[10,10,8]{2,1,0:T(8,128)}', space=vmem, size = 0x14000, scoped, tag = 'scratch operand']
  #allocation3 [shape = 'f32[64,216]{1,0:T(8,128)}', space=vmem, size = 0x10000, scoped, tag = 'scratch operand']
  %s0 = inlined_call_operand.vmem [shape: bf16[16,8,8,8], index: 0, kind: input, shape index: {}, may-alias: {0,1,2}]
  %s1 = inlined_call_operand.vmem [shape: bf16[16,8,8,8], index: 1, kind: input, shape index: {}, may-alias: {0,1,2}]
  %s2 = inlined_call_operand.vmem [shape: bf16[16,8,8,8], index: 2, kind: input, shape index: {}, may-alias: {0,1,2}]
  %s3 = inlined_call_operand.vmem [shape: bf16[216,16], index: 3, kind: input, shape index: {}]
  %s4 = inlined_call_operand.vmem [shape: f32[1,1,8], index: 4, kind: input, shape index: {}]
  %s5 = inlined_call_operand.vmem [shape: f32[1,1,8], index: 5, kind: input, shape index: {}]
  %s6 = inlined_call_operand.vmem [shape: bf16[16,64,16], index: 6, kind: output, shape index: {0}]
  %s7 = inlined_call_operand.vmem [shape: f32[16,2,16], index: 7, kind: output, shape index: {1}]
  %8 = xla_tuple %s6, %s7
  %s9 = sld [smem:[#allocation0]]
  $region65: #{res_block.3} parent=0
    _
  %s11 = ssub.s32 1, %s9
  %s12 = scalar_select 0, %s11, %s9
  loop: start=0, step=1, limit=18
  $region2: #{res_block.3} parent=0 // loop_pre_header
    _
  $region3: #{res_block.3} parent=0 // loop_header
    %s14 = sphi 0, %s18
    %p15 = scmp.ge.s32.totalorder %s14, 18
    %s30 = sphi 0, %s32
    %s33 = sphi 0, %s30
    %s34 = sphi 0, %s33
    %s50 = sphi 0, %s34
    %s56 = sphi 0, %s58
    %s59 = sphi 0, %s56
    %s60 = sphi 0, %s59
    %s76 = sphi 0, %s60
    %s88 = sphi 0, %s90
    %s91 = sphi 0, %s88
    %s92 = sphi 0, %s91
    %s108 = sphi 0, %s92
    %s112 = sphi 0, %s112
    %s114 = sphi 0, %s112
    %s115 = sphi 0, %s114
    %s129 = sphi 0, %s115
    %s133 = sphi 0, %s133
    %s135 = sphi 0, %s133
    %s136 = sphi 0, %s135
    %s150 = sphi 0, %s136
    %s154 = sphi 0, %s154
    %s156 = sphi 0, %s154
    %s157 = sphi 0, %s156
    %s171 = sphi 0, %s157
    %s177 = sphi 0, %s179
    %s180 = sphi 0, %s177
    %s181 = sphi 0, %s180
    %s197 = sphi 0, %s181
    %s203 = sphi 0, %s205
    %s206 = sphi 0, %s203
    %s207 = sphi 0, %s206
    %s223 = sphi 0, %s207
  $region4: #{res_block.3} parent=0 // loop_header_branch
    %17 = sbr.rel (%p15) target = $region8
  $region5: #{res_block.3} parent=0 // loop_body
    %s19 = ssub.s32 %s14, 1
    %s20 = ssub.s32 %s14, 2
    %s21 = sadd.s32 %s14, 1
    %s22 = ssub.s32 %s14, 1
    %p23 = scmp.gt.s32.totalorder %s22, 0
    %s24 = scalar_select %p23, %s22, 0
    %s25 = ssub.s32 %s21, 1
    %p26 = scmp.gt.s32.totalorder %s25, 0
    %s27 = scalar_select %p26, %s25, 0
    %s28 = ssub.s32 %s24, %s27
    %p29 = scmp.eq.s32.totalorder %s28, 0
    %s31 = sadd.s32 %s30, 1
    %s32 = scalar_select %p29, %s30, %s31
    %p35 = pneg %p29
    %p36 = scmp.eq.s32.totalorder %s14, 15
    %p37 = por %p35, %p36
    %p38 = scmp.ne.s32.totalorder %s30, %s33
    %p39 = scmp.eq.s32.totalorder %s14, 0
    %p40 = por %p38, %p39
    %p41 = scmp.ne.s32.totalorder %s30, %s33
    %p42 = scmp.eq.s32.totalorder %s19, 15
    %p43 = por %p41, %p42
    %p44 = scmp.ne.s32.totalorder %s33, %s34
    %p45 = scmp.eq.s32.totalorder %s19, 0
    %p46 = por %p44, %p45
    %p47 = scmp.ne.s32.totalorder %s33, %s34
    %p48 = scmp.eq.s32.totalorder %s20, 15
    %p49 = por %p47, %p48
    %p51 = scmp.ne.s32.totalorder %s34, %s50
    %p52 = scmp.eq.s32.totalorder %s20, 0
    %p53 = por %p51, %p52
    %s54 = ssub.s32 %s14, %s21
    %p55 = scmp.eq.s32.totalorder %s54, 0
    %s57 = sadd.s32 %s56, 1
    %s58 = scalar_select %p55, %s56, %s57
    %p61 = pneg %p55
    %p62 = scmp.eq.s32.totalorder %s14, 15
    %p63 = por %p61, %p62
    %p64 = scmp.ne.s32.totalorder %s56, %s59
    %p65 = scmp.eq.s32.totalorder %s14, 0
    %p66 = por %p64, %p65
    %p67 = scmp.ne.s32.totalorder %s56, %s59
    %p68 = scmp.eq.s32.totalorder %s19, 15
    %p69 = por %p67, %p68
    %p70 = scmp.ne.s32.totalorder %s59, %s60
    %p71 = scmp.eq.s32.totalorder %s19, 0
    %p72 = por %p70, %p71
    %p73 = scmp.ne.s32.totalorder %s59, %s60
    %p74 = scmp.eq.s32.totalorder %s20, 15
    %p75 = por %p73, %p74
    %p77 = scmp.ne.s32.totalorder %s60, %s76
    %p78 = scmp.eq.s32.totalorder %s20, 0
    %p79 = por %p77, %p78
    %s80 = sadd.s32 %s14, 1
    %p81 = scmp.lt.s32.totalorder %s80, 15
    %s82 = scalar_select %p81, %s80, 15
    %s83 = sadd.s32 %s21, 1
    %p84 = scmp.lt.s32.totalorder %s83, 15
    %s85 = scalar_select %p84, %s83, 15
    %s86 = ssub.s32 %s82, %s85
    %p87 = scmp.eq.s32.totalorder %s86, 0
    %s89 = sadd.s32 %s88, 1
    %s90 = scalar_select %p87, %s88, %s89
    %p93 = pneg %p87
    %p94 = scmp.eq.s32.totalorder %s14, 15
    %p95 = por %p93, %p94
    %p96 = scmp.ne.s32.totalorder %s88, %s91
    %p97 = scmp.eq.s32.totalorder %s14, 0
    %p98 = por %p96, %p97
    %p99 = scmp.ne.s32.totalorder %s88, %s91
    %p100 = scmp.eq.s32.totalorder %s19, 15
    %p101 = por %p99, %p100
    %p102 = scmp.ne.s32.totalorder %s91, %s92
    %p103 = scmp.eq.s32.totalorder %s19, 0
    %p104 = por %p102, %p103
    %p105 = scmp.ne.s32.totalorder %s91, %s92
    %p106 = scmp.eq.s32.totalorder %s20, 15
    %p107 = por %p105, %p106
    %p109 = scmp.ne.s32.totalorder %s92, %s108
    %p110 = scmp.eq.s32.totalorder %s20, 0
    %p111 = por %p109, %p110
    %s113 = sadd.s32 %s112, 1
    %p116 = scmp.eq.s32.totalorder %s14, 15
    %p117 = scmp.ne.s32.totalorder %s112, %s114
    %p118 = scmp.eq.s32.totalorder %s14, 0
    %p119 = por %p117, %p118
    %p120 = scmp.ne.s32.totalorder %s112, %s114
    %p121 = scmp.eq.s32.totalorder %s19, 15
    %p122 = por %p120, %p121
    %p123 = scmp.ne.s32.totalorder %s114, %s115
    %p124 = scmp.eq.s32.totalorder %s19, 0
    %p125 = por %p123, %p124
    %p126 = scmp.ne.s32.totalorder %s114, %s115
    %p127 = scmp.eq.s32.totalorder %s20, 15
    %p128 = por %p126, %p127
    %p130 = scmp.ne.s32.totalorder %s115, %s129
    %p131 = scmp.eq.s32.totalorder %s20, 0
    %p132 = por %p130, %p131
    %s134 = sadd.s32 %s133, 1
    %p137 = scmp.eq.s32.totalorder %s14, 15
    %p138 = scmp.ne.s32.totalorder %s133, %s135
    %p139 = scmp.eq.s32.totalorder %s14, 0
    %p140 = por %p138, %p139
    %p141 = scmp.ne.s32.totalorder %s133, %s135
    %p142 = scmp.eq.s32.totalorder %s19, 15
    %p143 = por %p141, %p142
    %p144 = scmp.ne.s32.totalorder %s135, %s136
    %p145 = scmp.eq.s32.totalorder %s19, 0
    %p146 = por %p144, %p145
    %p147 = scmp.ne.s32.totalorder %s135, %s136
    %p148 = scmp.eq.s32.totalorder %s20, 15
    %p149 = por %p147, %p148
    %p151 = scmp.ne.s32.totalorder %s136, %s150
    %p152 = scmp.eq.s32.totalorder %s20, 0
    %p153 = por %p151, %p152
    %s155 = sadd.s32 %s154, 1
    %p158 = scmp.eq.s32.totalorder %s14, 15
    %p159 = scmp.ne.s32.totalorder %s154, %s156
    %p160 = scmp.eq.s32.totalorder %s14, 0
    %p161 = por %p159, %p160
    %p162 = scmp.ne.s32.totalorder %s154, %s156
    %p163 = scmp.eq.s32.totalorder %s19, 15
    %p164 = por %p162, %p163
    %p165 = scmp.ne.s32.totalorder %s156, %s157
    %p166 = scmp.eq.s32.totalorder %s19, 0
    %p167 = por %p165, %p166
    %p168 = scmp.ne.s32.totalorder %s156, %s157
    %p169 = scmp.eq.s32.totalorder %s20, 15
    %p170 = por %p168, %p169
    %p172 = scmp.ne.s32.totalorder %s157, %s171
    %p173 = scmp.eq.s32.totalorder %s20, 0
    %p174 = por %p172, %p173
    %s175 = ssub.s32 %s14, %s21
    %p176 = scmp.eq.s32.totalorder %s175, 0
    %s178 = sadd.s32 %s177, 1
    %s179 = scalar_select %p176, %s177, %s178
    %p182 = pneg %p176
    %p183 = scmp.eq.s32.totalorder %s14, 15
    %p184 = por %p182, %p183
    %p185 = scmp.ne.s32.totalorder %s177, %s180
    %p186 = scmp.eq.s32.totalorder %s14, 0
    %p187 = por %p185, %p186
    %p188 = scmp.ne.s32.totalorder %s177, %s180
    %p189 = scmp.eq.s32.totalorder %s19, 15
    %p190 = por %p188, %p189
    %p191 = scmp.ne.s32.totalorder %s180, %s181
    %p192 = scmp.eq.s32.totalorder %s19, 0
    %p193 = por %p191, %p192
    %p194 = scmp.ne.s32.totalorder %s180, %s181
    %p195 = scmp.eq.s32.totalorder %s20, 15
    %p196 = por %p194, %p195
    %p198 = scmp.ne.s32.totalorder %s181, %s197
    %p199 = scmp.eq.s32.totalorder %s20, 0
    %p200 = por %p198, %p199
    %s201 = ssub.s32 %s14, %s21
    %p202 = scmp.eq.s32.totalorder %s201, 0
    %s204 = sadd.s32 %s203, 1
    %s205 = scalar_select %p202, %s203, %s204
    %p208 = pneg %p202
    %p209 = scmp.eq.s32.totalorder %s14, 15
    %p210 = por %p208, %p209
    %p211 = scmp.ne.s32.totalorder %s203, %s206
    %p212 = scmp.eq.s32.totalorder %s14, 0
    %p213 = por %p211, %p212
    %p214 = scmp.ne.s32.totalorder %s203, %s206
    %p215 = scmp.eq.s32.totalorder %s19, 15
    %p216 = por %p214, %p215
    %p217 = scmp.ne.s32.totalorder %s206, %s207
    %p218 = scmp.eq.s32.totalorder %s19, 0
    %p219 = por %p217, %p218
    %p220 = scmp.ne.s32.totalorder %s206, %s207
    %p221 = scmp.eq.s32.totalorder %s20, 15
    %p222 = por %p220, %p221
    %p224 = scmp.ne.s32.totalorder %s207, %s223
    %p225 = scmp.eq.s32.totalorder %s20, 0
    %p226 = por %p224, %p225
    %p227 = scmp.le.s32.totalorder 1, %s14
    %p228 = scmp.lt.s32.totalorder %s14, 17
    %p229 = pnand %p227, %p228
    %p230 = pneg %p229
    // Predicated region
    $region9: #{res_block.3} parent=5 // pred_check
      _
    $region10: #{res_block.3} parent=5 // pred_check_branch
      %232 = sbr.rel (%p229) target = $region12
    $region11: #{res_block.3} parent=5 // pred_region
      %s233 = ssub.s32 %s14, 1
      // Predicated region
      $region13: #{res_block.3} parent=11 // pred_check
        %p234 = pneg %p125
      $region14: #{res_block.3} parent=11 // pred_check_branch
        %236 = sbr.rel (%p234) target = $region16
      $region15: #{res_block.3} parent=11 // pred_region
        _
      $region16: #{res_block.3} parent=11 // pred_fallthru
        _
      // Predicated region
      $region17: #{res_block.3} parent=11 // pred_check
        %p237 = pneg %p146
      $region18: #{res_block.3} parent=11 // pred_check_branch
        %239 = sbr.rel (%p237) target = $region20
      $region19: #{res_block.3} parent=11 // pred_region
        _
      $region20: #{res_block.3} parent=11 // pred_fallthru
        _
      // Predicated region
      $region21: #{res_block.3} parent=11 // pred_check
        %p240 = pneg %p167
      $region22: #{res_block.3} parent=11 // pred_check_branch
        %242 = sbr.rel (%p240) target = $region24
      $region23: #{res_block.3} parent=11 // pred_region
        _
      $region24: #{res_block.3} parent=11 // pred_fallthru
        _
    $region12: #{res_block.3} parent=5 // pred_fallthru
      _
    %p243 = scmp.lt.s32.totalorder %s14, 16
    // Predicated region
    $region25: #{res_block.3} parent=5 // pred_check
      %p244 = pneg %p243
    $region26: #{res_block.3} parent=5 // pred_check_branch
      %246 = sbr.rel (%p244) target = $region28
    $region27: #{res_block.3} parent=5 // pred_region
      // Predicated region
      $region29: #{res_block.3} parent=27 // pred_check
        %p247 = pneg %p40
      $region30: #{res_block.3} parent=27 // pred_check_branch
        %249 = sbr.rel (%p247) target = $region32
      $region31: #{res_block.3} parent=27 // pred_region
        %s250 = ssub.s32 %s14, 1
        %p251 = scmp.gt.s32.totalorder %s250, 0
        %s252 = scalar_select %p251, %s250, 0
        %p253 = scmp.lt.s32.totalorder %s252, 15
        %s254 = scalar_select %p253, %s252, 15
        %s255 = smul.addr %s254, 8
        %s256 = smul.addr %s255, 4
        %s257 = scalar_lea.vmem %s0, %s256
        %s258 = ssub.s32 %s14, 1
        %p259 = scmp.gt.s32.totalorder %s258, 0
        %s260 = scalar_select %p259, %s258, 0
      $region32: #{res_block.3} parent=27 // pred_fallthru
        _
      // Predicated region
      $region33: #{res_block.3} parent=27 // pred_check
        %p261 = pneg %p66
      $region34: #{res_block.3} parent=27 // pred_check_branch
        %263 = sbr.rel (%p261) target = $region36
      $region35: #{res_block.3} parent=27 // pred_region
        %p264 = scmp.lt.s32.totalorder %s14, 15
        %s265 = scalar_select %p264, %s14, 15
        %s266 = smul.addr %s265, 8
        %s267 = smul.addr %s266, 4
        %s268 = scalar_lea.vmem %s1, %s267
      $region36: #{res_block.3} parent=27 // pred_fallthru
        _
      // Predicated region
      $region37: #{res_block.3} parent=27 // pred_check
        %p269 = pneg %p98
      $region38: #{res_block.3} parent=27 // pred_check_branch
        %271 = sbr.rel (%p269) target = $region40
      $region39: #{res_block.3} parent=27 // pred_region
        %s272 = sadd.s32 %s14, 1
        %p273 = scmp.lt.s32.totalorder %s272, 15
        %s274 = scalar_select %p273, %s272, 15
        %p275 = scmp.lt.s32.totalorder %s274, 15
        %s276 = scalar_select %p275, %s274, 15
        %s277 = smul.addr %s276, 8
        %s278 = smul.addr %s277, 4
        %s279 = scalar_lea.vmem %s2, %s278
        %s280 = sadd.s32 %s14, 1
        %p281 = scmp.lt.s32.totalorder %s280, 15
        %s282 = scalar_select %p281, %s280, 15
      $region40: #{res_block.3} parent=27 // pred_fallthru
        _
    $region28: #{res_block.3} parent=5 // pred_fallthru
      _
    %p283 = scmp.le.s32.totalorder 1, %s14
    %p284 = scmp.lt.s32.totalorder %s14, 17
    %p285 = pnand %p283, %p284
    %p286 = pneg %p285
    // Predicated region
    $region41: #{res_block.3} parent=5 // pred_check
      _
    $region42: #{res_block.3} parent=5 // pred_check_branch
      %288 = sbr.rel (%p285) target = $region44
    $region43: #{res_block.3} parent=5 // pred_region
      %s289 = ssub.s32 %s14, 1
      %s290 = ssub.s32 %s19, 1
      %p291 = scmp.gt.s32.totalorder %s290, 0
      %s292 = scalar_select %p291, %s290, 0
      %p293 = scmp.lt.s32.totalorder %s292, 15
      %s294 = scalar_select %p293, %s292, 15
      %s295 = smul.addr %s294, 8
      %s296 = smul.addr %s295, 4
      %s297 = scalar_lea.vmem %s0, %s296
      %p298 = pneg %p46
      %p299 = pneg %p43
      %p300 = scmp.lt.s32.totalorder %s19, 15
      %s301 = scalar_select %p300, %s19, 15
      %s302 = smul.addr %s301, 8
      %s303 = smul.addr %s302, 4
      %s304 = scalar_lea.vmem %s1, %s303
      %p305 = pneg %p72
      %p306 = pneg %p69
      %s307 = sadd.s32 %s19, 1
      %p308 = scmp.lt.s32.totalorder %s307, 15
      %s309 = scalar_select %p308, %s307, 15
      %p310 = scmp.lt.s32.totalorder %s309, 15
      %s311 = scalar_select %p310, %s309, 15
      %s312 = smul.addr %s311, 8
      %s313 = smul.addr %s312, 4
      %s314 = scalar_lea.vmem %s2, %s313
      %p315 = pneg %p104
      %p316 = pneg %p101
      %p317 = pneg %p125
      %p318 = pneg %p122
      %p319 = pneg %p146
      %p320 = pneg %p143
      %p321 = pneg %p167
      %p322 = pneg %p164
      %p323 = pneg %p193
      %p324 = pneg %p190
      %p325 = scmp.lt.s32.totalorder %s19, 15
      %s326 = scalar_select %p325, %s19, 15
      %s327 = smul.addr %s326, 8
      %s328 = smul.addr %s327, 4
      %s329 = scalar_lea.vmem %s6, %s328
      %p330 = pneg %p219
      %p331 = pneg %p216
      %p332 = scmp.lt.s32.totalorder %s19, 15
      %s333 = scalar_select %p332, %s19, 15
      %s334 = smul.addr %s333, 2
      %s335 = scalar_lea.vmem %s7, %s334
      %s336 = ssub.s32 %s19, 1
      %p337 = scmp.gt.s32.totalorder %s336, 0
      %s338 = scalar_select %p337, %s336, 0
      %p339 = scmp.lt.s32.totalorder %s338, 15
      %s340 = scalar_select %p339, %s338, 15
      %s341 = smul.addr %s340, 8
      %s342 = smul.addr %s341, 4
      %s343 = scalar_lea.vmem %s0, %s342
      %s344 = ssub.s32 %s19, 1
      %p345 = scmp.gt.s32.totalorder %s344, 0
      %s346 = scalar_select %p345, %s344, 0
      %p347 = scmp.lt.s32.totalorder %s19, 15
      %s348 = scalar_select %p347, %s19, 15
      %s349 = smul.addr %s348, 8
      %s350 = smul.addr %s349, 4
      %s351 = scalar_lea.vmem %s1, %s350
      %s352 = sadd.s32 %s19, 1
      %p353 = scmp.lt.s32.totalorder %s352, 15
      %s354 = scalar_select %p353, %s352, 15
      %p355 = scmp.lt.s32.totalorder %s354, 15
      %s356 = scalar_select %p355, %s354, 15
      %s357 = smul.addr %s356, 8
      %s358 = smul.addr %s357, 4
      %s359 = scalar_lea.vmem %s2, %s358
      %s360 = sadd.s32 %s19, 1
      %p361 = scmp.lt.s32.totalorder %s360, 15
      %s362 = scalar_select %p361, %s360, 15
      %p363 = scmp.lt.s32.totalorder %s19, 15
      %s364 = scalar_select %p363, %s19, 15
      %s365 = smul.addr %s364, 8
      %s366 = smul.addr %s365, 4
      %s367 = scalar_lea.vmem %s6, %s366
      %p368 = scmp.lt.s32.totalorder %s19, 15
      %s369 = scalar_select %p368, %s19, 15
      %s370 = smul.addr %s369, 2
      %s371 = scalar_lea.vmem %s7, %s370
      %p373 = scmp.lt.s32.totalorder %s19, 0
      %s374 = ssub.s32 0, %s19
      %s375 = scalar_select %p373, %s374, %s19
      %s376 = sand.u32 %s375, 7
      %s377 = ssub.s32 0, %s376
      %s378 = scalar_select %p373, %s377, %s376
      %p379 = scmp.ne.s32.totalorder %s378, 0
      %p380 = scmp.lt.s32.totalorder %s378, 0
      %p381 = pnand %p380, %p379
      %p382 = pneg %p381
      %s383 = sadd.s32 %s378, 8
      %s384 = scalar_select %p382, %s383, %s378
      %vm385 = vcmask 64512
      %386 = vst.msk [vmem:[#allocation2] sm:$0xff] %vm385, 0.0
      %vm387 = vcmask 58368
      %388 = vst.msk [vmem:[#allocation2 + $0x8] sm:$0x3] %vm387, 0.0
      %s389 = scalar_lea.vmem [#allocation2], 144
      %390 = vst.msk [vmem:[%s389] sm:$0xff] %vm385, 0.0
      %391 = vst.msk [vmem:[%s389 + $0x8] sm:$0x3] %vm387, 0.0
      %vm392 = vcmask 57344
      %393 = vst.msk [vmem:[#allocation2] sm:$0x1] %vm392, 0.0
      %394 = vst.msk [vmem:[#allocation2 + $0x10] sm:$0x1] %vm392, 0.0
      %395 = vst.msk [vmem:[#allocation2 + $0x20] sm:$0x1] %vm392, 0.0
      %396 = vst.msk [vmem:[#allocation2 + $0x30] sm:$0x1] %vm392, 0.0
      %397 = vst.msk [vmem:[#allocation2 + $0x40] sm:$0x1] %vm392, 0.0
      %398 = vst.msk [vmem:[#allocation2 + $0x50] sm:$0x1] %vm392, 0.0
      %399 = vst.msk [vmem:[#allocation2 + $0x60] sm:$0x1] %vm392, 0.0
      %400 = vst.msk [vmem:[#allocation2 + $0x70] sm:$0x1] %vm392, 0.0
      %401 = vst.msk [vmem:[#allocation2 + $0x80] sm:$0x1] %vm392, 0.0
      %402 = vst.msk [vmem:[#allocation2 + $0x90] sm:$0x1] %vm392, 0.0
      %403 = vst.msk [vmem:[#allocation2 + $0x9] sm:$0x1] %vm392, 0.0
      %404 = vst.msk [vmem:[#allocation2 + $0x19] sm:$0x1] %vm392, 0.0
      %405 = vst.msk [vmem:[#allocation2 + $0x29] sm:$0x1] %vm392, 0.0
      %406 = vst.msk [vmem:[#allocation2 + $0x39] sm:$0x1] %vm392, 0.0
      %407 = vst.msk [vmem:[#allocation2 + $0x49] sm:$0x1] %vm392, 0.0
      %408 = vst.msk [vmem:[#allocation2 + $0x59] sm:$0x1] %vm392, 0.0
      %409 = vst.msk [vmem:[#allocation2 + $0x69] sm:$0x1] %vm392, 0.0
      %410 = vst.msk [vmem:[#allocation2 + $0x79] sm:$0x1] %vm392, 0.0
      %411 = vst.msk [vmem:[#allocation2 + $0x89] sm:$0x1] %vm392, 0.0
      %412 = vst.msk [vmem:[#allocation2 + $0x99] sm:$0x1] %vm392, 0.0
      %v413 = vld [vmem:[%s4] sm:$0x1]
      %v414 = vld [vmem:[%s5] sm:$0x1]
      %v415 = vld [vmem:[%s343] sm:$0xf]
      %v416 = vld [vmem:[%s343 + $0x4] sm:$0xf]
      %v417 = vld [vmem:[%s343 + $0x8] sm:$0xf]
      %v418 = vld [vmem:[%s343 + $0xc] sm:$0xf]
      %v419 = vld [vmem:[%s343 + $0x10] sm:$0xf]
      %v420 = vld [vmem:[%s343 + $0x14] sm:$0xf]
      %v421 = vld [vmem:[%s343 + $0x18] sm:$0xf]
      %v422 = vld [vmem:[%s343 + $0x1c] sm:$0xf]
      %v423 = vunpack.c.l.bf16 %v415
      %v424 = vunpack.c.l.bf16 %v416
      %v425 = vunpack.c.l.bf16 %v417
      %v426 = vunpack.c.l.bf16 %v418
      %v427 = vunpack.c.l.bf16 %v419
      %v428 = vunpack.c.l.bf16 %v420
      %v429 = vunpack.c.l.bf16 %v421
      %v430 = vunpack.c.l.bf16 %v422
      %v432 = vlaneseq
      %v433 = vshrl.u32 %v432, 7
      %v434 = vsub.s32 0, %v433
      %v435 = vrot.slane %v413, %v434
      %v437 = vmul.f32 %v423, %v435
      %v438 = vmul.f32 %v424, %v435
      %v439 = vmul.f32 %v425, %v435
      %v440 = vmul.f32 %v426, %v435
      %v441 = vmul.f32 %v427, %v435
      %v442 = vmul.f32 %v428, %v435
      %v443 = vmul.f32 %v429, %v435
      %v444 = vmul.f32 %v430, %v435
      %v446 = vlaneseq
      %v447 = vshrl.u32 %v446, 7
      %v448 = vsub.s32 0, %v447
      %v449 = vrot.slane %v414, %v448
      %v451 = vadd.f32 %v437, %v449
      %v452 = vadd.f32 %v438, %v449
      %v453 = vadd.f32 %v439, %v449
      %v454 = vadd.f32 %v440, %v449
      %v455 = vadd.f32 %v441, %v449
      %v456 = vadd.f32 %v442, %v449
      %v457 = vadd.f32 %v443, %v449
      %v458 = vadd.f32 %v444, %v449
      %p459 = scmp.gt.s32.totalorder %s384, 0
      %s460 = scalar_select %p459, 1, 0
      %v461 = vstv %s460
      %vm462 = vcmp.eq.s32.totalorder %v461, 1
      %v463 = vsel %vm462, %v451, 0.0
      %v464 = vsel %vm462, %v452, 0.0
      %v465 = vsel %vm462, %v453, 0.0
      %v466 = vsel %vm462, %v454, 0.0
      %v467 = vsel %vm462, %v455, 0.0
      %v468 = vsel %vm462, %v456, 0.0
      %v469 = vsel %vm462, %v457, 0.0
      %v470 = vsel %vm462, %v458, 0.0
      %s471 = scalar_lea.vmem [#allocation2], 16
      %472 = vst.msk [vmem:[%s471 + $0x1] sm:$0xff] %vm385, %v463
      %473 = vst.msk [vmem:[%s471 + $0x11] sm:$0xff] %vm385, %v464
      %474 = vst.msk [vmem:[%s471 + $0x21] sm:$0xff] %vm385, %v465
      %475 = vst.msk [vmem:[%s471 + $0x31] sm:$0xff] %vm385, %v466
      %476 = vst.msk [vmem:[%s471 + $0x41] sm:$0xff] %vm385, %v467
      %477 = vst.msk [vmem:[%s471 + $0x51] sm:$0xff] %vm385, %v468
      %478 = vst.msk [vmem:[%s471 + $0x61] sm:$0xff] %vm385, %v469
      %479 = vst.msk [vmem:[%s471 + $0x71] sm:$0xff] %vm385, %v470
      %v480 = vld [vmem:[#allocation2] sm:$0xff]
      %v481 = vld [vmem:[#allocation2 + $0x10] sm:$0xff]
      %v482 = vld [vmem:[#allocation2 + $0x20] sm:$0xff]
      %v483 = vld [vmem:[#allocation2 + $0x30] sm:$0xff]
      %v484 = vld [vmem:[#allocation2 + $0x40] sm:$0xff]
      %v485 = vld [vmem:[#allocation2 + $0x50] sm:$0xff]
      %v486 = vld [vmem:[#allocation2 + $0x60] sm:$0xff]
      %v487 = vld [vmem:[#allocation2 + $0x70] sm:$0xff]
      %488 = vst.msk [vmem:[#allocation3] sm:$0xff] %vm385, %v480
      %489 = vst.msk [vmem:[#allocation3 + $0x10] sm:$0xff] %vm385, %v481
      %490 = vst.msk [vmem:[#allocation3 + $0x20] sm:$0xff] %vm385, %v482
      %491 = vst.msk [vmem:[#allocation3 + $0x30] sm:$0xff] %vm385, %v483
      %492 = vst.msk [vmem:[#allocation3 + $0x40] sm:$0xff] %vm385, %v484
      %493 = vst.msk [vmem:[#allocation3 + $0x50] sm:$0xff] %vm385, %v485
      %494 = vst.msk [vmem:[#allocation3 + $0x60] sm:$0xff] %vm385, %v486
      %495 = vst.msk [vmem:[#allocation3 + $0x70] sm:$0xff] %vm385, %v487
      %v496 = vld [vmem:[#allocation2 + $0x1] sm:$0xff]
      %v497 = vld [vmem:[#allocation2 + $0x11] sm:$0xff]
      %v498 = vld [vmem:[#allocation2 + $0x21] sm:$0xff]
      %v499 = vld [vmem:[#allocation2 + $0x31] sm:$0xff]
      %v500 = vld [vmem:[#allocation2 + $0x41] sm:$0xff]
      %v501 = vld [vmem:[#allocation2 + $0x51] sm:$0xff]
      %v502 = vld [vmem:[#allocation2 + $0x61] sm:$0xff]
      %v503 = vld [vmem:[#allocation2 + $0x71] sm:$0xff]
      %512 = vrot.lane.b32.xlu0 %v496, 8
      %v513 = vpop.permute.xlu0 %512
      %514 = vrot.lane.b32.xlu0 %v497, 8
      %v515 = vpop.permute.xlu0 %514
      %516 = vrot.lane.b32.xlu0 %v498, 8
      %v517 = vpop.permute.xlu0 %516
      %518 = vrot.lane.b32.xlu0 %v499, 8
      %v519 = vpop.permute.xlu0 %518
      %520 = vrot.lane.b32.xlu0 %v500, 8
      %v521 = vpop.permute.xlu0 %520
      %522 = vrot.lane.b32.xlu0 %v501, 8
      %v523 = vpop.permute.xlu0 %522
      %524 = vrot.lane.b32.xlu0 %v502, 8
      %v525 = vpop.permute.xlu0 %524
      %526 = vrot.lane.b32.xlu0 %v503, 8
      %v527 = vpop.permute.xlu0 %526
      %vm536 = vcmask 130112
      %537 = vst.msk [vmem:[#allocation3] sm:$0xff] %vm536, %v513
      %538 = vst.msk [vmem:[#allocation3 + $0x10] sm:$0xff] %vm536, %v515
      %539 = vst.msk [vmem:[#allocation3 + $0x20] sm:$0xff] %vm536, %v517
      %540 = vst.msk [vmem:[#allocation3 + $0x30] sm:$0xff] %vm536, %v519
      %541 = vst.msk [vmem:[#allocation3 + $0x40] sm:$0xff] %vm536, %v521
      %542 = vst.msk [vmem:[#allocation3 + $0x50] sm:$0xff] %vm536, %v523
      %543 = vst.msk [vmem:[#allocation3 + $0x60] sm:$0xff] %vm536, %v525
      %544 = vst.msk [vmem:[#allocation3 + $0x70] sm:$0xff] %vm536, %v527
      %v545 = vld [vmem:[#allocation2 + $0x2] sm:$0xff]
      %v546 = vld [vmem:[#allocation2 + $0x12] sm:$0xff]
      %v547 = vld [vmem:[#allocation2 + $0x22] sm:$0xff]
      %v548 = vld [vmem:[#allocation2 + $0x32] sm:$0xff]
      %v549 = vld [vmem:[#allocation2 + $0x42] sm:$0xff]
      %v550 = vld [vmem:[#allocation2 + $0x52] sm:$0xff]
      %v551 = vld [vmem:[#allocation2 + $0x62] sm:$0xff]
      %v552 = vld [vmem:[#allocation2 + $0x72] sm:$0xff]
      %561 = vrot.lane.b32.xlu0 %v545, 16
      %v562 = vpop.permute.xlu0 %561
      %563 = vrot.lane.b32.xlu0 %v546, 16
      %v564 = vpop.permute.xlu0 %563
      %565 = vrot.lane.b32.xlu0 %v547, 16
      %v566 = vpop.permute.xlu0 %565
      %567 = vrot.lane.b32.xlu0 %v548, 16
      %v568 = vpop.permute.xlu0 %567
      %569 = vrot.lane.b32.xlu0 %v549, 16
      %v570 = vpop.permute.xlu0 %569
      %571 = vrot.lane.b32.xlu0 %v550, 16
      %v572 = vpop.permute.xlu0 %571
      %573 = vrot.lane.b32.xlu0 %v551, 16
      %v574 = vpop.permute.xlu0 %573
      %575 = vrot.lane.b32.xlu0 %v552, 16
      %v576 = vpop.permute.xlu0 %575
      %vm585 = vcmask 195712
      %586 = vst.msk [vmem:[#allocation3] sm:$0xff] %vm585, %v562
      %587 = vst.msk [vmem:[#allocation3 + $0x10] sm:$0xff] %vm585, %v564
      %588 = vst.msk [vmem:[#allocation3 + $0x20] sm:$0xff] %vm585, %v566
      %589 = vst.msk [vmem:[#allocation3 + $0x30] sm:$0xff] %vm585, %v568
      %590 = vst.msk [vmem:[#allocation3 + $0x40] sm:$0xff] %vm585, %v570
      %591 = vst.msk [vmem:[#allocation3 + $0x50] sm:$0xff] %vm585, %v572
      %592 = vst.msk [vmem:[#allocation3 + $0x60] sm:$0xff] %vm585, %v574
      %593 = vst.msk [vmem:[#allocation3 + $0x70] sm:$0xff] %vm585, %v576
      %v594 = vld [vmem:[%s471] sm:$0xff]
      %v595 = vld [vmem:[%s471 + $0x10] sm:$0xff]
      %v596 = vld [vmem:[%s471 + $0x20] sm:$0xff]
      %v597 = vld [vmem:[%s471 + $0x30] sm:$0xff]
      %v598 = vld [vmem:[%s471 + $0x40] sm:$0xff]
      %v599 = vld [vmem:[%s471 + $0x50] sm:$0xff]
      %v600 = vld [vmem:[%s471 + $0x60] sm:$0xff]
      %v601 = vld [vmem:[%s471 + $0x70] sm:$0xff]
      %610 = vrot.lane.b32.xlu0 %v594, 24
      %v611 = vpop.permute.xlu0 %610
      %612 = vrot.lane.b32.xlu0 %v595, 24
      %v613 = vpop.permute.xlu0 %612
      %614 = vrot.lane.b32.xlu0 %v596, 24
      %v615 = vpop.permute.xlu0 %614
      %616 = vrot.lane.b32.xlu0 %v597, 24
      %v617 = vpop.permute.xlu0 %616
      %618 = vrot.lane.b32.xlu0 %v598, 24
      %v619 = vpop.permute.xlu0 %618
      %620 = vrot.lane.b32.xlu0 %v599, 24
      %v621 = vpop.permute.xlu0 %620
      %622 = vrot.lane.b32.xlu0 %v600, 24
      %v623 = vpop.permute.xlu0 %622
      %624 = vrot.lane.b32.xlu0 %v601, 24
      %v625 = vpop.permute.xlu0 %624
      %vm634 = vcmask 261312
      %635 = vst.msk [vmem:[#allocation3] sm:$0xff] %vm634, %v611
      %636 = vst.msk [vmem:[#allocation3 + $0x10] sm:$0xff] %vm634, %v613
      %637 = vst.msk [vmem:[#allocation3 + $0x20] sm:$0xff] %vm634, %v615
      %638 = vst.msk [vmem:[#allocation3 + $0x30] sm:$0xff] %vm634, %v617
      %639 = vst.msk [vmem:[#allocation3 + $0x40] sm:$0xff] %vm634, %v619
      %640 = vst.msk [vmem:[#allocation3 + $0x50] sm:$0xff] %vm634, %v621
      %641 = vst.msk [vmem:[#allocation3 + $0x60] sm:$0xff] %vm634, %v623
      %642 = vst.msk [vmem:[#allocation3 + $0x70] sm:$0xff] %vm634, %v625
      %v643 = vld [vmem:[%s471 + $0x1] sm:$0xff]
      %v644 = vld [vmem:[%s471 + $0x11] sm:$0xff]
      %v645 = vld [vmem:[%s471 + $0x21] sm:$0xff]
      %v646 = vld [vmem:[%s471 + $0x31] sm:$0xff]
      %v647 = vld [vmem:[%s471 + $0x41] sm:$0xff]
      %v648 = vld [vmem:[%s471 + $0x51] sm:$0xff]
      %v649 = vld [vmem:[%s471 + $0x61] sm:$0xff]
      %v650 = vld [vmem:[%s471 + $0x71] sm:$0xff]
      %659 = vrot.lane.b32.xlu0 %v643, 32
      %v660 = vpop.permute.xlu0 %659
      %661 = vrot.lane.b32.xlu0 %v644, 32
      %v662 = vpop.permute.xlu0 %661
      %663 = vrot.lane.b32.xlu0 %v645, 32
      %v664 = vpop.permute.xlu0 %663
      %665 = vrot.lane.b32.xlu0 %v646, 32
      %v666 = vpop.permute.xlu0 %665
      %667 = vrot.lane.b32.xlu0 %v647, 32
      %v668 = vpop.permute.xlu0 %667
      %669 = vrot.lane.b32.xlu0 %v648, 32
      %v670 = vpop.permute.xlu0 %669
      %671 = vrot.lane.b32.xlu0 %v649, 32
      %v672 = vpop.permute.xlu0 %671
      %673 = vrot.lane.b32.xlu0 %v650, 32
      %v674 = vpop.permute.xlu0 %673
      %vm683 = vcmask 326912
      %684 = vst.msk [vmem:[#allocation3] sm:$0xff] %vm683, %v660
      %685 = vst.msk [vmem:[#allocation3 + $0x10] sm:$0xff] %vm683, %v662
      %686 = vst.msk [vmem:[#allocation3 + $0x20] sm:$0xff] %vm683, %v664
      %687 = vst.msk [vmem:[#allocation3 + $0x30] sm:$0xff] %vm683, %v666
      %688 = vst.msk [vmem:[#allocation3 + $0x40] sm:$0xff] %vm683, %v668
      %689 = vst.msk [vmem:[#allocation3 + $0x50] sm:$0xff] %vm683, %v670
      %690 = vst.msk [vmem:[#allocation3 + $0x60] sm:$0xff] %vm683, %v672
      %691 = vst.msk [vmem:[#allocation3 + $0x70] sm:$0xff] %vm683, %v674
      %v692 = vld [vmem:[%s471 + $0x2] sm:$0xff]
      %v693 = vld [vmem:[%s471 + $0x12] sm:$0xff]
      %v694 = vld [vmem:[%s471 + $0x22] sm:$0xff]
      %v695 = vld [vmem:[%s471 + $0x32] sm:$0xff]
      %v696 = vld [vmem:[%s471 + $0x42] sm:$0xff]
      %v697 = vld [vmem:[%s471 + $0x52] sm:$0xff]
      %v698 = vld [vmem:[%s471 + $0x62] sm:$0xff]
      %v699 = vld [vmem:[%s471 + $0x72] sm:$0xff]
      %708 = vrot.lane.b32.xlu0 %v692, 40
      %v709 = vpop.permute.xlu0 %708
      %710 = vrot.lane.b32.xlu0 %v693, 40
      %v711 = vpop.permute.xlu0 %710
      %712 = vrot.lane.b32.xlu0 %v694, 40
      %v713 = vpop.permute.xlu0 %712
      %714 = vrot.lane.b32.xlu0 %v695, 40
      %v715 = vpop.permute.xlu0 %714
      %716 = vrot.lane.b32.xlu0 %v696, 40
      %v717 = vpop.permute.xlu0 %716
      %718 = vrot.lane.b32.xlu0 %v697, 40
      %v719 = vpop.permute.xlu0 %718
      %720 = vrot.lane.b32.xlu0 %v698, 40
      %v721 = vpop.permute.xlu0 %720
      %722 = vrot.lane.b32.xlu0 %v699, 40
      %v723 = vpop.permute.xlu0 %722
      %vm732 = vcmask 392512
      %733 = vst.msk [vmem:[#allocation3] sm:$0xff] %vm732, %v709
      %734 = vst.msk [vmem:[#allocation3 + $0x10] sm:$0xff] %vm732, %v711
      %735 = vst.msk [vmem:[#allocation3 + $0x20] sm:$0xff] %vm732, %v713
      %736 = vst.msk [vmem:[#allocation3 + $0x30] sm:$0xff] %vm732, %v715
      %737 = vst.msk [vmem:[#allocation3 + $0x40] sm:$0xff] %vm732, %v717
      %738 = vst.msk [vmem:[#allocation3 + $0x50] sm:$0xff] %vm732, %v719
      %739 = vst.msk [vmem:[#allocation3 + $0x60] sm:$0xff] %vm732, %v721
      %740 = vst.msk [vmem:[#allocation3 + $0x70] sm:$0xff] %vm732, %v723
      %s741 = scalar_lea.vmem [#allocation2], 32
      %v742 = vld [vmem:[%s741] sm:$0xff]
      %v743 = vld [vmem:[%s741 + $0x10] sm:$0xff]
      %v744 = vld [vmem:[%s741 + $0x20] sm:$0xff]
      %v745 = vld [vmem:[%s741 + $0x30] sm:$0xff]
      %v746 = vld [vmem:[%s741 + $0x40] sm:$0xff]
      %v747 = vld [vmem:[%s741 + $0x50] sm:$0xff]
      %v748 = vld [vmem:[%s741 + $0x60] sm:$0xff]
      %v749 = vld [vmem:[%s741 + $0x70] sm:$0xff]
      %758 = vrot.lane.b32.xlu0 %v742, 48
      %v759 = vpop.permute.xlu0 %758
      %760 = vrot.lane.b32.xlu0 %v743, 48
      %v761 = vpop.permute.xlu0 %760
      %762 = vrot.lane.b32.xlu0 %v744, 48
      %v763 = vpop.permute.xlu0 %762
      %764 = vrot.lane.b32.xlu0 %v745, 48
      %v765 = vpop.permute.xlu0 %764
      %766 = vrot.lane.b32.xlu0 %v746, 48
      %v767 = vpop.permute.xlu0 %766
      %768 = vrot.lane.b32.xlu0 %v747, 48
      %v769 = vpop.permute.xlu0 %768
      %770 = vrot.lane.b32.xlu0 %v748, 48
      %v771 = vpop.permute.xlu0 %770
      %772 = vrot.lane.b32.xlu0 %v749, 48
      %v773 = vpop.permute.xlu0 %772
      %vm782 = vcmask 458112
      %783 = vst.msk [vmem:[#allocation3] sm:$0xff] %vm782, %v759
      %784 = vst.msk [vmem:[#allocation3 + $0x10] sm:$0xff] %vm782, %v761
      %785 = vst.msk [vmem:[#allocation3 + $0x20] sm:$0xff] %vm782, %v763
      %786 = vst.msk [vmem:[#allocation3 + $0x30] sm:$0xff] %vm782, %v765
      %787 = vst.msk [vmem:[#allocation3 + $0x40] sm:$0xff] %vm782, %v767
      %788 = vst.msk [vmem:[#allocation3 + $0x50] sm:$0xff] %vm782, %v769
      %789 = vst.msk [vmem:[#allocation3 + $0x60] sm:$0xff] %vm782, %v771
      %790 = vst.msk [vmem:[#allocation3 + $0x70] sm:$0xff] %vm782, %v773
      %v791 = vld [vmem:[%s741 + $0x1] sm:$0xff]
      %v792 = vld [vmem:[%s741 + $0x11] sm:$0xff]
      %v793 = vld [vmem:[%s741 + $0x21] sm:$0xff]
      %v794 = vld [vmem:[%s741 + $0x31] sm:$0xff]
      %v795 = vld [vmem:[%s741 + $0x41] sm:$0xff]
      %v796 = vld [vmem:[%s741 + $0x51] sm:$0xff]
      %v797 = vld [vmem:[%s741 + $0x61] sm:$0xff]
      %v798 = vld [vmem:[%s741 + $0x71] sm:$0xff]
      %807 = vrot.lane.b32.xlu0 %v791, 56
      %v808 = vpop.permute.xlu0 %807
      %809 = vrot.lane.b32.xlu0 %v792, 56
      %v810 = vpop.permute.xlu0 %809
      %811 = vrot.lane.b32.xlu0 %v793, 56
      %v812 = vpop.permute.xlu0 %811
      %813 = vrot.lane.b32.xlu0 %v794, 56
      %v814 = vpop.permute.xlu0 %813
      %815 = vrot.lane.b32.xlu0 %v795, 56
      %v816 = vpop.permute.xlu0 %815
      %817 = vrot.lane.b32.xlu0 %v796, 56
      %v818 = vpop.permute.xlu0 %817
      %819 = vrot.lane.b32.xlu0 %v797, 56
      %v820 = vpop.permute.xlu0 %819
      %821 = vrot.lane.b32.xlu0 %v798, 56
      %v822 = vpop.permute.xlu0 %821
      %vm831 = vcmask 523712
      %832 = vst.msk [vmem:[#allocation3] sm:$0xff] %vm831, %v808
      %833 = vst.msk [vmem:[#allocation3 + $0x10] sm:$0xff] %vm831, %v810
      %834 = vst.msk [vmem:[#allocation3 + $0x20] sm:$0xff] %vm831, %v812
      %835 = vst.msk [vmem:[#allocation3 + $0x30] sm:$0xff] %vm831, %v814
      %836 = vst.msk [vmem:[#allocation3 + $0x40] sm:$0xff] %vm831, %v816
      %837 = vst.msk [vmem:[#allocation3 + $0x50] sm:$0xff] %vm831, %v818
      %838 = vst.msk [vmem:[#allocation3 + $0x60] sm:$0xff] %vm831, %v820
      %839 = vst.msk [vmem:[#allocation3 + $0x70] sm:$0xff] %vm831, %v822
      %v840 = vld [vmem:[%s741 + $0x2] sm:$0xff]
      %v841 = vld [vmem:[%s741 + $0x12] sm:$0xff]
      %v842 = vld [vmem:[%s741 + $0x22] sm:$0xff]
      %v843 = vld [vmem:[%s741 + $0x32] sm:$0xff]
      %v844 = vld [vmem:[%s741 + $0x42] sm:$0xff]
      %v845 = vld [vmem:[%s741 + $0x52] sm:$0xff]
      %v846 = vld [vmem:[%s741 + $0x62] sm:$0xff]
      %v847 = vld [vmem:[%s741 + $0x72] sm:$0xff]
      %856 = vrot.lane.b32.xlu0 %v840, 64
      %v857 = vpop.permute.xlu0 %856
      %858 = vrot.lane.b32.xlu0 %v841, 64
      %v859 = vpop.permute.xlu0 %858
      %860 = vrot.lane.b32.xlu0 %v842, 64
      %v861 = vpop.permute.xlu0 %860
      %862 = vrot.lane.b32.xlu0 %v843, 64
      %v863 = vpop.permute.xlu0 %862
      %864 = vrot.lane.b32.xlu0 %v844, 64
      %v865 = vpop.permute.xlu0 %864
      %866 = vrot.lane.b32.xlu0 %v845, 64
      %v867 = vpop.permute.xlu0 %866
      %868 = vrot.lane.b32.xlu0 %v846, 64
      %v869 = vpop.permute.xlu0 %868
      %870 = vrot.lane.b32.xlu0 %v847, 64
      %v871 = vpop.permute.xlu0 %870
      %vm880 = vcmask 589312
      %881 = vst.msk [vmem:[#allocation3] sm:$0xff] %vm880, %v857
      %882 = vst.msk [vmem:[#allocation3 + $0x10] sm:$0xff] %vm880, %v859
      %883 = vst.msk [vmem:[#allocation3 + $0x20] sm:$0xff] %vm880, %v861
      %884 = vst.msk [vmem:[#allocation3 + $0x30] sm:$0xff] %vm880, %v863
      %885 = vst.msk [vmem:[#allocation3 + $0x40] sm:$0xff] %vm880, %v865
      %886 = vst.msk [vmem:[#allocation3 + $0x50] sm:$0xff] %vm880, %v867
      %887 = vst.msk [vmem:[#allocation3 + $0x60] sm:$0xff] %vm880, %v869
      %888 = vst.msk [vmem:[#allocation3 + $0x70] sm:$0xff] %vm880, %v871
      %v889 = vld [vmem:[%s351] sm:$0xf]
      %v890 = vld [vmem:[%s351 + $0x4] sm:$0xf]
      %v891 = vld [vmem:[%s351 + $0x8] sm:$0xf]
      %v892 = vld [vmem:[%s351 + $0xc] sm:$0xf]
      %v893 = vld [vmem:[%s351 + $0x10] sm:$0xf]
      %v894 = vld [vmem:[%s351 + $0x14] sm:$0xf]
      %v895 = vld [vmem:[%s351 + $0x18] sm:$0xf]
      %v896 = vld [vmem:[%s351 + $0x1c] sm:$0xf]
      %v897 = vunpack.c.l.bf16 %v889
      %v898 = vunpack.c.l.bf16 %v890
      %v899 = vunpack.c.l.bf16 %v891
      %v900 = vunpack.c.l.bf16 %v892
      %v901 = vunpack.c.l.bf16 %v893
      %v902 = vunpack.c.l.bf16 %v894
      %v903 = vunpack.c.l.bf16 %v895
      %v904 = vunpack.c.l.bf16 %v896
      %v905 = vmul.f32 %v897, %v435
      %v906 = vmul.f32 %v898, %v435
      %v907 = vmul.f32 %v899, %v435
      %v908 = vmul.f32 %v900, %v435
      %v909 = vmul.f32 %v901, %v435
      %v910 = vmul.f32 %v902, %v435
      %v911 = vmul.f32 %v903, %v435
      %v912 = vmul.f32 %v904, %v435
      %v913 = vadd.f32 %v905, %v449
      %v914 = vadd.f32 %v906, %v449
      %v915 = vadd.f32 %v907, %v449
      %v916 = vadd.f32 %v908, %v449
      %v917 = vadd.f32 %v909, %v449
      %v918 = vadd.f32 %v910, %v449
      %v919 = vadd.f32 %v911, %v449
      %v920 = vadd.f32 %v912, %v449
      %921 = vst.msk [vmem:[%s471 + $0x1] sm:$0xff] %vm385, %v913
      %922 = vst.msk [vmem:[%s471 + $0x11] sm:$0xff] %vm385, %v914
      %923 = vst.msk [vmem:[%s471 + $0x21] sm:$0xff] %vm385, %v915
      %924 = vst.msk [vmem:[%s471 + $0x31] sm:$0xff] %vm385, %v916
      %925 = vst.msk [vmem:[%s471 + $0x41] sm:$0xff] %vm385, %v917
      %926 = vst.msk [vmem:[%s471 + $0x51] sm:$0xff] %vm385, %v918
      %927 = vst.msk [vmem:[%s471 + $0x61] sm:$0xff] %vm385, %v919
      %928 = vst.msk [vmem:[%s471 + $0x71] sm:$0xff] %vm385, %v920
      %v929 = vld [vmem:[#allocation2] sm:$0xff]
      %v930 = vld [vmem:[#allocation2 + $0x10] sm:$0xff]
      %v931 = vld [vmem:[#allocation2 + $0x20] sm:$0xff]
      %v932 = vld [vmem:[#allocation2 + $0x30] sm:$0xff]
      %v933 = vld [vmem:[#allocation2 + $0x40] sm:$0xff]
      %v934 = vld [vmem:[#allocation2 + $0x50] sm:$0xff]
      %v935 = vld [vmem:[#allocation2 + $0x60] sm:$0xff]
      %v936 = vld [vmem:[#allocation2 + $0x70] sm:$0xff]
      %945 = vrot.lane.b32.xlu0 %v929, 72
      %v946 = vpop.permute.xlu0 %945
      %947 = vrot.lane.b32.xlu0 %v930, 72
      %v948 = vpop.permute.xlu0 %947
      %949 = vrot.lane.b32.xlu0 %v931, 72
      %v950 = vpop.permute.xlu0 %949
      %951 = vrot.lane.b32.xlu0 %v932, 72
      %v952 = vpop.permute.xlu0 %951
      %953 = vrot.lane.b32.xlu0 %v933, 72
      %v954 = vpop.permute.xlu0 %953
      %955 = vrot.lane.b32.xlu0 %v934, 72
      %v956 = vpop.permute.xlu0 %955
      %957 = vrot.lane.b32.xlu0 %v935, 72
      %v958 = vpop.permute.xlu0 %957
      %959 = vrot.lane.b32.xlu0 %v936, 72
      %v960 = vpop.permute.xlu0 %959
      %vm969 = vcmask 654912
      %970 = vst.msk [vmem:[#allocation3] sm:$0xff] %vm969, %v946
      %971 = vst.msk [vmem:[#allocation3 + $0x10] sm:$0xff] %vm969, %v948
      %972 = vst.msk [vmem:[#allocation3 + $0x20] sm:$0xff] %vm969, %v950
      %973 = vst.msk [vmem:[#allocation3 + $0x30] sm:$0xff] %vm969, %v952
      %974 = vst.msk [vmem:[#allocation3 + $0x40] sm:$0xff] %vm969, %v954
      %975 = vst.msk [vmem:[#allocation3 + $0x50] sm:$0xff] %vm969, %v956
      %976 = vst.msk [vmem:[#allocation3 + $0x60] sm:$0xff] %vm969, %v958
      %977 = vst.msk [vmem:[#allocation3 + $0x70] sm:$0xff] %vm969, %v960
      %v978 = vld [vmem:[#allocation2 + $0x1] sm:$0xff]
      %v979 = vld [vmem:[#allocation2 + $0x11] sm:$0xff]
      %v980 = vld [vmem:[#allocation2 + $0x21] sm:$0xff]
      %v981 = vld [vmem:[#allocation2 + $0x31] sm:$0xff]
      %v982 = vld [vmem:[#allocation2 + $0x41] sm:$0xff]
      %v983 = vld [vmem:[#allocation2 + $0x51] sm:$0xff]
      %v984 = vld [vmem:[#allocation2 + $0x61] sm:$0xff]
      %v985 = vld [vmem:[#allocation2 + $0x71] sm:$0xff]
      %994 = vrot.lane.b32.xlu0 %v978, 80
      %v995 = vpop.permute.xlu0 %994
      %996 = vrot.lane.b32.xlu0 %v979, 80
      %v997 = vpop.permute.xlu0 %996
      %998 = vrot.lane.b32.xlu0 %v980, 80
      %v999 = vpop.permute.xlu0 %998
      %1000 = vrot.lane.b32.xlu0 %v981, 80
      %v1001 = vpop.permute.xlu0 %1000
      %1002 = vrot.lane.b32.xlu0 %v982, 80
      %v1003 = vpop.permute.xlu0 %1002
      %1004 = vrot.lane.b32.xlu0 %v983, 80
      %v1005 = vpop.permute.xlu0 %1004
      %1006 = vrot.lane.b32.xlu0 %v984, 80
      %v1007 = vpop.permute.xlu0 %1006
      %1008 = vrot.lane.b32.xlu0 %v985, 80
      %v1009 = vpop.permute.xlu0 %1008
      %vm1018 = vcmask 720512
      %1019 = vst.msk [vmem:[#allocation3] sm:$0xff] %vm1018, %v995
      %1020 = vst.msk [vmem:[#allocation3 + $0x10] sm:$0xff] %vm1018, %v997
      %1021 = vst.msk [vmem:[#allocation3 + $0x20] sm:$0xff] %vm1018, %v999
      %1022 = vst.msk [vmem:[#allocation3 + $0x30] sm:$0xff] %vm1018, %v1001
      %1023 = vst.msk [vmem:[#allocation3 + $0x40] sm:$0xff] %vm1018, %v1003
      %1024 = vst.msk [vmem:[#allocation3 + $0x50] sm:$0xff] %vm1018, %v1005
      %1025 = vst.msk [vmem:[#allocation3 + $0x60] sm:$0xff] %vm1018, %v1007
      %1026 = vst.msk [vmem:[#allocation3 + $0x70] sm:$0xff] %vm1018, %v1009
      %v1027 = vld [vmem:[#allocation2 + $0x2] sm:$0xff]
      %v1028 = vld [vmem:[#allocation2 + $0x12] sm:$0xff]
      %v1029 = vld [vmem:[#allocation2 + $0x22] sm:$0xff]
      %v1030 = vld [vmem:[#allocation2 + $0x32] sm:$0xff]
      %v1031 = vld [vmem:[#allocation2 + $0x42] sm:$0xff]
      %v1032 = vld [vmem:[#allocation2 + $0x52] sm:$0xff]
      %v1033 = vld [vmem:[#allocation2 + $0x62] sm:$0xff]
      %v1034 = vld [vmem:[#allocation2 + $0x72] sm:$0xff]
      %1043 = vrot.lane.b32.xlu0 %v1027, 88
      %v1044 = vpop.permute.xlu0 %1043
      %1045 = vrot.lane.b32.xlu0 %v1028, 88
      %v1046 = vpop.permute.xlu0 %1045
      %1047 = vrot.lane.b32.xlu0 %v1029, 88
      %v1048 = vpop.permute.xlu0 %1047
      %1049 = vrot.lane.b32.xlu0 %v1030, 88
      %v1050 = vpop.permute.xlu0 %1049
      %1051 = vrot.lane.b32.xlu0 %v1031, 88
      %v1052 = vpop.permute.xlu0 %1051
      %1053 = vrot.lane.b32.xlu0 %v1032, 88
      %v1054 = vpop.permute.xlu0 %1053
      %1055 = vrot.lane.b32.xlu0 %v1033, 88
      %v1056 = vpop.permute.xlu0 %1055
      %1057 = vrot.lane.b32.xlu0 %v1034, 88
      %v1058 = vpop.permute.xlu0 %1057
      %vm1067 = vcmask 786112
      %1068 = vst.msk [vmem:[#allocation3] sm:$0xff] %vm1067, %v1044
      %1069 = vst.msk [vmem:[#allocation3 + $0x10] sm:$0xff] %vm1067, %v1046
      %1070 = vst.msk [vmem:[#allocation3 + $0x20] sm:$0xff] %vm1067, %v1048
      %1071 = vst.msk [vmem:[#allocation3 + $0x30] sm:$0xff] %vm1067, %v1050
      %1072 = vst.msk [vmem:[#allocation3 + $0x40] sm:$0xff] %vm1067, %v1052
      %1073 = vst.msk [vmem:[#allocation3 + $0x50] sm:$0xff] %vm1067, %v1054
      %1074 = vst.msk [vmem:[#allocation3 + $0x60] sm:$0xff] %vm1067, %v1056
      %1075 = vst.msk [vmem:[#allocation3 + $0x70] sm:$0xff] %vm1067, %v1058
      %v1076 = vld [vmem:[%s471] sm:$0xff]
      %v1077 = vld [vmem:[%s471 + $0x10] sm:$0xff]
      %v1078 = vld [vmem:[%s471 + $0x20] sm:$0xff]
      %v1079 = vld [vmem:[%s471 + $0x30] sm:$0xff]
      %v1080 = vld [vmem:[%s471 + $0x40] sm:$0xff]
      %v1081 = vld [vmem:[%s471 + $0x50] sm:$0xff]
      %v1082 = vld [vmem:[%s471 + $0x60] sm:$0xff]
      %v1083 = vld [vmem:[%s471 + $0x70] sm:$0xff]
      %1092 = vrot.lane.b32.xlu0 %v1076, 96
      %v1093 = vpop.permute.xlu0 %1092
      %1094 = vrot.lane.b32.xlu0 %v1077, 96
      %v1095 = vpop.permute.xlu0 %1094
      %1096 = vrot.lane.b32.xlu0 %v1078, 96
      %v1097 = vpop.permute.xlu0 %1096
      %1098 = vrot.lane.b32.xlu0 %v1079, 96
      %v1099 = vpop.permute.xlu0 %1098
      %1100 = vrot.lane.b32.xlu0 %v1080, 96
      %v1101 = vpop.permute.xlu0 %1100
      %1102 = vrot.lane.b32.xlu0 %v1081, 96
      %v1103 = vpop.permute.xlu0 %1102
      %1104 = vrot.lane.b32.xlu0 %v1082, 96
      %v1105 = vpop.permute.xlu0 %1104
      %1106 = vrot.lane.b32.xlu0 %v1083, 96
      %v1107 = vpop.permute.xlu0 %1106
      %vm1116 = vcmask 851712
      %1117 = vst.msk [vmem:[#allocation3] sm:$0xff] %vm1116, %v1093
      %1118 = vst.msk [vmem:[#allocation3 + $0x10] sm:$0xff] %vm1116, %v1095
      %1119 = vst.msk [vmem:[#allocation3 + $0x20] sm:$0xff] %vm1116, %v1097
      %1120 = vst.msk [vmem:[#allocation3 + $0x30] sm:$0xff] %vm1116, %v1099
      %1121 = vst.msk [vmem:[#allocation3 + $0x40] sm:$0xff] %vm1116, %v1101
      %1122 = vst.msk [vmem:[#allocation3 + $0x50] sm:$0xff] %vm1116, %v1103
      %1123 = vst.msk [vmem:[#allocation3 + $0x60] sm:$0xff] %vm1116, %v1105
      %1124 = vst.msk [vmem:[#allocation3 + $0x70] sm:$0xff] %vm1116, %v1107
      %v1125 = vld [vmem:[%s471 + $0x1] sm:$0xff]
      %v1126 = vld [vmem:[%s471 + $0x11] sm:$0xff]
      %v1127 = vld [vmem:[%s471 + $0x21] sm:$0xff]
      %v1128 = vld [vmem:[%s471 + $0x31] sm:$0xff]
      %v1129 = vld [vmem:[%s471 + $0x41] sm:$0xff]
      %v1130 = vld [vmem:[%s471 + $0x51] sm:$0xff]
      %v1131 = vld [vmem:[%s471 + $0x61] sm:$0xff]
      %v1132 = vld [vmem:[%s471 + $0x71] sm:$0xff]
      %1141 = vrot.lane.b32.xlu0 %v1125, 104
      %v1142 = vpop.permute.xlu0 %1141
      %1143 = vrot.lane.b32.xlu0 %v1126, 104
      %v1144 = vpop.permute.xlu0 %1143
      %1145 = vrot.lane.b32.xlu0 %v1127, 104
      %v1146 = vpop.permute.xlu0 %1145
      %1147 = vrot.lane.b32.xlu0 %v1128, 104
      %v1148 = vpop.permute.xlu0 %1147
      %1149 = vrot.lane.b32.xlu0 %v1129, 104
      %v1150 = vpop.permute.xlu0 %1149
      %1151 = vrot.lane.b32.xlu0 %v1130, 104
      %v1152 = vpop.permute.xlu0 %1151
      %1153 = vrot.lane.b32.xlu0 %v1131, 104
      %v1154 = vpop.permute.xlu0 %1153
      %1155 = vrot.lane.b32.xlu0 %v1132, 104
      %v1156 = vpop.permute.xlu0 %1155
      %vm1165 = vcmask 917312
      %1166 = vst.msk [vmem:[#allocation3] sm:$0xff] %vm1165, %v1142
      %1167 = vst.msk [vmem:[#allocation3 + $0x10] sm:$0xff] %vm1165, %v1144
      %1168 = vst.msk [vmem:[#allocation3 + $0x20] sm:$0xff] %vm1165, %v1146
      %1169 = vst.msk [vmem:[#allocation3 + $0x30] sm:$0xff] %vm1165, %v1148
      %1170 = vst.msk [vmem:[#allocation3 + $0x40] sm:$0xff] %vm1165, %v1150
      %1171 = vst.msk [vmem:[#allocation3 + $0x50] sm:$0xff] %vm1165, %v1152
      %1172 = vst.msk [vmem:[#allocation3 + $0x60] sm:$0xff] %vm1165, %v1154
      %1173 = vst.msk [vmem:[#allocation3 + $0x70] sm:$0xff] %vm1165, %v1156
      %v1174 = vld [vmem:[%s471 + $0x2] sm:$0xff]
      %v1175 = vld [vmem:[%s471 + $0x12] sm:$0xff]
      %v1176 = vld [vmem:[%s471 + $0x22] sm:$0xff]
      %v1177 = vld [vmem:[%s471 + $0x32] sm:$0xff]
      %v1178 = vld [vmem:[%s471 + $0x42] sm:$0xff]
      %v1179 = vld [vmem:[%s471 + $0x52] sm:$0xff]
      %v1180 = vld [vmem:[%s471 + $0x62] sm:$0xff]
      %v1181 = vld [vmem:[%s471 + $0x72] sm:$0xff]
      %1190 = vrot.lane.b32.xlu0 %v1174, 112
      %v1191 = vpop.permute.xlu0 %1190
      %1192 = vrot.lane.b32.xlu0 %v1175, 112
      %v1193 = vpop.permute.xlu0 %1192
      %1194 = vrot.lane.b32.xlu0 %v1176, 112
      %v1195 = vpop.permute.xlu0 %1194
      %1196 = vrot.lane.b32.xlu0 %v1177, 112
      %v1197 = vpop.permute.xlu0 %1196
      %1198 = vrot.lane.b32.xlu0 %v1178, 112
      %v1199 = vpop.permute.xlu0 %1198
      %1200 = vrot.lane.b32.xlu0 %v1179, 112
      %v1201 = vpop.permute.xlu0 %1200
      %1202 = vrot.lane.b32.xlu0 %v1180, 112
      %v1203 = vpop.permute.xlu0 %1202
      %1204 = vrot.lane.b32.xlu0 %v1181, 112
      %v1205 = vpop.permute.xlu0 %1204
      %vm1214 = vcmask 982912
      %1215 = vst.msk [vmem:[#allocation3] sm:$0xff] %vm1214, %v1191
      %1216 = vst.msk [vmem:[#allocation3 + $0x10] sm:$0xff] %vm1214, %v1193
      %1217 = vst.msk [vmem:[#allocation3 + $0x20] sm:$0xff] %vm1214, %v1195
      %1218 = vst.msk [vmem:[#allocation3 + $0x30] sm:$0xff] %vm1214, %v1197
      %1219 = vst.msk [vmem:[#allocation3 + $0x40] sm:$0xff] %vm1214, %v1199
      %1220 = vst.msk [vmem:[#allocation3 + $0x50] sm:$0xff] %vm1214, %v1201
      %1221 = vst.msk [vmem:[#allocation3 + $0x60] sm:$0xff] %vm1214, %v1203
      %1222 = vst.msk [vmem:[#allocation3 + $0x70] sm:$0xff] %vm1214, %v1205
      %v1223 = vld [vmem:[%s741] sm:$0xff]
      %v1224 = vld [vmem:[%s741 + $0x10] sm:$0xff]
      %v1225 = vld [vmem:[%s741 + $0x20] sm:$0xff]
      %v1226 = vld [vmem:[%s741 + $0x30] sm:$0xff]
      %v1227 = vld [vmem:[%s741 + $0x40] sm:$0xff]
      %v1228 = vld [vmem:[%s741 + $0x50] sm:$0xff]
      %v1229 = vld [vmem:[%s741 + $0x60] sm:$0xff]
      %v1230 = vld [vmem:[%s741 + $0x70] sm:$0xff]
      %1239 = vrot.lane.b32.xlu0 %v1223, 120
      %v1240 = vpop.permute.xlu0 %1239
      %1241 = vrot.lane.b32.xlu0 %v1224, 120
      %v1242 = vpop.permute.xlu0 %1241
      %1243 = vrot.lane.b32.xlu0 %v1225, 120
      %v1244 = vpop.permute.xlu0 %1243
      %1245 = vrot.lane.b32.xlu0 %v1226, 120
      %v1246 = vpop.permute.xlu0 %1245
      %1247 = vrot.lane.b32.xlu0 %v1227, 120
      %v1248 = vpop.permute.xlu0 %1247
      %1249 = vrot.lane.b32.xlu0 %v1228, 120
      %v1250 = vpop.permute.xlu0 %1249
      %1251 = vrot.lane.b32.xlu0 %v1229, 120
      %v1252 = vpop.permute.xlu0 %1251
      %1253 = vrot.lane.b32.xlu0 %v1230, 120
      %v1254 = vpop.permute.xlu0 %1253
      %vm1263 = vcmask 1048512
      %1264 = vst.msk [vmem:[#allocation3] sm:$0xff] %vm1263, %v1240
      %1265 = vst.msk [vmem:[#allocation3 + $0x10] sm:$0xff] %vm1263, %v1242
      %1266 = vst.msk [vmem:[#allocation3 + $0x20] sm:$0xff] %vm1263, %v1244
      %1267 = vst.msk [vmem:[#allocation3 + $0x30] sm:$0xff] %vm1263, %v1246
      %1268 = vst.msk [vmem:[#allocation3 + $0x40] sm:$0xff] %vm1263, %v1248
      %1269 = vst.msk [vmem:[#allocation3 + $0x50] sm:$0xff] %vm1263, %v1250
      %1270 = vst.msk [vmem:[#allocation3 + $0x60] sm:$0xff] %vm1263, %v1252
      %1271 = vst.msk [vmem:[#allocation3 + $0x70] sm:$0xff] %vm1263, %v1254
      %v1272 = vld [vmem:[%s741 + $0x1] sm:$0xff]
      %v1273 = vld [vmem:[%s741 + $0x11] sm:$0xff]
      %v1274 = vld [vmem:[%s741 + $0x21] sm:$0xff]
      %v1275 = vld [vmem:[%s741 + $0x31] sm:$0xff]
      %v1276 = vld [vmem:[%s741 + $0x41] sm:$0xff]
      %v1277 = vld [vmem:[%s741 + $0x51] sm:$0xff]
      %v1278 = vld [vmem:[%s741 + $0x61] sm:$0xff]
      %v1279 = vld [vmem:[%s741 + $0x71] sm:$0xff]
      %1280 = vst.msk [vmem:[#allocation3 + $0x8] sm:$0xff] %vm385, %v1272
      %1281 = vst.msk [vmem:[#allocation3 + $0x18] sm:$0xff] %vm385, %v1273
      %1282 = vst.msk [vmem:[#allocation3 + $0x28] sm:$0xff] %vm385, %v1274
      %1283 = vst.msk [vmem:[#allocation3 + $0x38] sm:$0xff] %vm385, %v1275
      %1284 = vst.msk [vmem:[#allocation3 + $0x48] sm:$0xff] %vm385, %v1276
      %1285 = vst.msk [vmem:[#allocation3 + $0x58] sm:$0xff] %vm385, %v1277
      %1286 = vst.msk [vmem:[#allocation3 + $0x68] sm:$0xff] %vm385, %v1278
      %1287 = vst.msk [vmem:[#allocation3 + $0x78] sm:$0xff] %vm385, %v1279
      %v1288 = vld [vmem:[%s741 + $0x2] sm:$0xff]
      %v1289 = vld [vmem:[%s741 + $0x12] sm:$0xff]
      %v1290 = vld [vmem:[%s741 + $0x22] sm:$0xff]
      %v1291 = vld [vmem:[%s741 + $0x32] sm:$0xff]
      %v1292 = vld [vmem:[%s741 + $0x42] sm:$0xff]
      %v1293 = vld [vmem:[%s741 + $0x52] sm:$0xff]
      %v1294 = vld [vmem:[%s741 + $0x62] sm:$0xff]
      %v1295 = vld [vmem:[%s741 + $0x72] sm:$0xff]
      %1304 = vrot.lane.b32.xlu0 %v1288, 8
      %v1305 = vpop.permute.xlu0 %1304
      %1306 = vrot.lane.b32.xlu0 %v1289, 8
      %v1307 = vpop.permute.xlu0 %1306
      %1308 = vrot.lane.b32.xlu0 %v1290, 8
      %v1309 = vpop.permute.xlu0 %1308
      %1310 = vrot.lane.b32.xlu0 %v1291, 8
      %v1311 = vpop.permute.xlu0 %1310
      %1312 = vrot.lane.b32.xlu0 %v1292, 8
      %v1313 = vpop.permute.xlu0 %1312
      %1314 = vrot.lane.b32.xlu0 %v1293, 8
      %v1315 = vpop.permute.xlu0 %1314
      %1316 = vrot.lane.b32.xlu0 %v1294, 8
      %v1317 = vpop.permute.xlu0 %1316
      %1318 = vrot.lane.b32.xlu0 %v1295, 8
      %v1319 = vpop.permute.xlu0 %1318
      %1328 = vst.msk [vmem:[#allocation3 + $0x8] sm:$0xff] %vm536, %v1305
      %1329 = vst.msk [vmem:[#allocation3 + $0x18] sm:$0xff] %vm536, %v1307
      %1330 = vst.msk [vmem:[#allocation3 + $0x28] sm:$0xff] %vm536, %v1309
      %1331 = vst.msk [vmem:[#allocation3 + $0x38] sm:$0xff] %vm536, %v1311
      %1332 = vst.msk [vmem:[#allocation3 + $0x48] sm:$0xff] %vm536, %v1313
      %1333 = vst.msk [vmem:[#allocation3 + $0x58] sm:$0xff] %vm536, %v1315
      %1334 = vst.msk [vmem:[#allocation3 + $0x68] sm:$0xff] %vm536, %v1317
      %1335 = vst.msk [vmem:[#allocation3 + $0x78] sm:$0xff] %vm536, %v1319
      %v1336 = vld [vmem:[%s359] sm:$0xf]
      %v1337 = vld [vmem:[%s359 + $0x4] sm:$0xf]
      %v1338 = vld [vmem:[%s359 + $0x8] sm:$0xf]
      %v1339 = vld [vmem:[%s359 + $0xc] sm:$0xf]
      %v1340 = vld [vmem:[%s359 + $0x10] sm:$0xf]
      %v1341 = vld [vmem:[%s359 + $0x14] sm:$0xf]
      %v1342 = vld [vmem:[%s359 + $0x18] sm:$0xf]
      %v1343 = vld [vmem:[%s359 + $0x1c] sm:$0xf]
      %v1344 = vunpack.c.l.bf16 %v1336
      %v1345 = vunpack.c.l.bf16 %v1337
      %v1346 = vunpack.c.l.bf16 %v1338
      %v1347 = vunpack.c.l.bf16 %v1339
      %v1348 = vunpack.c.l.bf16 %v1340
      %v1349 = vunpack.c.l.bf16 %v1341
      %v1350 = vunpack.c.l.bf16 %v1342
      %v1351 = vunpack.c.l.bf16 %v1343
      %v1352 = vmul.f32 %v1344, %v435
      %v1353 = vmul.f32 %v1345, %v435
      %v1354 = vmul.f32 %v1346, %v435
      %v1355 = vmul.f32 %v1347, %v435
      %v1356 = vmul.f32 %v1348, %v435
      %v1357 = vmul.f32 %v1349, %v435
      %v1358 = vmul.f32 %v1350, %v435
      %v1359 = vmul.f32 %v1351, %v435
      %v1360 = vadd.f32 %v1352, %v449
      %v1361 = vadd.f32 %v1353, %v449
      %v1362 = vadd.f32 %v1354, %v449
      %v1363 = vadd.f32 %v1355, %v449
      %v1364 = vadd.f32 %v1356, %v449
      %v1365 = vadd.f32 %v1357, %v449
      %v1366 = vadd.f32 %v1358, %v449
      %v1367 = vadd.f32 %v1359, %v449
      %p1368 = scmp.lt.s32.totalorder %s384, 7
      %s1369 = scalar_select %p1368, 1, 0
      %v1370 = vstv %s1369
      %vm1371 = vcmp.eq.s32.totalorder %v1370, 1
      %v1372 = vsel %vm1371, %v1360, 0.0
      %v1373 = vsel %vm1371, %v1361, 0.0
      %v1374 = vsel %vm1371, %v1362, 0.0
      %v1375 = vsel %vm1371, %v1363, 0.0
      %v1376 = vsel %vm1371, %v1364, 0.0
      %v1377 = vsel %vm1371, %v1365, 0.0
      %v1378 = vsel %vm1371, %v1366, 0.0
      %v1379 = vsel %vm1371, %v1367, 0.0
      %1380 = vst.msk [vmem:[%s471 + $0x1] sm:$0xff] %vm385, %v1372
      %1381 = vst.msk [vmem:[%s471 + $0x11] sm:$0xff] %vm385, %v1373
      %1382 = vst.msk [vmem:[%s471 + $0x21] sm:$0xff] %vm385, %v1374
      %1383 = vst.msk [vmem:[%s471 + $0x31] sm:$0xff] %vm385, %v1375
      %1384 = vst.msk [vmem:[%s471 + $0x41] sm:$0xff] %vm385, %v1376
      %1385 = vst.msk [vmem:[%s471 + $0x51] sm:$0xff] %vm385, %v1377
      %1386 = vst.msk [vmem:[%s471 + $0x61] sm:$0xff] %vm385, %v1378
      %1387 = vst.msk [vmem:[%s471 + $0x71] sm:$0xff] %vm385, %v1379
      %v1388 = vld [vmem:[#allocation2] sm:$0xff]
      %v1389 = vld [vmem:[#allocation2 + $0x10] sm:$0xff]
      %v1390 = vld [vmem:[#allocation2 + $0x20] sm:$0xff]
      %v1391 = vld [vmem:[#allocation2 + $0x30] sm:$0xff]
      %v1392 = vld [vmem:[#allocation2 + $0x40] sm:$0xff]
      %v1393 = vld [vmem:[#allocation2 + $0x50] sm:$0xff]
      %v1394 = vld [vmem:[#allocation2 + $0x60] sm:$0xff]
      %v1395 = vld [vmem:[#allocation2 + $0x70] sm:$0xff]
      %1404 = vrot.lane.b32.xlu0 %v1388, 16
      %v1405 = vpop.permute.xlu0 %1404
      %1406 = vrot.lane.b32.xlu0 %v1389, 16
      %v1407 = vpop.permute.xlu0 %1406
      %1408 = vrot.lane.b32.xlu0 %v1390, 16
      %v1409 = vpop.permute.xlu0 %1408
      %1410 = vrot.lane.b32.xlu0 %v1391, 16
      %v1411 = vpop.permute.xlu0 %1410
      %1412 = vrot.lane.b32.xlu0 %v1392, 16
      %v1413 = vpop.permute.xlu0 %1412
      %1414 = vrot.lane.b32.xlu0 %v1393, 16
      %v1415 = vpop.permute.xlu0 %1414
      %1416 = vrot.lane.b32.xlu0 %v1394, 16
      %v1417 = vpop.permute.xlu0 %1416
      %1418 = vrot.lane.b32.xlu0 %v1395, 16
      %v1419 = vpop.permute.xlu0 %1418
      %1428 = vst.msk [vmem:[#allocation3 + $0x8] sm:$0xff] %vm585, %v1405
      %1429 = vst.msk [vmem:[#allocation3 + $0x18] sm:$0xff] %vm585, %v1407
      %1430 = vst.msk [vmem:[#allocation3 + $0x28] sm:$0xff] %vm585, %v1409
      %1431 = vst.msk [vmem:[#allocation3 + $0x38] sm:$0xff] %vm585, %v1411
      %1432 = vst.msk [vmem:[#allocation3 + $0x48] sm:$0xff] %vm585, %v1413
      %1433 = vst.msk [vmem:[#allocation3 + $0x58] sm:$0xff] %vm585, %v1415
      %1434 = vst.msk [vmem:[#allocation3 + $0x68] sm:$0xff] %vm585, %v1417
      %1435 = vst.msk [vmem:[#allocation3 + $0x78] sm:$0xff] %vm585, %v1419
      %v1436 = vld [vmem:[#allocation2 + $0x1] sm:$0xff]
      %v1437 = vld [vmem:[#allocation2 + $0x11] sm:$0xff]
      %v1438 = vld [vmem:[#allocation2 + $0x21] sm:$0xff]
      %v1439 = vld [vmem:[#allocation2 + $0x31] sm:$0xff]
      %v1440 = vld [vmem:[#allocation2 + $0x41] sm:$0xff]
      %v1441 = vld [vmem:[#allocation2 + $0x51] sm:$0xff]
      %v1442 = vld [vmem:[#allocation2 + $0x61] sm:$0xff]
      %v1443 = vld [vmem:[#allocation2 + $0x71] sm:$0xff]
      %1452 = vrot.lane.b32.xlu0 %v1436, 24
      %v1453 = vpop.permute.xlu0 %1452
      %1454 = vrot.lane.b32.xlu0 %v1437, 24
      %v1455 = vpop.permute.xlu0 %1454
      %1456 = vrot.lane.b32.xlu0 %v1438, 24
      %v1457 = vpop.permute.xlu0 %1456
      %1458 = vrot.lane.b32.xlu0 %v1439, 24
      %v1459 = vpop.permute.xlu0 %1458
      %1460 = vrot.lane.b32.xlu0 %v1440, 24
      %v1461 = vpop.permute.xlu0 %1460
      %1462 = vrot.lane.b32.xlu0 %v1441, 24
      %v1463 = vpop.permute.xlu0 %1462
      %1464 = vrot.lane.b32.xlu0 %v1442, 24
      %v1465 = vpop.permute.xlu0 %1464
      %1466 = vrot.lane.b32.xlu0 %v1443, 24
      %v1467 = vpop.permute.xlu0 %1466
      %1476 = vst.msk [vmem:[#allocation3 + $0x8] sm:$0xff] %vm634, %v1453
      %1477 = vst.msk [vmem:[#allocation3 + $0x18] sm:$0xff] %vm634, %v1455
      %1478 = vst.msk [vmem:[#allocation3 + $0x28] sm:$0xff] %vm634, %v1457
      %1479 = vst.msk [vmem:[#allocation3 + $0x38] sm:$0xff] %vm634, %v1459
      %1480 = vst.msk [vmem:[#allocation3 + $0x48] sm:$0xff] %vm634, %v1461
      %1481 = vst.msk [vmem:[#allocation3 + $0x58] sm:$0xff] %vm634, %v1463
      %1482 = vst.msk [vmem:[#allocation3 + $0x68] sm:$0xff] %vm634, %v1465
      %1483 = vst.msk [vmem:[#allocation3 + $0x78] sm:$0xff] %vm634, %v1467
      %v1484 = vld [vmem:[#allocation2 + $0x2] sm:$0xff]
      %v1485 = vld [vmem:[#allocation2 + $0x12] sm:$0xff]
      %v1486 = vld [vmem:[#allocation2 + $0x22] sm:$0xff]
      %v1487 = vld [vmem:[#allocation2 + $0x32] sm:$0xff]
      %v1488 = vld [vmem:[#allocation2 + $0x42] sm:$0xff]
      %v1489 = vld [vmem:[#allocation2 + $0x52] sm:$0xff]
      %v1490 = vld [vmem:[#allocation2 + $0x62] sm:$0xff]
      %v1491 = vld [vmem:[#allocation2 + $0x72] sm:$0xff]
      %1500 = vrot.lane.b32.xlu0 %v1484, 32
      %v1501 = vpop.permute.xlu0 %1500
      %1502 = vrot.lane.b32.xlu0 %v1485, 32
      %v1503 = vpop.permute.xlu0 %1502
      %1504 = vrot.lane.b32.xlu0 %v1486, 32
      %v1505 = vpop.permute.xlu0 %1504
      %1506 = vrot.lane.b32.xlu0 %v1487, 32
      %v1507 = vpop.permute.xlu0 %1506
      %1508 = vrot.lane.b32.xlu0 %v1488, 32
      %v1509 = vpop.permute.xlu0 %1508
      %1510 = vrot.lane.b32.xlu0 %v1489, 32
      %v1511 = vpop.permute.xlu0 %1510
      %1512 = vrot.lane.b32.xlu0 %v1490, 32
      %v1513 = vpop.permute.xlu0 %1512
      %1514 = vrot.lane.b32.xlu0 %v1491, 32
      %v1515 = vpop.permute.xlu0 %1514
      %1524 = vst.msk [vmem:[#allocation3 + $0x8] sm:$0xff] %vm683, %v1501
      %1525 = vst.msk [vmem:[#allocation3 + $0x18] sm:$0xff] %vm683, %v1503
      %1526 = vst.msk [vmem:[#allocation3 + $0x28] sm:$0xff] %vm683, %v1505
      %1527 = vst.msk [vmem:[#allocation3 + $0x38] sm:$0xff] %vm683, %v1507
      %1528 = vst.msk [vmem:[#allocation3 + $0x48] sm:$0xff] %vm683, %v1509
      %1529 = vst.msk [vmem:[#allocation3 + $0x58] sm:$0xff] %vm683, %v1511
      %1530 = vst.msk [vmem:[#allocation3 + $0x68] sm:$0xff] %vm683, %v1513
      %1531 = vst.msk [vmem:[#allocation3 + $0x78] sm:$0xff] %vm683, %v1515
      %v1532 = vld [vmem:[%s471] sm:$0xff]
      %v1533 = vld [vmem:[%s471 + $0x10] sm:$0xff]
      %v1534 = vld [vmem:[%s471 + $0x20] sm:$0xff]
      %v1535 = vld [vmem:[%s471 + $0x30] sm:$0xff]
      %v1536 = vld [vmem:[%s471 + $0x40] sm:$0xff]
      %v1537 = vld [vmem:[%s471 + $0x50] sm:$0xff]
      %v1538 = vld [vmem:[%s471 + $0x60] sm:$0xff]
      %v1539 = vld [vmem:[%s471 + $0x70] sm:$0xff]
      %1548 = vrot.lane.b32.xlu0 %v1532, 40
      %v1549 = vpop.permute.xlu0 %1548
      %1550 = vrot.lane.b32.xlu0 %v1533, 40
      %v1551 = vpop.permute.xlu0 %1550
      %1552 = vrot.lane.b32.xlu0 %v1534, 40
      %v1553 = vpop.permute.xlu0 %1552
      %1554 = vrot.lane.b32.xlu0 %v1535, 40
      %v1555 = vpop.permute.xlu0 %1554
      %1556 = vrot.lane.b32.xlu0 %v1536, 40
      %v1557 = vpop.permute.xlu0 %1556
      %1558 = vrot.lane.b32.xlu0 %v1537, 40
      %v1559 = vpop.permute.xlu0 %1558
      %1560 = vrot.lane.b32.xlu0 %v1538, 40
      %v1561 = vpop.permute.xlu0 %1560
      %1562 = vrot.lane.b32.xlu0 %v1539, 40
      %v1563 = vpop.permute.xlu0 %1562
      %1572 = vst.msk [vmem:[#allocation3 + $0x8] sm:$0xff] %vm732, %v1549
      %1573 = vst.msk [vmem:[#allocation3 + $0x18] sm:$0xff] %vm732, %v1551
      %1574 = vst.msk [vmem:[#allocation3 + $0x28] sm:$0xff] %vm732, %v1553
      %1575 = vst.msk [vmem:[#allocation3 + $0x38] sm:$0xff] %vm732, %v1555
      %1576 = vst.msk [vmem:[#allocation3 + $0x48] sm:$0xff] %vm732, %v1557
      %1577 = vst.msk [vmem:[#allocation3 + $0x58] sm:$0xff] %vm732, %v1559
      %1578 = vst.msk [vmem:[#allocation3 + $0x68] sm:$0xff] %vm732, %v1561
      %1579 = vst.msk [vmem:[#allocation3 + $0x78] sm:$0xff] %vm732, %v1563
      %v1580 = vld [vmem:[%s471 + $0x1] sm:$0xff]
      %v1581 = vld [vmem:[%s471 + $0x11] sm:$0xff]
      %v1582 = vld [vmem:[%s471 + $0x21] sm:$0xff]
      %v1583 = vld [vmem:[%s471 + $0x31] sm:$0xff]
      %v1584 = vld [vmem:[%s471 + $0x41] sm:$0xff]
      %v1585 = vld [vmem:[%s471 + $0x51] sm:$0xff]
      %v1586 = vld [vmem:[%s471 + $0x61] sm:$0xff]
      %v1587 = vld [vmem:[%s471 + $0x71] sm:$0xff]
      %1596 = vrot.lane.b32.xlu0 %v1580, 48
      %v1597 = vpop.permute.xlu0 %1596
      %1598 = vrot.lane.b32.xlu0 %v1581, 48
      %v1599 = vpop.permute.xlu0 %1598
      %1600 = vrot.lane.b32.xlu0 %v1582, 48
      %v1601 = vpop.permute.xlu0 %1600
      %1602 = vrot.lane.b32.xlu0 %v1583, 48
      %v1603 = vpop.permute.xlu0 %1602
      %1604 = vrot.lane.b32.xlu0 %v1584, 48
      %v1605 = vpop.permute.xlu0 %1604
      %1606 = vrot.lane.b32.xlu0 %v1585, 48
      %v1607 = vpop.permute.xlu0 %1606
      %1608 = vrot.lane.b32.xlu0 %v1586, 48
      %v1609 = vpop.permute.xlu0 %1608
      %1610 = vrot.lane.b32.xlu0 %v1587, 48
      %v1611 = vpop.permute.xlu0 %1610
      %1620 = vst.msk [vmem:[#allocation3 + $0x8] sm:$0xff] %vm782, %v1597
      %1621 = vst.msk [vmem:[#allocation3 + $0x18] sm:$0xff] %vm782, %v1599
      %1622 = vst.msk [vmem:[#allocation3 + $0x28] sm:$0xff] %vm782, %v1601
      %1623 = vst.msk [vmem:[#allocation3 + $0x38] sm:$0xff] %vm782, %v1603
      %1624 = vst.msk [vmem:[#allocation3 + $0x48] sm:$0xff] %vm782, %v1605
      %1625 = vst.msk [vmem:[#allocation3 + $0x58] sm:$0xff] %vm782, %v1607
      %1626 = vst.msk [vmem:[#allocation3 + $0x68] sm:$0xff] %vm782, %v1609
      %1627 = vst.msk [vmem:[#allocation3 + $0x78] sm:$0xff] %vm782, %v1611
      %v1628 = vld [vmem:[%s471 + $0x2] sm:$0xff]
      %v1629 = vld [vmem:[%s471 + $0x12] sm:$0xff]
      %v1630 = vld [vmem:[%s471 + $0x22] sm:$0xff]
      %v1631 = vld [vmem:[%s471 + $0x32] sm:$0xff]
      %v1632 = vld [vmem:[%s471 + $0x42] sm:$0xff]
      %v1633 = vld [vmem:[%s471 + $0x52] sm:$0xff]
      %v1634 = vld [vmem:[%s471 + $0x62] sm:$0xff]
      %v1635 = vld [vmem:[%s471 + $0x72] sm:$0xff]
      %1644 = vrot.lane.b32.xlu0 %v1628, 56
      %v1645 = vpop.permute.xlu0 %1644
      %1646 = vrot.lane.b32.xlu0 %v1629, 56
      %v1647 = vpop.permute.xlu0 %1646
      %1648 = vrot.lane.b32.xlu0 %v1630, 56
      %v1649 = vpop.permute.xlu0 %1648
      %1650 = vrot.lane.b32.xlu0 %v1631, 56
      %v1651 = vpop.permute.xlu0 %1650
      %1652 = vrot.lane.b32.xlu0 %v1632, 56
      %v1653 = vpop.permute.xlu0 %1652
      %1654 = vrot.lane.b32.xlu0 %v1633, 56
      %v1655 = vpop.permute.xlu0 %1654
      %1656 = vrot.lane.b32.xlu0 %v1634, 56
      %v1657 = vpop.permute.xlu0 %1656
      %1658 = vrot.lane.b32.xlu0 %v1635, 56
      %v1659 = vpop.permute.xlu0 %1658
      %1668 = vst.msk [vmem:[#allocation3 + $0x8] sm:$0xff] %vm831, %v1645
      %1669 = vst.msk [vmem:[#allocation3 + $0x18] sm:$0xff] %vm831, %v1647
      %1670 = vst.msk [vmem:[#allocation3 + $0x28] sm:$0xff] %vm831, %v1649
      %1671 = vst.msk [vmem:[#allocation3 + $0x38] sm:$0xff] %vm831, %v1651
      %1672 = vst.msk [vmem:[#allocation3 + $0x48] sm:$0xff] %vm831, %v1653
      %1673 = vst.msk [vmem:[#allocation3 + $0x58] sm:$0xff] %vm831, %v1655
      %1674 = vst.msk [vmem:[#allocation3 + $0x68] sm:$0xff] %vm831, %v1657
      %1675 = vst.msk [vmem:[#allocation3 + $0x78] sm:$0xff] %vm831, %v1659
      %v1676 = vld [vmem:[%s741] sm:$0xff]
      %v1677 = vld [vmem:[%s741 + $0x10] sm:$0xff]
      %v1678 = vld [vmem:[%s741 + $0x20] sm:$0xff]
      %v1679 = vld [vmem:[%s741 + $0x30] sm:$0xff]
      %v1680 = vld [vmem:[%s741 + $0x40] sm:$0xff]
      %v1681 = vld [vmem:[%s741 + $0x50] sm:$0xff]
      %v1682 = vld [vmem:[%s741 + $0x60] sm:$0xff]
      %v1683 = vld [vmem:[%s741 + $0x70] sm:$0xff]
      %1692 = vrot.lane.b32.xlu0 %v1676, 64
      %v1693 = vpop.permute.xlu0 %1692
      %1694 = vrot.lane.b32.xlu0 %v1677, 64
      %v1695 = vpop.permute.xlu0 %1694
      %1696 = vrot.lane.b32.xlu0 %v1678, 64
      %v1697 = vpop.permute.xlu0 %1696
      %1698 = vrot.lane.b32.xlu0 %v1679, 64
      %v1699 = vpop.permute.xlu0 %1698
      %1700 = vrot.lane.b32.xlu0 %v1680, 64
      %v1701 = vpop.permute.xlu0 %1700
      %1702 = vrot.lane.b32.xlu0 %v1681, 64
      %v1703 = vpop.permute.xlu0 %1702
      %1704 = vrot.lane.b32.xlu0 %v1682, 64
      %v1705 = vpop.permute.xlu0 %1704
      %1706 = vrot.lane.b32.xlu0 %v1683, 64
      %v1707 = vpop.permute.xlu0 %1706
      %1716 = vst.msk [vmem:[#allocation3 + $0x8] sm:$0xff] %vm880, %v1693
      %1717 = vst.msk [vmem:[#allocation3 + $0x18] sm:$0xff] %vm880, %v1695
      %1718 = vst.msk [vmem:[#allocation3 + $0x28] sm:$0xff] %vm880, %v1697
      %1719 = vst.msk [vmem:[#allocation3 + $0x38] sm:$0xff] %vm880, %v1699
      %1720 = vst.msk [vmem:[#allocation3 + $0x48] sm:$0xff] %vm880, %v1701
      %1721 = vst.msk [vmem:[#allocation3 + $0x58] sm:$0xff] %vm880, %v1703
      %1722 = vst.msk [vmem:[#allocation3 + $0x68] sm:$0xff] %vm880, %v1705
      %1723 = vst.msk [vmem:[#allocation3 + $0x78] sm:$0xff] %vm880, %v1707
      %v1724 = vld [vmem:[%s741 + $0x1] sm:$0xff]
      %v1725 = vld [vmem:[%s741 + $0x11] sm:$0xff]
      %v1726 = vld [vmem:[%s741 + $0x21] sm:$0xff]
      %v1727 = vld [vmem:[%s741 + $0x31] sm:$0xff]
      %v1728 = vld [vmem:[%s741 + $0x41] sm:$0xff]
      %v1729 = vld [vmem:[%s741 + $0x51] sm:$0xff]
      %v1730 = vld [vmem:[%s741 + $0x61] sm:$0xff]
      %v1731 = vld [vmem:[%s741 + $0x71] sm:$0xff]
      %1740 = vrot.lane.b32.xlu0 %v1724, 72
      %v1741 = vpop.permute.xlu0 %1740
      %1742 = vrot.lane.b32.xlu0 %v1725, 72
      %v1743 = vpop.permute.xlu0 %1742
      %1744 = vrot.lane.b32.xlu0 %v1726, 72
      %v1745 = vpop.permute.xlu0 %1744
      %1746 = vrot.lane.b32.xlu0 %v1727, 72
      %v1747 = vpop.permute.xlu0 %1746
      %1748 = vrot.lane.b32.xlu0 %v1728, 72
      %v1749 = vpop.permute.xlu0 %1748
      %1750 = vrot.lane.b32.xlu0 %v1729, 72
      %v1751 = vpop.permute.xlu0 %1750
      %1752 = vrot.lane.b32.xlu0 %v1730, 72
      %v1753 = vpop.permute.xlu0 %1752
      %1754 = vrot.lane.b32.xlu0 %v1731, 72
      %v1755 = vpop.permute.xlu0 %1754
      %1764 = vst.msk [vmem:[#allocation3 + $0x8] sm:$0xff] %vm969, %v1741
      %1765 = vst.msk [vmem:[#allocation3 + $0x18] sm:$0xff] %vm969, %v1743
      %1766 = vst.msk [vmem:[#allocation3 + $0x28] sm:$0xff] %vm969, %v1745
      %1767 = vst.msk [vmem:[#allocation3 + $0x38] sm:$0xff] %vm969, %v1747
      %1768 = vst.msk [vmem:[#allocation3 + $0x48] sm:$0xff] %vm969, %v1749
      %1769 = vst.msk [vmem:[#allocation3 + $0x58] sm:$0xff] %vm969, %v1751
      %1770 = vst.msk [vmem:[#allocation3 + $0x68] sm:$0xff] %vm969, %v1753
      %1771 = vst.msk [vmem:[#allocation3 + $0x78] sm:$0xff] %vm969, %v1755
      %v1772 = vld [vmem:[%s741 + $0x2] sm:$0xff]
      %v1773 = vld [vmem:[%s741 + $0x12] sm:$0xff]
      %v1774 = vld [vmem:[%s741 + $0x22] sm:$0xff]
      %v1775 = vld [vmem:[%s741 + $0x32] sm:$0xff]
      %v1776 = vld [vmem:[%s741 + $0x42] sm:$0xff]
      %v1777 = vld [vmem:[%s741 + $0x52] sm:$0xff]
      %v1778 = vld [vmem:[%s741 + $0x62] sm:$0xff]
      %v1779 = vld [vmem:[%s741 + $0x72] sm:$0xff]
      %1788 = vrot.lane.b32.xlu0 %v1772, 80
      %v1789 = vpop.permute.xlu0 %1788
      %1790 = vrot.lane.b32.xlu0 %v1773, 80
      %v1791 = vpop.permute.xlu0 %1790
      %1792 = vrot.lane.b32.xlu0 %v1774, 80
      %v1793 = vpop.permute.xlu0 %1792
      %1794 = vrot.lane.b32.xlu0 %v1775, 80
      %v1795 = vpop.permute.xlu0 %1794
      %1796 = vrot.lane.b32.xlu0 %v1776, 80
      %v1797 = vpop.permute.xlu0 %1796
      %1798 = vrot.lane.b32.xlu0 %v1777, 80
      %v1799 = vpop.permute.xlu0 %1798
      %1800 = vrot.lane.b32.xlu0 %v1778, 80
      %v1801 = vpop.permute.xlu0 %1800
      %1802 = vrot.lane.b32.xlu0 %v1779, 80
      %v1803 = vpop.permute.xlu0 %1802
      %1812 = vst.msk [vmem:[#allocation3 + $0x8] sm:$0xff] %vm1018, %v1789
      %1813 = vst.msk [vmem:[#allocation3 + $0x18] sm:$0xff] %vm1018, %v1791
      %1814 = vst.msk [vmem:[#allocation3 + $0x28] sm:$0xff] %vm1018, %v1793
      %1815 = vst.msk [vmem:[#allocation3 + $0x38] sm:$0xff] %vm1018, %v1795
      %1816 = vst.msk [vmem:[#allocation3 + $0x48] sm:$0xff] %vm1018, %v1797
      %1817 = vst.msk [vmem:[#allocation3 + $0x58] sm:$0xff] %vm1018, %v1799
      %1818 = vst.msk [vmem:[#allocation3 + $0x68] sm:$0xff] %vm1018, %v1801
      %1819 = vst.msk [vmem:[#allocation3 + $0x78] sm:$0xff] %vm1018, %v1803
      %v1820 = vld [vmem:[#allocation3] sm:$0xff]
      %v1821 = vld [vmem:[#allocation3 + $0x8] sm:$0xff]
      %v1822 = vld [vmem:[#allocation3 + $0x10] sm:$0xff]
      %v1823 = vld [vmem:[#allocation3 + $0x18] sm:$0xff]
      %v1824 = vld [vmem:[#allocation3 + $0x20] sm:$0xff]
      %v1825 = vld [vmem:[#allocation3 + $0x28] sm:$0xff]
      %v1826 = vld [vmem:[#allocation3 + $0x30] sm:$0xff]
      %v1827 = vld [vmem:[#allocation3 + $0x38] sm:$0xff]
      %v1828 = vld [vmem:[#allocation3 + $0x40] sm:$0xff]
      %v1829 = vld [vmem:[#allocation3 + $0x48] sm:$0xff]
      %v1830 = vld [vmem:[#allocation3 + $0x50] sm:$0xff]
      %v1831 = vld [vmem:[#allocation3 + $0x58] sm:$0xff]
      %v1832 = vld [vmem:[#allocation3 + $0x60] sm:$0xff]
      %v1833 = vld [vmem:[#allocation3 + $0x68] sm:$0xff]
      %v1834 = vld [vmem:[#allocation3 + $0x70] sm:$0xff]
      %v1835 = vld [vmem:[#allocation3 + $0x78] sm:$0xff]
      %v1836 = vpack.c.bf16 %v1822, %v1820
      %v1837 = vpack.c.bf16 %v1823, %v1821
      %v1838 = vpack.c.bf16 %v1826, %v1824
      %v1839 = vpack.c.bf16 %v1827, %v1825
      %v1840 = vpack.c.bf16 %v1830, %v1828
      %v1841 = vpack.c.bf16 %v1831, %v1829
      %v1842 = vpack.c.bf16 %v1834, %v1832
      %v1843 = vpack.c.bf16 %v1835, %v1833
      %v1844 = vld [vmem:[%s3] sm:$0xf]
      %v1845 = vld [vmem:[%s3 + $0x4] sm:$0xf]
      %v1846 = vld [vmem:[%s3 + $0x8] sm:$0xf]
      %v1847 = vld [vmem:[%s3 + $0xc] sm:$0xf]
      %v1848 = vld [vmem:[%s3 + $0x10] sm:$0xf]
      %v1849 = vld [vmem:[%s3 + $0x14] sm:$0xf]
      %v1850 = vld [vmem:[%s3 + $0x18] sm:$0xf]
      %v1851 = vld [vmem:[%s3 + $0x1c] sm:$0xf]
      %v1852 = vld [vmem:[%s3 + $0x20] sm:$0xf]
      %v1853 = vld [vmem:[%s3 + $0x24] sm:$0xf]
      %v1854 = vld [vmem:[%s3 + $0x28] sm:$0xf]
      %v1855 = vld [vmem:[%s3 + $0x2c] sm:$0xf]
      %v1856 = vld [vmem:[%s3 + $0x30] sm:$0xf]
      %v1857 = vld [vmem:[%s3 + $0x34] sm:$0xf]
      %v1858 = vld [vmem:[%s3 + $0x38] sm:$0xf]
      %v1859 = vld [vmem:[%s3 + $0x3c] sm:$0xf]
      %v1860 = vld [vmem:[%s3 + $0x40] sm:$0xf]
      %v1861 = vld [vmem:[%s3 + $0x44] sm:$0xf]
      %v1862 = vld [vmem:[%s3 + $0x48] sm:$0xf]
      %v1863 = vld [vmem:[%s3 + $0x4c] sm:$0xf]
      %v1864 = vld [vmem:[%s3 + $0x50] sm:$0xf]
      %v1865 = vld [vmem:[%s3 + $0x54] sm:$0xf]
      %v1866 = vld [vmem:[%s3 + $0x58] sm:$0xf]
      %v1867 = vld [vmem:[%s3 + $0x5c] sm:$0xf]
      %v1868 = vld [vmem:[%s3 + $0x60] sm:$0xf]
      %v1869 = vld [vmem:[%s3 + $0x64] sm:$0xf]
      %v1870 = vld [vmem:[%s3 + $0x68] sm:$0xf]
      %v1898 = vunpack.c.l.b16 %v1844
      %v1899 = vunpack.c.l.b16 %v1845
      %v1900 = vunpack.c.l.b16 %v1846
      %v1901 = vunpack.c.l.b16 %v1847
      %v1902 = vunpack.c.l.b16 %v1848
      %v1903 = vunpack.c.l.b16 %v1849
      %v1904 = vunpack.c.l.b16 %v1850
      %v1905 = vunpack.c.l.b16 %v1851
      %v1906 = vunpack.c.l.b16 %v1852
      %v1907 = vunpack.c.l.b16 %v1853
      %v1908 = vunpack.c.l.b16 %v1854
      %v1909 = vunpack.c.l.b16 %v1855
      %v1910 = vunpack.c.l.b16 %v1856
      %v1911 = vunpack.c.l.b16 %v1857
      %v1912 = vunpack.c.l.b16 %v1858
      %v1913 = vunpack.c.l.b16 %v1859
      %v1914 = vunpack.c.l.b16 %v1860
      %v1915 = vunpack.c.l.b16 %v1861
      %v1916 = vunpack.c.l.b16 %v1862
      %v1917 = vunpack.c.l.b16 %v1863
      %v1918 = vunpack.c.l.b16 %v1864
      %v1919 = vunpack.c.l.b16 %v1865
      %v1920 = vunpack.c.l.b16 %v1866
      %v1921 = vunpack.c.l.b16 %v1867
      %v1922 = vunpack.c.l.b16 %v1868
      %v1923 = vunpack.c.l.b16 %v1869
      %v1924 = vunpack.c.l.b16 %v1870
      %v1925 = vpack.c.b16 %v1899, %v1898
      %v1926 = vpack.c.b16 %v1901, %v1900
      %v1927 = vpack.c.b16 %v1903, %v1902
      %v1928 = vpack.c.b16 %v1905, %v1904
      %v1929 = vpack.c.b16 %v1907, %v1906
      %v1930 = vpack.c.b16 %v1909, %v1908
      %v1931 = vpack.c.b16 %v1911, %v1910
      %v1932 = vpack.c.b16 %v1913, %v1912
      %v1933 = vpack.c.b16 %v1915, %v1914
      %v1934 = vpack.c.b16 %v1917, %v1916
      %v1935 = vpack.c.b16 %v1919, %v1918
      %v1936 = vpack.c.b16 %v1921, %v1920
      %v1937 = vpack.c.b16 %v1923, %v1922
      %v1938 = vpack.c.b16 %v1924, %v1924
      %vm1952 = vcmask 719872
      %v1954 = vsel %vm1952, %v1837, 0
      %v1957 = vsel %vm1952, %v1839, 0
      %v1960 = vsel %vm1952, %v1841, 0
      %v1963 = vsel %vm1952, %v1843, 0
      %vm1965 = vcmask 1043456
      %v1967 = vsel %vm1965, %v1938, 0
      %1969 = vmatprep.subr.bf16.mxu0 0
      %1970 = vmatpush1.bf16.msra.mxu0 %v1932
      %1971 = vmatprep.subr.bf16.mxu0 0
      %1972 = vmatpush1.bf16.msra.mxu0 %v1931
      %1973 = vmatprep.subr.bf16.mxu0 0
      %1974 = vmatpush1.bf16.msra.mxu0 %v1930
      %1975 = vmatprep.subr.bf16.mxu0 0
      %1976 = vmatpush1.bf16.msra.mxu0 %v1929
      %1977 = vmatprep.subr.bf16.mxu0 0
      %1978 = vmatpush1.bf16.msra.mxu0 %v1928
      %1979 = vmatprep.subr.bf16.mxu0 0
      %1980 = vmatpush1.bf16.msra.mxu0 %v1927
      %1981 = vmatprep.subr.bf16.mxu0 0
      %1982 = vmatpush1.bf16.msra.mxu0 %v1926
      %1983 = vmatprep.subr.bf16.mxu0 0
      %1984 = vmatpush1.bf16.msra.mxu0 %v1925
      %1985 = vmatprep.subr.bf16.mxu0 0
      %1986 = vmatpush2.bf16.msra.mxu0 0
      %1987 = vmatprep.subr.bf16.mxu0 0
      %1988 = vmatpush2.bf16.msra.mxu0 0
      %1989 = vmatprep.subr.bf16.mxu0 0
      %1990 = vmatpush2.bf16.msra.mxu0 %v1967
      %1991 = vmatprep.subr.bf16.mxu0 0
      %1992 = vmatpush2.bf16.msra.mxu0 %v1937
      %1993 = vmatprep.subr.bf16.mxu0 0
      %1994 = vmatpush2.bf16.msra.mxu0 %v1936
      %1995 = vmatprep.subr.bf16.mxu0 0
      %1996 = vmatpush2.bf16.msra.mxu0 %v1935
      %1997 = vmatprep.subr.bf16.mxu0 0
      %1998 = vmatpush2.bf16.msra.mxu0 %v1934
      %1999 = vmatprep.subr.bf16.mxu0 0
      %2000 = vmatpush2.bf16.msra.mxu0 %v1933
      %2001 = vmatprep.mubr.bf16.mxu0 %v1954
      %2002 = vmatmul.mubr.bf16.gmra.mxu0 %v1836
      %v2003 = vpop.f32.mrf.mxu0
      %v2004 = vadd.f32 0.0, %v2003
      %v2005 = vpop.f32.mrf.mxu0
      %v2006 = vpop.f32.mrf.mxu0
      %v2007 = vadd.f32 0.0, %v2006
      %v2008 = vpop.f32.mrf.mxu0
      %2009 = vmatprep.mubr.bf16.mxu0 %v1957
      %2010 = vmatmul.mubr.bf16.gmra.mxu0 %v1838
      %v2011 = vpop.f32.mrf.mxu0
      %v2012 = vadd.f32 0.0, %v2011
      %v2013 = vpop.f32.mrf.mxu0
      %v2014 = vpop.f32.mrf.mxu0
      %v2015 = vadd.f32 0.0, %v2014
      %v2016 = vpop.f32.mrf.mxu0
      %2017 = vmatprep.mubr.bf16.mxu0 %v1960
      %2018 = vmatmul.mubr.bf16.gmra.mxu0 %v1840
      %v2019 = vpop.f32.mrf.mxu0
      %v2020 = vadd.f32 0.0, %v2019
      %v2021 = vpop.f32.mrf.mxu0
      %v2022 = vpop.f32.mrf.mxu0
      %v2023 = vadd.f32 0.0, %v2022
      %v2024 = vpop.f32.mrf.mxu0
      %2025 = vmatprep.mubr.bf16.mxu0 %v1963
      %2026 = vmatmul.mubr.bf16.gmra.mxu0 %v1842
      %v2027 = vpop.f32.mrf.mxu0
      %v2028 = vadd.f32 0.0, %v2027
      %v2029 = vpop.f32.mrf.mxu0
      %v2030 = vpop.f32.mrf.mxu0
      %v2031 = vadd.f32 0.0, %v2030
      %v2032 = vpop.f32.mrf.mxu0
      %2033 = vdwg.mxu0
      %v2034 = vpack.c.bf16 %v2007, %v2004
      %v2035 = vpack.c.bf16 %v2015, %v2012
      %v2036 = vpack.c.bf16 %v2023, %v2020
      %v2037 = vpack.c.bf16 %v2031, %v2028
      %v2042 = vunpack.c.l.b16 %v2034
      %v2043 = vunpack.c.h.b16 %v2034
      %v2044 = vunpack.c.l.b16 %v2035
      %v2045 = vunpack.c.h.b16 %v2035
      %v2046 = vunpack.c.l.b16 %v2036
      %v2047 = vunpack.c.h.b16 %v2036
      %v2048 = vunpack.c.l.b16 %v2037
      %v2049 = vunpack.c.h.b16 %v2037
      %v2050 = vpack.c.b16 %v2042, %v2042
      %v2051 = vpack.c.b16 %v2043, %v2043
      %v2052 = vpack.c.b16 %v2044, %v2044
      %v2053 = vpack.c.b16 %v2045, %v2045
      %v2054 = vpack.c.b16 %v2046, %v2046
      %v2055 = vpack.c.b16 %v2047, %v2047
      %v2056 = vpack.c.b16 %v2048, %v2048
      %v2057 = vpack.c.b16 %v2049, %v2049
      %vm2066 = vcmask 125952
      %2067 = vst.msk [vmem:[%s367] sm:$0xf] %vm2066, %v2050
      %2068 = vst.msk [vmem:[%s367 + $0x4] sm:$0xf] %vm2066, %v2051
      %2069 = vst.msk [vmem:[%s367 + $0x8] sm:$0xf] %vm2066, %v2052
      %2070 = vst.msk [vmem:[%s367 + $0xc] sm:$0xf] %vm2066, %v2053
      %2071 = vst.msk [vmem:[%s367 + $0x10] sm:$0xf] %vm2066, %v2054
      %2072 = vst.msk [vmem:[%s367 + $0x14] sm:$0xf] %vm2066, %v2055
      %2073 = vst.msk [vmem:[%s367 + $0x18] sm:$0xf] %vm2066, %v2056
      %2074 = vst.msk [vmem:[%s367 + $0x1c] sm:$0xf] %vm2066, %v2057
      %vm2075 = vcmask 130048
      %v2076 = vsel %vm2075, %v2004, 0.0
      %v2077 = vsel %vm2075, %v2007, 0.0
      %v2078 = vadd.f32 %v2076, %v2077
      %v2079 = vsel %vm2075, %v2012, 0.0
      %v2080 = vadd.f32 %v2078, %v2079
      %v2081 = vsel %vm2075, %v2015, 0.0
      %v2082 = vadd.f32 %v2080, %v2081
      %v2083 = vsel %vm2075, %v2020, 0.0
      %v2084 = vadd.f32 %v2082, %v2083
      %v2085 = vsel %vm2075, %v2023, 0.0
      %v2086 = vadd.f32 %v2084, %v2085
      %v2087 = vsel %vm2075, %v2028, 0.0
      %v2088 = vadd.f32 %v2086, %v2087
      %v2089 = vsel %vm2075, %v2031, 0.0
      %v2090 = vadd.f32 %v2088, %v2089
      %v2091 = vrot.slane %v2090, 4
      %v2092 = vadd.f32 %v2090, %v2091
      %v2093 = vrot.slane %v2092, 2
      %v2094 = vadd.f32 %v2092, %v2093
      %v2095 = vrot.slane %v2094, 1
      %v2096 = vadd.f32 %v2094, %v2095
      %vm2097 = vcmask 122880
      %2098 = vst.msk [vmem:[%s371] sm:$0x1] %vm2097, %v2096
      %v2099 = vmul.f32 %v2004, %v2004
      %v2100 = vmul.f32 %v2007, %v2007
      %v2101 = vmul.f32 %v2012, %v2012
      %v2102 = vmul.f32 %v2015, %v2015
      %v2103 = vmul.f32 %v2020, %v2020
      %v2104 = vmul.f32 %v2023, %v2023
      %v2105 = vmul.f32 %v2028, %v2028
      %v2106 = vmul.f32 %v2031, %v2031
      %v2107 = vsel %vm2075, %v2099, 0.0
      %v2108 = vsel %vm2075, %v2100, 0.0
      %v2109 = vadd.f32 %v2107, %v2108
      %v2110 = vsel %vm2075, %v2101, 0.0
      %v2111 = vadd.f32 %v2109, %v2110
      %v2112 = vsel %vm2075, %v2102, 0.0
      %v2113 = vadd.f32 %v2111, %v2112
      %v2114 = vsel %vm2075, %v2103, 0.0
      %v2115 = vadd.f32 %v2113, %v2114
      %v2116 = vsel %vm2075, %v2104, 0.0
      %v2117 = vadd.f32 %v2115, %v2116
      %v2118 = vsel %vm2075, %v2105, 0.0
      %v2119 = vadd.f32 %v2117, %v2118
      %v2120 = vsel %vm2075, %v2106, 0.0
      %v2121 = vadd.f32 %v2119, %v2120
      %v2122 = vrot.slane %v2121, 4
      %v2123 = vadd.f32 %v2121, %v2122
      %v2124 = vrot.slane %v2123, 2
      %v2125 = vadd.f32 %v2123, %v2124
      %v2126 = vrot.slane %v2125, 1
      %v2127 = vadd.f32 %v2125, %v2126
      %2128 = vst.msk [vmem:[%s371 + $0x1] sm:$0x1] %vm2097, %v2127
      %p2129 = scmp.lt.s32.totalorder %s19, 15
      %s2130 = scalar_select %p2129, %s19, 15
      %s2131 = smul.addr %s2130, 8
      %s2132 = smul.addr %s2131, 4
      %s2133 = scalar_lea.vmem %s6, %s2132
      %p2134 = scmp.lt.s32.totalorder %s19, 15
      %s2135 = scalar_select %p2134, %s19, 15
      %s2136 = smul.addr %s2135, 2
      %s2137 = scalar_lea.vmem %s7, %s2136
      // Predicated region
      $region45: #{res_block.3} parent=43 // pred_check
        %p2138 = pneg %p190
      $region46: #{res_block.3} parent=43 // pred_check_branch
        %2140 = sbr.rel (%p2138) target = $region48
      $region47: #{res_block.3} parent=43 // pred_region
        _
      $region48: #{res_block.3} parent=43 // pred_fallthru
        _
      // Predicated region
      $region49: #{res_block.3} parent=43 // pred_check
        %p2141 = pneg %p216
      $region50: #{res_block.3} parent=43 // pred_check_branch
        %2143 = sbr.rel (%p2141) target = $region52
      $region51: #{res_block.3} parent=43 // pred_region
        _
      $region52: #{res_block.3} parent=43 // pred_fallthru
        _
    $region44: #{res_block.3} parent=5 // pred_fallthru
      _
    %p2144 = scmp.le.s32.totalorder 2, %s14
    // Predicated region
    $region53: #{res_block.3} parent=5 // pred_check
      %p2145 = pneg %p2144
    $region54: #{res_block.3} parent=5 // pred_check_branch
      %2147 = sbr.rel (%p2145) target = $region56
    $region55: #{res_block.3} parent=5 // pred_region
      %s2148 = ssub.s32 %s14, 2
      // Predicated region
      $region57: #{res_block.3} parent=55 // pred_check
        %p2149 = pneg %p196
      $region58: #{res_block.3} parent=55 // pred_check_branch
        %2151 = sbr.rel (%p2149) target = $region60
      $region59: #{res_block.3} parent=55 // pred_region
        %p2152 = scmp.lt.s32.totalorder %s20, 15
        %s2153 = scalar_select %p2152, %s20, 15
        %s2154 = smul.addr %s2153, 8
        %s2155 = smul.addr %s2154, 4
        %s2156 = scalar_lea.vmem %s6, %s2155
      $region60: #{res_block.3} parent=55 // pred_fallthru
        _
      // Predicated region
      $region61: #{res_block.3} parent=55 // pred_check
        %p2157 = pneg %p222
      $region62: #{res_block.3} parent=55 // pred_check_branch
        %2159 = sbr.rel (%p2157) target = $region64
      $region63: #{res_block.3} parent=55 // pred_region
        %p2160 = scmp.lt.s32.totalorder %s20, 15
        %s2161 = scalar_select %p2160, %s20, 15
        %s2162 = smul.addr %s2161, 2
        %s2163 = scalar_lea.vmem %s7, %s2162
      $region64: #{res_block.3} parent=55 // pred_fallthru
        _
    $region56: #{res_block.3} parent=5 // pred_fallthru
      _
  $region6: #{res_block.3} parent=0 // loop_footer
    %s18 = sadd.s32 1, %s14
  $region7: #{res_block.3} parent=0 // loop_footer_branch
    %13 = sbr.rel target = $region3
  $region8: #{res_block.3} parent=0 // loop_exit
    _

// kernel: res_block.4
$region0: #{res_block.4}
  #allocation0 [shape = 'u32[]', space=smem, size = 0x4, offset = 0x4, fixed_abs, tag = 'smem constant byte address 0x4 - core index']
  #allocation1 [shape = 'u32[144,128]{1,0:T(1,128)}', space=vmem, size = 0x12000, scoped, tag = 'internal scratch']
  #allocation2 [shape = 'f32[10,10,16]{2,1,0:T(8,128)}', space=vmem, size = 0x14000, scoped, tag = 'scratch operand']
  #allocation3 [shape = 'f32[64,432]{1,0:T(8,128)}', space=vmem, size = 0x20000, scoped, tag = 'scratch operand']
  %s0 = inlined_call_operand.vmem [shape: bf16[16,8,8,16], index: 0, kind: input, shape index: {}, may-alias: {0,1,2}]
  %s1 = inlined_call_operand.vmem [shape: bf16[16,8,8,16], index: 1, kind: input, shape index: {}, may-alias: {0,1,2}]
  %s2 = inlined_call_operand.vmem [shape: bf16[16,8,8,16], index: 2, kind: input, shape index: {}, may-alias: {0,1,2}]
  %s3 = inlined_call_operand.vmem [shape: bf16[432,16], index: 3, kind: input, shape index: {}]
  %s4 = inlined_call_operand.vmem [shape: f32[1,1,16], index: 4, kind: input, shape index: {}]
  %s5 = inlined_call_operand.vmem [shape: f32[1,1,16], index: 5, kind: input, shape index: {}]
  %s6 = inlined_call_operand.vmem [shape: bf16[16,64,16], index: 6, kind: output, shape index: {0}]
  %s7 = inlined_call_operand.vmem [shape: f32[16,2,16], index: 7, kind: output, shape index: {1}]
  %8 = xla_tuple %s6, %s7
  %s9 = sld [smem:[#allocation0]]
  $region65: #{res_block.4} parent=0
    _
  %s11 = ssub.s32 1, %s9
  %s12 = scalar_select 0, %s11, %s9
  loop: start=0, step=1, limit=18
  $region2: #{res_block.4} parent=0 // loop_pre_header
    _
  $region3: #{res_block.4} parent=0 // loop_header
    %s14 = sphi 0, %s18
    %p15 = scmp.ge.s32.totalorder %s14, 18
    %s30 = sphi 0, %s32
    %s33 = sphi 0, %s30
    %s34 = sphi 0, %s33
    %s50 = sphi 0, %s34
    %s56 = sphi 0, %s58
    %s59 = sphi 0, %s56
    %s60 = sphi 0, %s59
    %s76 = sphi 0, %s60
    %s88 = sphi 0, %s90
    %s91 = sphi 0, %s88
    %s92 = sphi 0, %s91
    %s108 = sphi 0, %s92
    %s112 = sphi 0, %s112
    %s114 = sphi 0, %s112
    %s115 = sphi 0, %s114
    %s129 = sphi 0, %s115
    %s133 = sphi 0, %s133
    %s135 = sphi 0, %s133
    %s136 = sphi 0, %s135
    %s150 = sphi 0, %s136
    %s154 = sphi 0, %s154
    %s156 = sphi 0, %s154
    %s157 = sphi 0, %s156
    %s171 = sphi 0, %s157
    %s177 = sphi 0, %s179
    %s180 = sphi 0, %s177
    %s181 = sphi 0, %s180
    %s197 = sphi 0, %s181
    %s203 = sphi 0, %s205
    %s206 = sphi 0, %s203
    %s207 = sphi 0, %s206
    %s223 = sphi 0, %s207
  $region4: #{res_block.4} parent=0 // loop_header_branch
    %17 = sbr.rel (%p15) target = $region8
  $region5: #{res_block.4} parent=0 // loop_body
    %s19 = ssub.s32 %s14, 1
    %s20 = ssub.s32 %s14, 2
    %s21 = sadd.s32 %s14, 1
    %s22 = ssub.s32 %s14, 1
    %p23 = scmp.gt.s32.totalorder %s22, 0
    %s24 = scalar_select %p23, %s22, 0
    %s25 = ssub.s32 %s21, 1
    %p26 = scmp.gt.s32.totalorder %s25, 0
    %s27 = scalar_select %p26, %s25, 0
    %s28 = ssub.s32 %s24, %s27
    %p29 = scmp.eq.s32.totalorder %s28, 0
    %s31 = sadd.s32 %s30, 1
    %s32 = scalar_select %p29, %s30, %s31
    %p35 = pneg %p29
    %p36 = scmp.eq.s32.totalorder %s14, 15
    %p37 = por %p35, %p36
    %p38 = scmp.ne.s32.totalorder %s30, %s33
    %p39 = scmp.eq.s32.totalorder %s14, 0
    %p40 = por %p38, %p39
    %p41 = scmp.ne.s32.totalorder %s30, %s33
    %p42 = scmp.eq.s32.totalorder %s19, 15
    %p43 = por %p41, %p42
    %p44 = scmp.ne.s32.totalorder %s33, %s34
    %p45 = scmp.eq.s32.totalorder %s19, 0
    %p46 = por %p44, %p45
    %p47 = scmp.ne.s32.totalorder %s33, %s34
    %p48 = scmp.eq.s32.totalorder %s20, 15
    %p49 = por %p47, %p48
    %p51 = scmp.ne.s32.totalorder %s34, %s50
    %p52 = scmp.eq.s32.totalorder %s20, 0
    %p53 = por %p51, %p52
    %s54 = ssub.s32 %s14, %s21
    %p55 = scmp.eq.s32.totalorder %s54, 0
    %s57 = sadd.s32 %s56, 1
    %s58 = scalar_select %p55, %s56, %s57
    %p61 = pneg %p55
    %p62 = scmp.eq.s32.totalorder %s14, 15
    %p63 = por %p61, %p62
    %p64 = scmp.ne.s32.totalorder %s56, %s59
    %p65 = scmp.eq.s32.totalorder %s14, 0
    %p66 = por %p64, %p65
    %p67 = scmp.ne.s32.totalorder %s56, %s59
    %p68 = scmp.eq.s32.totalorder %s19, 15
    %p69 = por %p67, %p68
    %p70 = scmp.ne.s32.totalorder %s59, %s60
    %p71 = scmp.eq.s32.totalorder %s19, 0
    %p72 = por %p70, %p71
    %p73 = scmp.ne.s32.totalorder %s59, %s60
    %p74 = scmp.eq.s32.totalorder %s20, 15
    %p75 = por %p73, %p74
    %p77 = scmp.ne.s32.totalorder %s60, %s76
    %p78 = scmp.eq.s32.totalorder %s20, 0
    %p79 = por %p77, %p78
    %s80 = sadd.s32 %s14, 1
    %p81 = scmp.lt.s32.totalorder %s80, 15
    %s82 = scalar_select %p81, %s80, 15
    %s83 = sadd.s32 %s21, 1
    %p84 = scmp.lt.s32.totalorder %s83, 15
    %s85 = scalar_select %p84, %s83, 15
    %s86 = ssub.s32 %s82, %s85
    %p87 = scmp.eq.s32.totalorder %s86, 0
    %s89 = sadd.s32 %s88, 1
    %s90 = scalar_select %p87, %s88, %s89
    %p93 = pneg %p87
    %p94 = scmp.eq.s32.totalorder %s14, 15
    %p95 = por %p93, %p94
    %p96 = scmp.ne.s32.totalorder %s88, %s91
    %p97 = scmp.eq.s32.totalorder %s14, 0
    %p98 = por %p96, %p97
    %p99 = scmp.ne.s32.totalorder %s88, %s91
    %p100 = scmp.eq.s32.totalorder %s19, 15
    %p101 = por %p99, %p100
    %p102 = scmp.ne.s32.totalorder %s91, %s92
    %p103 = scmp.eq.s32.totalorder %s19, 0
    %p104 = por %p102, %p103
    %p105 = scmp.ne.s32.totalorder %s91, %s92
    %p106 = scmp.eq.s32.totalorder %s20, 15
    %p107 = por %p105, %p106
    %p109 = scmp.ne.s32.totalorder %s92, %s108
    %p110 = scmp.eq.s32.totalorder %s20, 0
    %p111 = por %p109, %p110
    %s113 = sadd.s32 %s112, 1
    %p116 = scmp.eq.s32.totalorder %s14, 15
    %p117 = scmp.ne.s32.totalorder %s112, %s114
    %p118 = scmp.eq.s32.totalorder %s14, 0
    %p119 = por %p117, %p118
    %p120 = scmp.ne.s32.totalorder %s112, %s114
    %p121 = scmp.eq.s32.totalorder %s19, 15
    %p122 = por %p120, %p121
    %p123 = scmp.ne.s32.totalorder %s114, %s115
    %p124 = scmp.eq.s32.totalorder %s19, 0
    %p125 = por %p123, %p124
    %p126 = scmp.ne.s32.totalorder %s114, %s115
    %p127 = scmp.eq.s32.totalorder %s20, 15
    %p128 = por %p126, %p127
    %p130 = scmp.ne.s32.totalorder %s115, %s129
    %p131 = scmp.eq.s32.totalorder %s20, 0
    %p132 = por %p130, %p131
    %s134 = sadd.s32 %s133, 1
    %p137 = scmp.eq.s32.totalorder %s14, 15
    %p138 = scmp.ne.s32.totalorder %s133, %s135
    %p139 = scmp.eq.s32.totalorder %s14, 0
    %p140 = por %p138, %p139
    %p141 = scmp.ne.s32.totalorder %s133, %s135
    %p142 = scmp.eq.s32.totalorder %s19, 15
    %p143 = por %p141, %p142
    %p144 = scmp.ne.s32.totalorder %s135, %s136
    %p145 = scmp.eq.s32.totalorder %s19, 0
    %p146 = por %p144, %p145
    %p147 = scmp.ne.s32.totalorder %s135, %s136
    %p148 = scmp.eq.s32.totalorder %s20, 15
    %p149 = por %p147, %p148
    %p151 = scmp.ne.s32.totalorder %s136, %s150
    %p152 = scmp.eq.s32.totalorder %s20, 0
    %p153 = por %p151, %p152
    %s155 = sadd.s32 %s154, 1
    %p158 = scmp.eq.s32.totalorder %s14, 15
    %p159 = scmp.ne.s32.totalorder %s154, %s156
    %p160 = scmp.eq.s32.totalorder %s14, 0
    %p161 = por %p159, %p160
    %p162 = scmp.ne.s32.totalorder %s154, %s156
    %p163 = scmp.eq.s32.totalorder %s19, 15
    %p164 = por %p162, %p163
    %p165 = scmp.ne.s32.totalorder %s156, %s157
    %p166 = scmp.eq.s32.totalorder %s19, 0
    %p167 = por %p165, %p166
    %p168 = scmp.ne.s32.totalorder %s156, %s157
    %p169 = scmp.eq.s32.totalorder %s20, 15
    %p170 = por %p168, %p169
    %p172 = scmp.ne.s32.totalorder %s157, %s171
    %p173 = scmp.eq.s32.totalorder %s20, 0
    %p174 = por %p172, %p173
    %s175 = ssub.s32 %s14, %s21
    %p176 = scmp.eq.s32.totalorder %s175, 0
    %s178 = sadd.s32 %s177, 1
    %s179 = scalar_select %p176, %s177, %s178
    %p182 = pneg %p176
    %p183 = scmp.eq.s32.totalorder %s14, 15
    %p184 = por %p182, %p183
    %p185 = scmp.ne.s32.totalorder %s177, %s180
    %p186 = scmp.eq.s32.totalorder %s14, 0
    %p187 = por %p185, %p186
    %p188 = scmp.ne.s32.totalorder %s177, %s180
    %p189 = scmp.eq.s32.totalorder %s19, 15
    %p190 = por %p188, %p189
    %p191 = scmp.ne.s32.totalorder %s180, %s181
    %p192 = scmp.eq.s32.totalorder %s19, 0
    %p193 = por %p191, %p192
    %p194 = scmp.ne.s32.totalorder %s180, %s181
    %p195 = scmp.eq.s32.totalorder %s20, 15
    %p196 = por %p194, %p195
    %p198 = scmp.ne.s32.totalorder %s181, %s197
    %p199 = scmp.eq.s32.totalorder %s20, 0
    %p200 = por %p198, %p199
    %s201 = ssub.s32 %s14, %s21
    %p202 = scmp.eq.s32.totalorder %s201, 0
    %s204 = sadd.s32 %s203, 1
    %s205 = scalar_select %p202, %s203, %s204
    %p208 = pneg %p202
    %p209 = scmp.eq.s32.totalorder %s14, 15
    %p210 = por %p208, %p209
    %p211 = scmp.ne.s32.totalorder %s203, %s206
    %p212 = scmp.eq.s32.totalorder %s14, 0
    %p213 = por %p211, %p212
    %p214 = scmp.ne.s32.totalorder %s203, %s206
    %p215 = scmp.eq.s32.totalorder %s19, 15
    %p216 = por %p214, %p215
    %p217 = scmp.ne.s32.totalorder %s206, %s207
    %p218 = scmp.eq.s32.totalorder %s19, 0
    %p219 = por %p217, %p218
    %p220 = scmp.ne.s32.totalorder %s206, %s207
    %p221 = scmp.eq.s32.totalorder %s20, 15
    %p222 = por %p220, %p221
    %p224 = scmp.ne.s32.totalorder %s207, %s223
    %p225 = scmp.eq.s32.totalorder %s20, 0
    %p226 = por %p224, %p225
    %p227 = scmp.le.s32.totalorder 1, %s14
    %p228 = scmp.lt.s32.totalorder %s14, 17
    %p229 = pnand %p227, %p228
    %p230 = pneg %p229
    // Predicated region
    $region9: #{res_block.4} parent=5 // pred_check
      _
    $region10: #{res_block.4} parent=5 // pred_check_branch
      %232 = sbr.rel (%p229) target = $region12
    $region11: #{res_block.4} parent=5 // pred_region
      %s233 = ssub.s32 %s14, 1
      // Predicated region
      $region13: #{res_block.4} parent=11 // pred_check
        %p234 = pneg %p125
      $region14: #{res_block.4} parent=11 // pred_check_branch
        %236 = sbr.rel (%p234) target = $region16
      $region15: #{res_block.4} parent=11 // pred_region
        _
      $region16: #{res_block.4} parent=11 // pred_fallthru
        _
      // Predicated region
      $region17: #{res_block.4} parent=11 // pred_check
        %p237 = pneg %p146
      $region18: #{res_block.4} parent=11 // pred_check_branch
        %239 = sbr.rel (%p237) target = $region20
      $region19: #{res_block.4} parent=11 // pred_region
        _
      $region20: #{res_block.4} parent=11 // pred_fallthru
        _
      // Predicated region
      $region21: #{res_block.4} parent=11 // pred_check
        %p240 = pneg %p167
      $region22: #{res_block.4} parent=11 // pred_check_branch
        %242 = sbr.rel (%p240) target = $region24
      $region23: #{res_block.4} parent=11 // pred_region
        _
      $region24: #{res_block.4} parent=11 // pred_fallthru
        _
    $region12: #{res_block.4} parent=5 // pred_fallthru
      _
    %p243 = scmp.lt.s32.totalorder %s14, 16
    // Predicated region
    $region25: #{res_block.4} parent=5 // pred_check
      %p244 = pneg %p243
    $region26: #{res_block.4} parent=5 // pred_check_branch
      %246 = sbr.rel (%p244) target = $region28
    $region27: #{res_block.4} parent=5 // pred_region
      // Predicated region
      $region29: #{res_block.4} parent=27 // pred_check
        %p247 = pneg %p40
      $region30: #{res_block.4} parent=27 // pred_check_branch
        %249 = sbr.rel (%p247) target = $region32
      $region31: #{res_block.4} parent=27 // pred_region
        %s250 = ssub.s32 %s14, 1
        %p251 = scmp.gt.s32.totalorder %s250, 0
        %s252 = scalar_select %p251, %s250, 0
        %p253 = scmp.lt.s32.totalorder %s252, 15
        %s254 = scalar_select %p253, %s252, 15
        %s255 = smul.addr %s254, 8
        %s256 = smul.addr %s255, 4
        %s257 = scalar_lea.vmem %s0, %s256
        %s258 = ssub.s32 %s14, 1
        %p259 = scmp.gt.s32.totalorder %s258, 0
        %s260 = scalar_select %p259, %s258, 0
      $region32: #{res_block.4} parent=27 // pred_fallthru
        _
      // Predicated region
      $region33: #{res_block.4} parent=27 // pred_check
        %p261 = pneg %p66
      $region34: #{res_block.4} parent=27 // pred_check_branch
        %263 = sbr.rel (%p261) target = $region36
      $region35: #{res_block.4} parent=27 // pred_region
        %p264 = scmp.lt.s32.totalorder %s14, 15
        %s265 = scalar_select %p264, %s14, 15
        %s266 = smul.addr %s265, 8
        %s267 = smul.addr %s266, 4
        %s268 = scalar_lea.vmem %s1, %s267
      $region36: #{res_block.4} parent=27 // pred_fallthru
        _
      // Predicated region
      $region37: #{res_block.4} parent=27 // pred_check
        %p269 = pneg %p98
      $region38: #{res_block.4} parent=27 // pred_check_branch
        %271 = sbr.rel (%p269) target = $region40
      $region39: #{res_block.4} parent=27 // pred_region
        %s272 = sadd.s32 %s14, 1
        %p273 = scmp.lt.s32.totalorder %s272, 15
        %s274 = scalar_select %p273, %s272, 15
        %p275 = scmp.lt.s32.totalorder %s274, 15
        %s276 = scalar_select %p275, %s274, 15
        %s277 = smul.addr %s276, 8
        %s278 = smul.addr %s277, 4
        %s279 = scalar_lea.vmem %s2, %s278
        %s280 = sadd.s32 %s14, 1
        %p281 = scmp.lt.s32.totalorder %s280, 15
        %s282 = scalar_select %p281, %s280, 15
      $region40: #{res_block.4} parent=27 // pred_fallthru
        _
    $region28: #{res_block.4} parent=5 // pred_fallthru
      _
    %p283 = scmp.le.s32.totalorder 1, %s14
    %p284 = scmp.lt.s32.totalorder %s14, 17
    %p285 = pnand %p283, %p284
    %p286 = pneg %p285
    // Predicated region
    $region41: #{res_block.4} parent=5 // pred_check
      _
    $region42: #{res_block.4} parent=5 // pred_check_branch
      %288 = sbr.rel (%p285) target = $region44
    $region43: #{res_block.4} parent=5 // pred_region
      %s289 = ssub.s32 %s14, 1
      %s290 = ssub.s32 %s19, 1
      %p291 = scmp.gt.s32.totalorder %s290, 0
      %s292 = scalar_select %p291, %s290, 0
      %p293 = scmp.lt.s32.totalorder %s292, 15
      %s294 = scalar_select %p293, %s292, 15
      %s295 = smul.addr %s294, 8
      %s296 = smul.addr %s295, 4
      %s297 = scalar_lea.vmem %s0, %s296
      %p298 = pneg %p46
      %p299 = pneg %p43
      %p300 = scmp.lt.s32.totalorder %s19, 15
      %s301 = scalar_select %p300, %s19, 15
      %s302 = smul.addr %s301, 8
      %s303 = smul.addr %s302, 4
      %s304 = scalar_lea.vmem %s1, %s303
      %p305 = pneg %p72
      %p306 = pneg %p69
      %s307 = sadd.s32 %s19, 1
      %p308 = scmp.lt.s32.totalorder %s307, 15
      %s309 = scalar_select %p308, %s307, 15
      %p310 = scmp.lt.s32.totalorder %s309, 15
      %s311 = scalar_select %p310, %s309, 15
      %s312 = smul.addr %s311, 8
      %s313 = smul.addr %s312, 4
      %s314 = scalar_lea.vmem %s2, %s313
      %p315 = pneg %p104
      %p316 = pneg %p101
      %p317 = pneg %p125
      %p318 = pneg %p122
      %p319 = pneg %p146
      %p320 = pneg %p143
      %p321 = pneg %p167
      %p322 = pneg %p164
      %p323 = pneg %p193
      %p324 = pneg %p190
      %p325 = scmp.lt.s32.totalorder %s19, 15
      %s326 = scalar_select %p325, %s19, 15
      %s327 = smul.addr %s326, 8
      %s328 = smul.addr %s327, 4
      %s329 = scalar_lea.vmem %s6, %s328
      %p330 = pneg %p219
      %p331 = pneg %p216
      %p332 = scmp.lt.s32.totalorder %s19, 15
      %s333 = scalar_select %p332, %s19, 15
      %s334 = smul.addr %s333, 2
      %s335 = scalar_lea.vmem %s7, %s334
      %s336 = ssub.s32 %s19, 1
      %p337 = scmp.gt.s32.totalorder %s336, 0
      %s338 = scalar_select %p337, %s336, 0
      %p339 = scmp.lt.s32.totalorder %s338, 15
      %s340 = scalar_select %p339, %s338, 15
      %s341 = smul.addr %s340, 8
      %s342 = smul.addr %s341, 4
      %s343 = scalar_lea.vmem %s0, %s342
      %s344 = ssub.s32 %s19, 1
      %p345 = scmp.gt.s32.totalorder %s344, 0
      %s346 = scalar_select %p345, %s344, 0
      %p347 = scmp.lt.s32.totalorder %s19, 15
      %s348 = scalar_select %p347, %s19, 15
      %s349 = smul.addr %s348, 8
      %s350 = smul.addr %s349, 4
      %s351 = scalar_lea.vmem %s1, %s350
      %s352 = sadd.s32 %s19, 1
      %p353 = scmp.lt.s32.totalorder %s352, 15
      %s354 = scalar_select %p353, %s352, 15
      %p355 = scmp.lt.s32.totalorder %s354, 15
      %s356 = scalar_select %p355, %s354, 15
      %s357 = smul.addr %s356, 8
      %s358 = smul.addr %s357, 4
      %s359 = scalar_lea.vmem %s2, %s358
      %s360 = sadd.s32 %s19, 1
      %p361 = scmp.lt.s32.totalorder %s360, 15
      %s362 = scalar_select %p361, %s360, 15
      %p363 = scmp.lt.s32.totalorder %s19, 15
      %s364 = scalar_select %p363, %s19, 15
      %s365 = smul.addr %s364, 8
      %s366 = smul.addr %s365, 4
      %s367 = scalar_lea.vmem %s6, %s366
      %p368 = scmp.lt.s32.totalorder %s19, 15
      %s369 = scalar_select %p368, %s19, 15
      %s370 = smul.addr %s369, 2
      %s371 = scalar_lea.vmem %s7, %s370
      %p373 = scmp.lt.s32.totalorder %s19, 0
      %s374 = ssub.s32 0, %s19
      %s375 = scalar_select %p373, %s374, %s19
      %s376 = sand.u32 %s375, 7
      %s377 = ssub.s32 0, %s376
      %s378 = scalar_select %p373, %s377, %s376
      %p379 = scmp.ne.s32.totalorder %s378, 0
      %p380 = scmp.lt.s32.totalorder %s378, 0
      %p381 = pnand %p380, %p379
      %p382 = pneg %p381
      %s383 = sadd.s32 %s378, 8
      %s384 = scalar_select %p382, %s383, %s378
      %vm385 = vcmask 130048
      %386 = vst.msk [vmem:[#allocation2] sm:$0xff] %vm385, 0.0
      %vm387 = vcmask 123904
      %388 = vst.msk [vmem:[#allocation2 + $0x8] sm:$0x3] %vm387, 0.0
      %s389 = scalar_lea.vmem [#allocation2], 144
      %390 = vst.msk [vmem:[%s389] sm:$0xff] %vm385, 0.0
      %391 = vst.msk [vmem:[%s389 + $0x8] sm:$0x3] %vm387, 0.0
      %vm392 = vcmask 122880
      %393 = vst.msk [vmem:[#allocation2] sm:$0x1] %vm392, 0.0
      %394 = vst.msk [vmem:[#allocation2 + $0x10] sm:$0x1] %vm392, 0.0
      %395 = vst.msk [vmem:[#allocation2 + $0x20] sm:$0x1] %vm392, 0.0
      %396 = vst.msk [vmem:[#allocation2 + $0x30] sm:$0x1] %vm392, 0.0
      %397 = vst.msk [vmem:[#allocation2 + $0x40] sm:$0x1] %vm392, 0.0
      %398 = vst.msk [vmem:[#allocation2 + $0x50] sm:$0x1] %vm392, 0.0
      %399 = vst.msk [vmem:[#allocation2 + $0x60] sm:$0x1] %vm392, 0.0
      %400 = vst.msk [vmem:[#allocation2 + $0x70] sm:$0x1] %vm392, 0.0
      %401 = vst.msk [vmem:[#allocation2 + $0x80] sm:$0x1] %vm392, 0.0
      %402 = vst.msk [vmem:[#allocation2 + $0x90] sm:$0x1] %vm392, 0.0
      %403 = vst.msk [vmem:[#allocation2 + $0x9] sm:$0x1] %vm392, 0.0
      %404 = vst.msk [vmem:[#allocation2 + $0x19] sm:$0x1] %vm392, 0.0
      %405 = vst.msk [vmem:[#allocation2 + $0x29] sm:$0x1] %vm392, 0.0
      %406 = vst.msk [vmem:[#allocation2 + $0x39] sm:$0x1] %vm392, 0.0
      %407 = vst.msk [vmem:[#allocation2 + $0x49] sm:$0x1] %vm392, 0.0
      %408 = vst.msk [vmem:[#allocation2 + $0x59] sm:$0x1] %vm392, 0.0
      %409 = vst.msk [vmem:[#allocation2 + $0x69] sm:$0x1] %vm392, 0.0
      %410 = vst.msk [vmem:[#allocation2 + $0x79] sm:$0x1] %vm392, 0.0
      %411 = vst.msk [vmem:[#allocation2 + $0x89] sm:$0x1] %vm392, 0.0
      %412 = vst.msk [vmem:[#allocation2 + $0x99] sm:$0x1] %vm392, 0.0
      %v413 = vld [vmem:[%s4] sm:$0x1]
      %v414 = vld [vmem:[%s5] sm:$0x1]
      %v415 = vld [vmem:[%s343] sm:$0xf]
      %v416 = vld [vmem:[%s343 + $0x4] sm:$0xf]
      %v417 = vld [vmem:[%s343 + $0x8] sm:$0xf]
      %v418 = vld [vmem:[%s343 + $0xc] sm:$0xf]
      %v419 = vld [vmem:[%s343 + $0x10] sm:$0xf]
      %v420 = vld [vmem:[%s343 + $0x14] sm:$0xf]
      %v421 = vld [vmem:[%s343 + $0x18] sm:$0xf]
      %v422 = vld [vmem:[%s343 + $0x1c] sm:$0xf]
      %v423 = vunpack.c.l.bf16 %v415
      %v424 = vunpack.c.l.bf16 %v416
      %v425 = vunpack.c.l.bf16 %v417
      %v426 = vunpack.c.l.bf16 %v418
      %v427 = vunpack.c.l.bf16 %v419
      %v428 = vunpack.c.l.bf16 %v420
      %v429 = vunpack.c.l.bf16 %v421
      %v430 = vunpack.c.l.bf16 %v422
      %v432 = vlaneseq
      %v433 = vshrl.u32 %v432, 7
      %v434 = vsub.s32 0, %v433
      %v435 = vrot.slane %v413, %v434
      %v437 = vmul.f32 %v423, %v435
      %v438 = vmul.f32 %v424, %v435
      %v439 = vmul.f32 %v425, %v435
      %v440 = vmul.f32 %v426, %v435
      %v441 = vmul.f32 %v427, %v435
      %v442 = vmul.f32 %v428, %v435
      %v443 = vmul.f32 %v429, %v435
      %v444 = vmul.f32 %v430, %v435
      %v446 = vlaneseq
      %v447 = vshrl.u32 %v446, 7
      %v448 = vsub.s32 0, %v447
      %v449 = vrot.slane %v414, %v448
      %v451 = vadd.f32 %v437, %v449
      %v452 = vadd.f32 %v438, %v449
      %v453 = vadd.f32 %v439, %v449
      %v454 = vadd.f32 %v440, %v449
      %v455 = vadd.f32 %v441, %v449
      %v456 = vadd.f32 %v442, %v449
      %v457 = vadd.f32 %v443, %v449
      %v458 = vadd.f32 %v444, %v449
      %v459 = vmax.f32 %v451, 0.0
      %v460 = vmax.f32 %v452, 0.0
      %v461 = vmax.f32 %v453, 0.0
      %v462 = vmax.f32 %v454, 0.0
      %v463 = vmax.f32 %v455, 0.0
      %v464 = vmax.f32 %v456, 0.0
      %v465 = vmax.f32 %v457, 0.0
      %v466 = vmax.f32 %v458, 0.0
      %p467 = scmp.gt.s32.totalorder %s384, 0
      %s468 = scalar_select %p467, 1, 0
      %v469 = vstv %s468
      %vm470 = vcmp.eq.s32.totalorder %v469, 1
      %v471 = vsel %vm470, %v459, 0.0
      %v472 = vsel %vm470, %v460, 0.0
      %v473 = vsel %vm470, %v461, 0.0
      %v474 = vsel %vm470, %v462, 0.0
      %v475 = vsel %vm470, %v463, 0.0
      %v476 = vsel %vm470, %v464, 0.0
      %v477 = vsel %vm470, %v465, 0.0
      %v478 = vsel %vm470, %v466, 0.0
      %s479 = scalar_lea.vmem [#allocation2], 16
      %480 = vst.msk [vmem:[%s479 + $0x1] sm:$0xff] %vm385, %v471
      %481 = vst.msk [vmem:[%s479 + $0x11] sm:$0xff] %vm385, %v472
      %482 = vst.msk [vmem:[%s479 + $0x21] sm:$0xff] %vm385, %v473
      %483 = vst.msk [vmem:[%s479 + $0x31] sm:$0xff] %vm385, %v474
      %484 = vst.msk [vmem:[%s479 + $0x41] sm:$0xff] %vm385, %v475
      %485 = vst.msk [vmem:[%s479 + $0x51] sm:$0xff] %vm385, %v476
      %486 = vst.msk [vmem:[%s479 + $0x61] sm:$0xff] %vm385, %v477
      %487 = vst.msk [vmem:[%s479 + $0x71] sm:$0xff] %vm385, %v478
      %v488 = vld [vmem:[#allocation2] sm:$0xff]
      %v489 = vld [vmem:[#allocation2 + $0x10] sm:$0xff]
      %v490 = vld [vmem:[#allocation2 + $0x20] sm:$0xff]
      %v491 = vld [vmem:[#allocation2 + $0x30] sm:$0xff]
      %v492 = vld [vmem:[#allocation2 + $0x40] sm:$0xff]
      %v493 = vld [vmem:[#allocation2 + $0x50] sm:$0xff]
      %v494 = vld [vmem:[#allocation2 + $0x60] sm:$0xff]
      %v495 = vld [vmem:[#allocation2 + $0x70] sm:$0xff]
      %496 = vst.msk [vmem:[#allocation3] sm:$0xff] %vm385, %v488
      %497 = vst.msk [vmem:[#allocation3 + $0x20] sm:$0xff] %vm385, %v489
      %498 = vst.msk [vmem:[#allocation3 + $0x40] sm:$0xff] %vm385, %v490
      %499 = vst.msk [vmem:[#allocation3 + $0x60] sm:$0xff] %vm385, %v491
      %500 = vst.msk [vmem:[#allocation3 + $0x80] sm:$0xff] %vm385, %v492
      %501 = vst.msk [vmem:[#allocation3 + $0xa0] sm:$0xff] %vm385, %v493
      %502 = vst.msk [vmem:[#allocation3 + $0xc0] sm:$0xff] %vm385, %v494
      %503 = vst.msk [vmem:[#allocation3 + $0xe0] sm:$0xff] %vm385, %v495
      %v504 = vld [vmem:[#allocation2 + $0x1] sm:$0xff]
      %v505 = vld [vmem:[#allocation2 + $0x11] sm:$0xff]
      %v506 = vld [vmem:[#allocation2 + $0x21] sm:$0xff]
      %v507 = vld [vmem:[#allocation2 + $0x31] sm:$0xff]
      %v508 = vld [vmem:[#allocation2 + $0x41] sm:$0xff]
      %v509 = vld [vmem:[#allocation2 + $0x51] sm:$0xff]
      %v510 = vld [vmem:[#allocation2 + $0x61] sm:$0xff]
      %v511 = vld [vmem:[#allocation2 + $0x71] sm:$0xff]
      %520 = vrot.lane.b32.xlu0 %v504, 16
      %v521 = vpop.permute.xlu0 %520
      %522 = vrot.lane.b32.xlu0 %v505, 16
      %v523 = vpop.permute.xlu0 %522
      %524 = vrot.lane.b32.xlu0 %v506, 16
      %v525 = vpop.permute.xlu0 %524
      %526 = vrot.lane.b32.xlu0 %v507, 16
      %v527 = vpop.permute.xlu0 %526
      %528 = vrot.lane.b32.xlu0 %v508, 16
      %v529 = vpop.permute.xlu0 %528
      %530 = vrot.lane.b32.xlu0 %v509, 16
      %v531 = vpop.permute.xlu0 %530
      %532 = vrot.lane.b32.xlu0 %v510, 16
      %v533 = vpop.permute.xlu0 %532
      %534 = vrot.lane.b32.xlu0 %v511, 16
      %v535 = vpop.permute.xlu0 %534
      %vm544 = vcmask 261248
      %545 = vst.msk [vmem:[#allocation3] sm:$0xff] %vm544, %v521
      %546 = vst.msk [vmem:[#allocation3 + $0x20] sm:$0xff] %vm544, %v523
      %547 = vst.msk [vmem:[#allocation3 + $0x40] sm:$0xff] %vm544, %v525
      %548 = vst.msk [vmem:[#allocation3 + $0x60] sm:$0xff] %vm544, %v527
      %549 = vst.msk [vmem:[#allocation3 + $0x80] sm:$0xff] %vm544, %v529
      %550 = vst.msk [vmem:[#allocation3 + $0xa0] sm:$0xff] %vm544, %v531
      %551 = vst.msk [vmem:[#allocation3 + $0xc0] sm:$0xff] %vm544, %v533
      %552 = vst.msk [vmem:[#allocation3 + $0xe0] sm:$0xff] %vm544, %v535
      %v553 = vld [vmem:[#allocation2 + $0x2] sm:$0xff]
      %v554 = vld [vmem:[#allocation2 + $0x12] sm:$0xff]
      %v555 = vld [vmem:[#allocation2 + $0x22] sm:$0xff]
      %v556 = vld [vmem:[#allocation2 + $0x32] sm:$0xff]
      %v557 = vld [vmem:[#allocation2 + $0x42] sm:$0xff]
      %v558 = vld [vmem:[#allocation2 + $0x52] sm:$0xff]
      %v559 = vld [vmem:[#allocation2 + $0x62] sm:$0xff]
      %v560 = vld [vmem:[#allocation2 + $0x72] sm:$0xff]
      %569 = vrot.lane.b32.xlu0 %v553, 32
      %v570 = vpop.permute.xlu0 %569
      %571 = vrot.lane.b32.xlu0 %v554, 32
      %v572 = vpop.permute.xlu0 %571
      %573 = vrot.lane.b32.xlu0 %v555, 32
      %v574 = vpop.permute.xlu0 %573
      %575 = vrot.lane.b32.xlu0 %v556, 32
      %v576 = vpop.permute.xlu0 %575
      %577 = vrot.lane.b32.xlu0 %v557, 32
      %v578 = vpop.permute.xlu0 %577
      %579 = vrot.lane.b32.xlu0 %v558, 32
      %v580 = vpop.permute.xlu0 %579
      %581 = vrot.lane.b32.xlu0 %v559, 32
      %v582 = vpop.permute.xlu0 %581
      %583 = vrot.lane.b32.xlu0 %v560, 32
      %v584 = vpop.permute.xlu0 %583
      %vm593 = vcmask 392448
      %594 = vst.msk [vmem:[#allocation3] sm:$0xff] %vm593, %v570
      %595 = vst.msk [vmem:[#allocation3 + $0x20] sm:$0xff] %vm593, %v572
      %596 = vst.msk [vmem:[#allocation3 + $0x40] sm:$0xff] %vm593, %v574
      %597 = vst.msk [vmem:[#allocation3 + $0x60] sm:$0xff] %vm593, %v576
      %598 = vst.msk [vmem:[#allocation3 + $0x80] sm:$0xff] %vm593, %v578
      %599 = vst.msk [vmem:[#allocation3 + $0xa0] sm:$0xff] %vm593, %v580
      %600 = vst.msk [vmem:[#allocation3 + $0xc0] sm:$0xff] %vm593, %v582
      %601 = vst.msk [vmem:[#allocation3 + $0xe0] sm:$0xff] %vm593, %v584
      %v602 = vld [vmem:[%s479] sm:$0xff]
      %v603 = vld [vmem:[%s479 + $0x10] sm:$0xff]
      %v604 = vld [vmem:[%s479 + $0x20] sm:$0xff]
      %v605 = vld [vmem:[%s479 + $0x30] sm:$0xff]
      %v606 = vld [vmem:[%s479 + $0x40] sm:$0xff]
      %v607 = vld [vmem:[%s479 + $0x50] sm:$0xff]
      %v608 = vld [vmem:[%s479 + $0x60] sm:$0xff]
      %v609 = vld [vmem:[%s479 + $0x70] sm:$0xff]
      %618 = vrot.lane.b32.xlu0 %v602, 48
      %v619 = vpop.permute.xlu0 %618
      %620 = vrot.lane.b32.xlu0 %v603, 48
      %v621 = vpop.permute.xlu0 %620
      %622 = vrot.lane.b32.xlu0 %v604, 48
      %v623 = vpop.permute.xlu0 %622
      %624 = vrot.lane.b32.xlu0 %v605, 48
      %v625 = vpop.permute.xlu0 %624
      %626 = vrot.lane.b32.xlu0 %v606, 48
      %v627 = vpop.permute.xlu0 %626
      %628 = vrot.lane.b32.xlu0 %v607, 48
      %v629 = vpop.permute.xlu0 %628
      %630 = vrot.lane.b32.xlu0 %v608, 48
      %v631 = vpop.permute.xlu0 %630
      %632 = vrot.lane.b32.xlu0 %v609, 48
      %v633 = vpop.permute.xlu0 %632
      %vm642 = vcmask 523648
      %643 = vst.msk [vmem:[#allocation3] sm:$0xff] %vm642, %v619
      %644 = vst.msk [vmem:[#allocation3 + $0x20] sm:$0xff] %vm642, %v621
      %645 = vst.msk [vmem:[#allocation3 + $0x40] sm:$0xff] %vm642, %v623
      %646 = vst.msk [vmem:[#allocation3 + $0x60] sm:$0xff] %vm642, %v625
      %647 = vst.msk [vmem:[#allocation3 + $0x80] sm:$0xff] %vm642, %v627
      %648 = vst.msk [vmem:[#allocation3 + $0xa0] sm:$0xff] %vm642, %v629
      %649 = vst.msk [vmem:[#allocation3 + $0xc0] sm:$0xff] %vm642, %v631
      %650 = vst.msk [vmem:[#allocation3 + $0xe0] sm:$0xff] %vm642, %v633
      %v651 = vld [vmem:[%s479 + $0x1] sm:$0xff]
      %v652 = vld [vmem:[%s479 + $0x11] sm:$0xff]
      %v653 = vld [vmem:[%s479 + $0x21] sm:$0xff]
      %v654 = vld [vmem:[%s479 + $0x31] sm:$0xff]
      %v655 = vld [vmem:[%s479 + $0x41] sm:$0xff]
      %v656 = vld [vmem:[%s479 + $0x51] sm:$0xff]
      %v657 = vld [vmem:[%s479 + $0x61] sm:$0xff]
      %v658 = vld [vmem:[%s479 + $0x71] sm:$0xff]
      %667 = vrot.lane.b32.xlu0 %v651, 64
      %v668 = vpop.permute.xlu0 %667
      %669 = vrot.lane.b32.xlu0 %v652, 64
      %v670 = vpop.permute.xlu0 %669
      %671 = vrot.lane.b32.xlu0 %v653, 64
      %v672 = vpop.permute.xlu0 %671
      %673 = vrot.lane.b32.xlu0 %v654, 64
      %v674 = vpop.permute.xlu0 %673
      %675 = vrot.lane.b32.xlu0 %v655, 64
      %v676 = vpop.permute.xlu0 %675
      %677 = vrot.lane.b32.xlu0 %v656, 64
      %v678 = vpop.permute.xlu0 %677
      %679 = vrot.lane.b32.xlu0 %v657, 64
      %v680 = vpop.permute.xlu0 %679
      %681 = vrot.lane.b32.xlu0 %v658, 64
      %v682 = vpop.permute.xlu0 %681
      %vm691 = vcmask 654848
      %692 = vst.msk [vmem:[#allocation3] sm:$0xff] %vm691, %v668
      %693 = vst.msk [vmem:[#allocation3 + $0x20] sm:$0xff] %vm691, %v670
      %694 = vst.msk [vmem:[#allocation3 + $0x40] sm:$0xff] %vm691, %v672
      %695 = vst.msk [vmem:[#allocation3 + $0x60] sm:$0xff] %vm691, %v674
      %696 = vst.msk [vmem:[#allocation3 + $0x80] sm:$0xff] %vm691, %v676
      %697 = vst.msk [vmem:[#allocation3 + $0xa0] sm:$0xff] %vm691, %v678
      %698 = vst.msk [vmem:[#allocation3 + $0xc0] sm:$0xff] %vm691, %v680
      %699 = vst.msk [vmem:[#allocation3 + $0xe0] sm:$0xff] %vm691, %v682
      %v700 = vld [vmem:[%s479 + $0x2] sm:$0xff]
      %v701 = vld [vmem:[%s479 + $0x12] sm:$0xff]
      %v702 = vld [vmem:[%s479 + $0x22] sm:$0xff]
      %v703 = vld [vmem:[%s479 + $0x32] sm:$0xff]
      %v704 = vld [vmem:[%s479 + $0x42] sm:$0xff]
      %v705 = vld [vmem:[%s479 + $0x52] sm:$0xff]
      %v706 = vld [vmem:[%s479 + $0x62] sm:$0xff]
      %v707 = vld [vmem:[%s479 + $0x72] sm:$0xff]
      %716 = vrot.lane.b32.xlu0 %v700, 80
      %v717 = vpop.permute.xlu0 %716
      %718 = vrot.lane.b32.xlu0 %v701, 80
      %v719 = vpop.permute.xlu0 %718
      %720 = vrot.lane.b32.xlu0 %v702, 80
      %v721 = vpop.permute.xlu0 %720
      %722 = vrot.lane.b32.xlu0 %v703, 80
      %v723 = vpop.permute.xlu0 %722
      %724 = vrot.lane.b32.xlu0 %v704, 80
      %v725 = vpop.permute.xlu0 %724
      %726 = vrot.lane.b32.xlu0 %v705, 80
      %v727 = vpop.permute.xlu0 %726
      %728 = vrot.lane.b32.xlu0 %v706, 80
      %v729 = vpop.permute.xlu0 %728
      %730 = vrot.lane.b32.xlu0 %v707, 80
      %v731 = vpop.permute.xlu0 %730
      %vm740 = vcmask 786048
      %741 = vst.msk [vmem:[#allocation3] sm:$0xff] %vm740, %v717
      %742 = vst.msk [vmem:[#allocation3 + $0x20] sm:$0xff] %vm740, %v719
      %743 = vst.msk [vmem:[#allocation3 + $0x40] sm:$0xff] %vm740, %v721
      %744 = vst.msk [vmem:[#allocation3 + $0x60] sm:$0xff] %vm740, %v723
      %745 = vst.msk [vmem:[#allocation3 + $0x80] sm:$0xff] %vm740, %v725
      %746 = vst.msk [vmem:[#allocation3 + $0xa0] sm:$0xff] %vm740, %v727
      %747 = vst.msk [vmem:[#allocation3 + $0xc0] sm:$0xff] %vm740, %v729
      %748 = vst.msk [vmem:[#allocation3 + $0xe0] sm:$0xff] %vm740, %v731
      %s749 = scalar_lea.vmem [#allocation2], 32
      %v750 = vld [vmem:[%s749] sm:$0xff]
      %v751 = vld [vmem:[%s749 + $0x10] sm:$0xff]
      %v752 = vld [vmem:[%s749 + $0x20] sm:$0xff]
      %v753 = vld [vmem:[%s749 + $0x30] sm:$0xff]
      %v754 = vld [vmem:[%s749 + $0x40] sm:$0xff]
      %v755 = vld [vmem:[%s749 + $0x50] sm:$0xff]
      %v756 = vld [vmem:[%s749 + $0x60] sm:$0xff]
      %v757 = vld [vmem:[%s749 + $0x70] sm:$0xff]
      %766 = vrot.lane.b32.xlu0 %v750, 96
      %v767 = vpop.permute.xlu0 %766
      %768 = vrot.lane.b32.xlu0 %v751, 96
      %v769 = vpop.permute.xlu0 %768
      %770 = vrot.lane.b32.xlu0 %v752, 96
      %v771 = vpop.permute.xlu0 %770
      %772 = vrot.lane.b32.xlu0 %v753, 96
      %v773 = vpop.permute.xlu0 %772
      %774 = vrot.lane.b32.xlu0 %v754, 96
      %v775 = vpop.permute.xlu0 %774
      %776 = vrot.lane.b32.xlu0 %v755, 96
      %v777 = vpop.permute.xlu0 %776
      %778 = vrot.lane.b32.xlu0 %v756, 96
      %v779 = vpop.permute.xlu0 %778
      %780 = vrot.lane.b32.xlu0 %v757, 96
      %v781 = vpop.permute.xlu0 %780
      %vm790 = vcmask 917248
      %791 = vst.msk [vmem:[#allocation3] sm:$0xff] %vm790, %v767
      %792 = vst.msk [vmem:[#allocation3 + $0x20] sm:$0xff] %vm790, %v769
      %793 = vst.msk [vmem:[#allocation3 + $0x40] sm:$0xff] %vm790, %v771
      %794 = vst.msk [vmem:[#allocation3 + $0x60] sm:$0xff] %vm790, %v773
      %795 = vst.msk [vmem:[#allocation3 + $0x80] sm:$0xff] %vm790, %v775
      %796 = vst.msk [vmem:[#allocation3 + $0xa0] sm:$0xff] %vm790, %v777
      %797 = vst.msk [vmem:[#allocation3 + $0xc0] sm:$0xff] %vm790, %v779
      %798 = vst.msk [vmem:[#allocation3 + $0xe0] sm:$0xff] %vm790, %v781
      %v799 = vld [vmem:[%s749 + $0x1] sm:$0xff]
      %v800 = vld [vmem:[%s749 + $0x11] sm:$0xff]
      %v801 = vld [vmem:[%s749 + $0x21] sm:$0xff]
      %v802 = vld [vmem:[%s749 + $0x31] sm:$0xff]
      %v803 = vld [vmem:[%s749 + $0x41] sm:$0xff]
      %v804 = vld [vmem:[%s749 + $0x51] sm:$0xff]
      %v805 = vld [vmem:[%s749 + $0x61] sm:$0xff]
      %v806 = vld [vmem:[%s749 + $0x71] sm:$0xff]
      %815 = vrot.lane.b32.xlu0 %v799, 112
      %v816 = vpop.permute.xlu0 %815
      %817 = vrot.lane.b32.xlu0 %v800, 112
      %v818 = vpop.permute.xlu0 %817
      %819 = vrot.lane.b32.xlu0 %v801, 112
      %v820 = vpop.permute.xlu0 %819
      %821 = vrot.lane.b32.xlu0 %v802, 112
      %v822 = vpop.permute.xlu0 %821
      %823 = vrot.lane.b32.xlu0 %v803, 112
      %v824 = vpop.permute.xlu0 %823
      %825 = vrot.lane.b32.xlu0 %v804, 112
      %v826 = vpop.permute.xlu0 %825
      %827 = vrot.lane.b32.xlu0 %v805, 112
      %v828 = vpop.permute.xlu0 %827
      %829 = vrot.lane.b32.xlu0 %v806, 112
      %v830 = vpop.permute.xlu0 %829
      %vm839 = vcmask 1048448
      %840 = vst.msk [vmem:[#allocation3] sm:$0xff] %vm839, %v816
      %841 = vst.msk [vmem:[#allocation3 + $0x20] sm:$0xff] %vm839, %v818
      %842 = vst.msk [vmem:[#allocation3 + $0x40] sm:$0xff] %vm839, %v820
      %843 = vst.msk [vmem:[#allocation3 + $0x60] sm:$0xff] %vm839, %v822
      %844 = vst.msk [vmem:[#allocation3 + $0x80] sm:$0xff] %vm839, %v824
      %845 = vst.msk [vmem:[#allocation3 + $0xa0] sm:$0xff] %vm839, %v826
      %846 = vst.msk [vmem:[#allocation3 + $0xc0] sm:$0xff] %vm839, %v828
      %847 = vst.msk [vmem:[#allocation3 + $0xe0] sm:$0xff] %vm839, %v830
      %v848 = vld [vmem:[%s749 + $0x2] sm:$0xff]
      %v849 = vld [vmem:[%s749 + $0x12] sm:$0xff]
      %v850 = vld [vmem:[%s749 + $0x22] sm:$0xff]
      %v851 = vld [vmem:[%s749 + $0x32] sm:$0xff]
      %v852 = vld [vmem:[%s749 + $0x42] sm:$0xff]
      %v853 = vld [vmem:[%s749 + $0x52] sm:$0xff]
      %v854 = vld [vmem:[%s749 + $0x62] sm:$0xff]
      %v855 = vld [vmem:[%s749 + $0x72] sm:$0xff]
      %856 = vst.msk [vmem:[#allocation3 + $0x8] sm:$0xff] %vm385, %v848
      %857 = vst.msk [vmem:[#allocation3 + $0x28] sm:$0xff] %vm385, %v849
      %858 = vst.msk [vmem:[#allocation3 + $0x48] sm:$0xff] %vm385, %v850
      %859 = vst.msk [vmem:[#allocation3 + $0x68] sm:$0xff] %vm385, %v851
      %860 = vst.msk [vmem:[#allocation3 + $0x88] sm:$0xff] %vm385, %v852
      %861 = vst.msk [vmem:[#allocation3 + $0xa8] sm:$0xff] %vm385, %v853
      %862 = vst.msk [vmem:[#allocation3 + $0xc8] sm:$0xff] %vm385, %v854
      %863 = vst.msk [vmem:[#allocation3 + $0xe8] sm:$0xff] %vm385, %v855
      %v864 = vld [vmem:[%s351] sm:$0xf]
      %v865 = vld [vmem:[%s351 + $0x4] sm:$0xf]
      %v866 = vld [vmem:[%s351 + $0x8] sm:$0xf]
      %v867 = vld [vmem:[%s351 + $0xc] sm:$0xf]
      %v868 = vld [vmem:[%s351 + $0x10] sm:$0xf]
      %v869 = vld [vmem:[%s351 + $0x14] sm:$0xf]
      %v870 = vld [vmem:[%s351 + $0x18] sm:$0xf]
      %v871 = vld [vmem:[%s351 + $0x1c] sm:$0xf]
      %v872 = vunpack.c.l.bf16 %v864
      %v873 = vunpack.c.l.bf16 %v865
      %v874 = vunpack.c.l.bf16 %v866
      %v875 = vunpack.c.l.bf16 %v867
      %v876 = vunpack.c.l.bf16 %v868
      %v877 = vunpack.c.l.bf16 %v869
      %v878 = vunpack.c.l.bf16 %v870
      %v879 = vunpack.c.l.bf16 %v871
      %v880 = vmul.f32 %v872, %v435
      %v881 = vmul.f32 %v873, %v435
      %v882 = vmul.f32 %v874, %v435
      %v883 = vmul.f32 %v875, %v435
      %v884 = vmul.f32 %v876, %v435
      %v885 = vmul.f32 %v877, %v435
      %v886 = vmul.f32 %v878, %v435
      %v887 = vmul.f32 %v879, %v435
      %v888 = vadd.f32 %v880, %v449
      %v889 = vadd.f32 %v881, %v449
      %v890 = vadd.f32 %v882, %v449
      %v891 = vadd.f32 %v883, %v449
      %v892 = vadd.f32 %v884, %v449
      %v893 = vadd.f32 %v885, %v449
      %v894 = vadd.f32 %v886, %v449
      %v895 = vadd.f32 %v887, %v449
      %v896 = vmax.f32 %v888, 0.0
      %v897 = vmax.f32 %v889, 0.0
      %v898 = vmax.f32 %v890, 0.0
      %v899 = vmax.f32 %v891, 0.0
      %v900 = vmax.f32 %v892, 0.0
      %v901 = vmax.f32 %v893, 0.0
      %v902 = vmax.f32 %v894, 0.0
      %v903 = vmax.f32 %v895, 0.0
      %904 = vst.msk [vmem:[%s479 + $0x1] sm:$0xff] %vm385, %v896
      %905 = vst.msk [vmem:[%s479 + $0x11] sm:$0xff] %vm385, %v897
      %906 = vst.msk [vmem:[%s479 + $0x21] sm:$0xff] %vm385, %v898
      %907 = vst.msk [vmem:[%s479 + $0x31] sm:$0xff] %vm385, %v899
      %908 = vst.msk [vmem:[%s479 + $0x41] sm:$0xff] %vm385, %v900
      %909 = vst.msk [vmem:[%s479 + $0x51] sm:$0xff] %vm385, %v901
      %910 = vst.msk [vmem:[%s479 + $0x61] sm:$0xff] %vm385, %v902
      %911 = vst.msk [vmem:[%s479 + $0x71] sm:$0xff] %vm385, %v903
      %v912 = vld [vmem:[#allocation2] sm:$0xff]
      %v913 = vld [vmem:[#allocation2 + $0x10] sm:$0xff]
      %v914 = vld [vmem:[#allocation2 + $0x20] sm:$0xff]
      %v915 = vld [vmem:[#allocation2 + $0x30] sm:$0xff]
      %v916 = vld [vmem:[#allocation2 + $0x40] sm:$0xff]
      %v917 = vld [vmem:[#allocation2 + $0x50] sm:$0xff]
      %v918 = vld [vmem:[#allocation2 + $0x60] sm:$0xff]
      %v919 = vld [vmem:[#allocation2 + $0x70] sm:$0xff]
      %928 = vrot.lane.b32.xlu0 %v912, 16
      %v929 = vpop.permute.xlu0 %928
      %930 = vrot.lane.b32.xlu0 %v913, 16
      %v931 = vpop.permute.xlu0 %930
      %932 = vrot.lane.b32.xlu0 %v914, 16
      %v933 = vpop.permute.xlu0 %932
      %934 = vrot.lane.b32.xlu0 %v915, 16
      %v935 = vpop.permute.xlu0 %934
      %936 = vrot.lane.b32.xlu0 %v916, 16
      %v937 = vpop.permute.xlu0 %936
      %938 = vrot.lane.b32.xlu0 %v917, 16
      %v939 = vpop.permute.xlu0 %938
      %940 = vrot.lane.b32.xlu0 %v918, 16
      %v941 = vpop.permute.xlu0 %940
      %942 = vrot.lane.b32.xlu0 %v919, 16
      %v943 = vpop.permute.xlu0 %942
      %952 = vst.msk [vmem:[#allocation3 + $0x8] sm:$0xff] %vm544, %v929
      %953 = vst.msk [vmem:[#allocation3 + $0x28] sm:$0xff] %vm544, %v931
      %954 = vst.msk [vmem:[#allocation3 + $0x48] sm:$0xff] %vm544, %v933
      %955 = vst.msk [vmem:[#allocation3 + $0x68] sm:$0xff] %vm544, %v935
      %956 = vst.msk [vmem:[#allocation3 + $0x88] sm:$0xff] %vm544, %v937
      %957 = vst.msk [vmem:[#allocation3 + $0xa8] sm:$0xff] %vm544, %v939
      %958 = vst.msk [vmem:[#allocation3 + $0xc8] sm:$0xff] %vm544, %v941
      %959 = vst.msk [vmem:[#allocation3 + $0xe8] sm:$0xff] %vm544, %v943
      %v960 = vld [vmem:[#allocation2 + $0x1] sm:$0xff]
      %v961 = vld [vmem:[#allocation2 + $0x11] sm:$0xff]
      %v962 = vld [vmem:[#allocation2 + $0x21] sm:$0xff]
      %v963 = vld [vmem:[#allocation2 + $0x31] sm:$0xff]
      %v964 = vld [vmem:[#allocation2 + $0x41] sm:$0xff]
      %v965 = vld [vmem:[#allocation2 + $0x51] sm:$0xff]
      %v966 = vld [vmem:[#allocation2 + $0x61] sm:$0xff]
      %v967 = vld [vmem:[#allocation2 + $0x71] sm:$0xff]
      %976 = vrot.lane.b32.xlu0 %v960, 32
      %v977 = vpop.permute.xlu0 %976
      %978 = vrot.lane.b32.xlu0 %v961, 32
      %v979 = vpop.permute.xlu0 %978
      %980 = vrot.lane.b32.xlu0 %v962, 32
      %v981 = vpop.permute.xlu0 %980
      %982 = vrot.lane.b32.xlu0 %v963, 32
      %v983 = vpop.permute.xlu0 %982
      %984 = vrot.lane.b32.xlu0 %v964, 32
      %v985 = vpop.permute.xlu0 %984
      %986 = vrot.lane.b32.xlu0 %v965, 32
      %v987 = vpop.permute.xlu0 %986
      %988 = vrot.lane.b32.xlu0 %v966, 32
      %v989 = vpop.permute.xlu0 %988
      %990 = vrot.lane.b32.xlu0 %v967, 32
      %v991 = vpop.permute.xlu0 %990
      %1000 = vst.msk [vmem:[#allocation3 + $0x8] sm:$0xff] %vm593, %v977
      %1001 = vst.msk [vmem:[#allocation3 + $0x28] sm:$0xff] %vm593, %v979
      %1002 = vst.msk [vmem:[#allocation3 + $0x48] sm:$0xff] %vm593, %v981
      %1003 = vst.msk [vmem:[#allocation3 + $0x68] sm:$0xff] %vm593, %v983
      %1004 = vst.msk [vmem:[#allocation3 + $0x88] sm:$0xff] %vm593, %v985
      %1005 = vst.msk [vmem:[#allocation3 + $0xa8] sm:$0xff] %vm593, %v987
      %1006 = vst.msk [vmem:[#allocation3 + $0xc8] sm:$0xff] %vm593, %v989
      %1007 = vst.msk [vmem:[#allocation3 + $0xe8] sm:$0xff] %vm593, %v991
      %v1008 = vld [vmem:[#allocation2 + $0x2] sm:$0xff]
      %v1009 = vld [vmem:[#allocation2 + $0x12] sm:$0xff]
      %v1010 = vld [vmem:[#allocation2 + $0x22] sm:$0xff]
      %v1011 = vld [vmem:[#allocation2 + $0x32] sm:$0xff]
      %v1012 = vld [vmem:[#allocation2 + $0x42] sm:$0xff]
      %v1013 = vld [vmem:[#allocation2 + $0x52] sm:$0xff]
      %v1014 = vld [vmem:[#allocation2 + $0x62] sm:$0xff]
      %v1015 = vld [vmem:[#allocation2 + $0x72] sm:$0xff]
      %1024 = vrot.lane.b32.xlu0 %v1008, 48
      %v1025 = vpop.permute.xlu0 %1024
      %1026 = vrot.lane.b32.xlu0 %v1009, 48
      %v1027 = vpop.permute.xlu0 %1026
      %1028 = vrot.lane.b32.xlu0 %v1010, 48
      %v1029 = vpop.permute.xlu0 %1028
      %1030 = vrot.lane.b32.xlu0 %v1011, 48
      %v1031 = vpop.permute.xlu0 %1030
      %1032 = vrot.lane.b32.xlu0 %v1012, 48
      %v1033 = vpop.permute.xlu0 %1032
      %1034 = vrot.lane.b32.xlu0 %v1013, 48
      %v1035 = vpop.permute.xlu0 %1034
      %1036 = vrot.lane.b32.xlu0 %v1014, 48
      %v1037 = vpop.permute.xlu0 %1036
      %1038 = vrot.lane.b32.xlu0 %v1015, 48
      %v1039 = vpop.permute.xlu0 %1038
      %1048 = vst.msk [vmem:[#allocation3 + $0x8] sm:$0xff] %vm642, %v1025
      %1049 = vst.msk [vmem:[#allocation3 + $0x28] sm:$0xff] %vm642, %v1027
      %1050 = vst.msk [vmem:[#allocation3 + $0x48] sm:$0xff] %vm642, %v1029
      %1051 = vst.msk [vmem:[#allocation3 + $0x68] sm:$0xff] %vm642, %v1031
      %1052 = vst.msk [vmem:[#allocation3 + $0x88] sm:$0xff] %vm642, %v1033
      %1053 = vst.msk [vmem:[#allocation3 + $0xa8] sm:$0xff] %vm642, %v1035
      %1054 = vst.msk [vmem:[#allocation3 + $0xc8] sm:$0xff] %vm642, %v1037
      %1055 = vst.msk [vmem:[#allocation3 + $0xe8] sm:$0xff] %vm642, %v1039
      %v1056 = vld [vmem:[%s479] sm:$0xff]
      %v1057 = vld [vmem:[%s479 + $0x10] sm:$0xff]
      %v1058 = vld [vmem:[%s479 + $0x20] sm:$0xff]
      %v1059 = vld [vmem:[%s479 + $0x30] sm:$0xff]
      %v1060 = vld [vmem:[%s479 + $0x40] sm:$0xff]
      %v1061 = vld [vmem:[%s479 + $0x50] sm:$0xff]
      %v1062 = vld [vmem:[%s479 + $0x60] sm:$0xff]
      %v1063 = vld [vmem:[%s479 + $0x70] sm:$0xff]
      %1072 = vrot.lane.b32.xlu0 %v1056, 64
      %v1073 = vpop.permute.xlu0 %1072
      %1074 = vrot.lane.b32.xlu0 %v1057, 64
      %v1075 = vpop.permute.xlu0 %1074
      %1076 = vrot.lane.b32.xlu0 %v1058, 64
      %v1077 = vpop.permute.xlu0 %1076
      %1078 = vrot.lane.b32.xlu0 %v1059, 64
      %v1079 = vpop.permute.xlu0 %1078
      %1080 = vrot.lane.b32.xlu0 %v1060, 64
      %v1081 = vpop.permute.xlu0 %1080
      %1082 = vrot.lane.b32.xlu0 %v1061, 64
      %v1083 = vpop.permute.xlu0 %1082
      %1084 = vrot.lane.b32.xlu0 %v1062, 64
      %v1085 = vpop.permute.xlu0 %1084
      %1086 = vrot.lane.b32.xlu0 %v1063, 64
      %v1087 = vpop.permute.xlu0 %1086
      %1096 = vst.msk [vmem:[#allocation3 + $0x8] sm:$0xff] %vm691, %v1073
      %1097 = vst.msk [vmem:[#allocation3 + $0x28] sm:$0xff] %vm691, %v1075
      %1098 = vst.msk [vmem:[#allocation3 + $0x48] sm:$0xff] %vm691, %v1077
      %1099 = vst.msk [vmem:[#allocation3 + $0x68] sm:$0xff] %vm691, %v1079
      %1100 = vst.msk [vmem:[#allocation3 + $0x88] sm:$0xff] %vm691, %v1081
      %1101 = vst.msk [vmem:[#allocation3 + $0xa8] sm:$0xff] %vm691, %v1083
      %1102 = vst.msk [vmem:[#allocation3 + $0xc8] sm:$0xff] %vm691, %v1085
      %1103 = vst.msk [vmem:[#allocation3 + $0xe8] sm:$0xff] %vm691, %v1087
      %v1104 = vld [vmem:[%s479 + $0x1] sm:$0xff]
      %v1105 = vld [vmem:[%s479 + $0x11] sm:$0xff]
      %v1106 = vld [vmem:[%s479 + $0x21] sm:$0xff]
      %v1107 = vld [vmem:[%s479 + $0x31] sm:$0xff]
      %v1108 = vld [vmem:[%s479 + $0x41] sm:$0xff]
      %v1109 = vld [vmem:[%s479 + $0x51] sm:$0xff]
      %v1110 = vld [vmem:[%s479 + $0x61] sm:$0xff]
      %v1111 = vld [vmem:[%s479 + $0x71] sm:$0xff]
      %1120 = vrot.lane.b32.xlu0 %v1104, 80
      %v1121 = vpop.permute.xlu0 %1120
      %1122 = vrot.lane.b32.xlu0 %v1105, 80
      %v1123 = vpop.permute.xlu0 %1122
      %1124 = vrot.lane.b32.xlu0 %v1106, 80
      %v1125 = vpop.permute.xlu0 %1124
      %1126 = vrot.lane.b32.xlu0 %v1107, 80
      %v1127 = vpop.permute.xlu0 %1126
      %1128 = vrot.lane.b32.xlu0 %v1108, 80
      %v1129 = vpop.permute.xlu0 %1128
      %1130 = vrot.lane.b32.xlu0 %v1109, 80
      %v1131 = vpop.permute.xlu0 %1130
      %1132 = vrot.lane.b32.xlu0 %v1110, 80
      %v1133 = vpop.permute.xlu0 %1132
      %1134 = vrot.lane.b32.xlu0 %v1111, 80
      %v1135 = vpop.permute.xlu0 %1134
      %1144 = vst.msk [vmem:[#allocation3 + $0x8] sm:$0xff] %vm740, %v1121
      %1145 = vst.msk [vmem:[#allocation3 + $0x28] sm:$0xff] %vm740, %v1123
      %1146 = vst.msk [vmem:[#allocation3 + $0x48] sm:$0xff] %vm740, %v1125
      %1147 = vst.msk [vmem:[#allocation3 + $0x68] sm:$0xff] %vm740, %v1127
      %1148 = vst.msk [vmem:[#allocation3 + $0x88] sm:$0xff] %vm740, %v1129
      %1149 = vst.msk [vmem:[#allocation3 + $0xa8] sm:$0xff] %vm740, %v1131
      %1150 = vst.msk [vmem:[#allocation3 + $0xc8] sm:$0xff] %vm740, %v1133
      %1151 = vst.msk [vmem:[#allocation3 + $0xe8] sm:$0xff] %vm740, %v1135
      %v1152 = vld [vmem:[%s479 + $0x2] sm:$0xff]
      %v1153 = vld [vmem:[%s479 + $0x12] sm:$0xff]
      %v1154 = vld [vmem:[%s479 + $0x22] sm:$0xff]
      %v1155 = vld [vmem:[%s479 + $0x32] sm:$0xff]
      %v1156 = vld [vmem:[%s479 + $0x42] sm:$0xff]
      %v1157 = vld [vmem:[%s479 + $0x52] sm:$0xff]
      %v1158 = vld [vmem:[%s479 + $0x62] sm:$0xff]
      %v1159 = vld [vmem:[%s479 + $0x72] sm:$0xff]
      %1168 = vrot.lane.b32.xlu0 %v1152, 96
      %v1169 = vpop.permute.xlu0 %1168
      %1170 = vrot.lane.b32.xlu0 %v1153, 96
      %v1171 = vpop.permute.xlu0 %1170
      %1172 = vrot.lane.b32.xlu0 %v1154, 96
      %v1173 = vpop.permute.xlu0 %1172
      %1174 = vrot.lane.b32.xlu0 %v1155, 96
      %v1175 = vpop.permute.xlu0 %1174
      %1176 = vrot.lane.b32.xlu0 %v1156, 96
      %v1177 = vpop.permute.xlu0 %1176
      %1178 = vrot.lane.b32.xlu0 %v1157, 96
      %v1179 = vpop.permute.xlu0 %1178
      %1180 = vrot.lane.b32.xlu0 %v1158, 96
      %v1181 = vpop.permute.xlu0 %1180
      %1182 = vrot.lane.b32.xlu0 %v1159, 96
      %v1183 = vpop.permute.xlu0 %1182
      %1192 = vst.msk [vmem:[#allocation3 + $0x8] sm:$0xff] %vm790, %v1169
      %1193 = vst.msk [vmem:[#allocation3 + $0x28] sm:$0xff] %vm790, %v1171
      %1194 = vst.msk [vmem:[#allocation3 + $0x48] sm:$0xff] %vm790, %v1173
      %1195 = vst.msk [vmem:[#allocation3 + $0x68] sm:$0xff] %vm790, %v1175
      %1196 = vst.msk [vmem:[#allocation3 + $0x88] sm:$0xff] %vm790, %v1177
      %1197 = vst.msk [vmem:[#allocation3 + $0xa8] sm:$0xff] %vm790, %v1179
      %1198 = vst.msk [vmem:[#allocation3 + $0xc8] sm:$0xff] %vm790, %v1181
      %1199 = vst.msk [vmem:[#allocation3 + $0xe8] sm:$0xff] %vm790, %v1183
      %v1200 = vld [vmem:[%s749] sm:$0xff]
      %v1201 = vld [vmem:[%s749 + $0x10] sm:$0xff]
      %v1202 = vld [vmem:[%s749 + $0x20] sm:$0xff]
      %v1203 = vld [vmem:[%s749 + $0x30] sm:$0xff]
      %v1204 = vld [vmem:[%s749 + $0x40] sm:$0xff]
      %v1205 = vld [vmem:[%s749 + $0x50] sm:$0xff]
      %v1206 = vld [vmem:[%s749 + $0x60] sm:$0xff]
      %v1207 = vld [vmem:[%s749 + $0x70] sm:$0xff]
      %1216 = vrot.lane.b32.xlu0 %v1200, 112
      %v1217 = vpop.permute.xlu0 %1216
      %1218 = vrot.lane.b32.xlu0 %v1201, 112
      %v1219 = vpop.permute.xlu0 %1218
      %1220 = vrot.lane.b32.xlu0 %v1202, 112
      %v1221 = vpop.permute.xlu0 %1220
      %1222 = vrot.lane.b32.xlu0 %v1203, 112
      %v1223 = vpop.permute.xlu0 %1222
      %1224 = vrot.lane.b32.xlu0 %v1204, 112
      %v1225 = vpop.permute.xlu0 %1224
      %1226 = vrot.lane.b32.xlu0 %v1205, 112
      %v1227 = vpop.permute.xlu0 %1226
      %1228 = vrot.lane.b32.xlu0 %v1206, 112
      %v1229 = vpop.permute.xlu0 %1228
      %1230 = vrot.lane.b32.xlu0 %v1207, 112
      %v1231 = vpop.permute.xlu0 %1230
      %1240 = vst.msk [vmem:[#allocation3 + $0x8] sm:$0xff] %vm839, %v1217
      %1241 = vst.msk [vmem:[#allocation3 + $0x28] sm:$0xff] %vm839, %v1219
      %1242 = vst.msk [vmem:[#allocation3 + $0x48] sm:$0xff] %vm839, %v1221
      %1243 = vst.msk [vmem:[#allocation3 + $0x68] sm:$0xff] %vm839, %v1223
      %1244 = vst.msk [vmem:[#allocation3 + $0x88] sm:$0xff] %vm839, %v1225
      %1245 = vst.msk [vmem:[#allocation3 + $0xa8] sm:$0xff] %vm839, %v1227
      %1246 = vst.msk [vmem:[#allocation3 + $0xc8] sm:$0xff] %vm839, %v1229
      %1247 = vst.msk [vmem:[#allocation3 + $0xe8] sm:$0xff] %vm839, %v1231
      %v1248 = vld [vmem:[%s749 + $0x1] sm:$0xff]
      %v1249 = vld [vmem:[%s749 + $0x11] sm:$0xff]
      %v1250 = vld [vmem:[%s749 + $0x21] sm:$0xff]
      %v1251 = vld [vmem:[%s749 + $0x31] sm:$0xff]
      %v1252 = vld [vmem:[%s749 + $0x41] sm:$0xff]
      %v1253 = vld [vmem:[%s749 + $0x51] sm:$0xff]
      %v1254 = vld [vmem:[%s749 + $0x61] sm:$0xff]
      %v1255 = vld [vmem:[%s749 + $0x71] sm:$0xff]
      %1256 = vst.msk [vmem:[#allocation3 + $0x10] sm:$0xff] %vm385, %v1248
      %1257 = vst.msk [vmem:[#allocation3 + $0x30] sm:$0xff] %vm385, %v1249
      %1258 = vst.msk [vmem:[#allocation3 + $0x50] sm:$0xff] %vm385, %v1250
      %1259 = vst.msk [vmem:[#allocation3 + $0x70] sm:$0xff] %vm385, %v1251
      %1260 = vst.msk [vmem:[#allocation3 + $0x90] sm:$0xff] %vm385, %v1252
      %1261 = vst.msk [vmem:[#allocation3 + $0xb0] sm:$0xff] %vm385, %v1253
      %1262 = vst.msk [vmem:[#allocation3 + $0xd0] sm:$0xff] %vm385, %v1254
      %1263 = vst.msk [vmem:[#allocation3 + $0xf0] sm:$0xff] %vm385, %v1255
      %v1264 = vld [vmem:[%s749 + $0x2] sm:$0xff]
      %v1265 = vld [vmem:[%s749 + $0x12] sm:$0xff]
      %v1266 = vld [vmem:[%s749 + $0x22] sm:$0xff]
      %v1267 = vld [vmem:[%s749 + $0x32] sm:$0xff]
      %v1268 = vld [vmem:[%s749 + $0x42] sm:$0xff]
      %v1269 = vld [vmem:[%s749 + $0x52] sm:$0xff]
      %v1270 = vld [vmem:[%s749 + $0x62] sm:$0xff]
      %v1271 = vld [vmem:[%s749 + $0x72] sm:$0xff]
      %1280 = vrot.lane.b32.xlu0 %v1264, 16
      %v1281 = vpop.permute.xlu0 %1280
      %1282 = vrot.lane.b32.xlu0 %v1265, 16
      %v1283 = vpop.permute.xlu0 %1282
      %1284 = vrot.lane.b32.xlu0 %v1266, 16
      %v1285 = vpop.permute.xlu0 %1284
      %1286 = vrot.lane.b32.xlu0 %v1267, 16
      %v1287 = vpop.permute.xlu0 %1286
      %1288 = vrot.lane.b32.xlu0 %v1268, 16
      %v1289 = vpop.permute.xlu0 %1288
      %1290 = vrot.lane.b32.xlu0 %v1269, 16
      %v1291 = vpop.permute.xlu0 %1290
      %1292 = vrot.lane.b32.xlu0 %v1270, 16
      %v1293 = vpop.permute.xlu0 %1292
      %1294 = vrot.lane.b32.xlu0 %v1271, 16
      %v1295 = vpop.permute.xlu0 %1294
      %1304 = vst.msk [vmem:[#allocation3 + $0x10] sm:$0xff] %vm544, %v1281
      %1305 = vst.msk [vmem:[#allocation3 + $0x30] sm:$0xff] %vm544, %v1283
      %1306 = vst.msk [vmem:[#allocation3 + $0x50] sm:$0xff] %vm544, %v1285
      %1307 = vst.msk [vmem:[#allocation3 + $0x70] sm:$0xff] %vm544, %v1287
      %1308 = vst.msk [vmem:[#allocation3 + $0x90] sm:$0xff] %vm544, %v1289
      %1309 = vst.msk [vmem:[#allocation3 + $0xb0] sm:$0xff] %vm544, %v1291
      %1310 = vst.msk [vmem:[#allocation3 + $0xd0] sm:$0xff] %vm544, %v1293
      %1311 = vst.msk [vmem:[#allocation3 + $0xf0] sm:$0xff] %vm544, %v1295
      %v1312 = vld [vmem:[%s359] sm:$0xf]
      %v1313 = vld [vmem:[%s359 + $0x4] sm:$0xf]
      %v1314 = vld [vmem:[%s359 + $0x8] sm:$0xf]
      %v1315 = vld [vmem:[%s359 + $0xc] sm:$0xf]
      %v1316 = vld [vmem:[%s359 + $0x10] sm:$0xf]
      %v1317 = vld [vmem:[%s359 + $0x14] sm:$0xf]
      %v1318 = vld [vmem:[%s359 + $0x18] sm:$0xf]
      %v1319 = vld [vmem:[%s359 + $0x1c] sm:$0xf]
      %v1320 = vunpack.c.l.bf16 %v1312
      %v1321 = vunpack.c.l.bf16 %v1313
      %v1322 = vunpack.c.l.bf16 %v1314
      %v1323 = vunpack.c.l.bf16 %v1315
      %v1324 = vunpack.c.l.bf16 %v1316
      %v1325 = vunpack.c.l.bf16 %v1317
      %v1326 = vunpack.c.l.bf16 %v1318
      %v1327 = vunpack.c.l.bf16 %v1319
      %v1328 = vmul.f32 %v1320, %v435
      %v1329 = vmul.f32 %v1321, %v435
      %v1330 = vmul.f32 %v1322, %v435
      %v1331 = vmul.f32 %v1323, %v435
      %v1332 = vmul.f32 %v1324, %v435
      %v1333 = vmul.f32 %v1325, %v435
      %v1334 = vmul.f32 %v1326, %v435
      %v1335 = vmul.f32 %v1327, %v435
      %v1336 = vadd.f32 %v1328, %v449
      %v1337 = vadd.f32 %v1329, %v449
      %v1338 = vadd.f32 %v1330, %v449
      %v1339 = vadd.f32 %v1331, %v449
      %v1340 = vadd.f32 %v1332, %v449
      %v1341 = vadd.f32 %v1333, %v449
      %v1342 = vadd.f32 %v1334, %v449
      %v1343 = vadd.f32 %v1335, %v449
      %v1344 = vmax.f32 %v1336, 0.0
      %v1345 = vmax.f32 %v1337, 0.0
      %v1346 = vmax.f32 %v1338, 0.0
      %v1347 = vmax.f32 %v1339, 0.0
      %v1348 = vmax.f32 %v1340, 0.0
      %v1349 = vmax.f32 %v1341, 0.0
      %v1350 = vmax.f32 %v1342, 0.0
      %v1351 = vmax.f32 %v1343, 0.0
      %p1352 = scmp.lt.s32.totalorder %s384, 7
      %s1353 = scalar_select %p1352, 1, 0
      %v1354 = vstv %s1353
      %vm1355 = vcmp.eq.s32.totalorder %v1354, 1
      %v1356 = vsel %vm1355, %v1344, 0.0
      %v1357 = vsel %vm1355, %v1345, 0.0
      %v1358 = vsel %vm1355, %v1346, 0.0
      %v1359 = vsel %vm1355, %v1347, 0.0
      %v1360 = vsel %vm1355, %v1348, 0.0
      %v1361 = vsel %vm1355, %v1349, 0.0
      %v1362 = vsel %vm1355, %v1350, 0.0
      %v1363 = vsel %vm1355, %v1351, 0.0
      %1364 = vst.msk [vmem:[%s479 + $0x1] sm:$0xff] %vm385, %v1356
      %1365 = vst.msk [vmem:[%s479 + $0x11] sm:$0xff] %vm385, %v1357
      %1366 = vst.msk [vmem:[%s479 + $0x21] sm:$0xff] %vm385, %v1358
      %1367 = vst.msk [vmem:[%s479 + $0x31] sm:$0xff] %vm385, %v1359
      %1368 = vst.msk [vmem:[%s479 + $0x41] sm:$0xff] %vm385, %v1360
      %1369 = vst.msk [vmem:[%s479 + $0x51] sm:$0xff] %vm385, %v1361
      %1370 = vst.msk [vmem:[%s479 + $0x61] sm:$0xff] %vm385, %v1362
      %1371 = vst.msk [vmem:[%s479 + $0x71] sm:$0xff] %vm385, %v1363
      %v1372 = vld [vmem:[#allocation2] sm:$0xff]
      %v1373 = vld [vmem:[#allocation2 + $0x10] sm:$0xff]
      %v1374 = vld [vmem:[#allocation2 + $0x20] sm:$0xff]
      %v1375 = vld [vmem:[#allocation2 + $0x30] sm:$0xff]
      %v1376 = vld [vmem:[#allocation2 + $0x40] sm:$0xff]
      %v1377 = vld [vmem:[#allocation2 + $0x50] sm:$0xff]
      %v1378 = vld [vmem:[#allocation2 + $0x60] sm:$0xff]
      %v1379 = vld [vmem:[#allocation2 + $0x70] sm:$0xff]
      %1388 = vrot.lane.b32.xlu0 %v1372, 32
      %v1389 = vpop.permute.xlu0 %1388
      %1390 = vrot.lane.b32.xlu0 %v1373, 32
      %v1391 = vpop.permute.xlu0 %1390
      %1392 = vrot.lane.b32.xlu0 %v1374, 32
      %v1393 = vpop.permute.xlu0 %1392
      %1394 = vrot.lane.b32.xlu0 %v1375, 32
      %v1395 = vpop.permute.xlu0 %1394
      %1396 = vrot.lane.b32.xlu0 %v1376, 32
      %v1397 = vpop.permute.xlu0 %1396
      %1398 = vrot.lane.b32.xlu0 %v1377, 32
      %v1399 = vpop.permute.xlu0 %1398
      %1400 = vrot.lane.b32.xlu0 %v1378, 32
      %v1401 = vpop.permute.xlu0 %1400
      %1402 = vrot.lane.b32.xlu0 %v1379, 32
      %v1403 = vpop.permute.xlu0 %1402
      %1412 = vst.msk [vmem:[#allocation3 + $0x10] sm:$0xff] %vm593, %v1389
      %1413 = vst.msk [vmem:[#allocation3 + $0x30] sm:$0xff] %vm593, %v1391
      %1414 = vst.msk [vmem:[#allocation3 + $0x50] sm:$0xff] %vm593, %v1393
      %1415 = vst.msk [vmem:[#allocation3 + $0x70] sm:$0xff] %vm593, %v1395
      %1416 = vst.msk [vmem:[#allocation3 + $0x90] sm:$0xff] %vm593, %v1397
      %1417 = vst.msk [vmem:[#allocation3 + $0xb0] sm:$0xff] %vm593, %v1399
      %1418 = vst.msk [vmem:[#allocation3 + $0xd0] sm:$0xff] %vm593, %v1401
      %1419 = vst.msk [vmem:[#allocation3 + $0xf0] sm:$0xff] %vm593, %v1403
      %v1420 = vld [vmem:[#allocation2 + $0x1] sm:$0xff]
      %v1421 = vld [vmem:[#allocation2 + $0x11] sm:$0xff]
      %v1422 = vld [vmem:[#allocation2 + $0x21] sm:$0xff]
      %v1423 = vld [vmem:[#allocation2 + $0x31] sm:$0xff]
      %v1424 = vld [vmem:[#allocation2 + $0x41] sm:$0xff]
      %v1425 = vld [vmem:[#allocation2 + $0x51] sm:$0xff]
      %v1426 = vld [vmem:[#allocation2 + $0x61] sm:$0xff]
      %v1427 = vld [vmem:[#allocation2 + $0x71] sm:$0xff]
      %1436 = vrot.lane.b32.xlu0 %v1420, 48
      %v1437 = vpop.permute.xlu0 %1436
      %1438 = vrot.lane.b32.xlu0 %v1421, 48
      %v1439 = vpop.permute.xlu0 %1438
      %1440 = vrot.lane.b32.xlu0 %v1422, 48
      %v1441 = vpop.permute.xlu0 %1440
      %1442 = vrot.lane.b32.xlu0 %v1423, 48
      %v1443 = vpop.permute.xlu0 %1442
      %1444 = vrot.lane.b32.xlu0 %v1424, 48
      %v1445 = vpop.permute.xlu0 %1444
      %1446 = vrot.lane.b32.xlu0 %v1425, 48
      %v1447 = vpop.permute.xlu0 %1446
      %1448 = vrot.lane.b32.xlu0 %v1426, 48
      %v1449 = vpop.permute.xlu0 %1448
      %1450 = vrot.lane.b32.xlu0 %v1427, 48
      %v1451 = vpop.permute.xlu0 %1450
      %1460 = vst.msk [vmem:[#allocation3 + $0x10] sm:$0xff] %vm642, %v1437
      %1461 = vst.msk [vmem:[#allocation3 + $0x30] sm:$0xff] %vm642, %v1439
      %1462 = vst.msk [vmem:[#allocation3 + $0x50] sm:$0xff] %vm642, %v1441
      %1463 = vst.msk [vmem:[#allocation3 + $0x70] sm:$0xff] %vm642, %v1443
      %1464 = vst.msk [vmem:[#allocation3 + $0x90] sm:$0xff] %vm642, %v1445
      %1465 = vst.msk [vmem:[#allocation3 + $0xb0] sm:$0xff] %vm642, %v1447
      %1466 = vst.msk [vmem:[#allocation3 + $0xd0] sm:$0xff] %vm642, %v1449
      %1467 = vst.msk [vmem:[#allocation3 + $0xf0] sm:$0xff] %vm642, %v1451
      %v1468 = vld [vmem:[#allocation2 + $0x2] sm:$0xff]
      %v1469 = vld [vmem:[#allocation2 + $0x12] sm:$0xff]
      %v1470 = vld [vmem:[#allocation2 + $0x22] sm:$0xff]
      %v1471 = vld [vmem:[#allocation2 + $0x32] sm:$0xff]
      %v1472 = vld [vmem:[#allocation2 + $0x42] sm:$0xff]
      %v1473 = vld [vmem:[#allocation2 + $0x52] sm:$0xff]
      %v1474 = vld [vmem:[#allocation2 + $0x62] sm:$0xff]
      %v1475 = vld [vmem:[#allocation2 + $0x72] sm:$0xff]
      %1484 = vrot.lane.b32.xlu0 %v1468, 64
      %v1485 = vpop.permute.xlu0 %1484
      %1486 = vrot.lane.b32.xlu0 %v1469, 64
      %v1487 = vpop.permute.xlu0 %1486
      %1488 = vrot.lane.b32.xlu0 %v1470, 64
      %v1489 = vpop.permute.xlu0 %1488
      %1490 = vrot.lane.b32.xlu0 %v1471, 64
      %v1491 = vpop.permute.xlu0 %1490
      %1492 = vrot.lane.b32.xlu0 %v1472, 64
      %v1493 = vpop.permute.xlu0 %1492
      %1494 = vrot.lane.b32.xlu0 %v1473, 64
      %v1495 = vpop.permute.xlu0 %1494
      %1496 = vrot.lane.b32.xlu0 %v1474, 64
      %v1497 = vpop.permute.xlu0 %1496
      %1498 = vrot.lane.b32.xlu0 %v1475, 64
      %v1499 = vpop.permute.xlu0 %1498
      %1508 = vst.msk [vmem:[#allocation3 + $0x10] sm:$0xff] %vm691, %v1485
      %1509 = vst.msk [vmem:[#allocation3 + $0x30] sm:$0xff] %vm691, %v1487
      %1510 = vst.msk [vmem:[#allocation3 + $0x50] sm:$0xff] %vm691, %v1489
      %1511 = vst.msk [vmem:[#allocation3 + $0x70] sm:$0xff] %vm691, %v1491
      %1512 = vst.msk [vmem:[#allocation3 + $0x90] sm:$0xff] %vm691, %v1493
      %1513 = vst.msk [vmem:[#allocation3 + $0xb0] sm:$0xff] %vm691, %v1495
      %1514 = vst.msk [vmem:[#allocation3 + $0xd0] sm:$0xff] %vm691, %v1497
      %1515 = vst.msk [vmem:[#allocation3 + $0xf0] sm:$0xff] %vm691, %v1499
      %v1516 = vld [vmem:[%s479] sm:$0xff]
      %v1517 = vld [vmem:[%s479 + $0x10] sm:$0xff]
      %v1518 = vld [vmem:[%s479 + $0x20] sm:$0xff]
      %v1519 = vld [vmem:[%s479 + $0x30] sm:$0xff]
      %v1520 = vld [vmem:[%s479 + $0x40] sm:$0xff]
      %v1521 = vld [vmem:[%s479 + $0x50] sm:$0xff]
      %v1522 = vld [vmem:[%s479 + $0x60] sm:$0xff]
      %v1523 = vld [vmem:[%s479 + $0x70] sm:$0xff]
      %1532 = vrot.lane.b32.xlu0 %v1516, 80
      %v1533 = vpop.permute.xlu0 %1532
      %1534 = vrot.lane.b32.xlu0 %v1517, 80
      %v1535 = vpop.permute.xlu0 %1534
      %1536 = vrot.lane.b32.xlu0 %v1518, 80
      %v1537 = vpop.permute.xlu0 %1536
      %1538 = vrot.lane.b32.xlu0 %v1519, 80
      %v1539 = vpop.permute.xlu0 %1538
      %1540 = vrot.lane.b32.xlu0 %v1520, 80
      %v1541 = vpop.permute.xlu0 %1540
      %1542 = vrot.lane.b32.xlu0 %v1521, 80
      %v1543 = vpop.permute.xlu0 %1542
      %1544 = vrot.lane.b32.xlu0 %v1522, 80
      %v1545 = vpop.permute.xlu0 %1544
      %1546 = vrot.lane.b32.xlu0 %v1523, 80
      %v1547 = vpop.permute.xlu0 %1546
      %1556 = vst.msk [vmem:[#allocation3 + $0x10] sm:$0xff] %vm740, %v1533
      %1557 = vst.msk [vmem:[#allocation3 + $0x30] sm:$0xff] %vm740, %v1535
      %1558 = vst.msk [vmem:[#allocation3 + $0x50] sm:$0xff] %vm740, %v1537
      %1559 = vst.msk [vmem:[#allocation3 + $0x70] sm:$0xff] %vm740, %v1539
      %1560 = vst.msk [vmem:[#allocation3 + $0x90] sm:$0xff] %vm740, %v1541
      %1561 = vst.msk [vmem:[#allocation3 + $0xb0] sm:$0xff] %vm740, %v1543
      %1562 = vst.msk [vmem:[#allocation3 + $0xd0] sm:$0xff] %vm740, %v1545
      %1563 = vst.msk [vmem:[#allocation3 + $0xf0] sm:$0xff] %vm740, %v1547
      %v1564 = vld [vmem:[%s479 + $0x1] sm:$0xff]
      %v1565 = vld [vmem:[%s479 + $0x11] sm:$0xff]
      %v1566 = vld [vmem:[%s479 + $0x21] sm:$0xff]
      %v1567 = vld [vmem:[%s479 + $0x31] sm:$0xff]
      %v1568 = vld [vmem:[%s479 + $0x41] sm:$0xff]
      %v1569 = vld [vmem:[%s479 + $0x51] sm:$0xff]
      %v1570 = vld [vmem:[%s479 + $0x61] sm:$0xff]
      %v1571 = vld [vmem:[%s479 + $0x71] sm:$0xff]
      %1580 = vrot.lane.b32.xlu0 %v1564, 96
      %v1581 = vpop.permute.xlu0 %1580
      %1582 = vrot.lane.b32.xlu0 %v1565, 96
      %v1583 = vpop.permute.xlu0 %1582
      %1584 = vrot.lane.b32.xlu0 %v1566, 96
      %v1585 = vpop.permute.xlu0 %1584
      %1586 = vrot.lane.b32.xlu0 %v1567, 96
      %v1587 = vpop.permute.xlu0 %1586
      %1588 = vrot.lane.b32.xlu0 %v1568, 96
      %v1589 = vpop.permute.xlu0 %1588
      %1590 = vrot.lane.b32.xlu0 %v1569, 96
      %v1591 = vpop.permute.xlu0 %1590
      %1592 = vrot.lane.b32.xlu0 %v1570, 96
      %v1593 = vpop.permute.xlu0 %1592
      %1594 = vrot.lane.b32.xlu0 %v1571, 96
      %v1595 = vpop.permute.xlu0 %1594
      %1604 = vst.msk [vmem:[#allocation3 + $0x10] sm:$0xff] %vm790, %v1581
      %1605 = vst.msk [vmem:[#allocation3 + $0x30] sm:$0xff] %vm790, %v1583
      %1606 = vst.msk [vmem:[#allocation3 + $0x50] sm:$0xff] %vm790, %v1585
      %1607 = vst.msk [vmem:[#allocation3 + $0x70] sm:$0xff] %vm790, %v1587
      %1608 = vst.msk [vmem:[#allocation3 + $0x90] sm:$0xff] %vm790, %v1589
      %1609 = vst.msk [vmem:[#allocation3 + $0xb0] sm:$0xff] %vm790, %v1591
      %1610 = vst.msk [vmem:[#allocation3 + $0xd0] sm:$0xff] %vm790, %v1593
      %1611 = vst.msk [vmem:[#allocation3 + $0xf0] sm:$0xff] %vm790, %v1595
      %v1612 = vld [vmem:[%s479 + $0x2] sm:$0xff]
      %v1613 = vld [vmem:[%s479 + $0x12] sm:$0xff]
      %v1614 = vld [vmem:[%s479 + $0x22] sm:$0xff]
      %v1615 = vld [vmem:[%s479 + $0x32] sm:$0xff]
      %v1616 = vld [vmem:[%s479 + $0x42] sm:$0xff]
      %v1617 = vld [vmem:[%s479 + $0x52] sm:$0xff]
      %v1618 = vld [vmem:[%s479 + $0x62] sm:$0xff]
      %v1619 = vld [vmem:[%s479 + $0x72] sm:$0xff]
      %1628 = vrot.lane.b32.xlu0 %v1612, 112
      %v1629 = vpop.permute.xlu0 %1628
      %1630 = vrot.lane.b32.xlu0 %v1613, 112
      %v1631 = vpop.permute.xlu0 %1630
      %1632 = vrot.lane.b32.xlu0 %v1614, 112
      %v1633 = vpop.permute.xlu0 %1632
      %1634 = vrot.lane.b32.xlu0 %v1615, 112
      %v1635 = vpop.permute.xlu0 %1634
      %1636 = vrot.lane.b32.xlu0 %v1616, 112
      %v1637 = vpop.permute.xlu0 %1636
      %1638 = vrot.lane.b32.xlu0 %v1617, 112
      %v1639 = vpop.permute.xlu0 %1638
      %1640 = vrot.lane.b32.xlu0 %v1618, 112
      %v1641 = vpop.permute.xlu0 %1640
      %1642 = vrot.lane.b32.xlu0 %v1619, 112
      %v1643 = vpop.permute.xlu0 %1642
      %1652 = vst.msk [vmem:[#allocation3 + $0x10] sm:$0xff] %vm839, %v1629
      %1653 = vst.msk [vmem:[#allocation3 + $0x30] sm:$0xff] %vm839, %v1631
      %1654 = vst.msk [vmem:[#allocation3 + $0x50] sm:$0xff] %vm839, %v1633
      %1655 = vst.msk [vmem:[#allocation3 + $0x70] sm:$0xff] %vm839, %v1635
      %1656 = vst.msk [vmem:[#allocation3 + $0x90] sm:$0xff] %vm839, %v1637
      %1657 = vst.msk [vmem:[#allocation3 + $0xb0] sm:$0xff] %vm839, %v1639
      %1658 = vst.msk [vmem:[#allocation3 + $0xd0] sm:$0xff] %vm839, %v1641
      %1659 = vst.msk [vmem:[#allocation3 + $0xf0] sm:$0xff] %vm839, %v1643
      %v1660 = vld [vmem:[%s749] sm:$0xff]
      %v1661 = vld [vmem:[%s749 + $0x10] sm:$0xff]
      %v1662 = vld [vmem:[%s749 + $0x20] sm:$0xff]
      %v1663 = vld [vmem:[%s749 + $0x30] sm:$0xff]
      %v1664 = vld [vmem:[%s749 + $0x40] sm:$0xff]
      %v1665 = vld [vmem:[%s749 + $0x50] sm:$0xff]
      %v1666 = vld [vmem:[%s749 + $0x60] sm:$0xff]
      %v1667 = vld [vmem:[%s749 + $0x70] sm:$0xff]
      %1668 = vst.msk [vmem:[#allocation3 + $0x18] sm:$0xff] %vm385, %v1660
      %1669 = vst.msk [vmem:[#allocation3 + $0x38] sm:$0xff] %vm385, %v1661
      %1670 = vst.msk [vmem:[#allocation3 + $0x58] sm:$0xff] %vm385, %v1662
      %1671 = vst.msk [vmem:[#allocation3 + $0x78] sm:$0xff] %vm385, %v1663
      %1672 = vst.msk [vmem:[#allocation3 + $0x98] sm:$0xff] %vm385, %v1664
      %1673 = vst.msk [vmem:[#allocation3 + $0xb8] sm:$0xff] %vm385, %v1665
      %1674 = vst.msk [vmem:[#allocation3 + $0xd8] sm:$0xff] %vm385, %v1666
      %1675 = vst.msk [vmem:[#allocation3 + $0xf8] sm:$0xff] %vm385, %v1667
      %v1676 = vld [vmem:[%s749 + $0x1] sm:$0xff]
      %v1677 = vld [vmem:[%s749 + $0x11] sm:$0xff]
      %v1678 = vld [vmem:[%s749 + $0x21] sm:$0xff]
      %v1679 = vld [vmem:[%s749 + $0x31] sm:$0xff]
      %v1680 = vld [vmem:[%s749 + $0x41] sm:$0xff]
      %v1681 = vld [vmem:[%s749 + $0x51] sm:$0xff]
      %v1682 = vld [vmem:[%s749 + $0x61] sm:$0xff]
      %v1683 = vld [vmem:[%s749 + $0x71] sm:$0xff]
      %1692 = vrot.lane.b32.xlu0 %v1676, 16
      %v1693 = vpop.permute.xlu0 %1692
      %1694 = vrot.lane.b32.xlu0 %v1677, 16
      %v1695 = vpop.permute.xlu0 %1694
      %1696 = vrot.lane.b32.xlu0 %v1678, 16
      %v1697 = vpop.permute.xlu0 %1696
      %1698 = vrot.lane.b32.xlu0 %v1679, 16
      %v1699 = vpop.permute.xlu0 %1698
      %1700 = vrot.lane.b32.xlu0 %v1680, 16
      %v1701 = vpop.permute.xlu0 %1700
      %1702 = vrot.lane.b32.xlu0 %v1681, 16
      %v1703 = vpop.permute.xlu0 %1702
      %1704 = vrot.lane.b32.xlu0 %v1682, 16
      %v1705 = vpop.permute.xlu0 %1704
      %1706 = vrot.lane.b32.xlu0 %v1683, 16
      %v1707 = vpop.permute.xlu0 %1706
      %1716 = vst.msk [vmem:[#allocation3 + $0x18] sm:$0xff] %vm544, %v1693
      %1717 = vst.msk [vmem:[#allocation3 + $0x38] sm:$0xff] %vm544, %v1695
      %1718 = vst.msk [vmem:[#allocation3 + $0x58] sm:$0xff] %vm544, %v1697
      %1719 = vst.msk [vmem:[#allocation3 + $0x78] sm:$0xff] %vm544, %v1699
      %1720 = vst.msk [vmem:[#allocation3 + $0x98] sm:$0xff] %vm544, %v1701
      %1721 = vst.msk [vmem:[#allocation3 + $0xb8] sm:$0xff] %vm544, %v1703
      %1722 = vst.msk [vmem:[#allocation3 + $0xd8] sm:$0xff] %vm544, %v1705
      %1723 = vst.msk [vmem:[#allocation3 + $0xf8] sm:$0xff] %vm544, %v1707
      %v1724 = vld [vmem:[%s749 + $0x2] sm:$0xff]
      %v1725 = vld [vmem:[%s749 + $0x12] sm:$0xff]
      %v1726 = vld [vmem:[%s749 + $0x22] sm:$0xff]
      %v1727 = vld [vmem:[%s749 + $0x32] sm:$0xff]
      %v1728 = vld [vmem:[%s749 + $0x42] sm:$0xff]
      %v1729 = vld [vmem:[%s749 + $0x52] sm:$0xff]
      %v1730 = vld [vmem:[%s749 + $0x62] sm:$0xff]
      %v1731 = vld [vmem:[%s749 + $0x72] sm:$0xff]
      %1740 = vrot.lane.b32.xlu0 %v1724, 32
      %v1741 = vpop.permute.xlu0 %1740
      %1742 = vrot.lane.b32.xlu0 %v1725, 32
      %v1743 = vpop.permute.xlu0 %1742
      %1744 = vrot.lane.b32.xlu0 %v1726, 32
      %v1745 = vpop.permute.xlu0 %1744
      %1746 = vrot.lane.b32.xlu0 %v1727, 32
      %v1747 = vpop.permute.xlu0 %1746
      %1748 = vrot.lane.b32.xlu0 %v1728, 32
      %v1749 = vpop.permute.xlu0 %1748
      %1750 = vrot.lane.b32.xlu0 %v1729, 32
      %v1751 = vpop.permute.xlu0 %1750
      %1752 = vrot.lane.b32.xlu0 %v1730, 32
      %v1753 = vpop.permute.xlu0 %1752
      %1754 = vrot.lane.b32.xlu0 %v1731, 32
      %v1755 = vpop.permute.xlu0 %1754
      %1764 = vst.msk [vmem:[#allocation3 + $0x18] sm:$0xff] %vm593, %v1741
      %1765 = vst.msk [vmem:[#allocation3 + $0x38] sm:$0xff] %vm593, %v1743
      %1766 = vst.msk [vmem:[#allocation3 + $0x58] sm:$0xff] %vm593, %v1745
      %1767 = vst.msk [vmem:[#allocation3 + $0x78] sm:$0xff] %vm593, %v1747
      %1768 = vst.msk [vmem:[#allocation3 + $0x98] sm:$0xff] %vm593, %v1749
      %1769 = vst.msk [vmem:[#allocation3 + $0xb8] sm:$0xff] %vm593, %v1751
      %1770 = vst.msk [vmem:[#allocation3 + $0xd8] sm:$0xff] %vm593, %v1753
      %1771 = vst.msk [vmem:[#allocation3 + $0xf8] sm:$0xff] %vm593, %v1755
      %v1772 = vld [vmem:[#allocation3] sm:$0xff]
      %v1773 = vld [vmem:[#allocation3 + $0x8] sm:$0xff]
      %v1774 = vld [vmem:[#allocation3 + $0x10] sm:$0xff]
      %v1775 = vld [vmem:[#allocation3 + $0x18] sm:$0xff]
      %v1776 = vld [vmem:[#allocation3 + $0x20] sm:$0xff]
      %v1777 = vld [vmem:[#allocation3 + $0x28] sm:$0xff]
      %v1778 = vld [vmem:[#allocation3 + $0x30] sm:$0xff]
      %v1779 = vld [vmem:[#allocation3 + $0x38] sm:$0xff]
      %v1780 = vld [vmem:[#allocation3 + $0x40] sm:$0xff]
      %v1781 = vld [vmem:[#allocation3 + $0x48] sm:$0xff]
      %v1782 = vld [vmem:[#allocation3 + $0x50] sm:$0xff]
      %v1783 = vld [vmem:[#allocation3 + $0x58] sm:$0xff]
      %v1784 = vld [vmem:[#allocation3 + $0x60] sm:$0xff]
      %v1785 = vld [vmem:[#allocation3 + $0x68] sm:$0xff]
      %v1786 = vld [vmem:[#allocation3 + $0x70] sm:$0xff]
      %v1787 = vld [vmem:[#allocation3 + $0x78] sm:$0xff]
      %v1788 = vld [vmem:[#allocation3 + $0x80] sm:$0xff]
      %v1789 = vld [vmem:[#allocation3 + $0x88] sm:$0xff]
      %v1790 = vld [vmem:[#allocation3 + $0x90] sm:$0xff]
      %v1791 = vld [vmem:[#allocation3 + $0x98] sm:$0xff]
      %v1792 = vld [vmem:[#allocation3 + $0xa0] sm:$0xff]
      %v1793 = vld [vmem:[#allocation3 + $0xa8] sm:$0xff]
      %v1794 = vld [vmem:[#allocation3 + $0xb0] sm:$0xff]
      %v1795 = vld [vmem:[#allocation3 + $0xb8] sm:$0xff]
      %v1796 = vld [vmem:[#allocation3 + $0xc0] sm:$0xff]
      %v1797 = vld [vmem:[#allocation3 + $0xc8] sm:$0xff]
      %v1798 = vld [vmem:[#allocation3 + $0xd0] sm:$0xff]
      %v1799 = vld [vmem:[#allocation3 + $0xd8] sm:$0xff]
      %v1800 = vld [vmem:[#allocation3 + $0xe0] sm:$0xff]
      %v1801 = vld [vmem:[#allocation3 + $0xe8] sm:$0xff]
      %v1802 = vld [vmem:[#allocation3 + $0xf0] sm:$0xff]
      %v1803 = vld [vmem:[#allocation3 + $0xf8] sm:$0xff]
      %v1804 = vpack.c.bf16 %v1776, %v1772
      %v1805 = vpack.c.bf16 %v1777, %v1773
      %v1806 = vpack.c.bf16 %v1778, %v1774
      %v1807 = vpack.c.bf16 %v1779, %v1775
      %v1808 = vpack.c.bf16 %v1784, %v1780
      %v1809 = vpack.c.bf16 %v1785, %v1781
      %v1810 = vpack.c.bf16 %v1786, %v1782
      %v1811 = vpack.c.bf16 %v1787, %v1783
      %v1812 = vpack.c.bf16 %v1792, %v1788
      %v1813 = vpack.c.bf16 %v1793, %v1789
      %v1814 = vpack.c.bf16 %v1794, %v1790
      %v1815 = vpack.c.bf16 %v1795, %v1791
      %v1816 = vpack.c.bf16 %v1800, %v1796
      %v1817 = vpack.c.bf16 %v1801, %v1797
      %v1818 = vpack.c.bf16 %v1802, %v1798
      %v1819 = vpack.c.bf16 %v1803, %v1799
      %v1820 = vld [vmem:[%s3] sm:$0xf]
      %v1821 = vld [vmem:[%s3 + $0x4] sm:$0xf]
      %v1822 = vld [vmem:[%s3 + $0x8] sm:$0xf]
      %v1823 = vld [vmem:[%s3 + $0xc] sm:$0xf]
      %v1824 = vld [vmem:[%s3 + $0x10] sm:$0xf]
      %v1825 = vld [vmem:[%s3 + $0x14] sm:$0xf]
      %v1826 = vld [vmem:[%s3 + $0x18] sm:$0xf]
      %v1827 = vld [vmem:[%s3 + $0x1c] sm:$0xf]
      %v1828 = vld [vmem:[%s3 + $0x20] sm:$0xf]
      %v1829 = vld [vmem:[%s3 + $0x24] sm:$0xf]
      %v1830 = vld [vmem:[%s3 + $0x28] sm:$0xf]
      %v1831 = vld [vmem:[%s3 + $0x2c] sm:$0xf]
      %v1832 = vld [vmem:[%s3 + $0x30] sm:$0xf]
      %v1833 = vld [vmem:[%s3 + $0x34] sm:$0xf]
      %v1834 = vld [vmem:[%s3 + $0x38] sm:$0xf]
      %v1835 = vld [vmem:[%s3 + $0x3c] sm:$0xf]
      %v1836 = vld [vmem:[%s3 + $0x40] sm:$0xf]
      %v1837 = vld [vmem:[%s3 + $0x44] sm:$0xf]
      %v1838 = vld [vmem:[%s3 + $0x48] sm:$0xf]
      %v1839 = vld [vmem:[%s3 + $0x4c] sm:$0xf]
      %v1840 = vld [vmem:[%s3 + $0x50] sm:$0xf]
      %v1841 = vld [vmem:[%s3 + $0x54] sm:$0xf]
      %v1842 = vld [vmem:[%s3 + $0x58] sm:$0xf]
      %v1843 = vld [vmem:[%s3 + $0x5c] sm:$0xf]
      %v1844 = vld [vmem:[%s3 + $0x60] sm:$0xf]
      %v1845 = vld [vmem:[%s3 + $0x64] sm:$0xf]
      %v1846 = vld [vmem:[%s3 + $0x68] sm:$0xf]
      %v1847 = vld [vmem:[%s3 + $0x6c] sm:$0xf]
      %v1848 = vld [vmem:[%s3 + $0x70] sm:$0xf]
      %v1849 = vld [vmem:[%s3 + $0x74] sm:$0xf]
      %v1850 = vld [vmem:[%s3 + $0x78] sm:$0xf]
      %v1851 = vld [vmem:[%s3 + $0x7c] sm:$0xf]
      %v1852 = vld [vmem:[%s3 + $0x80] sm:$0xf]
      %v1853 = vld [vmem:[%s3 + $0x84] sm:$0xf]
      %v1854 = vld [vmem:[%s3 + $0x88] sm:$0xf]
      %v1855 = vld [vmem:[%s3 + $0x8c] sm:$0xf]
      %v1856 = vld [vmem:[%s3 + $0x90] sm:$0xf]
      %v1857 = vld [vmem:[%s3 + $0x94] sm:$0xf]
      %v1858 = vld [vmem:[%s3 + $0x98] sm:$0xf]
      %v1859 = vld [vmem:[%s3 + $0x9c] sm:$0xf]
      %v1860 = vld [vmem:[%s3 + $0xa0] sm:$0xf]
      %v1861 = vld [vmem:[%s3 + $0xa4] sm:$0xf]
      %v1862 = vld [vmem:[%s3 + $0xa8] sm:$0xf]
      %v1863 = vld [vmem:[%s3 + $0xac] sm:$0xf]
      %v1864 = vld [vmem:[%s3 + $0xb0] sm:$0xf]
      %v1865 = vld [vmem:[%s3 + $0xb4] sm:$0xf]
      %v1866 = vld [vmem:[%s3 + $0xb8] sm:$0xf]
      %v1867 = vld [vmem:[%s3 + $0xbc] sm:$0xf]
      %v1868 = vld [vmem:[%s3 + $0xc0] sm:$0xf]
      %v1869 = vld [vmem:[%s3 + $0xc4] sm:$0xf]
      %v1870 = vld [vmem:[%s3 + $0xc8] sm:$0xf]
      %v1871 = vld [vmem:[%s3 + $0xcc] sm:$0xf]
      %v1872 = vld [vmem:[%s3 + $0xd0] sm:$0xf]
      %v1873 = vld [vmem:[%s3 + $0xd4] sm:$0xf]
      %v1928 = vunpack.c.l.b16 %v1820
      %v1929 = vunpack.c.l.b16 %v1821
      %v1930 = vunpack.c.l.b16 %v1822
      %v1931 = vunpack.c.l.b16 %v1823
      %v1932 = vunpack.c.l.b16 %v1824
      %v1933 = vunpack.c.l.b16 %v1825
      %v1934 = vunpack.c.l.b16 %v1826
      %v1935 = vunpack.c.l.b16 %v1827
      %v1936 = vunpack.c.l.b16 %v1828
      %v1937 = vunpack.c.l.b16 %v1829
      %v1938 = vunpack.c.l.b16 %v1830
      %v1939 = vunpack.c.l.b16 %v1831
      %v1940 = vunpack.c.l.b16 %v1832
      %v1941 = vunpack.c.l.b16 %v1833
      %v1942 = vunpack.c.l.b16 %v1834
      %v1943 = vunpack.c.l.b16 %v1835
      %v1944 = vunpack.c.l.b16 %v1836
      %v1945 = vunpack.c.l.b16 %v1837
      %v1946 = vunpack.c.l.b16 %v1838
      %v1947 = vunpack.c.l.b16 %v1839
      %v1948 = vunpack.c.l.b16 %v1840
      %v1949 = vunpack.c.l.b16 %v1841
      %v1950 = vunpack.c.l.b16 %v1842
      %v1951 = vunpack.c.l.b16 %v1843
      %v1952 = vunpack.c.l.b16 %v1844
      %v1953 = vunpack.c.l.b16 %v1845
      %v1954 = vunpack.c.l.b16 %v1846
      %v1955 = vunpack.c.l.b16 %v1847
      %v1956 = vunpack.c.l.b16 %v1848
      %v1957 = vunpack.c.l.b16 %v1849
      %v1958 = vunpack.c.l.b16 %v1850
      %v1959 = vunpack.c.l.b16 %v1851
      %v1960 = vunpack.c.l.b16 %v1852
      %v1961 = vunpack.c.l.b16 %v1853
      %v1962 = vunpack.c.l.b16 %v1854
      %v1963 = vunpack.c.l.b16 %v1855
      %v1964 = vunpack.c.l.b16 %v1856
      %v1965 = vunpack.c.l.b16 %v1857
      %v1966 = vunpack.c.l.b16 %v1858
      %v1967 = vunpack.c.l.b16 %v1859
      %v1968 = vunpack.c.l.b16 %v1860
      %v1969 = vunpack.c.l.b16 %v1861
      %v1970 = vunpack.c.l.b16 %v1862
      %v1971 = vunpack.c.l.b16 %v1863
      %v1972 = vunpack.c.l.b16 %v1864
      %v1973 = vunpack.c.l.b16 %v1865
      %v1974 = vunpack.c.l.b16 %v1866
      %v1975 = vunpack.c.l.b16 %v1867
      %v1976 = vunpack.c.l.b16 %v1868
      %v1977 = vunpack.c.l.b16 %v1869
      %v1978 = vunpack.c.l.b16 %v1870
      %v1979 = vunpack.c.l.b16 %v1871
      %v1980 = vunpack.c.l.b16 %v1872
      %v1981 = vunpack.c.l.b16 %v1873
      %v1982 = vpack.c.b16 %v1929, %v1928
      %v1983 = vpack.c.b16 %v1931, %v1930
      %v1984 = vpack.c.b16 %v1933, %v1932
      %v1985 = vpack.c.b16 %v1935, %v1934
      %v1986 = vpack.c.b16 %v1937, %v1936
      %v1987 = vpack.c.b16 %v1939, %v1938
      %v1988 = vpack.c.b16 %v1941, %v1940
      %v1989 = vpack.c.b16 %v1943, %v1942
      %v1990 = vpack.c.b16 %v1945, %v1944
      %v1991 = vpack.c.b16 %v1947, %v1946
      %v1992 = vpack.c.b16 %v1949, %v1948
      %v1993 = vpack.c.b16 %v1951, %v1950
      %v1994 = vpack.c.b16 %v1953, %v1952
      %v1995 = vpack.c.b16 %v1955, %v1954
      %v1996 = vpack.c.b16 %v1957, %v1956
      %v1997 = vpack.c.b16 %v1959, %v1958
      %v1998 = vpack.c.b16 %v1961, %v1960
      %v1999 = vpack.c.b16 %v1963, %v1962
      %v2000 = vpack.c.b16 %v1965, %v1964
      %v2001 = vpack.c.b16 %v1967, %v1966
      %v2002 = vpack.c.b16 %v1969, %v1968
      %v2003 = vpack.c.b16 %v1971, %v1970
      %v2004 = vpack.c.b16 %v1973, %v1972
      %v2005 = vpack.c.b16 %v1975, %v1974
      %v2006 = vpack.c.b16 %v1977, %v1976
      %v2007 = vpack.c.b16 %v1979, %v1978
      %v2008 = vpack.c.b16 %v1981, %v1980
      %vm2036 = vcmask 392192
      %v2038 = vsel %vm2036, %v1807, 0
      %v2041 = vsel %vm2036, %v1811, 0
      %v2044 = vsel %vm2036, %v1815, 0
      %v2047 = vsel %vm2036, %v1819, 0
      %2049 = vmatprep.subr.bf16.mxu0 0
      %2050 = vmatpush1.bf16.msra.mxu0 %v1989
      %2051 = vmatprep.subr.bf16.mxu0 0
      %2052 = vmatpush1.bf16.msra.mxu0 %v1988
      %2053 = vmatprep.subr.bf16.mxu0 0
      %2054 = vmatpush1.bf16.msra.mxu0 %v1987
      %2055 = vmatprep.subr.bf16.mxu0 0
      %2056 = vmatpush1.bf16.msra.mxu0 %v1986
      %2057 = vmatprep.subr.bf16.mxu0 0
      %2058 = vmatpush1.bf16.msra.mxu0 %v1985
      %2059 = vmatprep.subr.bf16.mxu0 0
      %2060 = vmatpush1.bf16.msra.mxu0 %v1984
      %2061 = vmatprep.subr.bf16.mxu0 0
      %2062 = vmatpush1.bf16.msra.mxu0 %v1983
      %2063 = vmatprep.subr.bf16.mxu0 0
      %2064 = vmatpush1.bf16.msra.mxu0 %v1982
      %2065 = vmatprep.subr.bf16.mxu0 0
      %2066 = vmatpush2.bf16.msra.mxu0 %v1997
      %2067 = vmatprep.subr.bf16.mxu0 0
      %2068 = vmatpush2.bf16.msra.mxu0 %v1996
      %2069 = vmatprep.subr.bf16.mxu0 0
      %2070 = vmatpush2.bf16.msra.mxu0 %v1995
      %2071 = vmatprep.subr.bf16.mxu0 0
      %2072 = vmatpush2.bf16.msra.mxu0 %v1994
      %2073 = vmatprep.subr.bf16.mxu0 0
      %2074 = vmatpush2.bf16.msra.mxu0 %v1993
      %2075 = vmatprep.subr.bf16.mxu0 0
      %2076 = vmatpush2.bf16.msra.mxu0 %v1992
      %2077 = vmatprep.subr.bf16.mxu0 0
      %2078 = vmatpush2.bf16.msra.mxu0 %v1991
      %2079 = vmatprep.subr.bf16.mxu0 0
      %2080 = vmatpush2.bf16.msra.mxu0 %v1990
      %2081 = vmatprep.mubr.bf16.mxu0 %v1805
      %2082 = vmatmul.mubr.bf16.gmra.mxu0 %v1804
      %v2083 = vpop.f32.mrf.mxu0
      %v2084 = vadd.f32 0.0, %v2083
      %v2085 = vpop.f32.mrf.mxu0
      %v2086 = vpop.f32.mrf.mxu0
      %v2087 = vadd.f32 0.0, %v2086
      %v2088 = vpop.f32.mrf.mxu0
      %2089 = vmatprep.mubr.bf16.mxu0 %v1809
      %2090 = vmatmul.mubr.bf16.gmra.mxu0 %v1808
      %v2091 = vpop.f32.mrf.mxu0
      %v2092 = vadd.f32 0.0, %v2091
      %v2093 = vpop.f32.mrf.mxu0
      %v2094 = vpop.f32.mrf.mxu0
      %v2095 = vadd.f32 0.0, %v2094
      %v2096 = vpop.f32.mrf.mxu0
      %2097 = vmatprep.mubr.bf16.mxu0 %v1813
      %2098 = vmatmul.mubr.bf16.gmra.mxu0 %v1812
      %v2099 = vpop.f32.mrf.mxu0
      %v2100 = vadd.f32 0.0, %v2099
      %v2101 = vpop.f32.mrf.mxu0
      %v2102 = vpop.f32.mrf.mxu0
      %v2103 = vadd.f32 0.0, %v2102
      %v2104 = vpop.f32.mrf.mxu0
      %2105 = vmatprep.mubr.bf16.mxu0 %v1817
      %2106 = vmatmul.mubr.bf16.gmra.mxu0 %v1816
      %v2107 = vpop.f32.mrf.mxu0
      %v2108 = vadd.f32 0.0, %v2107
      %v2109 = vpop.f32.mrf.mxu0
      %v2110 = vpop.f32.mrf.mxu0
      %v2111 = vadd.f32 0.0, %v2110
      %v2112 = vpop.f32.mrf.mxu0
      %2113 = vdwg.mxu0
      %2114 = vmatprep.subr.bf16.mxu0 0
      %2115 = vmatpush1.bf16.msra.mxu0 %v2005
      %2116 = vmatprep.subr.bf16.mxu0 0
      %2117 = vmatpush1.bf16.msra.mxu0 %v2004
      %2118 = vmatprep.subr.bf16.mxu0 0
      %2119 = vmatpush1.bf16.msra.mxu0 %v2003
      %2120 = vmatprep.subr.bf16.mxu0 0
      %2121 = vmatpush1.bf16.msra.mxu0 %v2002
      %2122 = vmatprep.subr.bf16.mxu0 0
      %2123 = vmatpush1.bf16.msra.mxu0 %v2001
      %2124 = vmatprep.subr.bf16.mxu0 0
      %2125 = vmatpush1.bf16.msra.mxu0 %v2000
      %2126 = vmatprep.subr.bf16.mxu0 0
      %2127 = vmatpush1.bf16.msra.mxu0 %v1999
      %2128 = vmatprep.subr.bf16.mxu0 0
      %2129 = vmatpush1.bf16.msra.mxu0 %v1998
      %2130 = vmatprep.subr.bf16.mxu0 0
      %2131 = vmatpush2.bf16.msra.mxu0 0
      %2132 = vmatprep.subr.bf16.mxu0 0
      %2133 = vmatpush2.bf16.msra.mxu0 0
      %2134 = vmatprep.subr.bf16.mxu0 0
      %2135 = vmatpush2.bf16.msra.mxu0 0
      %2136 = vmatprep.subr.bf16.mxu0 0
      %2137 = vmatpush2.bf16.msra.mxu0 0
      %2138 = vmatprep.subr.bf16.mxu0 0
      %2139 = vmatpush2.bf16.msra.mxu0 0
      %2140 = vmatprep.subr.bf16.mxu0 0
      %2141 = vmatpush2.bf16.msra.mxu0 %v2008
      %2142 = vmatprep.subr.bf16.mxu0 0
      %2143 = vmatpush2.bf16.msra.mxu0 %v2007
      %2144 = vmatprep.subr.bf16.mxu0 0
      %2145 = vmatpush2.bf16.msra.mxu0 %v2006
      %2146 = vmatprep.mubr.bf16.mxu0 %v2038
      %2147 = vmatmul.mubr.bf16.gmra.mxu0 %v1806
      %v2148 = vpop.f32.mrf.mxu0
      %v2149 = vadd.f32 %v2084, %v2148
      %v2150 = vpop.f32.mrf.mxu0
      %v2151 = vpop.f32.mrf.mxu0
      %v2152 = vadd.f32 %v2087, %v2151
      %v2153 = vpop.f32.mrf.mxu0
      %2154 = vmatprep.mubr.bf16.mxu0 %v2041
      %2155 = vmatmul.mubr.bf16.gmra.mxu0 %v1810
      %v2156 = vpop.f32.mrf.mxu0
      %v2157 = vadd.f32 %v2092, %v2156
      %v2158 = vpop.f32.mrf.mxu0
      %v2159 = vpop.f32.mrf.mxu0
      %v2160 = vadd.f32 %v2095, %v2159
      %v2161 = vpop.f32.mrf.mxu0
      %2162 = vmatprep.mubr.bf16.mxu0 %v2044
      %2163 = vmatmul.mubr.bf16.gmra.mxu0 %v1814
      %v2164 = vpop.f32.mrf.mxu0
      %v2165 = vadd.f32 %v2100, %v2164
      %v2166 = vpop.f32.mrf.mxu0
      %v2167 = vpop.f32.mrf.mxu0
      %v2168 = vadd.f32 %v2103, %v2167
      %v2169 = vpop.f32.mrf.mxu0
      %2170 = vmatprep.mubr.bf16.mxu0 %v2047
      %2171 = vmatmul.mubr.bf16.gmra.mxu0 %v1818
      %v2172 = vpop.f32.mrf.mxu0
      %v2173 = vadd.f32 %v2108, %v2172
      %v2174 = vpop.f32.mrf.mxu0
      %v2175 = vpop.f32.mrf.mxu0
      %v2176 = vadd.f32 %v2111, %v2175
      %v2177 = vpop.f32.mrf.mxu0
      %2178 = vdwg.mxu0
      %v2179 = vpack.c.bf16 %v2152, %v2149
      %v2180 = vpack.c.bf16 %v2160, %v2157
      %v2181 = vpack.c.bf16 %v2168, %v2165
      %v2182 = vpack.c.bf16 %v2176, %v2173
      %v2187 = vunpack.c.l.b16 %v2179
      %v2188 = vunpack.c.h.b16 %v2179
      %v2189 = vunpack.c.l.b16 %v2180
      %v2190 = vunpack.c.h.b16 %v2180
      %v2191 = vunpack.c.l.b16 %v2181
      %v2192 = vunpack.c.h.b16 %v2181
      %v2193 = vunpack.c.l.b16 %v2182
      %v2194 = vunpack.c.h.b16 %v2182
      %v2195 = vpack.c.b16 %v2187, %v2187
      %v2196 = vpack.c.b16 %v2188, %v2188
      %v2197 = vpack.c.b16 %v2189, %v2189
      %v2198 = vpack.c.b16 %v2190, %v2190
      %v2199 = vpack.c.b16 %v2191, %v2191
      %v2200 = vpack.c.b16 %v2192, %v2192
      %v2201 = vpack.c.b16 %v2193, %v2193
      %v2202 = vpack.c.b16 %v2194, %v2194
      %vm2211 = vcmask 125952
      %2212 = vst.msk [vmem:[%s367] sm:$0xf] %vm2211, %v2195
      %2213 = vst.msk [vmem:[%s367 + $0x4] sm:$0xf] %vm2211, %v2196
      %2214 = vst.msk [vmem:[%s367 + $0x8] sm:$0xf] %vm2211, %v2197
      %2215 = vst.msk [vmem:[%s367 + $0xc] sm:$0xf] %vm2211, %v2198
      %2216 = vst.msk [vmem:[%s367 + $0x10] sm:$0xf] %vm2211, %v2199
      %2217 = vst.msk [vmem:[%s367 + $0x14] sm:$0xf] %vm2211, %v2200
      %2218 = vst.msk [vmem:[%s367 + $0x18] sm:$0xf] %vm2211, %v2201
      %2219 = vst.msk [vmem:[%s367 + $0x1c] sm:$0xf] %vm2211, %v2202
      %v2220 = vsel %vm385, %v2149, 0.0
      %v2221 = vsel %vm385, %v2152, 0.0
      %v2222 = vadd.f32 %v2220, %v2221
      %v2223 = vsel %vm385, %v2157, 0.0
      %v2224 = vadd.f32 %v2222, %v2223
      %v2225 = vsel %vm385, %v2160, 0.0
      %v2226 = vadd.f32 %v2224, %v2225
      %v2227 = vsel %vm385, %v2165, 0.0
      %v2228 = vadd.f32 %v2226, %v2227
      %v2229 = vsel %vm385, %v2168, 0.0
      %v2230 = vadd.f32 %v2228, %v2229
      %v2231 = vsel %vm385, %v2173, 0.0
      %v2232 = vadd.f32 %v2230, %v2231
      %v2233 = vsel %vm385, %v2176, 0.0
      %v2234 = vadd.f32 %v2232, %v2233
      %v2235 = vrot.slane %v2234, 4
      %v2236 = vadd.f32 %v2234, %v2235
      %v2237 = vrot.slane %v2236, 2
      %v2238 = vadd.f32 %v2236, %v2237
      %v2239 = vrot.slane %v2238, 1
      %v2240 = vadd.f32 %v2238, %v2239
      %2241 = vst.msk [vmem:[%s371] sm:$0x1] %vm392, %v2240
      %v2242 = vmul.f32 %v2149, %v2149
      %v2243 = vmul.f32 %v2152, %v2152
      %v2244 = vmul.f32 %v2157, %v2157
      %v2245 = vmul.f32 %v2160, %v2160
      %v2246 = vmul.f32 %v2165, %v2165
      %v2247 = vmul.f32 %v2168, %v2168
      %v2248 = vmul.f32 %v2173, %v2173
      %v2249 = vmul.f32 %v2176, %v2176
      %v2250 = vsel %vm385, %v2242, 0.0
      %v2251 = vsel %vm385, %v2243, 0.0
      %v2252 = vadd.f32 %v2250, %v2251
      %v2253 = vsel %vm385, %v2244, 0.0
      %v2254 = vadd.f32 %v2252, %v2253
      %v2255 = vsel %vm385, %v2245, 0.0
      %v2256 = vadd.f32 %v2254, %v2255
      %v2257 = vsel %vm385, %v2246, 0.0
      %v2258 = vadd.f32 %v2256, %v2257
      %v2259 = vsel %vm385, %v2247, 0.0
      %v2260 = vadd.f32 %v2258, %v2259
      %v2261 = vsel %vm385, %v2248, 0.0
      %v2262 = vadd.f32 %v2260, %v2261
      %v2263 = vsel %vm385, %v2249, 0.0
      %v2264 = vadd.f32 %v2262, %v2263
      %v2265 = vrot.slane %v2264, 4
      %v2266 = vadd.f32 %v2264, %v2265
      %v2267 = vrot.slane %v2266, 2
      %v2268 = vadd.f32 %v2266, %v2267
      %v2269 = vrot.slane %v2268, 1
      %v2270 = vadd.f32 %v2268, %v2269
      %2271 = vst.msk [vmem:[%s371 + $0x1] sm:$0x1] %vm392, %v2270
      %p2272 = scmp.lt.s32.totalorder %s19, 15
      %s2273 = scalar_select %p2272, %s19, 15
      %s2274 = smul.addr %s2273, 8
      %s2275 = smul.addr %s2274, 4
      %s2276 = scalar_lea.vmem %s6, %s2275
      %p2277 = scmp.lt.s32.totalorder %s19, 15
      %s2278 = scalar_select %p2277, %s19, 15
      %s2279 = smul.addr %s2278, 2
      %s2280 = scalar_lea.vmem %s7, %s2279
      // Predicated region
      $region45: #{res_block.4} parent=43 // pred_check
        %p2281 = pneg %p190
      $region46: #{res_block.4} parent=43 // pred_check_branch
        %2283 = sbr.rel (%p2281) target = $region48
      $region47: #{res_block.4} parent=43 // pred_region
        _
      $region48: #{res_block.4} parent=43 // pred_fallthru
        _
      // Predicated region
      $region49: #{res_block.4} parent=43 // pred_check
        %p2284 = pneg %p216
      $region50: #{res_block.4} parent=43 // pred_check_branch
        %2286 = sbr.rel (%p2284) target = $region52
      $region51: #{res_block.4} parent=43 // pred_region
        _
      $region52: #{res_block.4} parent=43 // pred_fallthru
        _
    $region44: #{res_block.4} parent=5 // pred_fallthru
      _
    %p2287 = scmp.le.s32.totalorder 2, %s14
    // Predicated region
    $region53: #{res_block.4} parent=5 // pred_check
      %p2288 = pneg %p2287
    $region54: #{res_block.4} parent=5 // pred_check_branch
      %2290 = sbr.rel (%p2288) target = $region56
    $region55: #{res_block.4} parent=5 // pred_region
      %s2291 = ssub.s32 %s14, 2
      // Predicated region
      $region57: #{res_block.4} parent=55 // pred_check
        %p2292 = pneg %p196
      $region58: #{res_block.4} parent=55 // pred_check_branch
        %2294 = sbr.rel (%p2292) target = $region60
      $region59: #{res_block.4} parent=55 // pred_region
        %p2295 = scmp.lt.s32.totalorder %s20, 15
        %s2296 = scalar_select %p2295, %s20, 15
        %s2297 = smul.addr %s2296, 8
        %s2298 = smul.addr %s2297, 4
        %s2299 = scalar_lea.vmem %s6, %s2298
      $region60: #{res_block.4} parent=55 // pred_fallthru
        _
      // Predicated region
      $region61: #{res_block.4} parent=55 // pred_check
        %p2300 = pneg %p222
      $region62: #{res_block.4} parent=55 // pred_check_branch
        %2302 = sbr.rel (%p2300) target = $region64
      $region63: #{res_block.4} parent=55 // pred_region
        %p2303 = scmp.lt.s32.totalorder %s20, 15
        %s2304 = scalar_select %p2303, %s20, 15
        %s2305 = smul.addr %s2304, 2
        %s2306 = scalar_lea.vmem %s7, %s2305
      $region64: #{res_block.4} parent=55 // pred_fallthru
        _
    $region56: #{res_block.4} parent=5 // pred_fallthru
      _
  $region6: #{res_block.4} parent=0 // loop_footer
    %s18 = sadd.s32 1, %s14
  $region7: #{res_block.4} parent=0 // loop_footer_branch
    %13 = sbr.rel target = $region3
  $region8: #{res_block.4} parent=0 // loop_exit
    _

// kernel: res_block.5
$region0: #{res_block.5}
  #allocation0 [shape = 'u32[]', space=smem, size = 0x4, offset = 0x4, fixed_abs, tag = 'smem constant byte address 0x4 - core index']
  #allocation1 [shape = 'u32[144,128]{1,0:T(1,128)}', space=vmem, size = 0x12000, scoped, tag = 'internal scratch']
  %s0 = inlined_call_operand.vmem [shape: bf16[1024,16], index: 0, kind: input, shape index: {}]
  %s1 = inlined_call_operand.vmem [shape: bf16[1024,8], index: 1, kind: input, shape index: {}]
  %s2 = inlined_call_operand.vmem [shape: bf16[8,16], index: 2, kind: input, shape index: {}]
  %s3 = inlined_call_operand.vmem [shape: f32[1,16], index: 3, kind: input, shape index: {}]
  %s4 = inlined_call_operand.vmem [shape: f32[1,16], index: 4, kind: input, shape index: {}]
  %s5 = inlined_call_operand.vmem [shape: f32[1,16], index: 5, kind: input, shape index: {}]
  %s6 = inlined_call_operand.vmem [shape: f32[1,16], index: 6, kind: input, shape index: {}]
  %s7 = inlined_call_operand.hbm [shape: f32[1024,16], index: 7, kind: output, shape index: {}]
  %s8 = sld [smem:[#allocation0]]
  $region38: #{res_block.5} parent=0
    _
  %s10 = ssub.s32 1, %s8
  %s11 = scalar_select 0, %s10, %s8
  $region1: #{res_block.5} parent=0
    #allocation2 [shape = 'u8[524288]{0}', space=vmem, size = 0x80000, scoped, tag = 'output window, operand 0, single buffered']
    #allocation3 [shape = 's32[1]{0}', space=sflag, size = 0x4, scoped, tag = 'scoped memory for res_block.5']
    %12 = vsyncpa [#allocation3], 0
    // Predicated region
    $region2: #{res_block.5} parent=1 // pred_check
      _
    $region3: #{res_block.5} parent=1 // pred_check_branch
      %14 = sbr.rel (0) target = $region5
    $region4: #{res_block.5} parent=1 // pred_region
      _
    $region5: #{res_block.5} parent=1 // pred_fallthru
      _
    // Predicated region
    $region6: #{res_block.5} parent=1 // pred_check
      _
    $region7: #{res_block.5} parent=1 // pred_check_branch
      %16 = sbr.rel (0) target = $region9
    $region8: #{res_block.5} parent=1 // pred_region
      _
    $region9: #{res_block.5} parent=1 // pred_fallthru
      _
    // Predicated region
    $region10: #{res_block.5} parent=1 // pred_check
      _
    $region11: #{res_block.5} parent=1 // pred_check_branch
      %18 = sbr.rel (0) target = $region13
    $region12: #{res_block.5} parent=1 // pred_region
      _
    $region13: #{res_block.5} parent=1 // pred_fallthru
      _
    // Predicated region
    $region14: #{res_block.5} parent=1 // pred_check
      _
    $region15: #{res_block.5} parent=1 // pred_check_branch
      %20 = sbr.rel (0) target = $region17
    $region16: #{res_block.5} parent=1 // pred_region
      _
    $region17: #{res_block.5} parent=1 // pred_fallthru
      _
    // Predicated region
    $region18: #{res_block.5} parent=1 // pred_check
      _
    $region19: #{res_block.5} parent=1 // pred_check_branch
      %22 = sbr.rel (0) target = $region21
    $region20: #{res_block.5} parent=1 // pred_region
      _
    $region21: #{res_block.5} parent=1 // pred_fallthru
      _
    // Predicated region
    $region22: #{res_block.5} parent=1 // pred_check
      _
    $region23: #{res_block.5} parent=1 // pred_check_branch
      %24 = sbr.rel (0) target = $region25
    $region24: #{res_block.5} parent=1 // pred_region
      _
    $region25: #{res_block.5} parent=1 // pred_fallthru
      _
    // Predicated region
    $region26: #{res_block.5} parent=1 // pred_check
      _
    $region27: #{res_block.5} parent=1 // pred_check_branch
      %26 = sbr.rel (0) target = $region29
    $region28: #{res_block.5} parent=1 // pred_region
      _
    $region29: #{res_block.5} parent=1 // pred_fallthru
      _
    %v28 = vld [vmem:[%s1] sm:$0xf]
    %v29 = vld [vmem:[%s1 + $0x4] sm:$0xf]
    %v30 = vld [vmem:[%s1 + $0x8] sm:$0xf]
    %v31 = vld [vmem:[%s1 + $0xc] sm:$0xf]
    %v32 = vld [vmem:[%s1 + $0x10] sm:$0xf]
    %v33 = vld [vmem:[%s1 + $0x14] sm:$0xf]
    %v34 = vld [vmem:[%s1 + $0x18] sm:$0xf]
    %v35 = vld [vmem:[%s1 + $0x1c] sm:$0xf]
    %v36 = vld [vmem:[%s1 + $0x20] sm:$0xf]
    %v37 = vld [vmem:[%s1 + $0x24] sm:$0xf]
    %v38 = vld [vmem:[%s1 + $0x28] sm:$0xf]
    %v39 = vld [vmem:[%s1 + $0x2c] sm:$0xf]
    %v40 = vld [vmem:[%s1 + $0x30] sm:$0xf]
    %v41 = vld [vmem:[%s1 + $0x34] sm:$0xf]
    %v42 = vld [vmem:[%s1 + $0x38] sm:$0xf]
    %v43 = vld [vmem:[%s1 + $0x3c] sm:$0xf]
    %v44 = vld [vmem:[%s1 + $0x40] sm:$0xf]
    %v45 = vld [vmem:[%s1 + $0x44] sm:$0xf]
    %v46 = vld [vmem:[%s1 + $0x48] sm:$0xf]
    %v47 = vld [vmem:[%s1 + $0x4c] sm:$0xf]
    %v48 = vld [vmem:[%s1 + $0x50] sm:$0xf]
    %v49 = vld [vmem:[%s1 + $0x54] sm:$0xf]
    %v50 = vld [vmem:[%s1 + $0x58] sm:$0xf]
    %v51 = vld [vmem:[%s1 + $0x5c] sm:$0xf]
    %v52 = vld [vmem:[%s1 + $0x60] sm:$0xf]
    %v53 = vld [vmem:[%s1 + $0x64] sm:$0xf]
    %v54 = vld [vmem:[%s1 + $0x68] sm:$0xf]
    %v55 = vld [vmem:[%s1 + $0x6c] sm:$0xf]
    %v56 = vld [vmem:[%s1 + $0x70] sm:$0xf]
    %v57 = vld [vmem:[%s1 + $0x74] sm:$0xf]
    %v58 = vld [vmem:[%s1 + $0x78] sm:$0xf]
    %v59 = vld [vmem:[%s1 + $0x7c] sm:$0xf]
    %v60 = vld [vmem:[%s1 + $0x80] sm:$0xf]
    %v61 = vld [vmem:[%s1 + $0x84] sm:$0xf]
    %v62 = vld [vmem:[%s1 + $0x88] sm:$0xf]
    %v63 = vld [vmem:[%s1 + $0x8c] sm:$0xf]
    %v64 = vld [vmem:[%s1 + $0x90] sm:$0xf]
    %v65 = vld [vmem:[%s1 + $0x94] sm:$0xf]
    %v66 = vld [vmem:[%s1 + $0x98] sm:$0xf]
    %v67 = vld [vmem:[%s1 + $0x9c] sm:$0xf]
    %v68 = vld [vmem:[%s1 + $0xa0] sm:$0xf]
    %v69 = vld [vmem:[%s1 + $0xa4] sm:$0xf]
    %v70 = vld [vmem:[%s1 + $0xa8] sm:$0xf]
    %v71 = vld [vmem:[%s1 + $0xac] sm:$0xf]
    %v72 = vld [vmem:[%s1 + $0xb0] sm:$0xf]
    %v73 = vld [vmem:[%s1 + $0xb4] sm:$0xf]
    %v74 = vld [vmem:[%s1 + $0xb8] sm:$0xf]
    %v75 = vld [vmem:[%s1 + $0xbc] sm:$0xf]
    %v76 = vld [vmem:[%s1 + $0xc0] sm:$0xf]
    %v77 = vld [vmem:[%s1 + $0xc4] sm:$0xf]
    %v78 = vld [vmem:[%s1 + $0xc8] sm:$0xf]
    %v79 = vld [vmem:[%s1 + $0xcc] sm:$0xf]
    %v80 = vld [vmem:[%s1 + $0xd0] sm:$0xf]
    %v81 = vld [vmem:[%s1 + $0xd4] sm:$0xf]
    %v82 = vld [vmem:[%s1 + $0xd8] sm:$0xf]
    %v83 = vld [vmem:[%s1 + $0xdc] sm:$0xf]
    %v84 = vld [vmem:[%s1 + $0xe0] sm:$0xf]
    %v85 = vld [vmem:[%s1 + $0xe4] sm:$0xf]
    %v86 = vld [vmem:[%s1 + $0xe8] sm:$0xf]
    %v87 = vld [vmem:[%s1 + $0xec] sm:$0xf]
    %v88 = vld [vmem:[%s1 + $0xf0] sm:$0xf]
    %v89 = vld [vmem:[%s1 + $0xf4] sm:$0xf]
    %v90 = vld [vmem:[%s1 + $0xf8] sm:$0xf]
    %v91 = vld [vmem:[%s1 + $0xfc] sm:$0xf]
    %v92 = vld [vmem:[%s1 + $0x100] sm:$0xf]
    %v93 = vld [vmem:[%s1 + $0x104] sm:$0xf]
    %v94 = vld [vmem:[%s1 + $0x108] sm:$0xf]
    %v95 = vld [vmem:[%s1 + $0x10c] sm:$0xf]
    %v96 = vld [vmem:[%s1 + $0x110] sm:$0xf]
    %v97 = vld [vmem:[%s1 + $0x114] sm:$0xf]
    %v98 = vld [vmem:[%s1 + $0x118] sm:$0xf]
    %v99 = vld [vmem:[%s1 + $0x11c] sm:$0xf]
    %v100 = vld [vmem:[%s1 + $0x120] sm:$0xf]
    %v101 = vld [vmem:[%s1 + $0x124] sm:$0xf]
    %v102 = vld [vmem:[%s1 + $0x128] sm:$0xf]
    %v103 = vld [vmem:[%s1 + $0x12c] sm:$0xf]
    %v104 = vld [vmem:[%s1 + $0x130] sm:$0xf]
    %v105 = vld [vmem:[%s1 + $0x134] sm:$0xf]
    %v106 = vld [vmem:[%s1 + $0x138] sm:$0xf]
    %v107 = vld [vmem:[%s1 + $0x13c] sm:$0xf]
    %v108 = vld [vmem:[%s1 + $0x140] sm:$0xf]
    %v109 = vld [vmem:[%s1 + $0x144] sm:$0xf]
    %v110 = vld [vmem:[%s1 + $0x148] sm:$0xf]
    %v111 = vld [vmem:[%s1 + $0x14c] sm:$0xf]
    %v112 = vld [vmem:[%s1 + $0x150] sm:$0xf]
    %v113 = vld [vmem:[%s1 + $0x154] sm:$0xf]
    %v114 = vld [vmem:[%s1 + $0x158] sm:$0xf]
    %v115 = vld [vmem:[%s1 + $0x15c] sm:$0xf]
    %v116 = vld [vmem:[%s1 + $0x160] sm:$0xf]
    %v117 = vld [vmem:[%s1 + $0x164] sm:$0xf]
    %v118 = vld [vmem:[%s1 + $0x168] sm:$0xf]
    %v119 = vld [vmem:[%s1 + $0x16c] sm:$0xf]
    %v120 = vld [vmem:[%s1 + $0x170] sm:$0xf]
    %v121 = vld [vmem:[%s1 + $0x174] sm:$0xf]
    %v122 = vld [vmem:[%s1 + $0x178] sm:$0xf]
    %v123 = vld [vmem:[%s1 + $0x17c] sm:$0xf]
    %v124 = vld [vmem:[%s1 + $0x180] sm:$0xf]
    %v125 = vld [vmem:[%s1 + $0x184] sm:$0xf]
    %v126 = vld [vmem:[%s1 + $0x188] sm:$0xf]
    %v127 = vld [vmem:[%s1 + $0x18c] sm:$0xf]
    %v128 = vld [vmem:[%s1 + $0x190] sm:$0xf]
    %v129 = vld [vmem:[%s1 + $0x194] sm:$0xf]
    %v130 = vld [vmem:[%s1 + $0x198] sm:$0xf]
    %v131 = vld [vmem:[%s1 + $0x19c] sm:$0xf]
    %v132 = vld [vmem:[%s1 + $0x1a0] sm:$0xf]
    %v133 = vld [vmem:[%s1 + $0x1a4] sm:$0xf]
    %v134 = vld [vmem:[%s1 + $0x1a8] sm:$0xf]
    %v135 = vld [vmem:[%s1 + $0x1ac] sm:$0xf]
    %v136 = vld [vmem:[%s1 + $0x1b0] sm:$0xf]
    %v137 = vld [vmem:[%s1 + $0x1b4] sm:$0xf]
    %v138 = vld [vmem:[%s1 + $0x1b8] sm:$0xf]
    %v139 = vld [vmem:[%s1 + $0x1bc] sm:$0xf]
    %v140 = vld [vmem:[%s1 + $0x1c0] sm:$0xf]
    %v141 = vld [vmem:[%s1 + $0x1c4] sm:$0xf]
    %v142 = vld [vmem:[%s1 + $0x1c8] sm:$0xf]
    %v143 = vld [vmem:[%s1 + $0x1cc] sm:$0xf]
    %v144 = vld [vmem:[%s1 + $0x1d0] sm:$0xf]
    %v145 = vld [vmem:[%s1 + $0x1d4] sm:$0xf]
    %v146 = vld [vmem:[%s1 + $0x1d8] sm:$0xf]
    %v147 = vld [vmem:[%s1 + $0x1dc] sm:$0xf]
    %v148 = vld [vmem:[%s1 + $0x1e0] sm:$0xf]
    %v149 = vld [vmem:[%s1 + $0x1e4] sm:$0xf]
    %v150 = vld [vmem:[%s1 + $0x1e8] sm:$0xf]
    %v151 = vld [vmem:[%s1 + $0x1ec] sm:$0xf]
    %v152 = vld [vmem:[%s1 + $0x1f0] sm:$0xf]
    %v153 = vld [vmem:[%s1 + $0x1f4] sm:$0xf]
    %v154 = vld [vmem:[%s1 + $0x1f8] sm:$0xf]
    %v155 = vld [vmem:[%s1 + $0x1fc] sm:$0xf]
    %v156 = vld [vmem:[%s2] sm:$0xf]
    %v285 = vunpack.c.l.b16 %v28
    %v286 = vunpack.c.l.b16 %v29
    %v287 = vunpack.c.l.b16 %v30
    %v288 = vunpack.c.l.b16 %v31
    %v289 = vunpack.c.l.b16 %v32
    %v290 = vunpack.c.l.b16 %v33
    %v291 = vunpack.c.l.b16 %v34
    %v292 = vunpack.c.l.b16 %v35
    %v293 = vunpack.c.l.b16 %v36
    %v294 = vunpack.c.l.b16 %v37
    %v295 = vunpack.c.l.b16 %v38
    %v296 = vunpack.c.l.b16 %v39
    %v297 = vunpack.c.l.b16 %v40
    %v298 = vunpack.c.l.b16 %v41
    %v299 = vunpack.c.l.b16 %v42
    %v300 = vunpack.c.l.b16 %v43
    %v301 = vunpack.c.l.b16 %v44
    %v302 = vunpack.c.l.b16 %v45
    %v303 = vunpack.c.l.b16 %v46
    %v304 = vunpack.c.l.b16 %v47
    %v305 = vunpack.c.l.b16 %v48
    %v306 = vunpack.c.l.b16 %v49
    %v307 = vunpack.c.l.b16 %v50
    %v308 = vunpack.c.l.b16 %v51
    %v309 = vunpack.c.l.b16 %v52
    %v310 = vunpack.c.l.b16 %v53
    %v311 = vunpack.c.l.b16 %v54
    %v312 = vunpack.c.l.b16 %v55
    %v313 = vunpack.c.l.b16 %v56
    %v314 = vunpack.c.l.b16 %v57
    %v315 = vunpack.c.l.b16 %v58
    %v316 = vunpack.c.l.b16 %v59
    %v317 = vunpack.c.l.b16 %v60
    %v318 = vunpack.c.l.b16 %v61
    %v319 = vunpack.c.l.b16 %v62
    %v320 = vunpack.c.l.b16 %v63
    %v321 = vunpack.c.l.b16 %v64
    %v322 = vunpack.c.l.b16 %v65
    %v323 = vunpack.c.l.b16 %v66
    %v324 = vunpack.c.l.b16 %v67
    %v325 = vunpack.c.l.b16 %v68
    %v326 = vunpack.c.l.b16 %v69
    %v327 = vunpack.c.l.b16 %v70
    %v328 = vunpack.c.l.b16 %v71
    %v329 = vunpack.c.l.b16 %v72
    %v330 = vunpack.c.l.b16 %v73
    %v331 = vunpack.c.l.b16 %v74
    %v332 = vunpack.c.l.b16 %v75
    %v333 = vunpack.c.l.b16 %v76
    %v334 = vunpack.c.l.b16 %v77
    %v335 = vunpack.c.l.b16 %v78
    %v336 = vunpack.c.l.b16 %v79
    %v337 = vunpack.c.l.b16 %v80
    %v338 = vunpack.c.l.b16 %v81
    %v339 = vunpack.c.l.b16 %v82
    %v340 = vunpack.c.l.b16 %v83
    %v341 = vunpack.c.l.b16 %v84
    %v342 = vunpack.c.l.b16 %v85
    %v343 = vunpack.c.l.b16 %v86
    %v344 = vunpack.c.l.b16 %v87
    %v345 = vunpack.c.l.b16 %v88
    %v346 = vunpack.c.l.b16 %v89
    %v347 = vunpack.c.l.b16 %v90
    %v348 = vunpack.c.l.b16 %v91
    %v349 = vunpack.c.l.b16 %v92
    %v350 = vunpack.c.l.b16 %v93
    %v351 = vunpack.c.l.b16 %v94
    %v352 = vunpack.c.l.b16 %v95
    %v353 = vunpack.c.l.b16 %v96
    %v354 = vunpack.c.l.b16 %v97
    %v355 = vunpack.c.l.b16 %v98
    %v356 = vunpack.c.l.b16 %v99
    %v357 = vunpack.c.l.b16 %v100
    %v358 = vunpack.c.l.b16 %v101
    %v359 = vunpack.c.l.b16 %v102
    %v360 = vunpack.c.l.b16 %v103
    %v361 = vunpack.c.l.b16 %v104
    %v362 = vunpack.c.l.b16 %v105
    %v363 = vunpack.c.l.b16 %v106
    %v364 = vunpack.c.l.b16 %v107
    %v365 = vunpack.c.l.b16 %v108
    %v366 = vunpack.c.l.b16 %v109
    %v367 = vunpack.c.l.b16 %v110
    %v368 = vunpack.c.l.b16 %v111
    %v369 = vunpack.c.l.b16 %v112
    %v370 = vunpack.c.l.b16 %v113
    %v371 = vunpack.c.l.b16 %v114
    %v372 = vunpack.c.l.b16 %v115
    %v373 = vunpack.c.l.b16 %v116
    %v374 = vunpack.c.l.b16 %v117
    %v375 = vunpack.c.l.b16 %v118
    %v376 = vunpack.c.l.b16 %v119
    %v377 = vunpack.c.l.b16 %v120
    %v378 = vunpack.c.l.b16 %v121
    %v379 = vunpack.c.l.b16 %v122
    %v380 = vunpack.c.l.b16 %v123
    %v381 = vunpack.c.l.b16 %v124
    %v382 = vunpack.c.l.b16 %v125
    %v383 = vunpack.c.l.b16 %v126
    %v384 = vunpack.c.l.b16 %v127
    %v385 = vunpack.c.l.b16 %v128
    %v386 = vunpack.c.l.b16 %v129
    %v387 = vunpack.c.l.b16 %v130
    %v388 = vunpack.c.l.b16 %v131
    %v389 = vunpack.c.l.b16 %v132
    %v390 = vunpack.c.l.b16 %v133
    %v391 = vunpack.c.l.b16 %v134
    %v392 = vunpack.c.l.b16 %v135
    %v393 = vunpack.c.l.b16 %v136
    %v394 = vunpack.c.l.b16 %v137
    %v395 = vunpack.c.l.b16 %v138
    %v396 = vunpack.c.l.b16 %v139
    %v397 = vunpack.c.l.b16 %v140
    %v398 = vunpack.c.l.b16 %v141
    %v399 = vunpack.c.l.b16 %v142
    %v400 = vunpack.c.l.b16 %v143
    %v401 = vunpack.c.l.b16 %v144
    %v402 = vunpack.c.l.b16 %v145
    %v403 = vunpack.c.l.b16 %v146
    %v404 = vunpack.c.l.b16 %v147
    %v405 = vunpack.c.l.b16 %v148
    %v406 = vunpack.c.l.b16 %v149
    %v407 = vunpack.c.l.b16 %v150
    %v408 = vunpack.c.l.b16 %v151
    %v409 = vunpack.c.l.b16 %v152
    %v410 = vunpack.c.l.b16 %v153
    %v411 = vunpack.c.l.b16 %v154
    %v412 = vunpack.c.l.b16 %v155
    %v413 = vpack.c.b16 %v286, %v285
    %v414 = vpack.c.b16 %v288, %v287
    %v415 = vpack.c.b16 %v290, %v289
    %v416 = vpack.c.b16 %v292, %v291
    %v417 = vpack.c.b16 %v294, %v293
    %v418 = vpack.c.b16 %v296, %v295
    %v419 = vpack.c.b16 %v298, %v297
    %v420 = vpack.c.b16 %v300, %v299
    %v421 = vpack.c.b16 %v302, %v301
    %v422 = vpack.c.b16 %v304, %v303
    %v423 = vpack.c.b16 %v306, %v305
    %v424 = vpack.c.b16 %v308, %v307
    %v425 = vpack.c.b16 %v310, %v309
    %v426 = vpack.c.b16 %v312, %v311
    %v427 = vpack.c.b16 %v314, %v313
    %v428 = vpack.c.b16 %v316, %v315
    %v429 = vpack.c.b16 %v318, %v317
    %v430 = vpack.c.b16 %v320, %v319
    %v431 = vpack.c.b16 %v322, %v321
    %v432 = vpack.c.b16 %v324, %v323
    %v433 = vpack.c.b16 %v326, %v325
    %v434 = vpack.c.b16 %v328, %v327
    %v435 = vpack.c.b16 %v330, %v329
    %v436 = vpack.c.b16 %v332, %v331
    %v437 = vpack.c.b16 %v334, %v333
    %v438 = vpack.c.b16 %v336, %v335
    %v439 = vpack.c.b16 %v338, %v337
    %v440 = vpack.c.b16 %v340, %v339
    %v441 = vpack.c.b16 %v342, %v341
    %v442 = vpack.c.b16 %v344, %v343
    %v443 = vpack.c.b16 %v346, %v345
    %v444 = vpack.c.b16 %v348, %v347
    %v445 = vpack.c.b16 %v350, %v349
    %v446 = vpack.c.b16 %v352, %v351
    %v447 = vpack.c.b16 %v354, %v353
    %v448 = vpack.c.b16 %v356, %v355
    %v449 = vpack.c.b16 %v358, %v357
    %v450 = vpack.c.b16 %v360, %v359
    %v451 = vpack.c.b16 %v362, %v361
    %v452 = vpack.c.b16 %v364, %v363
    %v453 = vpack.c.b16 %v366, %v365
    %v454 = vpack.c.b16 %v368, %v367
    %v455 = vpack.c.b16 %v370, %v369
    %v456 = vpack.c.b16 %v372, %v371
    %v457 = vpack.c.b16 %v374, %v373
    %v458 = vpack.c.b16 %v376, %v375
    %v459 = vpack.c.b16 %v378, %v377
    %v460 = vpack.c.b16 %v380, %v379
    %v461 = vpack.c.b16 %v382, %v381
    %v462 = vpack.c.b16 %v384, %v383
    %v463 = vpack.c.b16 %v386, %v385
    %v464 = vpack.c.b16 %v388, %v387
    %v465 = vpack.c.b16 %v390, %v389
    %v466 = vpack.c.b16 %v392, %v391
    %v467 = vpack.c.b16 %v394, %v393
    %v468 = vpack.c.b16 %v396, %v395
    %v469 = vpack.c.b16 %v398, %v397
    %v470 = vpack.c.b16 %v400, %v399
    %v471 = vpack.c.b16 %v402, %v401
    %v472 = vpack.c.b16 %v404, %v403
    %v473 = vpack.c.b16 %v406, %v405
    %v474 = vpack.c.b16 %v408, %v407
    %v475 = vpack.c.b16 %v410, %v409
    %v476 = vpack.c.b16 %v412, %v411
    %vm477 = vcmask 64512
    %v479 = vsel %vm477, %v413, 0
    %v482 = vsel %vm477, %v414, 0
    %v485 = vsel %vm477, %v415, 0
    %v488 = vsel %vm477, %v416, 0
    %v491 = vsel %vm477, %v417, 0
    %v494 = vsel %vm477, %v418, 0
    %v497 = vsel %vm477, %v419, 0
    %v500 = vsel %vm477, %v420, 0
    %v503 = vsel %vm477, %v421, 0
    %v506 = vsel %vm477, %v422, 0
    %v509 = vsel %vm477, %v423, 0
    %v512 = vsel %vm477, %v424, 0
    %v515 = vsel %vm477, %v425, 0
    %v518 = vsel %vm477, %v426, 0
    %v521 = vsel %vm477, %v427, 0
    %v524 = vsel %vm477, %v428, 0
    %v527 = vsel %vm477, %v429, 0
    %v530 = vsel %vm477, %v430, 0
    %v533 = vsel %vm477, %v431, 0
    %v536 = vsel %vm477, %v432, 0
    %v539 = vsel %vm477, %v433, 0
    %v542 = vsel %vm477, %v434, 0
    %v545 = vsel %vm477, %v435, 0
    %v548 = vsel %vm477, %v436, 0
    %v551 = vsel %vm477, %v437, 0
    %v554 = vsel %vm477, %v438, 0
    %v557 = vsel %vm477, %v439, 0
    %v560 = vsel %vm477, %v440, 0
    %v563 = vsel %vm477, %v441, 0
    %v566 = vsel %vm477, %v442, 0
    %v569 = vsel %vm477, %v443, 0
    %v572 = vsel %vm477, %v444, 0
    %v575 = vsel %vm477, %v445, 0
    %v578 = vsel %vm477, %v446, 0
    %v581 = vsel %vm477, %v447, 0
    %v584 = vsel %vm477, %v448, 0
    %v587 = vsel %vm477, %v449, 0
    %v590 = vsel %vm477, %v450, 0
    %v593 = vsel %vm477, %v451, 0
    %v596 = vsel %vm477, %v452, 0
    %v599 = vsel %vm477, %v453, 0
    %v602 = vsel %vm477, %v454, 0
    %v605 = vsel %vm477, %v455, 0
    %v608 = vsel %vm477, %v456, 0
    %v611 = vsel %vm477, %v457, 0
    %v614 = vsel %vm477, %v458, 0
    %v617 = vsel %vm477, %v459, 0
    %v620 = vsel %vm477, %v460, 0
    %v623 = vsel %vm477, %v461, 0
    %v626 = vsel %vm477, %v462, 0
    %v629 = vsel %vm477, %v463, 0
    %v632 = vsel %vm477, %v464, 0
    %v635 = vsel %vm477, %v465, 0
    %v638 = vsel %vm477, %v466, 0
    %v641 = vsel %vm477, %v467, 0
    %v644 = vsel %vm477, %v468, 0
    %v647 = vsel %vm477, %v469, 0
    %v650 = vsel %vm477, %v470, 0
    %v653 = vsel %vm477, %v471, 0
    %v656 = vsel %vm477, %v472, 0
    %v659 = vsel %vm477, %v473, 0
    %v662 = vsel %vm477, %v474, 0
    %v665 = vsel %vm477, %v475, 0
    %v668 = vsel %vm477, %v476, 0
    %vm670 = vcmask 1043456
    %v672 = vsel %vm670, %v156, 0
    %674 = vmatprep.subr.bf16.mxu0 0
    %675 = vmatpush1.bf16.msra.mxu0 0
    %676 = vmatprep.subr.bf16.mxu0 0
    %677 = vmatpush1.bf16.msra.mxu0 0
    %678 = vmatprep.subr.bf16.mxu0 0
    %679 = vmatpush1.bf16.msra.mxu0 0
    %680 = vmatprep.subr.bf16.mxu0 0
    %681 = vmatpush1.bf16.msra.mxu0 0
    %682 = vmatprep.subr.bf16.mxu0 0
    %683 = vmatpush1.bf16.msra.mxu0 0
    %684 = vmatprep.subr.bf16.mxu0 0
    %685 = vmatpush1.bf16.msra.mxu0 0
    %686 = vmatprep.subr.bf16.mxu0 0
    %687 = vmatpush1.bf16.msra.mxu0 0
    %688 = vmatprep.subr.bf16.mxu0 0
    %689 = vmatpush1.bf16.msra.mxu0 %v672
    %690 = vmatprep.subr.bf16.mxu0 0
    %691 = vmatpush2.bf16.msra.mxu0 0
    %692 = vmatprep.subr.bf16.mxu0 0
    %693 = vmatpush2.bf16.msra.mxu0 0
    %694 = vmatprep.subr.bf16.mxu0 0
    %695 = vmatpush2.bf16.msra.mxu0 0
    %696 = vmatprep.subr.bf16.mxu0 0
    %697 = vmatpush2.bf16.msra.mxu0 0
    %698 = vmatprep.subr.bf16.mxu0 0
    %699 = vmatpush2.bf16.msra.mxu0 0
    %700 = vmatprep.subr.bf16.mxu0 0
    %701 = vmatpush2.bf16.msra.mxu0 0
    %702 = vmatprep.subr.bf16.mxu0 0
    %703 = vmatpush2.bf16.msra.mxu0 0
    %704 = vmatprep.subr.bf16.mxu0 0
    %705 = vmatpush2.bf16.msra.mxu0 0
    %706 = vmatprep.mubr.bf16.mxu0 0
    %707 = vmatmul.mubr.bf16.gmra.mxu0 %v479
    %v708 = vpop.f32.mrf.mxu0
    %v709 = vadd.f32 0.0, %v708
    %v710 = vpop.f32.mrf.mxu0
    %v711 = vpop.f32.mrf.mxu0
    %v712 = vadd.f32 0.0, %v711
    %v713 = vpop.f32.mrf.mxu0
    %714 = vmatprep.mubr.bf16.mxu0 0
    %715 = vmatmul.mubr.bf16.gmra.mxu0 %v482
    %v716 = vpop.f32.mrf.mxu0
    %v717 = vadd.f32 0.0, %v716
    %v718 = vpop.f32.mrf.mxu0
    %v719 = vpop.f32.mrf.mxu0
    %v720 = vadd.f32 0.0, %v719
    %v721 = vpop.f32.mrf.mxu0
    %722 = vmatprep.mubr.bf16.mxu0 0
    %723 = vmatmul.mubr.bf16.gmra.mxu0 %v485
    %v724 = vpop.f32.mrf.mxu0
    %v725 = vadd.f32 0.0, %v724
    %v726 = vpop.f32.mrf.mxu0
    %v727 = vpop.f32.mrf.mxu0
    %v728 = vadd.f32 0.0, %v727
    %v729 = vpop.f32.mrf.mxu0
    %730 = vmatprep.mubr.bf16.mxu0 0
    %731 = vmatmul.mubr.bf16.gmra.mxu0 %v488
    %v732 = vpop.f32.mrf.mxu0
    %v733 = vadd.f32 0.0, %v732
    %v734 = vpop.f32.mrf.mxu0
    %v735 = vpop.f32.mrf.mxu0
    %v736 = vadd.f32 0.0, %v735
    %v737 = vpop.f32.mrf.mxu0
    %738 = vmatprep.mubr.bf16.mxu0 0
    %739 = vmatmul.mubr.bf16.gmra.mxu0 %v491
    %v740 = vpop.f32.mrf.mxu0
    %v741 = vadd.f32 0.0, %v740
    %v742 = vpop.f32.mrf.mxu0
    %v743 = vpop.f32.mrf.mxu0
    %v744 = vadd.f32 0.0, %v743
    %v745 = vpop.f32.mrf.mxu0
    %746 = vmatprep.mubr.bf16.mxu0 0
    %747 = vmatmul.mubr.bf16.gmra.mxu0 %v494
    %v748 = vpop.f32.mrf.mxu0
    %v749 = vadd.f32 0.0, %v748
    %v750 = vpop.f32.mrf.mxu0
    %v751 = vpop.f32.mrf.mxu0
    %v752 = vadd.f32 0.0, %v751
    %v753 = vpop.f32.mrf.mxu0
    %754 = vmatprep.mubr.bf16.mxu0 0
    %755 = vmatmul.mubr.bf16.gmra.mxu0 %v497
    %v756 = vpop.f32.mrf.mxu0
    %v757 = vadd.f32 0.0, %v756
    %v758 = vpop.f32.mrf.mxu0
    %v759 = vpop.f32.mrf.mxu0
    %v760 = vadd.f32 0.0, %v759
    %v761 = vpop.f32.mrf.mxu0
    %762 = vmatprep.mubr.bf16.mxu0 0
    %763 = vmatmul.mubr.bf16.gmra.mxu0 %v500
    %v764 = vpop.f32.mrf.mxu0
    %v765 = vadd.f32 0.0, %v764
    %v766 = vpop.f32.mrf.mxu0
    %v767 = vpop.f32.mrf.mxu0
    %v768 = vadd.f32 0.0, %v767
    %v769 = vpop.f32.mrf.mxu0
    %770 = vmatprep.mubr.bf16.mxu0 0
    %771 = vmatmul.mubr.bf16.gmra.mxu0 %v503
    %v772 = vpop.f32.mrf.mxu0
    %v773 = vadd.f32 0.0, %v772
    %v774 = vpop.f32.mrf.mxu0
    %v775 = vpop.f32.mrf.mxu0
    %v776 = vadd.f32 0.0, %v775
    %v777 = vpop.f32.mrf.mxu0
    %778 = vmatprep.mubr.bf16.mxu0 0
    %779 = vmatmul.mubr.bf16.gmra.mxu0 %v506
    %v780 = vpop.f32.mrf.mxu0
    %v781 = vadd.f32 0.0, %v780
    %v782 = vpop.f32.mrf.mxu0
    %v783 = vpop.f32.mrf.mxu0
    %v784 = vadd.f32 0.0, %v783
    %v785 = vpop.f32.mrf.mxu0
    %786 = vmatprep.mubr.bf16.mxu0 0
    %787 = vmatmul.mubr.bf16.gmra.mxu0 %v509
    %v788 = vpop.f32.mrf.mxu0
    %v789 = vadd.f32 0.0, %v788
    %v790 = vpop.f32.mrf.mxu0
    %v791 = vpop.f32.mrf.mxu0
    %v792 = vadd.f32 0.0, %v791
    %v793 = vpop.f32.mrf.mxu0
    %794 = vmatprep.mubr.bf16.mxu0 0
    %795 = vmatmul.mubr.bf16.gmra.mxu0 %v512
    %v796 = vpop.f32.mrf.mxu0
    %v797 = vadd.f32 0.0, %v796
    %v798 = vpop.f32.mrf.mxu0
    %v799 = vpop.f32.mrf.mxu0
    %v800 = vadd.f32 0.0, %v799
    %v801 = vpop.f32.mrf.mxu0
    %802 = vmatprep.mubr.bf16.mxu0 0
    %803 = vmatmul.mubr.bf16.gmra.mxu0 %v515
    %v804 = vpop.f32.mrf.mxu0
    %v805 = vadd.f32 0.0, %v804
    %v806 = vpop.f32.mrf.mxu0
    %v807 = vpop.f32.mrf.mxu0
    %v808 = vadd.f32 0.0, %v807
    %v809 = vpop.f32.mrf.mxu0
    %810 = vmatprep.mubr.bf16.mxu0 0
    %811 = vmatmul.mubr.bf16.gmra.mxu0 %v518
    %v812 = vpop.f32.mrf.mxu0
    %v813 = vadd.f32 0.0, %v812
    %v814 = vpop.f32.mrf.mxu0
    %v815 = vpop.f32.mrf.mxu0
    %v816 = vadd.f32 0.0, %v815
    %v817 = vpop.f32.mrf.mxu0
    %818 = vmatprep.mubr.bf16.mxu0 0
    %819 = vmatmul.mubr.bf16.gmra.mxu0 %v521
    %v820 = vpop.f32.mrf.mxu0
    %v821 = vadd.f32 0.0, %v820
    %v822 = vpop.f32.mrf.mxu0
    %v823 = vpop.f32.mrf.mxu0
    %v824 = vadd.f32 0.0, %v823
    %v825 = vpop.f32.mrf.mxu0
    %826 = vmatprep.mubr.bf16.mxu0 0
    %827 = vmatmul.mubr.bf16.gmra.mxu0 %v524
    %v828 = vpop.f32.mrf.mxu0
    %v829 = vadd.f32 0.0, %v828
    %v830 = vpop.f32.mrf.mxu0
    %v831 = vpop.f32.mrf.mxu0
    %v832 = vadd.f32 0.0, %v831
    %v833 = vpop.f32.mrf.mxu0
    %834 = vmatprep.mubr.bf16.mxu0 0
    %835 = vmatmul.mubr.bf16.gmra.mxu0 %v527
    %v836 = vpop.f32.mrf.mxu0
    %v837 = vadd.f32 0.0, %v836
    %v838 = vpop.f32.mrf.mxu0
    %v839 = vpop.f32.mrf.mxu0
    %v840 = vadd.f32 0.0, %v839
    %v841 = vpop.f32.mrf.mxu0
    %842 = vmatprep.mubr.bf16.mxu0 0
    %843 = vmatmul.mubr.bf16.gmra.mxu0 %v530
    %v844 = vpop.f32.mrf.mxu0
    %v845 = vadd.f32 0.0, %v844
    %v846 = vpop.f32.mrf.mxu0
    %v847 = vpop.f32.mrf.mxu0
    %v848 = vadd.f32 0.0, %v847
    %v849 = vpop.f32.mrf.mxu0
    %850 = vmatprep.mubr.bf16.mxu0 0
    %851 = vmatmul.mubr.bf16.gmra.mxu0 %v533
    %v852 = vpop.f32.mrf.mxu0
    %v853 = vadd.f32 0.0, %v852
    %v854 = vpop.f32.mrf.mxu0
    %v855 = vpop.f32.mrf.mxu0
    %v856 = vadd.f32 0.0, %v855
    %v857 = vpop.f32.mrf.mxu0
    %858 = vmatprep.mubr.bf16.mxu0 0
    %859 = vmatmul.mubr.bf16.gmra.mxu0 %v536
    %v860 = vpop.f32.mrf.mxu0
    %v861 = vadd.f32 0.0, %v860
    %v862 = vpop.f32.mrf.mxu0
    %v863 = vpop.f32.mrf.mxu0
    %v864 = vadd.f32 0.0, %v863
    %v865 = vpop.f32.mrf.mxu0
    %866 = vmatprep.mubr.bf16.mxu0 0
    %867 = vmatmul.mubr.bf16.gmra.mxu0 %v539
    %v868 = vpop.f32.mrf.mxu0
    %v869 = vadd.f32 0.0, %v868
    %v870 = vpop.f32.mrf.mxu0
    %v871 = vpop.f32.mrf.mxu0
    %v872 = vadd.f32 0.0, %v871
    %v873 = vpop.f32.mrf.mxu0
    %874 = vmatprep.mubr.bf16.mxu0 0
    %875 = vmatmul.mubr.bf16.gmra.mxu0 %v542
    %v876 = vpop.f32.mrf.mxu0
    %v877 = vadd.f32 0.0, %v876
    %v878 = vpop.f32.mrf.mxu0
    %v879 = vpop.f32.mrf.mxu0
    %v880 = vadd.f32 0.0, %v879
    %v881 = vpop.f32.mrf.mxu0
    %882 = vmatprep.mubr.bf16.mxu0 0
    %883 = vmatmul.mubr.bf16.gmra.mxu0 %v545
    %v884 = vpop.f32.mrf.mxu0
    %v885 = vadd.f32 0.0, %v884
    %v886 = vpop.f32.mrf.mxu0
    %v887 = vpop.f32.mrf.mxu0
    %v888 = vadd.f32 0.0, %v887
    %v889 = vpop.f32.mrf.mxu0
    %890 = vmatprep.mubr.bf16.mxu0 0
    %891 = vmatmul.mubr.bf16.gmra.mxu0 %v548
    %v892 = vpop.f32.mrf.mxu0
    %v893 = vadd.f32 0.0, %v892
    %v894 = vpop.f32.mrf.mxu0
    %v895 = vpop.f32.mrf.mxu0
    %v896 = vadd.f32 0.0, %v895
    %v897 = vpop.f32.mrf.mxu0
    %898 = vmatprep.mubr.bf16.mxu0 0
    %899 = vmatmul.mubr.bf16.gmra.mxu0 %v551
    %v900 = vpop.f32.mrf.mxu0
    %v901 = vadd.f32 0.0, %v900
    %v902 = vpop.f32.mrf.mxu0
    %v903 = vpop.f32.mrf.mxu0
    %v904 = vadd.f32 0.0, %v903
    %v905 = vpop.f32.mrf.mxu0
    %906 = vmatprep.mubr.bf16.mxu0 0
    %907 = vmatmul.mubr.bf16.gmra.mxu0 %v554
    %v908 = vpop.f32.mrf.mxu0
    %v909 = vadd.f32 0.0, %v908
    %v910 = vpop.f32.mrf.mxu0
    %v911 = vpop.f32.mrf.mxu0
    %v912 = vadd.f32 0.0, %v911
    %v913 = vpop.f32.mrf.mxu0
    %914 = vmatprep.mubr.bf16.mxu0 0
    %915 = vmatmul.mubr.bf16.gmra.mxu0 %v557
    %v916 = vpop.f32.mrf.mxu0
    %v917 = vadd.f32 0.0, %v916
    %v918 = vpop.f32.mrf.mxu0
    %v919 = vpop.f32.mrf.mxu0
    %v920 = vadd.f32 0.0, %v919
    %v921 = vpop.f32.mrf.mxu0
    %922 = vmatprep.mubr.bf16.mxu0 0
    %923 = vmatmul.mubr.bf16.gmra.mxu0 %v560
    %v924 = vpop.f32.mrf.mxu0
    %v925 = vadd.f32 0.0, %v924
    %v926 = vpop.f32.mrf.mxu0
    %v927 = vpop.f32.mrf.mxu0
    %v928 = vadd.f32 0.0, %v927
    %v929 = vpop.f32.mrf.mxu0
    %930 = vmatprep.mubr.bf16.mxu0 0
    %931 = vmatmul.mubr.bf16.gmra.mxu0 %v563
    %v932 = vpop.f32.mrf.mxu0
    %v933 = vadd.f32 0.0, %v932
    %v934 = vpop.f32.mrf.mxu0
    %v935 = vpop.f32.mrf.mxu0
    %v936 = vadd.f32 0.0, %v935
    %v937 = vpop.f32.mrf.mxu0
    %938 = vmatprep.mubr.bf16.mxu0 0
    %939 = vmatmul.mubr.bf16.gmra.mxu0 %v566
    %v940 = vpop.f32.mrf.mxu0
    %v941 = vadd.f32 0.0, %v940
    %v942 = vpop.f32.mrf.mxu0
    %v943 = vpop.f32.mrf.mxu0
    %v944 = vadd.f32 0.0, %v943
    %v945 = vpop.f32.mrf.mxu0
    %946 = vmatprep.mubr.bf16.mxu0 0
    %947 = vmatmul.mubr.bf16.gmra.mxu0 %v569
    %v948 = vpop.f32.mrf.mxu0
    %v949 = vadd.f32 0.0, %v948
    %v950 = vpop.f32.mrf.mxu0
    %v951 = vpop.f32.mrf.mxu0
    %v952 = vadd.f32 0.0, %v951
    %v953 = vpop.f32.mrf.mxu0
    %954 = vmatprep.mubr.bf16.mxu0 0
    %955 = vmatmul.mubr.bf16.gmra.mxu0 %v572
    %v956 = vpop.f32.mrf.mxu0
    %v957 = vadd.f32 0.0, %v956
    %v958 = vpop.f32.mrf.mxu0
    %v959 = vpop.f32.mrf.mxu0
    %v960 = vadd.f32 0.0, %v959
    %v961 = vpop.f32.mrf.mxu0
    %962 = vmatprep.mubr.bf16.mxu0 0
    %963 = vmatmul.mubr.bf16.gmra.mxu0 %v575
    %v964 = vpop.f32.mrf.mxu0
    %v965 = vadd.f32 0.0, %v964
    %v966 = vpop.f32.mrf.mxu0
    %v967 = vpop.f32.mrf.mxu0
    %v968 = vadd.f32 0.0, %v967
    %v969 = vpop.f32.mrf.mxu0
    %970 = vmatprep.mubr.bf16.mxu0 0
    %971 = vmatmul.mubr.bf16.gmra.mxu0 %v578
    %v972 = vpop.f32.mrf.mxu0
    %v973 = vadd.f32 0.0, %v972
    %v974 = vpop.f32.mrf.mxu0
    %v975 = vpop.f32.mrf.mxu0
    %v976 = vadd.f32 0.0, %v975
    %v977 = vpop.f32.mrf.mxu0
    %978 = vmatprep.mubr.bf16.mxu0 0
    %979 = vmatmul.mubr.bf16.gmra.mxu0 %v581
    %v980 = vpop.f32.mrf.mxu0
    %v981 = vadd.f32 0.0, %v980
    %v982 = vpop.f32.mrf.mxu0
    %v983 = vpop.f32.mrf.mxu0
    %v984 = vadd.f32 0.0, %v983
    %v985 = vpop.f32.mrf.mxu0
    %986 = vmatprep.mubr.bf16.mxu0 0
    %987 = vmatmul.mubr.bf16.gmra.mxu0 %v584
    %v988 = vpop.f32.mrf.mxu0
    %v989 = vadd.f32 0.0, %v988
    %v990 = vpop.f32.mrf.mxu0
    %v991 = vpop.f32.mrf.mxu0
    %v992 = vadd.f32 0.0, %v991
    %v993 = vpop.f32.mrf.mxu0
    %994 = vmatprep.mubr.bf16.mxu0 0
    %995 = vmatmul.mubr.bf16.gmra.mxu0 %v587
    %v996 = vpop.f32.mrf.mxu0
    %v997 = vadd.f32 0.0, %v996
    %v998 = vpop.f32.mrf.mxu0
    %v999 = vpop.f32.mrf.mxu0
    %v1000 = vadd.f32 0.0, %v999
    %v1001 = vpop.f32.mrf.mxu0
    %1002 = vmatprep.mubr.bf16.mxu0 0
    %1003 = vmatmul.mubr.bf16.gmra.mxu0 %v590
    %v1004 = vpop.f32.mrf.mxu0
    %v1005 = vadd.f32 0.0, %v1004
    %v1006 = vpop.f32.mrf.mxu0
    %v1007 = vpop.f32.mrf.mxu0
    %v1008 = vadd.f32 0.0, %v1007
    %v1009 = vpop.f32.mrf.mxu0
    %1010 = vmatprep.mubr.bf16.mxu0 0
    %1011 = vmatmul.mubr.bf16.gmra.mxu0 %v593
    %v1012 = vpop.f32.mrf.mxu0
    %v1013 = vadd.f32 0.0, %v1012
    %v1014 = vpop.f32.mrf.mxu0
    %v1015 = vpop.f32.mrf.mxu0
    %v1016 = vadd.f32 0.0, %v1015
    %v1017 = vpop.f32.mrf.mxu0
    %1018 = vmatprep.mubr.bf16.mxu0 0
    %1019 = vmatmul.mubr.bf16.gmra.mxu0 %v596
    %v1020 = vpop.f32.mrf.mxu0
    %v1021 = vadd.f32 0.0, %v1020
    %v1022 = vpop.f32.mrf.mxu0
    %v1023 = vpop.f32.mrf.mxu0
    %v1024 = vadd.f32 0.0, %v1023
    %v1025 = vpop.f32.mrf.mxu0
    %1026 = vmatprep.mubr.bf16.mxu0 0
    %1027 = vmatmul.mubr.bf16.gmra.mxu0 %v599
    %v1028 = vpop.f32.mrf.mxu0
    %v1029 = vadd.f32 0.0, %v1028
    %v1030 = vpop.f32.mrf.mxu0
    %v1031 = vpop.f32.mrf.mxu0
    %v1032 = vadd.f32 0.0, %v1031
    %v1033 = vpop.f32.mrf.mxu0
    %1034 = vmatprep.mubr.bf16.mxu0 0
    %1035 = vmatmul.mubr.bf16.gmra.mxu0 %v602
    %v1036 = vpop.f32.mrf.mxu0
    %v1037 = vadd.f32 0.0, %v1036
    %v1038 = vpop.f32.mrf.mxu0
    %v1039 = vpop.f32.mrf.mxu0
    %v1040 = vadd.f32 0.0, %v1039
    %v1041 = vpop.f32.mrf.mxu0
    %1042 = vmatprep.mubr.bf16.mxu0 0
    %1043 = vmatmul.mubr.bf16.gmra.mxu0 %v605
    %v1044 = vpop.f32.mrf.mxu0
    %v1045 = vadd.f32 0.0, %v1044
    %v1046 = vpop.f32.mrf.mxu0
    %v1047 = vpop.f32.mrf.mxu0
    %v1048 = vadd.f32 0.0, %v1047
    %v1049 = vpop.f32.mrf.mxu0
    %1050 = vmatprep.mubr.bf16.mxu0 0
    %1051 = vmatmul.mubr.bf16.gmra.mxu0 %v608
    %v1052 = vpop.f32.mrf.mxu0
    %v1053 = vadd.f32 0.0, %v1052
    %v1054 = vpop.f32.mrf.mxu0
    %v1055 = vpop.f32.mrf.mxu0
    %v1056 = vadd.f32 0.0, %v1055
    %v1057 = vpop.f32.mrf.mxu0
    %1058 = vmatprep.mubr.bf16.mxu0 0
    %1059 = vmatmul.mubr.bf16.gmra.mxu0 %v611
    %v1060 = vpop.f32.mrf.mxu0
    %v1061 = vadd.f32 0.0, %v1060
    %v1062 = vpop.f32.mrf.mxu0
    %v1063 = vpop.f32.mrf.mxu0
    %v1064 = vadd.f32 0.0, %v1063
    %v1065 = vpop.f32.mrf.mxu0
    %1066 = vmatprep.mubr.bf16.mxu0 0
    %1067 = vmatmul.mubr.bf16.gmra.mxu0 %v614
    %v1068 = vpop.f32.mrf.mxu0
    %v1069 = vadd.f32 0.0, %v1068
    %v1070 = vpop.f32.mrf.mxu0
    %v1071 = vpop.f32.mrf.mxu0
    %v1072 = vadd.f32 0.0, %v1071
    %v1073 = vpop.f32.mrf.mxu0
    %1074 = vmatprep.mubr.bf16.mxu0 0
    %1075 = vmatmul.mubr.bf16.gmra.mxu0 %v617
    %v1076 = vpop.f32.mrf.mxu0
    %v1077 = vadd.f32 0.0, %v1076
    %v1078 = vpop.f32.mrf.mxu0
    %v1079 = vpop.f32.mrf.mxu0
    %v1080 = vadd.f32 0.0, %v1079
    %v1081 = vpop.f32.mrf.mxu0
    %1082 = vmatprep.mubr.bf16.mxu0 0
    %1083 = vmatmul.mubr.bf16.gmra.mxu0 %v620
    %v1084 = vpop.f32.mrf.mxu0
    %v1085 = vadd.f32 0.0, %v1084
    %v1086 = vpop.f32.mrf.mxu0
    %v1087 = vpop.f32.mrf.mxu0
    %v1088 = vadd.f32 0.0, %v1087
    %v1089 = vpop.f32.mrf.mxu0
    %1090 = vmatprep.mubr.bf16.mxu0 0
    %1091 = vmatmul.mubr.bf16.gmra.mxu0 %v623
    %v1092 = vpop.f32.mrf.mxu0
    %v1093 = vadd.f32 0.0, %v1092
    %v1094 = vpop.f32.mrf.mxu0
    %v1095 = vpop.f32.mrf.mxu0
    %v1096 = vadd.f32 0.0, %v1095
    %v1097 = vpop.f32.mrf.mxu0
    %1098 = vmatprep.mubr.bf16.mxu0 0
    %1099 = vmatmul.mubr.bf16.gmra.mxu0 %v626
    %v1100 = vpop.f32.mrf.mxu0
    %v1101 = vadd.f32 0.0, %v1100
    %v1102 = vpop.f32.mrf.mxu0
    %v1103 = vpop.f32.mrf.mxu0
    %v1104 = vadd.f32 0.0, %v1103
    %v1105 = vpop.f32.mrf.mxu0
    %1106 = vmatprep.mubr.bf16.mxu0 0
    %1107 = vmatmul.mubr.bf16.gmra.mxu0 %v629
    %v1108 = vpop.f32.mrf.mxu0
    %v1109 = vadd.f32 0.0, %v1108
    %v1110 = vpop.f32.mrf.mxu0
    %v1111 = vpop.f32.mrf.mxu0
    %v1112 = vadd.f32 0.0, %v1111
    %v1113 = vpop.f32.mrf.mxu0
    %1114 = vmatprep.mubr.bf16.mxu0 0
    %1115 = vmatmul.mubr.bf16.gmra.mxu0 %v632
    %v1116 = vpop.f32.mrf.mxu0
    %v1117 = vadd.f32 0.0, %v1116
    %v1118 = vpop.f32.mrf.mxu0
    %v1119 = vpop.f32.mrf.mxu0
    %v1120 = vadd.f32 0.0, %v1119
    %v1121 = vpop.f32.mrf.mxu0
    %1122 = vmatprep.mubr.bf16.mxu0 0
    %1123 = vmatmul.mubr.bf16.gmra.mxu0 %v635
    %v1124 = vpop.f32.mrf.mxu0
    %v1125 = vadd.f32 0.0, %v1124
    %v1126 = vpop.f32.mrf.mxu0
    %v1127 = vpop.f32.mrf.mxu0
    %v1128 = vadd.f32 0.0, %v1127
    %v1129 = vpop.f32.mrf.mxu0
    %1130 = vmatprep.mubr.bf16.mxu0 0
    %1131 = vmatmul.mubr.bf16.gmra.mxu0 %v638
    %v1132 = vpop.f32.mrf.mxu0
    %v1133 = vadd.f32 0.0, %v1132
    %v1134 = vpop.f32.mrf.mxu0
    %v1135 = vpop.f32.mrf.mxu0
    %v1136 = vadd.f32 0.0, %v1135
    %v1137 = vpop.f32.mrf.mxu0
    %1138 = vmatprep.mubr.bf16.mxu0 0
    %1139 = vmatmul.mubr.bf16.gmra.mxu0 %v641
    %v1140 = vpop.f32.mrf.mxu0
    %v1141 = vadd.f32 0.0, %v1140
    %v1142 = vpop.f32.mrf.mxu0
    %v1143 = vpop.f32.mrf.mxu0
    %v1144 = vadd.f32 0.0, %v1143
    %v1145 = vpop.f32.mrf.mxu0
    %1146 = vmatprep.mubr.bf16.mxu0 0
    %1147 = vmatmul.mubr.bf16.gmra.mxu0 %v644
    %v1148 = vpop.f32.mrf.mxu0
    %v1149 = vadd.f32 0.0, %v1148
    %v1150 = vpop.f32.mrf.mxu0
    %v1151 = vpop.f32.mrf.mxu0
    %v1152 = vadd.f32 0.0, %v1151
    %v1153 = vpop.f32.mrf.mxu0
    %1154 = vmatprep.mubr.bf16.mxu0 0
    %1155 = vmatmul.mubr.bf16.gmra.mxu0 %v647
    %v1156 = vpop.f32.mrf.mxu0
    %v1157 = vadd.f32 0.0, %v1156
    %v1158 = vpop.f32.mrf.mxu0
    %v1159 = vpop.f32.mrf.mxu0
    %v1160 = vadd.f32 0.0, %v1159
    %v1161 = vpop.f32.mrf.mxu0
    %1162 = vmatprep.mubr.bf16.mxu0 0
    %1163 = vmatmul.mubr.bf16.gmra.mxu0 %v650
    %v1164 = vpop.f32.mrf.mxu0
    %v1165 = vadd.f32 0.0, %v1164
    %v1166 = vpop.f32.mrf.mxu0
    %v1167 = vpop.f32.mrf.mxu0
    %v1168 = vadd.f32 0.0, %v1167
    %v1169 = vpop.f32.mrf.mxu0
    %1170 = vmatprep.mubr.bf16.mxu0 0
    %1171 = vmatmul.mubr.bf16.gmra.mxu0 %v653
    %v1172 = vpop.f32.mrf.mxu0
    %v1173 = vadd.f32 0.0, %v1172
    %v1174 = vpop.f32.mrf.mxu0
    %v1175 = vpop.f32.mrf.mxu0
    %v1176 = vadd.f32 0.0, %v1175
    %v1177 = vpop.f32.mrf.mxu0
    %1178 = vmatprep.mubr.bf16.mxu0 0
    %1179 = vmatmul.mubr.bf16.gmra.mxu0 %v656
    %v1180 = vpop.f32.mrf.mxu0
    %v1181 = vadd.f32 0.0, %v1180
    %v1182 = vpop.f32.mrf.mxu0
    %v1183 = vpop.f32.mrf.mxu0
    %v1184 = vadd.f32 0.0, %v1183
    %v1185 = vpop.f32.mrf.mxu0
    %1186 = vmatprep.mubr.bf16.mxu0 0
    %1187 = vmatmul.mubr.bf16.gmra.mxu0 %v659
    %v1188 = vpop.f32.mrf.mxu0
    %v1189 = vadd.f32 0.0, %v1188
    %v1190 = vpop.f32.mrf.mxu0
    %v1191 = vpop.f32.mrf.mxu0
    %v1192 = vadd.f32 0.0, %v1191
    %v1193 = vpop.f32.mrf.mxu0
    %1194 = vmatprep.mubr.bf16.mxu0 0
    %1195 = vmatmul.mubr.bf16.gmra.mxu0 %v662
    %v1196 = vpop.f32.mrf.mxu0
    %v1197 = vadd.f32 0.0, %v1196
    %v1198 = vpop.f32.mrf.mxu0
    %v1199 = vpop.f32.mrf.mxu0
    %v1200 = vadd.f32 0.0, %v1199
    %v1201 = vpop.f32.mrf.mxu0
    %1202 = vmatprep.mubr.bf16.mxu0 0
    %1203 = vmatmul.mubr.bf16.gmra.mxu0 %v665
    %v1204 = vpop.f32.mrf.mxu0
    %v1205 = vadd.f32 0.0, %v1204
    %v1206 = vpop.f32.mrf.mxu0
    %v1207 = vpop.f32.mrf.mxu0
    %v1208 = vadd.f32 0.0, %v1207
    %v1209 = vpop.f32.mrf.mxu0
    %1210 = vmatprep.mubr.bf16.mxu0 0
    %1211 = vmatmul.mubr.bf16.gmra.mxu0 %v668
    %v1212 = vpop.f32.mrf.mxu0
    %v1213 = vadd.f32 0.0, %v1212
    %v1214 = vpop.f32.mrf.mxu0
    %v1215 = vpop.f32.mrf.mxu0
    %v1216 = vadd.f32 0.0, %v1215
    %v1217 = vpop.f32.mrf.mxu0
    %1218 = vdwg.mxu0
    %v1219 = vld [vmem:[%s0] sm:$0xf]
    %v1220 = vld [vmem:[%s0 + $0x4] sm:$0xf]
    %v1221 = vld [vmem:[%s0 + $0x8] sm:$0xf]
    %v1222 = vld [vmem:[%s0 + $0xc] sm:$0xf]
    %v1223 = vld [vmem:[%s0 + $0x10] sm:$0xf]
    %v1224 = vld [vmem:[%s0 + $0x14] sm:$0xf]
    %v1225 = vld [vmem:[%s0 + $0x18] sm:$0xf]
    %v1226 = vld [vmem:[%s0 + $0x1c] sm:$0xf]
    %v1227 = vld [vmem:[%s0 + $0x20] sm:$0xf]
    %v1228 = vld [vmem:[%s0 + $0x24] sm:$0xf]
    %v1229 = vld [vmem:[%s0 + $0x28] sm:$0xf]
    %v1230 = vld [vmem:[%s0 + $0x2c] sm:$0xf]
    %v1231 = vld [vmem:[%s0 + $0x30] sm:$0xf]
    %v1232 = vld [vmem:[%s0 + $0x34] sm:$0xf]
    %v1233 = vld [vmem:[%s0 + $0x38] sm:$0xf]
    %v1234 = vld [vmem:[%s0 + $0x3c] sm:$0xf]
    %v1235 = vld [vmem:[%s0 + $0x40] sm:$0xf]
    %v1236 = vld [vmem:[%s0 + $0x44] sm:$0xf]
    %v1237 = vld [vmem:[%s0 + $0x48] sm:$0xf]
    %v1238 = vld [vmem:[%s0 + $0x4c] sm:$0xf]
    %v1239 = vld [vmem:[%s0 + $0x50] sm:$0xf]
    %v1240 = vld [vmem:[%s0 + $0x54] sm:$0xf]
    %v1241 = vld [vmem:[%s0 + $0x58] sm:$0xf]
    %v1242 = vld [vmem:[%s0 + $0x5c] sm:$0xf]
    %v1243 = vld [vmem:[%s0 + $0x60] sm:$0xf]
    %v1244 = vld [vmem:[%s0 + $0x64] sm:$0xf]
    %v1245 = vld [vmem:[%s0 + $0x68] sm:$0xf]
    %v1246 = vld [vmem:[%s0 + $0x6c] sm:$0xf]
    %v1247 = vld [vmem:[%s0 + $0x70] sm:$0xf]
    %v1248 = vld [vmem:[%s0 + $0x74] sm:$0xf]
    %v1249 = vld [vmem:[%s0 + $0x78] sm:$0xf]
    %v1250 = vld [vmem:[%s0 + $0x7c] sm:$0xf]
    %v1251 = vld [vmem:[%s0 + $0x80] sm:$0xf]
    %v1252 = vld [vmem:[%s0 + $0x84] sm:$0xf]
    %v1253 = vld [vmem:[%s0 + $0x88] sm:$0xf]
    %v1254 = vld [vmem:[%s0 + $0x8c] sm:$0xf]
    %v1255 = vld [vmem:[%s0 + $0x90] sm:$0xf]
    %v1256 = vld [vmem:[%s0 + $0x94] sm:$0xf]
    %v1257 = vld [vmem:[%s0 + $0x98] sm:$0xf]
    %v1258 = vld [vmem:[%s0 + $0x9c] sm:$0xf]
    %v1259 = vld [vmem:[%s0 + $0xa0] sm:$0xf]
    %v1260 = vld [vmem:[%s0 + $0xa4] sm:$0xf]
    %v1261 = vld [vmem:[%s0 + $0xa8] sm:$0xf]
    %v1262 = vld [vmem:[%s0 + $0xac] sm:$0xf]
    %v1263 = vld [vmem:[%s0 + $0xb0] sm:$0xf]
    %v1264 = vld [vmem:[%s0 + $0xb4] sm:$0xf]
    %v1265 = vld [vmem:[%s0 + $0xb8] sm:$0xf]
    %v1266 = vld [vmem:[%s0 + $0xbc] sm:$0xf]
    %v1267 = vld [vmem:[%s0 + $0xc0] sm:$0xf]
    %v1268 = vld [vmem:[%s0 + $0xc4] sm:$0xf]
    %v1269 = vld [vmem:[%s0 + $0xc8] sm:$0xf]
    %v1270 = vld [vmem:[%s0 + $0xcc] sm:$0xf]
    %v1271 = vld [vmem:[%s0 + $0xd0] sm:$0xf]
    %v1272 = vld [vmem:[%s0 + $0xd4] sm:$0xf]
    %v1273 = vld [vmem:[%s0 + $0xd8] sm:$0xf]
    %v1274 = vld [vmem:[%s0 + $0xdc] sm:$0xf]
    %v1275 = vld [vmem:[%s0 + $0xe0] sm:$0xf]
    %v1276 = vld [vmem:[%s0 + $0xe4] sm:$0xf]
    %v1277 = vld [vmem:[%s0 + $0xe8] sm:$0xf]
    %v1278 = vld [vmem:[%s0 + $0xec] sm:$0xf]
    %v1279 = vld [vmem:[%s0 + $0xf0] sm:$0xf]
    %v1280 = vld [vmem:[%s0 + $0xf4] sm:$0xf]
    %v1281 = vld [vmem:[%s0 + $0xf8] sm:$0xf]
    %v1282 = vld [vmem:[%s0 + $0xfc] sm:$0xf]
    %v1283 = vld [vmem:[%s0 + $0x100] sm:$0xf]
    %v1284 = vld [vmem:[%s0 + $0x104] sm:$0xf]
    %v1285 = vld [vmem:[%s0 + $0x108] sm:$0xf]
    %v1286 = vld [vmem:[%s0 + $0x10c] sm:$0xf]
    %v1287 = vld [vmem:[%s0 + $0x110] sm:$0xf]
    %v1288 = vld [vmem:[%s0 + $0x114] sm:$0xf]
    %v1289 = vld [vmem:[%s0 + $0x118] sm:$0xf]
    %v1290 = vld [vmem:[%s0 + $0x11c] sm:$0xf]
    %v1291 = vld [vmem:[%s0 + $0x120] sm:$0xf]
    %v1292 = vld [vmem:[%s0 + $0x124] sm:$0xf]
    %v1293 = vld [vmem:[%s0 + $0x128] sm:$0xf]
    %v1294 = vld [vmem:[%s0 + $0x12c] sm:$0xf]
    %v1295 = vld [vmem:[%s0 + $0x130] sm:$0xf]
    %v1296 = vld [vmem:[%s0 + $0x134] sm:$0xf]
    %v1297 = vld [vmem:[%s0 + $0x138] sm:$0xf]
    %v1298 = vld [vmem:[%s0 + $0x13c] sm:$0xf]
    %v1299 = vld [vmem:[%s0 + $0x140] sm:$0xf]
    %v1300 = vld [vmem:[%s0 + $0x144] sm:$0xf]
    %v1301 = vld [vmem:[%s0 + $0x148] sm:$0xf]
    %v1302 = vld [vmem:[%s0 + $0x14c] sm:$0xf]
    %v1303 = vld [vmem:[%s0 + $0x150] sm:$0xf]
    %v1304 = vld [vmem:[%s0 + $0x154] sm:$0xf]
    %v1305 = vld [vmem:[%s0 + $0x158] sm:$0xf]
    %v1306 = vld [vmem:[%s0 + $0x15c] sm:$0xf]
    %v1307 = vld [vmem:[%s0 + $0x160] sm:$0xf]
    %v1308 = vld [vmem:[%s0 + $0x164] sm:$0xf]
    %v1309 = vld [vmem:[%s0 + $0x168] sm:$0xf]
    %v1310 = vld [vmem:[%s0 + $0x16c] sm:$0xf]
    %v1311 = vld [vmem:[%s0 + $0x170] sm:$0xf]
    %v1312 = vld [vmem:[%s0 + $0x174] sm:$0xf]
    %v1313 = vld [vmem:[%s0 + $0x178] sm:$0xf]
    %v1314 = vld [vmem:[%s0 + $0x17c] sm:$0xf]
    %v1315 = vld [vmem:[%s0 + $0x180] sm:$0xf]
    %v1316 = vld [vmem:[%s0 + $0x184] sm:$0xf]
    %v1317 = vld [vmem:[%s0 + $0x188] sm:$0xf]
    %v1318 = vld [vmem:[%s0 + $0x18c] sm:$0xf]
    %v1319 = vld [vmem:[%s0 + $0x190] sm:$0xf]
    %v1320 = vld [vmem:[%s0 + $0x194] sm:$0xf]
    %v1321 = vld [vmem:[%s0 + $0x198] sm:$0xf]
    %v1322 = vld [vmem:[%s0 + $0x19c] sm:$0xf]
    %v1323 = vld [vmem:[%s0 + $0x1a0] sm:$0xf]
    %v1324 = vld [vmem:[%s0 + $0x1a4] sm:$0xf]
    %v1325 = vld [vmem:[%s0 + $0x1a8] sm:$0xf]
    %v1326 = vld [vmem:[%s0 + $0x1ac] sm:$0xf]
    %v1327 = vld [vmem:[%s0 + $0x1b0] sm:$0xf]
    %v1328 = vld [vmem:[%s0 + $0x1b4] sm:$0xf]
    %v1329 = vld [vmem:[%s0 + $0x1b8] sm:$0xf]
    %v1330 = vld [vmem:[%s0 + $0x1bc] sm:$0xf]
    %v1331 = vld [vmem:[%s0 + $0x1c0] sm:$0xf]
    %v1332 = vld [vmem:[%s0 + $0x1c4] sm:$0xf]
    %v1333 = vld [vmem:[%s0 + $0x1c8] sm:$0xf]
    %v1334 = vld [vmem:[%s0 + $0x1cc] sm:$0xf]
    %v1335 = vld [vmem:[%s0 + $0x1d0] sm:$0xf]
    %v1336 = vld [vmem:[%s0 + $0x1d4] sm:$0xf]
    %v1337 = vld [vmem:[%s0 + $0x1d8] sm:$0xf]
    %v1338 = vld [vmem:[%s0 + $0x1dc] sm:$0xf]
    %v1339 = vld [vmem:[%s0 + $0x1e0] sm:$0xf]
    %v1340 = vld [vmem:[%s0 + $0x1e4] sm:$0xf]
    %v1341 = vld [vmem:[%s0 + $0x1e8] sm:$0xf]
    %v1342 = vld [vmem:[%s0 + $0x1ec] sm:$0xf]
    %v1343 = vld [vmem:[%s0 + $0x1f0] sm:$0xf]
    %v1344 = vld [vmem:[%s0 + $0x1f4] sm:$0xf]
    %v1345 = vld [vmem:[%s0 + $0x1f8] sm:$0xf]
    %v1346 = vld [vmem:[%s0 + $0x1fc] sm:$0xf]
    %v1347 = vunpack.c.l.bf16 %v1219
    %v1348 = vunpack.c.l.bf16 %v1220
    %v1349 = vunpack.c.l.bf16 %v1221
    %v1350 = vunpack.c.l.bf16 %v1222
    %v1351 = vunpack.c.l.bf16 %v1223
    %v1352 = vunpack.c.l.bf16 %v1224
    %v1353 = vunpack.c.l.bf16 %v1225
    %v1354 = vunpack.c.l.bf16 %v1226
    %v1355 = vunpack.c.l.bf16 %v1227
    %v1356 = vunpack.c.l.bf16 %v1228
    %v1357 = vunpack.c.l.bf16 %v1229
    %v1358 = vunpack.c.l.bf16 %v1230
    %v1359 = vunpack.c.l.bf16 %v1231
    %v1360 = vunpack.c.l.bf16 %v1232
    %v1361 = vunpack.c.l.bf16 %v1233
    %v1362 = vunpack.c.l.bf16 %v1234
    %v1363 = vunpack.c.l.bf16 %v1235
    %v1364 = vunpack.c.l.bf16 %v1236
    %v1365 = vunpack.c.l.bf16 %v1237
    %v1366 = vunpack.c.l.bf16 %v1238
    %v1367 = vunpack.c.l.bf16 %v1239
    %v1368 = vunpack.c.l.bf16 %v1240
    %v1369 = vunpack.c.l.bf16 %v1241
    %v1370 = vunpack.c.l.bf16 %v1242
    %v1371 = vunpack.c.l.bf16 %v1243
    %v1372 = vunpack.c.l.bf16 %v1244
    %v1373 = vunpack.c.l.bf16 %v1245
    %v1374 = vunpack.c.l.bf16 %v1246
    %v1375 = vunpack.c.l.bf16 %v1247
    %v1376 = vunpack.c.l.bf16 %v1248
    %v1377 = vunpack.c.l.bf16 %v1249
    %v1378 = vunpack.c.l.bf16 %v1250
    %v1379 = vunpack.c.l.bf16 %v1251
    %v1380 = vunpack.c.l.bf16 %v1252
    %v1381 = vunpack.c.l.bf16 %v1253
    %v1382 = vunpack.c.l.bf16 %v1254
    %v1383 = vunpack.c.l.bf16 %v1255
    %v1384 = vunpack.c.l.bf16 %v1256
    %v1385 = vunpack.c.l.bf16 %v1257
    %v1386 = vunpack.c.l.bf16 %v1258
    %v1387 = vunpack.c.l.bf16 %v1259
    %v1388 = vunpack.c.l.bf16 %v1260
    %v1389 = vunpack.c.l.bf16 %v1261
    %v1390 = vunpack.c.l.bf16 %v1262
    %v1391 = vunpack.c.l.bf16 %v1263
    %v1392 = vunpack.c.l.bf16 %v1264
    %v1393 = vunpack.c.l.bf16 %v1265
    %v1394 = vunpack.c.l.bf16 %v1266
    %v1395 = vunpack.c.l.bf16 %v1267
    %v1396 = vunpack.c.l.bf16 %v1268
    %v1397 = vunpack.c.l.bf16 %v1269
    %v1398 = vunpack.c.l.bf16 %v1270
    %v1399 = vunpack.c.l.bf16 %v1271
    %v1400 = vunpack.c.l.bf16 %v1272
    %v1401 = vunpack.c.l.bf16 %v1273
    %v1402 = vunpack.c.l.bf16 %v1274
    %v1403 = vunpack.c.l.bf16 %v1275
    %v1404 = vunpack.c.l.bf16 %v1276
    %v1405 = vunpack.c.l.bf16 %v1277
    %v1406 = vunpack.c.l.bf16 %v1278
    %v1407 = vunpack.c.l.bf16 %v1279
    %v1408 = vunpack.c.l.bf16 %v1280
    %v1409 = vunpack.c.l.bf16 %v1281
    %v1410 = vunpack.c.l.bf16 %v1282
    %v1411 = vunpack.c.l.bf16 %v1283
    %v1412 = vunpack.c.l.bf16 %v1284
    %v1413 = vunpack.c.l.bf16 %v1285
    %v1414 = vunpack.c.l.bf16 %v1286
    %v1415 = vunpack.c.l.bf16 %v1287
    %v1416 = vunpack.c.l.bf16 %v1288
    %v1417 = vunpack.c.l.bf16 %v1289
    %v1418 = vunpack.c.l.bf16 %v1290
    %v1419 = vunpack.c.l.bf16 %v1291
    %v1420 = vunpack.c.l.bf16 %v1292
    %v1421 = vunpack.c.l.bf16 %v1293
    %v1422 = vunpack.c.l.bf16 %v1294
    %v1423 = vunpack.c.l.bf16 %v1295
    %v1424 = vunpack.c.l.bf16 %v1296
    %v1425 = vunpack.c.l.bf16 %v1297
    %v1426 = vunpack.c.l.bf16 %v1298
    %v1427 = vunpack.c.l.bf16 %v1299
    %v1428 = vunpack.c.l.bf16 %v1300
    %v1429 = vunpack.c.l.bf16 %v1301
    %v1430 = vunpack.c.l.bf16 %v1302
    %v1431 = vunpack.c.l.bf16 %v1303
    %v1432 = vunpack.c.l.bf16 %v1304
    %v1433 = vunpack.c.l.bf16 %v1305
    %v1434 = vunpack.c.l.bf16 %v1306
    %v1435 = vunpack.c.l.bf16 %v1307
    %v1436 = vunpack.c.l.bf16 %v1308
    %v1437 = vunpack.c.l.bf16 %v1309
    %v1438 = vunpack.c.l.bf16 %v1310
    %v1439 = vunpack.c.l.bf16 %v1311
    %v1440 = vunpack.c.l.bf16 %v1312
    %v1441 = vunpack.c.l.bf16 %v1313
    %v1442 = vunpack.c.l.bf16 %v1314
    %v1443 = vunpack.c.l.bf16 %v1315
    %v1444 = vunpack.c.l.bf16 %v1316
    %v1445 = vunpack.c.l.bf16 %v1317
    %v1446 = vunpack.c.l.bf16 %v1318
    %v1447 = vunpack.c.l.bf16 %v1319
    %v1448 = vunpack.c.l.bf16 %v1320
    %v1449 = vunpack.c.l.bf16 %v1321
    %v1450 = vunpack.c.l.bf16 %v1322
    %v1451 = vunpack.c.l.bf16 %v1323
    %v1452 = vunpack.c.l.bf16 %v1324
    %v1453 = vunpack.c.l.bf16 %v1325
    %v1454 = vunpack.c.l.bf16 %v1326
    %v1455 = vunpack.c.l.bf16 %v1327
    %v1456 = vunpack.c.l.bf16 %v1328
    %v1457 = vunpack.c.l.bf16 %v1329
    %v1458 = vunpack.c.l.bf16 %v1330
    %v1459 = vunpack.c.l.bf16 %v1331
    %v1460 = vunpack.c.l.bf16 %v1332
    %v1461 = vunpack.c.l.bf16 %v1333
    %v1462 = vunpack.c.l.bf16 %v1334
    %v1463 = vunpack.c.l.bf16 %v1335
    %v1464 = vunpack.c.l.bf16 %v1336
    %v1465 = vunpack.c.l.bf16 %v1337
    %v1466 = vunpack.c.l.bf16 %v1338
    %v1467 = vunpack.c.l.bf16 %v1339
    %v1468 = vunpack.c.l.bf16 %v1340
    %v1469 = vunpack.c.l.bf16 %v1341
    %v1470 = vunpack.c.l.bf16 %v1342
    %v1471 = vunpack.c.l.bf16 %v1343
    %v1472 = vunpack.c.l.bf16 %v1344
    %v1473 = vunpack.c.l.bf16 %v1345
    %v1474 = vunpack.c.l.bf16 %v1346
    %v1475 = vld [vmem:[%s3] sm:$0x1]
    %v1477 = vlaneseq
    %v1478 = vshrl.u32 %v1477, 7
    %v1479 = vsub.s32 0, %v1478
    %v1480 = vrot.slane %v1475, %v1479
    %v1482 = vmul.f32 %v1347, %v1480
    %v1483 = vmul.f32 %v1348, %v1480
    %v1484 = vmul.f32 %v1349, %v1480
    %v1485 = vmul.f32 %v1350, %v1480
    %v1486 = vmul.f32 %v1351, %v1480
    %v1487 = vmul.f32 %v1352, %v1480
    %v1488 = vmul.f32 %v1353, %v1480
    %v1489 = vmul.f32 %v1354, %v1480
    %v1490 = vmul.f32 %v1355, %v1480
    %v1491 = vmul.f32 %v1356, %v1480
    %v1492 = vmul.f32 %v1357, %v1480
    %v1493 = vmul.f32 %v1358, %v1480
    %v1494 = vmul.f32 %v1359, %v1480
    %v1495 = vmul.f32 %v1360, %v1480
    %v1496 = vmul.f32 %v1361, %v1480
    %v1497 = vmul.f32 %v1362, %v1480
    %v1498 = vmul.f32 %v1363, %v1480
    %v1499 = vmul.f32 %v1364, %v1480
    %v1500 = vmul.f32 %v1365, %v1480
    %v1501 = vmul.f32 %v1366, %v1480
    %v1502 = vmul.f32 %v1367, %v1480
    %v1503 = vmul.f32 %v1368, %v1480
    %v1504 = vmul.f32 %v1369, %v1480
    %v1505 = vmul.f32 %v1370, %v1480
    %v1506 = vmul.f32 %v1371, %v1480
    %v1507 = vmul.f32 %v1372, %v1480
    %v1508 = vmul.f32 %v1373, %v1480
    %v1509 = vmul.f32 %v1374, %v1480
    %v1510 = vmul.f32 %v1375, %v1480
    %v1511 = vmul.f32 %v1376, %v1480
    %v1512 = vmul.f32 %v1377, %v1480
    %v1513 = vmul.f32 %v1378, %v1480
    %v1514 = vmul.f32 %v1379, %v1480
    %v1515 = vmul.f32 %v1380, %v1480
    %v1516 = vmul.f32 %v1381, %v1480
    %v1517 = vmul.f32 %v1382, %v1480
    %v1518 = vmul.f32 %v1383, %v1480
    %v1519 = vmul.f32 %v1384, %v1480
    %v1520 = vmul.f32 %v1385, %v1480
    %v1521 = vmul.f32 %v1386, %v1480
    %v1522 = vmul.f32 %v1387, %v1480
    %v1523 = vmul.f32 %v1388, %v1480
    %v1524 = vmul.f32 %v1389, %v1480
    %v1525 = vmul.f32 %v1390, %v1480
    %v1526 = vmul.f32 %v1391, %v1480
    %v1527 = vmul.f32 %v1392, %v1480
    %v1528 = vmul.f32 %v1393, %v1480
    %v1529 = vmul.f32 %v1394, %v1480
    %v1530 = vmul.f32 %v1395, %v1480
    %v1531 = vmul.f32 %v1396, %v1480
    %v1532 = vmul.f32 %v1397, %v1480
    %v1533 = vmul.f32 %v1398, %v1480
    %v1534 = vmul.f32 %v1399, %v1480
    %v1535 = vmul.f32 %v1400, %v1480
    %v1536 = vmul.f32 %v1401, %v1480
    %v1537 = vmul.f32 %v1402, %v1480
    %v1538 = vmul.f32 %v1403, %v1480
    %v1539 = vmul.f32 %v1404, %v1480
    %v1540 = vmul.f32 %v1405, %v1480
    %v1541 = vmul.f32 %v1406, %v1480
    %v1542 = vmul.f32 %v1407, %v1480
    %v1543 = vmul.f32 %v1408, %v1480
    %v1544 = vmul.f32 %v1409, %v1480
    %v1545 = vmul.f32 %v1410, %v1480
    %v1546 = vmul.f32 %v1411, %v1480
    %v1547 = vmul.f32 %v1412, %v1480
    %v1548 = vmul.f32 %v1413, %v1480
    %v1549 = vmul.f32 %v1414, %v1480
    %v1550 = vmul.f32 %v1415, %v1480
    %v1551 = vmul.f32 %v1416, %v1480
    %v1552 = vmul.f32 %v1417, %v1480
    %v1553 = vmul.f32 %v1418, %v1480
    %v1554 = vmul.f32 %v1419, %v1480
    %v1555 = vmul.f32 %v1420, %v1480
    %v1556 = vmul.f32 %v1421, %v1480
    %v1557 = vmul.f32 %v1422, %v1480
    %v1558 = vmul.f32 %v1423, %v1480
    %v1559 = vmul.f32 %v1424, %v1480
    %v1560 = vmul.f32 %v1425, %v1480
    %v1561 = vmul.f32 %v1426, %v1480
    %v1562 = vmul.f32 %v1427, %v1480
    %v1563 = vmul.f32 %v1428, %v1480
    %v1564 = vmul.f32 %v1429, %v1480
    %v1565 = vmul.f32 %v1430, %v1480
    %v1566 = vmul.f32 %v1431, %v1480
    %v1567 = vmul.f32 %v1432, %v1480
    %v1568 = vmul.f32 %v1433, %v1480
    %v1569 = vmul.f32 %v1434, %v1480
    %v1570 = vmul.f32 %v1435, %v1480
    %v1571 = vmul.f32 %v1436, %v1480
    %v1572 = vmul.f32 %v1437, %v1480
    %v1573 = vmul.f32 %v1438, %v1480
    %v1574 = vmul.f32 %v1439, %v1480
    %v1575 = vmul.f32 %v1440, %v1480
    %v1576 = vmul.f32 %v1441, %v1480
    %v1577 = vmul.f32 %v1442, %v1480
    %v1578 = vmul.f32 %v1443, %v1480
    %v1579 = vmul.f32 %v1444, %v1480
    %v1580 = vmul.f32 %v1445, %v1480
    %v1581 = vmul.f32 %v1446, %v1480
    %v1582 = vmul.f32 %v1447, %v1480
    %v1583 = vmul.f32 %v1448, %v1480
    %v1584 = vmul.f32 %v1449, %v1480
    %v1585 = vmul.f32 %v1450, %v1480
    %v1586 = vmul.f32 %v1451, %v1480
    %v1587 = vmul.f32 %v1452, %v1480
    %v1588 = vmul.f32 %v1453, %v1480
    %v1589 = vmul.f32 %v1454, %v1480
    %v1590 = vmul.f32 %v1455, %v1480
    %v1591 = vmul.f32 %v1456, %v1480
    %v1592 = vmul.f32 %v1457, %v1480
    %v1593 = vmul.f32 %v1458, %v1480
    %v1594 = vmul.f32 %v1459, %v1480
    %v1595 = vmul.f32 %v1460, %v1480
    %v1596 = vmul.f32 %v1461, %v1480
    %v1597 = vmul.f32 %v1462, %v1480
    %v1598 = vmul.f32 %v1463, %v1480
    %v1599 = vmul.f32 %v1464, %v1480
    %v1600 = vmul.f32 %v1465, %v1480
    %v1601 = vmul.f32 %v1466, %v1480
    %v1602 = vmul.f32 %v1467, %v1480
    %v1603 = vmul.f32 %v1468, %v1480
    %v1604 = vmul.f32 %v1469, %v1480
    %v1605 = vmul.f32 %v1470, %v1480
    %v1606 = vmul.f32 %v1471, %v1480
    %v1607 = vmul.f32 %v1472, %v1480
    %v1608 = vmul.f32 %v1473, %v1480
    %v1609 = vmul.f32 %v1474, %v1480
    %v1610 = vld [vmem:[%s4] sm:$0x1]
    %v1612 = vlaneseq
    %v1613 = vshrl.u32 %v1612, 7
    %v1614 = vsub.s32 0, %v1613
    %v1615 = vrot.slane %v1610, %v1614
    %v1617 = vadd.f32 %v1482, %v1615
    %v1618 = vadd.f32 %v1483, %v1615
    %v1619 = vadd.f32 %v1484, %v1615
    %v1620 = vadd.f32 %v1485, %v1615
    %v1621 = vadd.f32 %v1486, %v1615
    %v1622 = vadd.f32 %v1487, %v1615
    %v1623 = vadd.f32 %v1488, %v1615
    %v1624 = vadd.f32 %v1489, %v1615
    %v1625 = vadd.f32 %v1490, %v1615
    %v1626 = vadd.f32 %v1491, %v1615
    %v1627 = vadd.f32 %v1492, %v1615
    %v1628 = vadd.f32 %v1493, %v1615
    %v1629 = vadd.f32 %v1494, %v1615
    %v1630 = vadd.f32 %v1495, %v1615
    %v1631 = vadd.f32 %v1496, %v1615
    %v1632 = vadd.f32 %v1497, %v1615
    %v1633 = vadd.f32 %v1498, %v1615
    %v1634 = vadd.f32 %v1499, %v1615
    %v1635 = vadd.f32 %v1500, %v1615
    %v1636 = vadd.f32 %v1501, %v1615
    %v1637 = vadd.f32 %v1502, %v1615
    %v1638 = vadd.f32 %v1503, %v1615
    %v1639 = vadd.f32 %v1504, %v1615
    %v1640 = vadd.f32 %v1505, %v1615
    %v1641 = vadd.f32 %v1506, %v1615
    %v1642 = vadd.f32 %v1507, %v1615
    %v1643 = vadd.f32 %v1508, %v1615
    %v1644 = vadd.f32 %v1509, %v1615
    %v1645 = vadd.f32 %v1510, %v1615
    %v1646 = vadd.f32 %v1511, %v1615
    %v1647 = vadd.f32 %v1512, %v1615
    %v1648 = vadd.f32 %v1513, %v1615
    %v1649 = vadd.f32 %v1514, %v1615
    %v1650 = vadd.f32 %v1515, %v1615
    %v1651 = vadd.f32 %v1516, %v1615
    %v1652 = vadd.f32 %v1517, %v1615
    %v1653 = vadd.f32 %v1518, %v1615
    %v1654 = vadd.f32 %v1519, %v1615
    %v1655 = vadd.f32 %v1520, %v1615
    %v1656 = vadd.f32 %v1521, %v1615
    %v1657 = vadd.f32 %v1522, %v1615
    %v1658 = vadd.f32 %v1523, %v1615
    %v1659 = vadd.f32 %v1524, %v1615
    %v1660 = vadd.f32 %v1525, %v1615
    %v1661 = vadd.f32 %v1526, %v1615
    %v1662 = vadd.f32 %v1527, %v1615
    %v1663 = vadd.f32 %v1528, %v1615
    %v1664 = vadd.f32 %v1529, %v1615
    %v1665 = vadd.f32 %v1530, %v1615
    %v1666 = vadd.f32 %v1531, %v1615
    %v1667 = vadd.f32 %v1532, %v1615
    %v1668 = vadd.f32 %v1533, %v1615
    %v1669 = vadd.f32 %v1534, %v1615
    %v1670 = vadd.f32 %v1535, %v1615
    %v1671 = vadd.f32 %v1536, %v1615
    %v1672 = vadd.f32 %v1537, %v1615
    %v1673 = vadd.f32 %v1538, %v1615
    %v1674 = vadd.f32 %v1539, %v1615
    %v1675 = vadd.f32 %v1540, %v1615
    %v1676 = vadd.f32 %v1541, %v1615
    %v1677 = vadd.f32 %v1542, %v1615
    %v1678 = vadd.f32 %v1543, %v1615
    %v1679 = vadd.f32 %v1544, %v1615
    %v1680 = vadd.f32 %v1545, %v1615
    %v1681 = vadd.f32 %v1546, %v1615
    %v1682 = vadd.f32 %v1547, %v1615
    %v1683 = vadd.f32 %v1548, %v1615
    %v1684 = vadd.f32 %v1549, %v1615
    %v1685 = vadd.f32 %v1550, %v1615
    %v1686 = vadd.f32 %v1551, %v1615
    %v1687 = vadd.f32 %v1552, %v1615
    %v1688 = vadd.f32 %v1553, %v1615
    %v1689 = vadd.f32 %v1554, %v1615
    %v1690 = vadd.f32 %v1555, %v1615
    %v1691 = vadd.f32 %v1556, %v1615
    %v1692 = vadd.f32 %v1557, %v1615
    %v1693 = vadd.f32 %v1558, %v1615
    %v1694 = vadd.f32 %v1559, %v1615
    %v1695 = vadd.f32 %v1560, %v1615
    %v1696 = vadd.f32 %v1561, %v1615
    %v1697 = vadd.f32 %v1562, %v1615
    %v1698 = vadd.f32 %v1563, %v1615
    %v1699 = vadd.f32 %v1564, %v1615
    %v1700 = vadd.f32 %v1565, %v1615
    %v1701 = vadd.f32 %v1566, %v1615
    %v1702 = vadd.f32 %v1567, %v1615
    %v1703 = vadd.f32 %v1568, %v1615
    %v1704 = vadd.f32 %v1569, %v1615
    %v1705 = vadd.f32 %v1570, %v1615
    %v1706 = vadd.f32 %v1571, %v1615
    %v1707 = vadd.f32 %v1572, %v1615
    %v1708 = vadd.f32 %v1573, %v1615
    %v1709 = vadd.f32 %v1574, %v1615
    %v1710 = vadd.f32 %v1575, %v1615
    %v1711 = vadd.f32 %v1576, %v1615
    %v1712 = vadd.f32 %v1577, %v1615
    %v1713 = vadd.f32 %v1578, %v1615
    %v1714 = vadd.f32 %v1579, %v1615
    %v1715 = vadd.f32 %v1580, %v1615
    %v1716 = vadd.f32 %v1581, %v1615
    %v1717 = vadd.f32 %v1582, %v1615
    %v1718 = vadd.f32 %v1583, %v1615
    %v1719 = vadd.f32 %v1584, %v1615
    %v1720 = vadd.f32 %v1585, %v1615
    %v1721 = vadd.f32 %v1586, %v1615
    %v1722 = vadd.f32 %v1587, %v1615
    %v1723 = vadd.f32 %v1588, %v1615
    %v1724 = vadd.f32 %v1589, %v1615
    %v1725 = vadd.f32 %v1590, %v1615
    %v1726 = vadd.f32 %v1591, %v1615
    %v1727 = vadd.f32 %v1592, %v1615
    %v1728 = vadd.f32 %v1593, %v1615
    %v1729 = vadd.f32 %v1594, %v1615
    %v1730 = vadd.f32 %v1595, %v1615
    %v1731 = vadd.f32 %v1596, %v1615
    %v1732 = vadd.f32 %v1597, %v1615
    %v1733 = vadd.f32 %v1598, %v1615
    %v1734 = vadd.f32 %v1599, %v1615
    %v1735 = vadd.f32 %v1600, %v1615
    %v1736 = vadd.f32 %v1601, %v1615
    %v1737 = vadd.f32 %v1602, %v1615
    %v1738 = vadd.f32 %v1603, %v1615
    %v1739 = vadd.f32 %v1604, %v1615
    %v1740 = vadd.f32 %v1605, %v1615
    %v1741 = vadd.f32 %v1606, %v1615
    %v1742 = vadd.f32 %v1607, %v1615
    %v1743 = vadd.f32 %v1608, %v1615
    %v1744 = vadd.f32 %v1609, %v1615
    %v1745 = vld [vmem:[%s5] sm:$0x1]
    %v1747 = vlaneseq
    %v1748 = vshrl.u32 %v1747, 7
    %v1749 = vsub.s32 0, %v1748
    %v1750 = vrot.slane %v1745, %v1749
    %v1752 = vmul.f32 %v709, %v1750
    %v1753 = vmul.f32 %v712, %v1750
    %v1754 = vmul.f32 %v717, %v1750
    %v1755 = vmul.f32 %v720, %v1750
    %v1756 = vmul.f32 %v725, %v1750
    %v1757 = vmul.f32 %v728, %v1750
    %v1758 = vmul.f32 %v733, %v1750
    %v1759 = vmul.f32 %v736, %v1750
    %v1760 = vmul.f32 %v741, %v1750
    %v1761 = vmul.f32 %v744, %v1750
    %v1762 = vmul.f32 %v749, %v1750
    %v1763 = vmul.f32 %v752, %v1750
    %v1764 = vmul.f32 %v757, %v1750
    %v1765 = vmul.f32 %v760, %v1750
    %v1766 = vmul.f32 %v765, %v1750
    %v1767 = vmul.f32 %v768, %v1750
    %v1768 = vmul.f32 %v773, %v1750
    %v1769 = vmul.f32 %v776, %v1750
    %v1770 = vmul.f32 %v781, %v1750
    %v1771 = vmul.f32 %v784, %v1750
    %v1772 = vmul.f32 %v789, %v1750
    %v1773 = vmul.f32 %v792, %v1750
    %v1774 = vmul.f32 %v797, %v1750
    %v1775 = vmul.f32 %v800, %v1750
    %v1776 = vmul.f32 %v805, %v1750
    %v1777 = vmul.f32 %v808, %v1750
    %v1778 = vmul.f32 %v813, %v1750
    %v1779 = vmul.f32 %v816, %v1750
    %v1780 = vmul.f32 %v821, %v1750
    %v1781 = vmul.f32 %v824, %v1750
    %v1782 = vmul.f32 %v829, %v1750
    %v1783 = vmul.f32 %v832, %v1750
    %v1784 = vmul.f32 %v837, %v1750
    %v1785 = vmul.f32 %v840, %v1750
    %v1786 = vmul.f32 %v845, %v1750
    %v1787 = vmul.f32 %v848, %v1750
    %v1788 = vmul.f32 %v853, %v1750
    %v1789 = vmul.f32 %v856, %v1750
    %v1790 = vmul.f32 %v861, %v1750
    %v1791 = vmul.f32 %v864, %v1750
    %v1792 = vmul.f32 %v869, %v1750
    %v1793 = vmul.f32 %v872, %v1750
    %v1794 = vmul.f32 %v877, %v1750
    %v1795 = vmul.f32 %v880, %v1750
    %v1796 = vmul.f32 %v885, %v1750
    %v1797 = vmul.f32 %v888, %v1750
    %v1798 = vmul.f32 %v893, %v1750
    %v1799 = vmul.f32 %v896, %v1750
    %v1800 = vmul.f32 %v901, %v1750
    %v1801 = vmul.f32 %v904, %v1750
    %v1802 = vmul.f32 %v909, %v1750
    %v1803 = vmul.f32 %v912, %v1750
    %v1804 = vmul.f32 %v917, %v1750
    %v1805 = vmul.f32 %v920, %v1750
    %v1806 = vmul.f32 %v925, %v1750
    %v1807 = vmul.f32 %v928, %v1750
    %v1808 = vmul.f32 %v933, %v1750
    %v1809 = vmul.f32 %v936, %v1750
    %v1810 = vmul.f32 %v941, %v1750
    %v1811 = vmul.f32 %v944, %v1750
    %v1812 = vmul.f32 %v949, %v1750
    %v1813 = vmul.f32 %v952, %v1750
    %v1814 = vmul.f32 %v957, %v1750
    %v1815 = vmul.f32 %v960, %v1750
    %v1816 = vmul.f32 %v965, %v1750
    %v1817 = vmul.f32 %v968, %v1750
    %v1818 = vmul.f32 %v973, %v1750
    %v1819 = vmul.f32 %v976, %v1750
    %v1820 = vmul.f32 %v981, %v1750
    %v1821 = vmul.f32 %v984, %v1750
    %v1822 = vmul.f32 %v989, %v1750
    %v1823 = vmul.f32 %v992, %v1750
    %v1824 = vmul.f32 %v997, %v1750
    %v1825 = vmul.f32 %v1000, %v1750
    %v1826 = vmul.f32 %v1005, %v1750
    %v1827 = vmul.f32 %v1008, %v1750
    %v1828 = vmul.f32 %v1013, %v1750
    %v1829 = vmul.f32 %v1016, %v1750
    %v1830 = vmul.f32 %v1021, %v1750
    %v1831 = vmul.f32 %v1024, %v1750
    %v1832 = vmul.f32 %v1029, %v1750
    %v1833 = vmul.f32 %v1032, %v1750
    %v1834 = vmul.f32 %v1037, %v1750
    %v1835 = vmul.f32 %v1040, %v1750
    %v1836 = vmul.f32 %v1045, %v1750
    %v1837 = vmul.f32 %v1048, %v1750
    %v1838 = vmul.f32 %v1053, %v1750
    %v1839 = vmul.f32 %v1056, %v1750
    %v1840 = vmul.f32 %v1061, %v1750
    %v1841 = vmul.f32 %v1064, %v1750
    %v1842 = vmul.f32 %v1069, %v1750
    %v1843 = vmul.f32 %v1072, %v1750
    %v1844 = vmul.f32 %v1077, %v1750
    %v1845 = vmul.f32 %v1080, %v1750
    %v1846 = vmul.f32 %v1085, %v1750
    %v1847 = vmul.f32 %v1088, %v1750
    %v1848 = vmul.f32 %v1093, %v1750
    %v1849 = vmul.f32 %v1096, %v1750
    %v1850 = vmul.f32 %v1101, %v1750
    %v1851 = vmul.f32 %v1104, %v1750
    %v1852 = vmul.f32 %v1109, %v1750
    %v1853 = vmul.f32 %v1112, %v1750
    %v1854 = vmul.f32 %v1117, %v1750
    %v1855 = vmul.f32 %v1120, %v1750
    %v1856 = vmul.f32 %v1125, %v1750
    %v1857 = vmul.f32 %v1128, %v1750
    %v1858 = vmul.f32 %v1133, %v1750
    %v1859 = vmul.f32 %v1136, %v1750
    %v1860 = vmul.f32 %v1141, %v1750
    %v1861 = vmul.f32 %v1144, %v1750
    %v1862 = vmul.f32 %v1149, %v1750
    %v1863 = vmul.f32 %v1152, %v1750
    %v1864 = vmul.f32 %v1157, %v1750
    %v1865 = vmul.f32 %v1160, %v1750
    %v1866 = vmul.f32 %v1165, %v1750
    %v1867 = vmul.f32 %v1168, %v1750
    %v1868 = vmul.f32 %v1173, %v1750
    %v1869 = vmul.f32 %v1176, %v1750
    %v1870 = vmul.f32 %v1181, %v1750
    %v1871 = vmul.f32 %v1184, %v1750
    %v1872 = vmul.f32 %v1189, %v1750
    %v1873 = vmul.f32 %v1192, %v1750
    %v1874 = vmul.f32 %v1197, %v1750
    %v1875 = vmul.f32 %v1200, %v1750
    %v1876 = vmul.f32 %v1205, %v1750
    %v1877 = vmul.f32 %v1208, %v1750
    %v1878 = vmul.f32 %v1213, %v1750
    %v1879 = vmul.f32 %v1216, %v1750
    %v1880 = vadd.f32 %v1617, %v1752
    %v1881 = vadd.f32 %v1618, %v1753
    %v1882 = vadd.f32 %v1619, %v1754
    %v1883 = vadd.f32 %v1620, %v1755
    %v1884 = vadd.f32 %v1621, %v1756
    %v1885 = vadd.f32 %v1622, %v1757
    %v1886 = vadd.f32 %v1623, %v1758
    %v1887 = vadd.f32 %v1624, %v1759
    %v1888 = vadd.f32 %v1625, %v1760
    %v1889 = vadd.f32 %v1626, %v1761
    %v1890 = vadd.f32 %v1627, %v1762
    %v1891 = vadd.f32 %v1628, %v1763
    %v1892 = vadd.f32 %v1629, %v1764
    %v1893 = vadd.f32 %v1630, %v1765
    %v1894 = vadd.f32 %v1631, %v1766
    %v1895 = vadd.f32 %v1632, %v1767
    %v1896 = vadd.f32 %v1633, %v1768
    %v1897 = vadd.f32 %v1634, %v1769
    %v1898 = vadd.f32 %v1635, %v1770
    %v1899 = vadd.f32 %v1636, %v1771
    %v1900 = vadd.f32 %v1637, %v1772
    %v1901 = vadd.f32 %v1638, %v1773
    %v1902 = vadd.f32 %v1639, %v1774
    %v1903 = vadd.f32 %v1640, %v1775
    %v1904 = vadd.f32 %v1641, %v1776
    %v1905 = vadd.f32 %v1642, %v1777
    %v1906 = vadd.f32 %v1643, %v1778
    %v1907 = vadd.f32 %v1644, %v1779
    %v1908 = vadd.f32 %v1645, %v1780
    %v1909 = vadd.f32 %v1646, %v1781
    %v1910 = vadd.f32 %v1647, %v1782
    %v1911 = vadd.f32 %v1648, %v1783
    %v1912 = vadd.f32 %v1649, %v1784
    %v1913 = vadd.f32 %v1650, %v1785
    %v1914 = vadd.f32 %v1651, %v1786
    %v1915 = vadd.f32 %v1652, %v1787
    %v1916 = vadd.f32 %v1653, %v1788
    %v1917 = vadd.f32 %v1654, %v1789
    %v1918 = vadd.f32 %v1655, %v1790
    %v1919 = vadd.f32 %v1656, %v1791
    %v1920 = vadd.f32 %v1657, %v1792
    %v1921 = vadd.f32 %v1658, %v1793
    %v1922 = vadd.f32 %v1659, %v1794
    %v1923 = vadd.f32 %v1660, %v1795
    %v1924 = vadd.f32 %v1661, %v1796
    %v1925 = vadd.f32 %v1662, %v1797
    %v1926 = vadd.f32 %v1663, %v1798
    %v1927 = vadd.f32 %v1664, %v1799
    %v1928 = vadd.f32 %v1665, %v1800
    %v1929 = vadd.f32 %v1666, %v1801
    %v1930 = vadd.f32 %v1667, %v1802
    %v1931 = vadd.f32 %v1668, %v1803
    %v1932 = vadd.f32 %v1669, %v1804
    %v1933 = vadd.f32 %v1670, %v1805
    %v1934 = vadd.f32 %v1671, %v1806
    %v1935 = vadd.f32 %v1672, %v1807
    %v1936 = vadd.f32 %v1673, %v1808
    %v1937 = vadd.f32 %v1674, %v1809
    %v1938 = vadd.f32 %v1675, %v1810
    %v1939 = vadd.f32 %v1676, %v1811
    %v1940 = vadd.f32 %v1677, %v1812
    %v1941 = vadd.f32 %v1678, %v1813
    %v1942 = vadd.f32 %v1679, %v1814
    %v1943 = vadd.f32 %v1680, %v1815
    %v1944 = vadd.f32 %v1681, %v1816
    %v1945 = vadd.f32 %v1682, %v1817
    %v1946 = vadd.f32 %v1683, %v1818
    %v1947 = vadd.f32 %v1684, %v1819
    %v1948 = vadd.f32 %v1685, %v1820
    %v1949 = vadd.f32 %v1686, %v1821
    %v1950 = vadd.f32 %v1687, %v1822
    %v1951 = vadd.f32 %v1688, %v1823
    %v1952 = vadd.f32 %v1689, %v1824
    %v1953 = vadd.f32 %v1690, %v1825
    %v1954 = vadd.f32 %v1691, %v1826
    %v1955 = vadd.f32 %v1692, %v1827
    %v1956 = vadd.f32 %v1693, %v1828
    %v1957 = vadd.f32 %v1694, %v1829
    %v1958 = vadd.f32 %v1695, %v1830
    %v1959 = vadd.f32 %v1696, %v1831
    %v1960 = vadd.f32 %v1697, %v1832
    %v1961 = vadd.f32 %v1698, %v1833
    %v1962 = vadd.f32 %v1699, %v1834
    %v1963 = vadd.f32 %v1700, %v1835
    %v1964 = vadd.f32 %v1701, %v1836
    %v1965 = vadd.f32 %v1702, %v1837
    %v1966 = vadd.f32 %v1703, %v1838
    %v1967 = vadd.f32 %v1704, %v1839
    %v1968 = vadd.f32 %v1705, %v1840
    %v1969 = vadd.f32 %v1706, %v1841
    %v1970 = vadd.f32 %v1707, %v1842
    %v1971 = vadd.f32 %v1708, %v1843
    %v1972 = vadd.f32 %v1709, %v1844
    %v1973 = vadd.f32 %v1710, %v1845
    %v1974 = vadd.f32 %v1711, %v1846
    %v1975 = vadd.f32 %v1712, %v1847
    %v1976 = vadd.f32 %v1713, %v1848
    %v1977 = vadd.f32 %v1714, %v1849
    %v1978 = vadd.f32 %v1715, %v1850
    %v1979 = vadd.f32 %v1716, %v1851
    %v1980 = vadd.f32 %v1717, %v1852
    %v1981 = vadd.f32 %v1718, %v1853
    %v1982 = vadd.f32 %v1719, %v1854
    %v1983 = vadd.f32 %v1720, %v1855
    %v1984 = vadd.f32 %v1721, %v1856
    %v1985 = vadd.f32 %v1722, %v1857
    %v1986 = vadd.f32 %v1723, %v1858
    %v1987 = vadd.f32 %v1724, %v1859
    %v1988 = vadd.f32 %v1725, %v1860
    %v1989 = vadd.f32 %v1726, %v1861
    %v1990 = vadd.f32 %v1727, %v1862
    %v1991 = vadd.f32 %v1728, %v1863
    %v1992 = vadd.f32 %v1729, %v1864
    %v1993 = vadd.f32 %v1730, %v1865
    %v1994 = vadd.f32 %v1731, %v1866
    %v1995 = vadd.f32 %v1732, %v1867
    %v1996 = vadd.f32 %v1733, %v1868
    %v1997 = vadd.f32 %v1734, %v1869
    %v1998 = vadd.f32 %v1735, %v1870
    %v1999 = vadd.f32 %v1736, %v1871
    %v2000 = vadd.f32 %v1737, %v1872
    %v2001 = vadd.f32 %v1738, %v1873
    %v2002 = vadd.f32 %v1739, %v1874
    %v2003 = vadd.f32 %v1740, %v1875
    %v2004 = vadd.f32 %v1741, %v1876
    %v2005 = vadd.f32 %v1742, %v1877
    %v2006 = vadd.f32 %v1743, %v1878
    %v2007 = vadd.f32 %v1744, %v1879
    %v2008 = vld [vmem:[%s6] sm:$0x1]
    %v2010 = vlaneseq
    %v2011 = vshrl.u32 %v2010, 7
    %v2012 = vsub.s32 0, %v2011
    %v2013 = vrot.slane %v2008, %v2012
    %v2015 = vadd.f32 %v1880, %v2013
    %v2016 = vadd.f32 %v1881, %v2013
    %v2017 = vadd.f32 %v1882, %v2013
    %v2018 = vadd.f32 %v1883, %v2013
    %v2019 = vadd.f32 %v1884, %v2013
    %v2020 = vadd.f32 %v1885, %v2013
    %v2021 = vadd.f32 %v1886, %v2013
    %v2022 = vadd.f32 %v1887, %v2013
    %v2023 = vadd.f32 %v1888, %v2013
    %v2024 = vadd.f32 %v1889, %v2013
    %v2025 = vadd.f32 %v1890, %v2013
    %v2026 = vadd.f32 %v1891, %v2013
    %v2027 = vadd.f32 %v1892, %v2013
    %v2028 = vadd.f32 %v1893, %v2013
    %v2029 = vadd.f32 %v1894, %v2013
    %v2030 = vadd.f32 %v1895, %v2013
    %v2031 = vadd.f32 %v1896, %v2013
    %v2032 = vadd.f32 %v1897, %v2013
    %v2033 = vadd.f32 %v1898, %v2013
    %v2034 = vadd.f32 %v1899, %v2013
    %v2035 = vadd.f32 %v1900, %v2013
    %v2036 = vadd.f32 %v1901, %v2013
    %v2037 = vadd.f32 %v1902, %v2013
    %v2038 = vadd.f32 %v1903, %v2013
    %v2039 = vadd.f32 %v1904, %v2013
    %v2040 = vadd.f32 %v1905, %v2013
    %v2041 = vadd.f32 %v1906, %v2013
    %v2042 = vadd.f32 %v1907, %v2013
    %v2043 = vadd.f32 %v1908, %v2013
    %v2044 = vadd.f32 %v1909, %v2013
    %v2045 = vadd.f32 %v1910, %v2013
    %v2046 = vadd.f32 %v1911, %v2013
    %v2047 = vadd.f32 %v1912, %v2013
    %v2048 = vadd.f32 %v1913, %v2013
    %v2049 = vadd.f32 %v1914, %v2013
    %v2050 = vadd.f32 %v1915, %v2013
    %v2051 = vadd.f32 %v1916, %v2013
    %v2052 = vadd.f32 %v1917, %v2013
    %v2053 = vadd.f32 %v1918, %v2013
    %v2054 = vadd.f32 %v1919, %v2013
    %v2055 = vadd.f32 %v1920, %v2013
    %v2056 = vadd.f32 %v1921, %v2013
    %v2057 = vadd.f32 %v1922, %v2013
    %v2058 = vadd.f32 %v1923, %v2013
    %v2059 = vadd.f32 %v1924, %v2013
    %v2060 = vadd.f32 %v1925, %v2013
    %v2061 = vadd.f32 %v1926, %v2013
    %v2062 = vadd.f32 %v1927, %v2013
    %v2063 = vadd.f32 %v1928, %v2013
    %v2064 = vadd.f32 %v1929, %v2013
    %v2065 = vadd.f32 %v1930, %v2013
    %v2066 = vadd.f32 %v1931, %v2013
    %v2067 = vadd.f32 %v1932, %v2013
    %v2068 = vadd.f32 %v1933, %v2013
    %v2069 = vadd.f32 %v1934, %v2013
    %v2070 = vadd.f32 %v1935, %v2013
    %v2071 = vadd.f32 %v1936, %v2013
    %v2072 = vadd.f32 %v1937, %v2013
    %v2073 = vadd.f32 %v1938, %v2013
    %v2074 = vadd.f32 %v1939, %v2013
    %v2075 = vadd.f32 %v1940, %v2013
    %v2076 = vadd.f32 %v1941, %v2013
    %v2077 = vadd.f32 %v1942, %v2013
    %v2078 = vadd.f32 %v1943, %v2013
    %v2079 = vadd.f32 %v1944, %v2013
    %v2080 = vadd.f32 %v1945, %v2013
    %v2081 = vadd.f32 %v1946, %v2013
    %v2082 = vadd.f32 %v1947, %v2013
    %v2083 = vadd.f32 %v1948, %v2013
    %v2084 = vadd.f32 %v1949, %v2013
    %v2085 = vadd.f32 %v1950, %v2013
    %v2086 = vadd.f32 %v1951, %v2013
    %v2087 = vadd.f32 %v1952, %v2013
    %v2088 = vadd.f32 %v1953, %v2013
    %v2089 = vadd.f32 %v1954, %v2013
    %v2090 = vadd.f32 %v1955, %v2013
    %v2091 = vadd.f32 %v1956, %v2013
    %v2092 = vadd.f32 %v1957, %v2013
    %v2093 = vadd.f32 %v1958, %v2013
    %v2094 = vadd.f32 %v1959, %v2013
    %v2095 = vadd.f32 %v1960, %v2013
    %v2096 = vadd.f32 %v1961, %v2013
    %v2097 = vadd.f32 %v1962, %v2013
    %v2098 = vadd.f32 %v1963, %v2013
    %v2099 = vadd.f32 %v1964, %v2013
    %v2100 = vadd.f32 %v1965, %v2013
    %v2101 = vadd.f32 %v1966, %v2013
    %v2102 = vadd.f32 %v1967, %v2013
    %v2103 = vadd.f32 %v1968, %v2013
    %v2104 = vadd.f32 %v1969, %v2013
    %v2105 = vadd.f32 %v1970, %v2013
    %v2106 = vadd.f32 %v1971, %v2013
    %v2107 = vadd.f32 %v1972, %v2013
    %v2108 = vadd.f32 %v1973, %v2013
    %v2109 = vadd.f32 %v1974, %v2013
    %v2110 = vadd.f32 %v1975, %v2013
    %v2111 = vadd.f32 %v1976, %v2013
    %v2112 = vadd.f32 %v1977, %v2013
    %v2113 = vadd.f32 %v1978, %v2013
    %v2114 = vadd.f32 %v1979, %v2013
    %v2115 = vadd.f32 %v1980, %v2013
    %v2116 = vadd.f32 %v1981, %v2013
    %v2117 = vadd.f32 %v1982, %v2013
    %v2118 = vadd.f32 %v1983, %v2013
    %v2119 = vadd.f32 %v1984, %v2013
    %v2120 = vadd.f32 %v1985, %v2013
    %v2121 = vadd.f32 %v1986, %v2013
    %v2122 = vadd.f32 %v1987, %v2013
    %v2123 = vadd.f32 %v1988, %v2013
    %v2124 = vadd.f32 %v1989, %v2013
    %v2125 = vadd.f32 %v1990, %v2013
    %v2126 = vadd.f32 %v1991, %v2013
    %v2127 = vadd.f32 %v1992, %v2013
    %v2128 = vadd.f32 %v1993, %v2013
    %v2129 = vadd.f32 %v1994, %v2013
    %v2130 = vadd.f32 %v1995, %v2013
    %v2131 = vadd.f32 %v1996, %v2013
    %v2132 = vadd.f32 %v1997, %v2013
    %v2133 = vadd.f32 %v1998, %v2013
    %v2134 = vadd.f32 %v1999, %v2013
    %v2135 = vadd.f32 %v2000, %v2013
    %v2136 = vadd.f32 %v2001, %v2013
    %v2137 = vadd.f32 %v2002, %v2013
    %v2138 = vadd.f32 %v2003, %v2013
    %v2139 = vadd.f32 %v2004, %v2013
    %v2140 = vadd.f32 %v2005, %v2013
    %v2141 = vadd.f32 %v2006, %v2013
    %v2142 = vadd.f32 %v2007, %v2013
    %v2143 = vmax.f32 %v2015, 0.0
    %v2144 = vmax.f32 %v2016, 0.0
    %v2145 = vmax.f32 %v2017, 0.0
    %v2146 = vmax.f32 %v2018, 0.0
    %v2147 = vmax.f32 %v2019, 0.0
    %v2148 = vmax.f32 %v2020, 0.0
    %v2149 = vmax.f32 %v2021, 0.0
    %v2150 = vmax.f32 %v2022, 0.0
    %v2151 = vmax.f32 %v2023, 0.0
    %v2152 = vmax.f32 %v2024, 0.0
    %v2153 = vmax.f32 %v2025, 0.0
    %v2154 = vmax.f32 %v2026, 0.0
    %v2155 = vmax.f32 %v2027, 0.0
    %v2156 = vmax.f32 %v2028, 0.0
    %v2157 = vmax.f32 %v2029, 0.0
    %v2158 = vmax.f32 %v2030, 0.0
    %v2159 = vmax.f32 %v2031, 0.0
    %v2160 = vmax.f32 %v2032, 0.0
    %v2161 = vmax.f32 %v2033, 0.0
    %v2162 = vmax.f32 %v2034, 0.0
    %v2163 = vmax.f32 %v2035, 0.0
    %v2164 = vmax.f32 %v2036, 0.0
    %v2165 = vmax.f32 %v2037, 0.0
    %v2166 = vmax.f32 %v2038, 0.0
    %v2167 = vmax.f32 %v2039, 0.0
    %v2168 = vmax.f32 %v2040, 0.0
    %v2169 = vmax.f32 %v2041, 0.0
    %v2170 = vmax.f32 %v2042, 0.0
    %v2171 = vmax.f32 %v2043, 0.0
    %v2172 = vmax.f32 %v2044, 0.0
    %v2173 = vmax.f32 %v2045, 0.0
    %v2174 = vmax.f32 %v2046, 0.0
    %v2175 = vmax.f32 %v2047, 0.0
    %v2176 = vmax.f32 %v2048, 0.0
    %v2177 = vmax.f32 %v2049, 0.0
    %v2178 = vmax.f32 %v2050, 0.0
    %v2179 = vmax.f32 %v2051, 0.0
    %v2180 = vmax.f32 %v2052, 0.0
    %v2181 = vmax.f32 %v2053, 0.0
    %v2182 = vmax.f32 %v2054, 0.0
    %v2183 = vmax.f32 %v2055, 0.0
    %v2184 = vmax.f32 %v2056, 0.0
    %v2185 = vmax.f32 %v2057, 0.0
    %v2186 = vmax.f32 %v2058, 0.0
    %v2187 = vmax.f32 %v2059, 0.0
    %v2188 = vmax.f32 %v2060, 0.0
    %v2189 = vmax.f32 %v2061, 0.0
    %v2190 = vmax.f32 %v2062, 0.0
    %v2191 = vmax.f32 %v2063, 0.0
    %v2192 = vmax.f32 %v2064, 0.0
    %v2193 = vmax.f32 %v2065, 0.0
    %v2194 = vmax.f32 %v2066, 0.0
    %v2195 = vmax.f32 %v2067, 0.0
    %v2196 = vmax.f32 %v2068, 0.0
    %v2197 = vmax.f32 %v2069, 0.0
    %v2198 = vmax.f32 %v2070, 0.0
    %v2199 = vmax.f32 %v2071, 0.0
    %v2200 = vmax.f32 %v2072, 0.0
    %v2201 = vmax.f32 %v2073, 0.0
    %v2202 = vmax.f32 %v2074, 0.0
    %v2203 = vmax.f32 %v2075, 0.0
    %v2204 = vmax.f32 %v2076, 0.0
    %v2205 = vmax.f32 %v2077, 0.0
    %v2206 = vmax.f32 %v2078, 0.0
    %v2207 = vmax.f32 %v2079, 0.0
    %v2208 = vmax.f32 %v2080, 0.0
    %v2209 = vmax.f32 %v2081, 0.0
    %v2210 = vmax.f32 %v2082, 0.0
    %v2211 = vmax.f32 %v2083, 0.0
    %v2212 = vmax.f32 %v2084, 0.0
    %v2213 = vmax.f32 %v2085, 0.0
    %v2214 = vmax.f32 %v2086, 0.0
    %v2215 = vmax.f32 %v2087, 0.0
    %v2216 = vmax.f32 %v2088, 0.0
    %v2217 = vmax.f32 %v2089, 0.0
    %v2218 = vmax.f32 %v2090, 0.0
    %v2219 = vmax.f32 %v2091, 0.0
    %v2220 = vmax.f32 %v2092, 0.0
    %v2221 = vmax.f32 %v2093, 0.0
    %v2222 = vmax.f32 %v2094, 0.0
    %v2223 = vmax.f32 %v2095, 0.0
    %v2224 = vmax.f32 %v2096, 0.0
    %v2225 = vmax.f32 %v2097, 0.0
    %v2226 = vmax.f32 %v2098, 0.0
    %v2227 = vmax.f32 %v2099, 0.0
    %v2228 = vmax.f32 %v2100, 0.0
    %v2229 = vmax.f32 %v2101, 0.0
    %v2230 = vmax.f32 %v2102, 0.0
    %v2231 = vmax.f32 %v2103, 0.0
    %v2232 = vmax.f32 %v2104, 0.0
    %v2233 = vmax.f32 %v2105, 0.0
    %v2234 = vmax.f32 %v2106, 0.0
    %v2235 = vmax.f32 %v2107, 0.0
    %v2236 = vmax.f32 %v2108, 0.0
    %v2237 = vmax.f32 %v2109, 0.0
    %v2238 = vmax.f32 %v2110, 0.0
    %v2239 = vmax.f32 %v2111, 0.0
    %v2240 = vmax.f32 %v2112, 0.0
    %v2241 = vmax.f32 %v2113, 0.0
    %v2242 = vmax.f32 %v2114, 0.0
    %v2243 = vmax.f32 %v2115, 0.0
    %v2244 = vmax.f32 %v2116, 0.0
    %v2245 = vmax.f32 %v2117, 0.0
    %v2246 = vmax.f32 %v2118, 0.0
    %v2247 = vmax.f32 %v2119, 0.0
    %v2248 = vmax.f32 %v2120, 0.0
    %v2249 = vmax.f32 %v2121, 0.0
    %v2250 = vmax.f32 %v2122, 0.0
    %v2251 = vmax.f32 %v2123, 0.0
    %v2252 = vmax.f32 %v2124, 0.0
    %v2253 = vmax.f32 %v2125, 0.0
    %v2254 = vmax.f32 %v2126, 0.0
    %v2255 = vmax.f32 %v2127, 0.0
    %v2256 = vmax.f32 %v2128, 0.0
    %v2257 = vmax.f32 %v2129, 0.0
    %v2258 = vmax.f32 %v2130, 0.0
    %v2259 = vmax.f32 %v2131, 0.0
    %v2260 = vmax.f32 %v2132, 0.0
    %v2261 = vmax.f32 %v2133, 0.0
    %v2262 = vmax.f32 %v2134, 0.0
    %v2263 = vmax.f32 %v2135, 0.0
    %v2264 = vmax.f32 %v2136, 0.0
    %v2265 = vmax.f32 %v2137, 0.0
    %v2266 = vmax.f32 %v2138, 0.0
    %v2267 = vmax.f32 %v2139, 0.0
    %v2268 = vmax.f32 %v2140, 0.0
    %v2269 = vmax.f32 %v2141, 0.0
    %v2270 = vmax.f32 %v2142, 0.0
    %vm2271 = vcmask 130048
    %2272 = vst.msk [vmem:[#allocation2] sm:$0xff] %vm2271, %v2143
    %2273 = vst.msk [vmem:[#allocation2 + $0x8] sm:$0xff] %vm2271, %v2144
    %2274 = vst.msk [vmem:[#allocation2 + $0x10] sm:$0xff] %vm2271, %v2145
    %2275 = vst.msk [vmem:[#allocation2 + $0x18] sm:$0xff] %vm2271, %v2146
    %2276 = vst.msk [vmem:[#allocation2 + $0x20] sm:$0xff] %vm2271, %v2147
    %2277 = vst.msk [vmem:[#allocation2 + $0x28] sm:$0xff] %vm2271, %v2148
    %2278 = vst.msk [vmem:[#allocation2 + $0x30] sm:$0xff] %vm2271, %v2149
    %2279 = vst.msk [vmem:[#allocation2 + $0x38] sm:$0xff] %vm2271, %v2150
    %2280 = vst.msk [vmem:[#allocation2 + $0x40] sm:$0xff] %vm2271, %v2151
    %2281 = vst.msk [vmem:[#allocation2 + $0x48] sm:$0xff] %vm2271, %v2152
    %2282 = vst.msk [vmem:[#allocation2 + $0x50] sm:$0xff] %vm2271, %v2153
    %2283 = vst.msk [vmem:[#allocation2 + $0x58] sm:$0xff] %vm2271, %v2154
    %2284 = vst.msk [vmem:[#allocation2 + $0x60] sm:$0xff] %vm2271, %v2155
    %2285 = vst.msk [vmem:[#allocation2 + $0x68] sm:$0xff] %vm2271, %v2156
    %2286 = vst.msk [vmem:[#allocation2 + $0x70] sm:$0xff] %vm2271, %v2157
    %2287 = vst.msk [vmem:[#allocation2 + $0x78] sm:$0xff] %vm2271, %v2158
    %2288 = vst.msk [vmem:[#allocation2 + $0x80] sm:$0xff] %vm2271, %v2159
    %2289 = vst.msk [vmem:[#allocation2 + $0x88] sm:$0xff] %vm2271, %v2160
    %2290 = vst.msk [vmem:[#allocation2 + $0x90] sm:$0xff] %vm2271, %v2161
    %2291 = vst.msk [vmem:[#allocation2 + $0x98] sm:$0xff] %vm2271, %v2162
    %2292 = vst.msk [vmem:[#allocation2 + $0xa0] sm:$0xff] %vm2271, %v2163
    %2293 = vst.msk [vmem:[#allocation2 + $0xa8] sm:$0xff] %vm2271, %v2164
    %2294 = vst.msk [vmem:[#allocation2 + $0xb0] sm:$0xff] %vm2271, %v2165
    %2295 = vst.msk [vmem:[#allocation2 + $0xb8] sm:$0xff] %vm2271, %v2166
    %2296 = vst.msk [vmem:[#allocation2 + $0xc0] sm:$0xff] %vm2271, %v2167
    %2297 = vst.msk [vmem:[#allocation2 + $0xc8] sm:$0xff] %vm2271, %v2168
    %2298 = vst.msk [vmem:[#allocation2 + $0xd0] sm:$0xff] %vm2271, %v2169
    %2299 = vst.msk [vmem:[#allocation2 + $0xd8] sm:$0xff] %vm2271, %v2170
    %2300 = vst.msk [vmem:[#allocation2 + $0xe0] sm:$0xff] %vm2271, %v2171
    %2301 = vst.msk [vmem:[#allocation2 + $0xe8] sm:$0xff] %vm2271, %v2172
    %2302 = vst.msk [vmem:[#allocation2 + $0xf0] sm:$0xff] %vm2271, %v2173
    %2303 = vst.msk [vmem:[#allocation2 + $0xf8] sm:$0xff] %vm2271, %v2174
    %2304 = vst.msk [vmem:[#allocation2 + $0x100] sm:$0xff] %vm2271, %v2175
    %2305 = vst.msk [vmem:[#allocation2 + $0x108] sm:$0xff] %vm2271, %v2176
    %2306 = vst.msk [vmem:[#allocation2 + $0x110] sm:$0xff] %vm2271, %v2177
    %2307 = vst.msk [vmem:[#allocation2 + $0x118] sm:$0xff] %vm2271, %v2178
    %2308 = vst.msk [vmem:[#allocation2 + $0x120] sm:$0xff] %vm2271, %v2179
    %2309 = vst.msk [vmem:[#allocation2 + $0x128] sm:$0xff] %vm2271, %v2180
    %2310 = vst.msk [vmem:[#allocation2 + $0x130] sm:$0xff] %vm2271, %v2181
    %2311 = vst.msk [vmem:[#allocation2 + $0x138] sm:$0xff] %vm2271, %v2182
    %2312 = vst.msk [vmem:[#allocation2 + $0x140] sm:$0xff] %vm2271, %v2183
    %2313 = vst.msk [vmem:[#allocation2 + $0x148] sm:$0xff] %vm2271, %v2184
    %2314 = vst.msk [vmem:[#allocation2 + $0x150] sm:$0xff] %vm2271, %v2185
    %2315 = vst.msk [vmem:[#allocation2 + $0x158] sm:$0xff] %vm2271, %v2186
    %2316 = vst.msk [vmem:[#allocation2 + $0x160] sm:$0xff] %vm2271, %v2187
    %2317 = vst.msk [vmem:[#allocation2 + $0x168] sm:$0xff] %vm2271, %v2188
    %2318 = vst.msk [vmem:[#allocation2 + $0x170] sm:$0xff] %vm2271, %v2189
    %2319 = vst.msk [vmem:[#allocation2 + $0x178] sm:$0xff] %vm2271, %v2190
    %2320 = vst.msk [vmem:[#allocation2 + $0x180] sm:$0xff] %vm2271, %v2191
    %2321 = vst.msk [vmem:[#allocation2 + $0x188] sm:$0xff] %vm2271, %v2192
    %2322 = vst.msk [vmem:[#allocation2 + $0x190] sm:$0xff] %vm2271, %v2193
    %2323 = vst.msk [vmem:[#allocation2 + $0x198] sm:$0xff] %vm2271, %v2194
    %2324 = vst.msk [vmem:[#allocation2 + $0x1a0] sm:$0xff] %vm2271, %v2195
    %2325 = vst.msk [vmem:[#allocation2 + $0x1a8] sm:$0xff] %vm2271, %v2196
    %2326 = vst.msk [vmem:[#allocation2 + $0x1b0] sm:$0xff] %vm2271, %v2197
    %2327 = vst.msk [vmem:[#allocation2 + $0x1b8] sm:$0xff] %vm2271, %v2198
    %2328 = vst.msk [vmem:[#allocation2 + $0x1c0] sm:$0xff] %vm2271, %v2199
    %2329 = vst.msk [vmem:[#allocation2 + $0x1c8] sm:$0xff] %vm2271, %v2200
    %2330 = vst.msk [vmem:[#allocation2 + $0x1d0] sm:$0xff] %vm2271, %v2201
    %2331 = vst.msk [vmem:[#allocation2 + $0x1d8] sm:$0xff] %vm2271, %v2202
    %2332 = vst.msk [vmem:[#allocation2 + $0x1e0] sm:$0xff] %vm2271, %v2203
    %2333 = vst.msk [vmem:[#allocation2 + $0x1e8] sm:$0xff] %vm2271, %v2204
    %2334 = vst.msk [vmem:[#allocation2 + $0x1f0] sm:$0xff] %vm2271, %v2205
    %2335 = vst.msk [vmem:[#allocation2 + $0x1f8] sm:$0xff] %vm2271, %v2206
    %2336 = vst.msk [vmem:[#allocation2 + $0x200] sm:$0xff] %vm2271, %v2207
    %2337 = vst.msk [vmem:[#allocation2 + $0x208] sm:$0xff] %vm2271, %v2208
    %2338 = vst.msk [vmem:[#allocation2 + $0x210] sm:$0xff] %vm2271, %v2209
    %2339 = vst.msk [vmem:[#allocation2 + $0x218] sm:$0xff] %vm2271, %v2210
    %2340 = vst.msk [vmem:[#allocation2 + $0x220] sm:$0xff] %vm2271, %v2211
    %2341 = vst.msk [vmem:[#allocation2 + $0x228] sm:$0xff] %vm2271, %v2212
    %2342 = vst.msk [vmem:[#allocation2 + $0x230] sm:$0xff] %vm2271, %v2213
    %2343 = vst.msk [vmem:[#allocation2 + $0x238] sm:$0xff] %vm2271, %v2214
    %2344 = vst.msk [vmem:[#allocation2 + $0x240] sm:$0xff] %vm2271, %v2215
    %2345 = vst.msk [vmem:[#allocation2 + $0x248] sm:$0xff] %vm2271, %v2216
    %2346 = vst.msk [vmem:[#allocation2 + $0x250] sm:$0xff] %vm2271, %v2217
    %2347 = vst.msk [vmem:[#allocation2 + $0x258] sm:$0xff] %vm2271, %v2218
    %2348 = vst.msk [vmem:[#allocation2 + $0x260] sm:$0xff] %vm2271, %v2219
    %2349 = vst.msk [vmem:[#allocation2 + $0x268] sm:$0xff] %vm2271, %v2220
    %2350 = vst.msk [vmem:[#allocation2 + $0x270] sm:$0xff] %vm2271, %v2221
    %2351 = vst.msk [vmem:[#allocation2 + $0x278] sm:$0xff] %vm2271, %v2222
    %2352 = vst.msk [vmem:[#allocation2 + $0x280] sm:$0xff] %vm2271, %v2223
    %2353 = vst.msk [vmem:[#allocation2 + $0x288] sm:$0xff] %vm2271, %v2224
    %2354 = vst.msk [vmem:[#allocation2 + $0x290] sm:$0xff] %vm2271, %v2225
    %2355 = vst.msk [vmem:[#allocation2 + $0x298] sm:$0xff] %vm2271, %v2226
    %2356 = vst.msk [vmem:[#allocation2 + $0x2a0] sm:$0xff] %vm2271, %v2227
    %2357 = vst.msk [vmem:[#allocation2 + $0x2a8] sm:$0xff] %vm2271, %v2228
    %2358 = vst.msk [vmem:[#allocation2 + $0x2b0] sm:$0xff] %vm2271, %v2229
    %2359 = vst.msk [vmem:[#allocation2 + $0x2b8] sm:$0xff] %vm2271, %v2230
    %2360 = vst.msk [vmem:[#allocation2 + $0x2c0] sm:$0xff] %vm2271, %v2231
    %2361 = vst.msk [vmem:[#allocation2 + $0x2c8] sm:$0xff] %vm2271, %v2232
    %2362 = vst.msk [vmem:[#allocation2 + $0x2d0] sm:$0xff] %vm2271, %v2233
    %2363 = vst.msk [vmem:[#allocation2 + $0x2d8] sm:$0xff] %vm2271, %v2234
    %2364 = vst.msk [vmem:[#allocation2 + $0x2e0] sm:$0xff] %vm2271, %v2235
    %2365 = vst.msk [vmem:[#allocation2 + $0x2e8] sm:$0xff] %vm2271, %v2236
    %2366 = vst.msk [vmem:[#allocation2 + $0x2f0] sm:$0xff] %vm2271, %v2237
    %2367 = vst.msk [vmem:[#allocation2 + $0x2f8] sm:$0xff] %vm2271, %v2238
    %2368 = vst.msk [vmem:[#allocation2 + $0x300] sm:$0xff] %vm2271, %v2239
    %2369 = vst.msk [vmem:[#allocation2 + $0x308] sm:$0xff] %vm2271, %v2240
    %2370 = vst.msk [vmem:[#allocation2 + $0x310] sm:$0xff] %vm2271, %v2241
    %2371 = vst.msk [vmem:[#allocation2 + $0x318] sm:$0xff] %vm2271, %v2242
    %2372 = vst.msk [vmem:[#allocation2 + $0x320] sm:$0xff] %vm2271, %v2243
    %2373 = vst.msk [vmem:[#allocation2 + $0x328] sm:$0xff] %vm2271, %v2244
    %2374 = vst.msk [vmem:[#allocation2 + $0x330] sm:$0xff] %vm2271, %v2245
    %2375 = vst.msk [vmem:[#allocation2 + $0x338] sm:$0xff] %vm2271, %v2246
    %2376 = vst.msk [vmem:[#allocation2 + $0x340] sm:$0xff] %vm2271, %v2247
    %2377 = vst.msk [vmem:[#allocation2 + $0x348] sm:$0xff] %vm2271, %v2248
    %2378 = vst.msk [vmem:[#allocation2 + $0x350] sm:$0xff] %vm2271, %v2249
    %2379 = vst.msk [vmem:[#allocation2 + $0x358] sm:$0xff] %vm2271, %v2250
    %2380 = vst.msk [vmem:[#allocation2 + $0x360] sm:$0xff] %vm2271, %v2251
    %2381 = vst.msk [vmem:[#allocation2 + $0x368] sm:$0xff] %vm2271, %v2252
    %2382 = vst.msk [vmem:[#allocation2 + $0x370] sm:$0xff] %vm2271, %v2253
    %2383 = vst.msk [vmem:[#allocation2 + $0x378] sm:$0xff] %vm2271, %v2254
    %2384 = vst.msk [vmem:[#allocation2 + $0x380] sm:$0xff] %vm2271, %v2255
    %2385 = vst.msk [vmem:[#allocation2 + $0x388] sm:$0xff] %vm2271, %v2256
    %2386 = vst.msk [vmem:[#allocation2 + $0x390] sm:$0xff] %vm2271, %v2257
    %2387 = vst.msk [vmem:[#allocation2 + $0x398] sm:$0xff] %vm2271, %v2258
    %2388 = vst.msk [vmem:[#allocation2 + $0x3a0] sm:$0xff] %vm2271, %v2259
    %2389 = vst.msk [vmem:[#allocation2 + $0x3a8] sm:$0xff] %vm2271, %v2260
    %2390 = vst.msk [vmem:[#allocation2 + $0x3b0] sm:$0xff] %vm2271, %v2261
    %2391 = vst.msk [vmem:[#allocation2 + $0x3b8] sm:$0xff] %vm2271, %v2262
    %2392 = vst.msk [vmem:[#allocation2 + $0x3c0] sm:$0xff] %vm2271, %v2263
    %2393 = vst.msk [vmem:[#allocation2 + $0x3c8] sm:$0xff] %vm2271, %v2264
    %2394 = vst.msk [vmem:[#allocation2 + $0x3d0] sm:$0xff] %vm2271, %v2265
    %2395 = vst.msk [vmem:[#allocation2 + $0x3d8] sm:$0xff] %vm2271, %v2266
    %2396 = vst.msk [vmem:[#allocation2 + $0x3e0] sm:$0xff] %vm2271, %v2267
    %2397 = vst.msk [vmem:[#allocation2 + $0x3e8] sm:$0xff] %vm2271, %v2268
    %2398 = vst.msk [vmem:[#allocation2 + $0x3f0] sm:$0xff] %vm2271, %v2269
    %2399 = vst.msk [vmem:[#allocation2 + $0x3f8] sm:$0xff] %vm2271, %v2270
    // Predicated region
    $region30: #{res_block.5} parent=1 // pred_check
      _
    $region31: #{res_block.5} parent=1 // pred_check_branch
      %2401 = sbr.rel (0) target = $region33
    $region32: #{res_block.5} parent=1 // pred_region
      %s2403 = ssub.s32 16384, 16384
      %2404 = vsyncadd [#allocation3], %s2403
      %s2405 = sshll.u32 [#allocation2], 4
      %s2406 = int_to_ptr.vmem [resolvable:$true] %s2405
      %2411 = dma.vmem_to_hbm [thread:$0]  %s2406, 16384, %s7, [#allocation3], 128, 128, 8
    $region33: #{res_block.5} parent=1 // pred_fallthru
      _
    // Predicated region
    $region34: #{res_block.5} parent=1 // pred_check
      _
    $region35: #{res_block.5} parent=1 // pred_check_branch
      %2413 = sbr.rel (0) target = $region37
    $region36: #{res_block.5} parent=1 // pred_region
      %2414 = dma.done [#allocation3], 16384
    $region37: #{res_block.5} parent=1 // pred_fallthru
      _
    %2415 = vsyncpa [#allocation3], 1

</llo_original>
